<compile_context>
chip_gen: v5e
topology: v5e:2x2
jax: 0.10.0
libtpu: 0.0.40
codegen_flags: <defaults>
</compile_context>

<pallas_src>
import functools

import jax
import jax.numpy as jnp
from jax.experimental import pallas as pl
from jax.experimental.pallas import tpu as pltpu


def _conv_transpose_kernel(x_ref, w1_ref, s1_ref, t1_ref,
                           w2_ref, s2_ref, t2_ref,
                           wt_ref, bt_ref,
                           o_ref,
                           pln1_ref, cols1_ref, pln2_ref, cols2_ref,
                           *, NB, H, W, Cin, C1):
    f32 = jnp.float32
    bf16 = jnp.bfloat16
    M = NB * H * W

    def im2col(pln_ref, cols_ref, src, C):
        """Build the (M, 9*C) patch matrix for a 3x3 / pad=1 conv.

        pln_ref : VMEM (3*NB, H+2, W, C); rows [dw*NB, (dw+1)*NB) hold the
                  dw-shifted (zero-padded) copy of `src` with one zero row of
                  H-padding on top / bottom.
        cols_ref: VMEM (M, 9*C); tap (dh, dw) occupies columns
                  [(dh*3+dw)*C, (dh*3+dw+1)*C).
        src     : (NB, H, W, C) bf16 activation.
        """
        zrow = jnp.zeros((3 * NB, 1, W, C), bf16)
        zcol = jnp.zeros((NB, H, 1, C), bf16)
        # zero only the border strips (interior fully overwritten below)
        pln_ref[:, 0:1, :, :] = zrow                            # top H-pad row
        pln_ref[:, H + 1:H + 2, :, :] = zrow                    # bottom H-pad row
        pln_ref[0:NB, 1:H + 1, 0:1, :] = zcol                   # w = -1 col (dw=0 plane)
        pln_ref[2 * NB:3 * NB, 1:H + 1, W - 1:W, :] = zcol      # w = W  col (dw=2 plane)
        # dw-shifted planes: only these two stores are sublane-shifted
        pln_ref[NB:2 * NB, 1:H + 1, :, :] = src                           # dw = 1 (center)
        pln_ref[0:NB, 1:H + 1, 1:W, :] = src[:, :, 0:W - 1, :]            # dw = 0 (left tap)
        pln_ref[2 * NB:3 * NB, 1:H + 1, 0:W - 1, :] = src[:, :, 1:W, :]   # dw = 2 (right tap)
        # gather the 9 taps: dh shifts live on a leading (untiled) axis and the
        # (NB, H, W, C) -> (M, C) reshape is tile-exact when W % 8 == 0.
        for dh in range(3):
            for dw in range(3):
                tap = pln_ref[dw * NB:(dw + 1) * NB, dh:dh + H, :, :]
                c0 = (dh * 3 + dw) * C
                cols_ref[:, c0:c0 + C] = tap.reshape(M, C)

    # ---- conv1 (3x3, pad=1, Cin -> C1) + folded BN1 + ReLU: one GEMM, K = 9*Cin
    im2col(pln1_ref, cols1_ref, x_ref[...].reshape(NB, H, W, Cin), Cin)
    acc1 = jnp.dot(cols1_ref[...], w1_ref[...], preferred_element_type=f32)
    y1 = jnp.maximum(acc1 * s1_ref[...] + t1_ref[...], 0.0)

    # ---- conv2 (3x3, pad=1, C1 -> C1) + folded BN2 + ReLU: one GEMM, K = 9*C1
    im2col(pln2_ref, cols2_ref, y1.astype(bf16).reshape(NB, H, W, C1), C1)
    acc2 = jnp.dot(cols2_ref[...], w2_ref[...], preferred_element_type=f32)
    y2 = jnp.maximum(acc2 * s2_ref[...] + t2_ref[...], 0.0)

    # ---- ConvTranspose2d k=2, s=2 (no tap overlap) == per-pixel linear map.
    # Weight columns are lane-padded to P so the store is fully lane-dense.
    o_ref[...] = (jnp.dot(y2.astype(bf16), wt_ref[...],
                          preferred_element_type=f32) + bt_ref[...])


def _pick_batch_block(N, H, W, Cin, budget_bytes=8 * 1024 * 1024):
    """Largest divisor of N whose per-grid-step VMEM working set fits the budget."""
    C1 = Cin // 2
    lane = lambda c: ((c + 127) // 128) * 128      # lane-tile padded width
    per_image = (
        3 * (H + 2) * W * (lane(Cin) + lane(C1)) * 2        # dw-plane scratch (bf16)
        + H * W * (lane(9 * Cin) + lane(9 * C1)) * 2        # im2col scratch (bf16)
        + 2 * H * W * lane(Cin) * 2                         # x block (bf16, double-buffered)
        + 2 * H * W * lane(Cin) * 4                         # out block (f32, lane-padded, double-buffered)
    )
    best = 1
    for nb in range(1, N + 1):
        if N % nb == 0 and nb * per_image <= budget_bytes:
            best = nb
    return best


def conv_transpose_forward(x_nchw, params, *, nb=None):
    """x_nchw: [N, in_ch, H, W] float32 -> [N, in_ch//4, 2H, 2W] float32."""
    (w1, b1, g1, be1, rm1, rv1,
     w2, b2, g2, be2, rm2, rv2,
     wt, bt) = params

    N, Cin, H, W = x_nchw.shape
    C1, C2 = Cin // 2, Cin // 4
    eps = 1e-5
    P = ((4 * C2 + 127) // 128) * 128      # lane-padded deconv output width

    if nb is None:
        nb = _pick_batch_block(N, H, W, Cin)
    assert N % nb == 0
    G = N // nb
    M = nb * H * W

    # --- parameter preprocessing (glue) ---
    # conv weights: torch (Cout, Cin, kh, kw) -> (kh, kw, Cin, Cout) -> (9*Cin, Cout); bf16 MXU inputs
    w1_k = jnp.transpose(w1, (2, 3, 1, 0)).reshape(9 * Cin, C1).astype(jnp.bfloat16)
    w2_k = jnp.transpose(w2, (2, 3, 1, 0)).reshape(9 * C1, C1).astype(jnp.bfloat16)
    # BN (eval mode, running stats) with the conv bias folded into scale/shift (f32)
    s1 = (g1 / jnp.sqrt(rv1 + eps)).astype(jnp.float32)
    t1 = ((b1 - rm1) * s1 + be1).astype(jnp.float32)
    s2 = (g2 / jnp.sqrt(rv2 + eps)).astype(jnp.float32)
    t2 = ((b2 - rm2) * s2 + be2).astype(jnp.float32)
    s1, t1, s2, t2 = (v.reshape(1, C1) for v in (s1, t1, s2, t2))
    # transpose-conv weight: torch (C1, C2, 2, 2) -> (C1, 4*C2), columns ordered
    # (dh, dw, co); lane-pad the columns up to P (zeros stripped in the wrapper).
    wt_k = jnp.transpose(wt, (0, 2, 3, 1)).reshape(C1, 4 * C2)
    wt_k = jnp.pad(wt_k, ((0, 0), (0, P - 4 * C2))).astype(jnp.bfloat16)
    bt_k = jnp.pad(jnp.tile(bt, 4), (0, P - 4 * C2)).reshape(1, P).astype(jnp.float32)

    # NCHW -> NHWC, fold nb images per grid step, bf16 matmul inputs.
    x = jnp.transpose(x_nchw, (0, 2, 3, 1)).astype(jnp.bfloat16)
    x = x.reshape(G, nb * H, W, Cin)

    kernel = functools.partial(_conv_transpose_kernel,
                               NB=nb, H=H, W=W, Cin=Cin, C1=C1)
    const2 = lambda g: (0, 0)

    # NOTE: for very large images an extra H-strip grid axis (with a 1-row halo)
    # would be needed to bound the per-step VMEM working set on v7x; at these
    # shapes the auto-sized batch block is sufficient.
    out = pl.pallas_call(
        kernel,
        out_shape=jax.ShapeDtypeStruct((G, M, P), jnp.float32),
        grid=(G,),
        in_specs=[
            pl.BlockSpec((pl.Squeezed(), nb * H, W, Cin), lambda g: (g, 0, 0, 0)),  # x
            pl.BlockSpec((9 * Cin, C1), const2),   # w1 (im2col layout)
            pl.BlockSpec((1, C1), const2),         # bn1 scale
            pl.BlockSpec((1, C1), const2),         # bn1 shift (conv bias folded in)
            pl.BlockSpec((9 * C1, C1), const2),    # w2 (im2col layout)
            pl.BlockSpec((1, C1), const2),         # bn2 scale
            pl.BlockSpec((1, C1), const2),         # bn2 shift (conv bias folded in)
            pl.BlockSpec((C1, P), const2),         # deconv weight (lane-padded)
            pl.BlockSpec((1, P), const2),          # deconv bias (tiled per tap, lane-padded)
        ],
        out_specs=pl.BlockSpec((pl.Squeezed(), M, P), lambda g: (g, 0, 0)),
        scratch_shapes=[
            pltpu.VMEM((3 * nb, H + 2, W, Cin), jnp.bfloat16),  # conv1 dw-shifted planes
            pltpu.VMEM((M, 9 * Cin), jnp.bfloat16),             # conv1 im2col patch matrix
            pltpu.VMEM((3 * nb, H + 2, W, C1), jnp.bfloat16),   # conv2 dw-shifted planes
            pltpu.VMEM((M, 9 * C1), jnp.bfloat16),              # conv2 im2col patch matrix
        ],
        compiler_params=pltpu.CompilerParams(
            dimension_semantics=("parallel",),
            vmem_limit_bytes=40 * 1024 * 1024),
    )(x, w1_k, s1, t1, w2_k, s2, t2, wt_k, bt_k)

    # (G, M, P) -> strip lane padding -> (N, H, W, 2, 2, C2) -> (N, 2H, 2W, C2) -> NCHW
    y = out[..., :4 * C2].reshape(N, H, W, 2, 2, C2)
    y = jnp.transpose(y, (0, 1, 3, 2, 4, 5)).reshape(N, 2 * H, 2 * W, C2)
    return jnp.transpose(y, (0, 3, 1, 2))


def init_params(in_ch, key):
    """Deterministic synthetic parameters matching the module's shapes."""
    C1, C2 = in_ch // 2, in_ch // 4
    ks = jax.random.split(key, 8)
    scale = 0.1
    w1 = scale * jax.random.normal(ks[0], (C1, in_ch, 3, 3), jnp.float32)
    b1 = scale * jax.random.normal(ks[1], (C1,), jnp.float32)
    g1 = 1.0 + 0.05 * jax.random.normal(ks[2], (C1,), jnp.float32)
    be1 = 0.05 * jax.random.normal(ks[3], (C1,), jnp.float32)
    rm1 = jnp.zeros((C1,), jnp.float32)   # running_mean (fresh BN)
    rv1 = jnp.ones((C1,), jnp.float32)    # running_var  (fresh BN)
    w2 = scale * jax.random.normal(ks[4], (C1, C1, 3, 3), jnp.float32)
    b2 = scale * jax.random.normal(ks[5], (C1,), jnp.float32)
    g2 = jnp.ones((C1,), jnp.float32)
    be2 = jnp.zeros((C1,), jnp.float32)
    rm2 = jnp.zeros((C1,), jnp.float32)
    rv2 = jnp.ones((C1,), jnp.float32)
    wt = scale * jax.random.normal(ks[6], (C1, C2, 2, 2), jnp.float32)  # torch layout
    bt = scale * jax.random.normal(ks[7], (C2,), jnp.float32)
    return (w1, b1, g1, be1, rm1, rv1, w2, b2, g2, be2, rm2, rv2, wt, bt)


if __name__ == "__main__":
    N, in_ch, H, W = 2, 8, 16, 16
    x = jax.random.normal(jax.random.PRNGKey(0), (N, in_ch, H, W), jnp.float32)
    params = init_params(in_ch, jax.random.PRNGKey(42))

    out = conv_transpose_forward(x, params)
    out = jax.block_until_ready(out)
    assert out.shape == (N, in_ch // 4, 2 * H, 2 * W), out.shape
    assert bool(jnp.all(jnp.isfinite(out)))
    print("KERNEL_OK")
</pallas_src>

<mosaic_0001>
module attributes {stable_mosaic.version = 11 : i64} {
  func.func @_conv_transpose_kernel(%arg0: i32, %arg1: memref<1x32x16x8xbf16, #tpu.memory_space<vmem>>, %arg2: memref<72x4xbf16, #tpu.memory_space<vmem>>, %arg3: memref<1x4xf32, #tpu.memory_space<vmem>>, %arg4: memref<1x4xf32, #tpu.memory_space<vmem>>, %arg5: memref<36x4xbf16, #tpu.memory_space<vmem>>, %arg6: memref<1x4xf32, #tpu.memory_space<vmem>>, %arg7: memref<1x4xf32, #tpu.memory_space<vmem>>, %arg8: memref<4x128xbf16, #tpu.memory_space<vmem>>, %arg9: memref<1x128xf32, #tpu.memory_space<vmem>>, %arg10: memref<1x512x128xf32, #tpu.memory_space<vmem>>, %arg11: memref<6x18x16x8xbf16, #tpu.memory_space<vmem>>, %arg12: memref<512x72xbf16, #tpu.memory_space<vmem>>, %arg13: memref<6x18x16x4xbf16, #tpu.memory_space<vmem>>, %arg14: memref<512x36xbf16, #tpu.memory_space<vmem>>) attributes {dimension_semantics = [#tpu.dimension_semantics<parallel>], iteration_bounds = array<i64: 1>, scalar_prefetch = 0 : i64, scratch_operands = 4 : i64, tpu.core_type = #tpu.core_type<tc>, window_params = [{transform_indices = @transform_0, window_bounds = array<i64: 1, 32, 16, 8>}, {pipeline_mode = #tpu.pipeline_mode<synchronous>, transform_indices = @transform_1, window_bounds = array<i64: 72, 4>}, {pipeline_mode = #tpu.pipeline_mode<synchronous>, transform_indices = @transform_2, window_bounds = array<i64: 1, 4>}, {pipeline_mode = #tpu.pipeline_mode<synchronous>, transform_indices = @transform_3, window_bounds = array<i64: 1, 4>}, {pipeline_mode = #tpu.pipeline_mode<synchronous>, transform_indices = @transform_4, window_bounds = array<i64: 36, 4>}, {pipeline_mode = #tpu.pipeline_mode<synchronous>, transform_indices = @transform_5, window_bounds = array<i64: 1, 4>}, {pipeline_mode = #tpu.pipeline_mode<synchronous>, transform_indices = @transform_6, window_bounds = array<i64: 1, 4>}, {pipeline_mode = #tpu.pipeline_mode<synchronous>, transform_indices = @transform_7, window_bounds = array<i64: 4, 128>}, {pipeline_mode = #tpu.pipeline_mode<synchronous>, transform_indices = @transform_8, window_bounds = array<i64: 1, 128>}, {transform_indices = @transform_9, window_bounds = array<i64: 1, 512, 128>}]} {
    %c0 = arith.constant 0 : index
    %c0_0 = arith.constant 0 : index
    %c0_1 = arith.constant 0 : index
    %c0_2 = arith.constant 0 : index
    %0 = vector.load %arg1[%c0, %c0_0, %c0_1, %c0_2] : memref<1x32x16x8xbf16, #tpu.memory_space<vmem>>, vector<1x32x16x8xbf16>
    %1 = vector.shape_cast %0 : vector<1x32x16x8xbf16> to vector<32x16x8xbf16>
    %2 = vector.shape_cast %1 : vector<32x16x8xbf16> to vector<2x16x16x8xbf16>
    %cst = arith.constant 0.000000e+00 : bf16
    %3 = vector.broadcast %cst : bf16 to vector<6x1x16x8xbf16>
    %cst_3 = arith.constant 0.000000e+00 : bf16
    %4 = vector.broadcast %cst_3 : bf16 to vector<2x16x1x8xbf16>
    %c0_4 = arith.constant 0 : index
    %c0_5 = arith.constant 0 : index
    %c0_6 = arith.constant 0 : index
    %c0_7 = arith.constant 0 : index
    %5 = vector.load %arg11[%c0_4, %c0_5, %c0_6, %c0_7] : memref<6x18x16x8xbf16, #tpu.memory_space<vmem>>, vector<6x1x16x8xbf16>
    tpu.vector_store %arg11[%c0_4, %c0_5, %c0_6, %c0_7], %3 {strides = array<i32>} : memref<6x18x16x8xbf16, #tpu.memory_space<vmem>>, vector<6x1x16x8xbf16>,
    %c0_8 = arith.constant 0 : index
    %c17 = arith.constant 17 : index
    %c0_9 = arith.constant 0 : index
    %c0_10 = arith.constant 0 : index
    %6 = vector.load %arg11[%c0_8, %c17, %c0_9, %c0_10] : memref<6x18x16x8xbf16, #tpu.memory_space<vmem>>, vector<6x1x16x8xbf16>
    tpu.vector_store %arg11[%c0_8, %c17, %c0_9, %c0_10], %3 {strides = array<i32>} : memref<6x18x16x8xbf16, #tpu.memory_space<vmem>>, vector<6x1x16x8xbf16>,
    %c0_11 = arith.constant 0 : index
    %c1 = arith.constant 1 : index
    %c0_12 = arith.constant 0 : index
    %c0_13 = arith.constant 0 : index
    %7 = vector.load %arg11[%c0_11, %c1, %c0_12, %c0_13] : memref<6x18x16x8xbf16, #tpu.memory_space<vmem>>, vector<2x16x1x8xbf16>
    tpu.vector_store %arg11[%c0_11, %c1, %c0_12, %c0_13], %4 {strides = array<i32>} : memref<6x18x16x8xbf16, #tpu.memory_space<vmem>>, vector<2x16x1x8xbf16>,
    %c4 = arith.constant 4 : index
    %c1_14 = arith.constant 1 : index
    %c15 = arith.constant 15 : index
    %c0_15 = arith.constant 0 : index
    %8 = vector.load %arg11[%c4, %c1_14, %c15, %c0_15] : memref<6x18x16x8xbf16, #tpu.memory_space<vmem>>, vector<2x16x1x8xbf16>
    tpu.vector_store %arg11[%c4, %c1_14, %c15, %c0_15], %4 {strides = array<i32>} : memref<6x18x16x8xbf16, #tpu.memory_space<vmem>>, vector<2x16x1x8xbf16>,
    %c2 = arith.constant 2 : index
    %c1_16 = arith.constant 1 : index
    %c0_17 = arith.constant 0 : index
    %c0_18 = arith.constant 0 : index
    %9 = vector.load %arg11[%c2, %c1_16, %c0_17, %c0_18] : memref<6x18x16x8xbf16, #tpu.memory_space<vmem>>, vector<2x16x16x8xbf16>
    tpu.vector_store %arg11[%c2, %c1_16, %c0_17, %c0_18], %2 {strides = array<i32>} : memref<6x18x16x8xbf16, #tpu.memory_space<vmem>>, vector<2x16x16x8xbf16>,
    %10 = vector.extract_strided_slice %2 {offsets = [0, 0, 0, 0], sizes = [2, 16, 15, 8], strides = [1, 1, 1, 1]} : vector<2x16x16x8xbf16> to vector<2x16x15x8xbf16>
    %c0_19 = arith.constant 0 : index
    %c1_20 = arith.constant 1 : index
    %c1_21 = arith.constant 1 : index
    %c0_22 = arith.constant 0 : index
    %11 = vector.load %arg11[%c0_19, %c1_20, %c1_21, %c0_22] : memref<6x18x16x8xbf16, #tpu.memory_space<vmem>>, vector<2x16x15x8xbf16>
    tpu.vector_store %arg11[%c0_19, %c1_20, %c1_21, %c0_22], %10 {strides = array<i32>} : memref<6x18x16x8xbf16, #tpu.memory_space<vmem>>, vector<2x16x15x8xbf16>,
    %12 = vector.extract_strided_slice %2 {offsets = [0, 0, 1, 0], sizes = [2, 16, 15, 8], strides = [1, 1, 1, 1]} : vector<2x16x16x8xbf16> to vector<2x16x15x8xbf16>
    %c4_23 = arith.constant 4 : index
    %c1_24 = arith.constant 1 : index
    %c0_25 = arith.constant 0 : index
    %c0_26 = arith.constant 0 : index
    %13 = vector.load %arg11[%c4_23, %c1_24, %c0_25, %c0_26] : memref<6x18x16x8xbf16, #tpu.memory_space<vmem>>, vector<2x16x15x8xbf16>
    tpu.vector_store %arg11[%c4_23, %c1_24, %c0_25, %c0_26], %12 {strides = array<i32>} : memref<6x18x16x8xbf16, #tpu.memory_space<vmem>>, vector<2x16x15x8xbf16>,
    %c0_27 = arith.constant 0 : index
    %c0_28 = arith.constant 0 : index
    %c0_29 = arith.constant 0 : index
    %c0_30 = arith.constant 0 : index
    %14 = vector.load %arg11[%c0_27, %c0_28, %c0_29, %c0_30] : memref<6x18x16x8xbf16, #tpu.memory_space<vmem>>, vector<2x16x16x8xbf16>
    %15 = vector.shape_cast %14 : vector<2x16x16x8xbf16> to vector<512x8xbf16>
    %c0_31 = arith.constant 0 : index
    %c0_32 = arith.constant 0 : index
    %16 = vector.load %arg12[%c0_31, %c0_32] : memref<512x72xbf16, #tpu.memory_space<vmem>>, vector<512x8xbf16>
    tpu.vector_store %arg12[%c0_31, %c0_32], %15 {strides = array<i32>} : memref<512x72xbf16, #tpu.memory_space<vmem>>, vector<512x8xbf16>,
    %c2_33 = arith.constant 2 : index
    %c0_34 = arith.constant 0 : index
    %c0_35 = arith.constant 0 : index
    %c0_36 = arith.constant 0 : index
    %17 = vector.load %arg11[%c2_33, %c0_34, %c0_35, %c0_36] : memref<6x18x16x8xbf16, #tpu.memory_space<vmem>>, vector<2x16x16x8xbf16>
    %18 = vector.shape_cast %17 : vector<2x16x16x8xbf16> to vector<512x8xbf16>
    %c0_37 = arith.constant 0 : index
    %c8 = arith.constant 8 : index
    %19 = vector.load %arg12[%c0_37, %c8] : memref<512x72xbf16, #tpu.memory_space<vmem>>, vector<512x8xbf16>
    tpu.vector_store %arg12[%c0_37, %c8], %18 {strides = array<i32>} : memref<512x72xbf16, #tpu.memory_space<vmem>>, vector<512x8xbf16>,
    %c4_38 = arith.constant 4 : index
    %c0_39 = arith.constant 0 : index
    %c0_40 = arith.constant 0 : index
    %c0_41 = arith.constant 0 : index
    %20 = vector.load %arg11[%c4_38, %c0_39, %c0_40, %c0_41] : memref<6x18x16x8xbf16, #tpu.memory_space<vmem>>, vector<2x16x16x8xbf16>
    %21 = vector.shape_cast %20 : vector<2x16x16x8xbf16> to vector<512x8xbf16>
    %c0_42 = arith.constant 0 : index
    %c16 = arith.constant 16 : index
    %22 = vector.load %arg12[%c0_42, %c16] : memref<512x72xbf16, #tpu.memory_space<vmem>>, vector<512x8xbf16>
    tpu.vector_store %arg12[%c0_42, %c16], %21 {strides = array<i32>} : memref<512x72xbf16, #tpu.memory_space<vmem>>, vector<512x8xbf16>,
    %c0_43 = arith.constant 0 : index
    %c1_44 = arith.constant 1 : index
    %c0_45 = arith.constant 0 : index
    %c0_46 = arith.constant 0 : index
    %23 = vector.load %arg11[%c0_43, %c1_44, %c0_45, %c0_46] : memref<6x18x16x8xbf16, #tpu.memory_space<vmem>>, vector<2x16x16x8xbf16>
    %24 = vector.shape_cast %23 : vector<2x16x16x8xbf16> to vector<512x8xbf16>
    %c0_47 = arith.constant 0 : index
    %c24 = arith.constant 24 : index
    %25 = vector.load %arg12[%c0_47, %c24] : memref<512x72xbf16, #tpu.memory_space<vmem>>, vector<512x8xbf16>
    tpu.vector_store %arg12[%c0_47, %c24], %24 {strides = array<i32>} : memref<512x72xbf16, #tpu.memory_space<vmem>>, vector<512x8xbf16>,
    %c2_48 = arith.constant 2 : index
    %c1_49 = arith.constant 1 : index
    %c0_50 = arith.constant 0 : index
    %c0_51 = arith.constant 0 : index
    %26 = vector.load %arg11[%c2_48, %c1_49, %c0_50, %c0_51] : memref<6x18x16x8xbf16, #tpu.memory_space<vmem>>, vector<2x16x16x8xbf16>
    %27 = vector.shape_cast %26 : vector<2x16x16x8xbf16> to vector<512x8xbf16>
    %c0_52 = arith.constant 0 : index
    %c32 = arith.constant 32 : index
    %28 = vector.load %arg12[%c0_52, %c32] : memref<512x72xbf16, #tpu.memory_space<vmem>>, vector<512x8xbf16>
    tpu.vector_store %arg12[%c0_52, %c32], %27 {strides = array<i32>} : memref<512x72xbf16, #tpu.memory_space<vmem>>, vector<512x8xbf16>,
    %c4_53 = arith.constant 4 : index
    %c1_54 = arith.constant 1 : index
    %c0_55 = arith.constant 0 : index
    %c0_56 = arith.constant 0 : index
    %29 = vector.load %arg11[%c4_53, %c1_54, %c0_55, %c0_56] : memref<6x18x16x8xbf16, #tpu.memory_space<vmem>>, vector<2x16x16x8xbf16>
    %30 = vector.shape_cast %29 : vector<2x16x16x8xbf16> to vector<512x8xbf16>
    %c0_57 = arith.constant 0 : index
    %c40 = arith.constant 40 : index
    %31 = vector.load %arg12[%c0_57, %c40] : memref<512x72xbf16, #tpu.memory_space<vmem>>, vector<512x8xbf16>
    tpu.vector_store %arg12[%c0_57, %c40], %30 {strides = array<i32>} : memref<512x72xbf16, #tpu.memory_space<vmem>>, vector<512x8xbf16>,
    %c0_58 = arith.constant 0 : index
    %c2_59 = arith.constant 2 : index
    %c0_60 = arith.constant 0 : index
    %c0_61 = arith.constant 0 : index
    %32 = vector.load %arg11[%c0_58, %c2_59, %c0_60, %c0_61] : memref<6x18x16x8xbf16, #tpu.memory_space<vmem>>, vector<2x16x16x8xbf16>
    %33 = vector.shape_cast %32 : vector<2x16x16x8xbf16> to vector<512x8xbf16>
    %c0_62 = arith.constant 0 : index
    %c48 = arith.constant 48 : index
    %34 = vector.load %arg12[%c0_62, %c48] : memref<512x72xbf16, #tpu.memory_space<vmem>>, vector<512x8xbf16>
    tpu.vector_store %arg12[%c0_62, %c48], %33 {strides = array<i32>} : memref<512x72xbf16, #tpu.memory_space<vmem>>, vector<512x8xbf16>,
    %c2_63 = arith.constant 2 : index
    %c2_64 = arith.constant 2 : index
    %c0_65 = arith.constant 0 : index
    %c0_66 = arith.constant 0 : index
    %35 = vector.load %arg11[%c2_63, %c2_64, %c0_65, %c0_66] : memref<6x18x16x8xbf16, #tpu.memory_space<vmem>>, vector<2x16x16x8xbf16>
    %36 = vector.shape_cast %35 : vector<2x16x16x8xbf16> to vector<512x8xbf16>
    %c0_67 = arith.constant 0 : index
    %c56 = arith.constant 56 : index
    %37 = vector.load %arg12[%c0_67, %c56] : memref<512x72xbf16, #tpu.memory_space<vmem>>, vector<512x8xbf16>
    tpu.vector_store %arg12[%c0_67, %c56], %36 {strides = array<i32>} : memref<512x72xbf16, #tpu.memory_space<vmem>>, vector<512x8xbf16>,
    %c4_68 = arith.constant 4 : index
    %c2_69 = arith.constant 2 : index
    %c0_70 = arith.constant 0 : index
    %c0_71 = arith.constant 0 : index
    %38 = vector.load %arg11[%c4_68, %c2_69, %c0_70, %c0_71] : memref<6x18x16x8xbf16, #tpu.memory_space<vmem>>, vector<2x16x16x8xbf16>
    %39 = vector.shape_cast %38 : vector<2x16x16x8xbf16> to vector<512x8xbf16>
    %c0_72 = arith.constant 0 : index
    %c64 = arith.constant 64 : index
    %40 = vector.load %arg12[%c0_72, %c64] : memref<512x72xbf16, #tpu.memory_space<vmem>>, vector<512x8xbf16>
    tpu.vector_store %arg12[%c0_72, %c64], %39 {strides = array<i32>} : memref<512x72xbf16, #tpu.memory_space<vmem>>, vector<512x8xbf16>,
    %c0_73 = arith.constant 0 : index
    %c0_74 = arith.constant 0 : index
    %41 = vector.load %arg12[%c0_73, %c0_74] : memref<512x72xbf16, #tpu.memory_space<vmem>>, vector<512x72xbf16>
    %c0_75 = arith.constant 0 : index
    %c0_76 = arith.constant 0 : index
    %42 = vector.load %arg2[%c0_75, %c0_76] : memref<72x4xbf16, #tpu.memory_space<vmem>>, vector<72x4xbf16>
    %cst_77 = arith.constant dense<0.000000e+00> : vector<512x4xf32>
    %43 = tpu.matmul %41, %42, %cst_77 {dimension_numbers = #tpu.dot_dimension_numbers<[1], [0], [0], [1], [0, 0, 1, 1], [], []>} : vector<512x72xbf16>, vector<72x4xbf16>, vector<512x4xf32> -> vector<512x4xf32>
    %c0_78 = arith.constant 0 : index
    %c0_79 = arith.constant 0 : index
    %44 = vector.load %arg3[%c0_78, %c0_79] : memref<1x4xf32, #tpu.memory_space<vmem>>, vector<1x4xf32>
    %45 = vector.broadcast %44 : vector<1x4xf32> to vector<512x4xf32>
    %46 = arith.mulf %43, %45 : vector<512x4xf32>
    %c0_80 = arith.constant 0 : index
    %c0_81 = arith.constant 0 : index
    %47 = vector.load %arg4[%c0_80, %c0_81] : memref<1x4xf32, #tpu.memory_space<vmem>>, vector<1x4xf32>
    %48 = vector.broadcast %47 : vector<1x4xf32> to vector<512x4xf32>
    %49 = arith.addf %46, %48 : vector<512x4xf32>
    %cst_82 = arith.constant 0.000000e+00 : f32
    %50 = vector.broadcast %cst_82 : f32 to vector<512x4xf32>
    %51 = arith.maximumf %49, %50 : vector<512x4xf32>
    %52 = arith.truncf %51 : vector<512x4xf32> to vector<512x4xbf16>
    %53 = vector.shape_cast %52 : vector<512x4xbf16> to vector<2x16x16x4xbf16>
    %cst_83 = arith.constant 0.000000e+00 : bf16
    %54 = vector.broadcast %cst_83 : bf16 to vector<6x1x16x4xbf16>
    %cst_84 = arith.constant 0.000000e+00 : bf16
    %55 = vector.broadcast %cst_84 : bf16 to vector<2x16x1x4xbf16>
    %c0_85 = arith.constant 0 : index
    %c0_86 = arith.constant 0 : index
    %c0_87 = arith.constant 0 : index
    %c0_88 = arith.constant 0 : index
    %56 = vector.load %arg13[%c0_85, %c0_86, %c0_87, %c0_88] : memref<6x18x16x4xbf16, #tpu.memory_space<vmem>>, vector<6x1x16x4xbf16>
    tpu.vector_store %arg13[%c0_85, %c0_86, %c0_87, %c0_88], %54 {strides = array<i32>} : memref<6x18x16x4xbf16, #tpu.memory_space<vmem>>, vector<6x1x16x4xbf16>,
    %c0_89 = arith.constant 0 : index
    %c17_90 = arith.constant 17 : index
    %c0_91 = arith.constant 0 : index
    %c0_92 = arith.constant 0 : index
    %57 = vector.load %arg13[%c0_89, %c17_90, %c0_91, %c0_92] : memref<6x18x16x4xbf16, #tpu.memory_space<vmem>>, vector<6x1x16x4xbf16>
    tpu.vector_store %arg13[%c0_89, %c17_90, %c0_91, %c0_92], %54 {strides = array<i32>} : memref<6x18x16x4xbf16, #tpu.memory_space<vmem>>, vector<6x1x16x4xbf16>,
    %c0_93 = arith.constant 0 : index
    %c1_94 = arith.constant 1 : index
    %c0_95 = arith.constant 0 : index
    %c0_96 = arith.constant 0 : index
    %58 = vector.load %arg13[%c0_93, %c1_94, %c0_95, %c0_96] : memref<6x18x16x4xbf16, #tpu.memory_space<vmem>>, vector<2x16x1x4xbf16>
    tpu.vector_store %arg13[%c0_93, %c1_94, %c0_95, %c0_96], %55 {strides = array<i32>} : memref<6x18x16x4xbf16, #tpu.memory_space<vmem>>, vector<2x16x1x4xbf16>,
    %c4_97 = arith.constant 4 : index
    %c1_98 = arith.constant 1 : index
    %c15_99 = arith.constant 15 : index
    %c0_100 = arith.constant 0 : index
    %59 = vector.load %arg13[%c4_97, %c1_98, %c15_99, %c0_100] : memref<6x18x16x4xbf16, #tpu.memory_space<vmem>>, vector<2x16x1x4xbf16>
    tpu.vector_store %arg13[%c4_97, %c1_98, %c15_99, %c0_100], %55 {strides = array<i32>} : memref<6x18x16x4xbf16, #tpu.memory_space<vmem>>, vector<2x16x1x4xbf16>,
    %c2_101 = arith.constant 2 : index
    %c1_102 = arith.constant 1 : index
    %c0_103 = arith.constant 0 : index
    %c0_104 = arith.constant 0 : index
    %60 = vector.load %arg13[%c2_101, %c1_102, %c0_103, %c0_104] : memref<6x18x16x4xbf16, #tpu.memory_space<vmem>>, vector<2x16x16x4xbf16>
    tpu.vector_store %arg13[%c2_101, %c1_102, %c0_103, %c0_104], %53 {strides = array<i32>} : memref<6x18x16x4xbf16, #tpu.memory_space<vmem>>, vector<2x16x16x4xbf16>,
    %61 = vector.extract_strided_slice %53 {offsets = [0, 0, 0, 0], sizes = [2, 16, 15, 4], strides = [1, 1, 1, 1]} : vector<2x16x16x4xbf16> to vector<2x16x15x4xbf16>
    %c0_105 = arith.constant 0 : index
    %c1_106 = arith.constant 1 : index
    %c1_107 = arith.constant 1 : index
    %c0_108 = arith.constant 0 : index
    %62 = vector.load %arg13[%c0_105, %c1_106, %c1_107, %c0_108] : memref<6x18x16x4xbf16, #tpu.memory_space<vmem>>, vector<2x16x15x4xbf16>
    tpu.vector_store %arg13[%c0_105, %c1_106, %c1_107, %c0_108], %61 {strides = array<i32>} : memref<6x18x16x4xbf16, #tpu.memory_space<vmem>>, vector<2x16x15x4xbf16>,
    %63 = vector.extract_strided_slice %53 {offsets = [0, 0, 1, 0], sizes = [2, 16, 15, 4], strides = [1, 1, 1, 1]} : vector<2x16x16x4xbf16> to vector<2x16x15x4xbf16>
    %c4_109 = arith.constant 4 : index
    %c1_110 = arith.constant 1 : index
    %c0_111 = arith.constant 0 : index
    %c0_112 = arith.constant 0 : index
    %64 = vector.load %arg13[%c4_109, %c1_110, %c0_111, %c0_112] : memref<6x18x16x4xbf16, #tpu.memory_space<vmem>>, vector<2x16x15x4xbf16>
    tpu.vector_store %arg13[%c4_109, %c1_110, %c0_111, %c0_112], %63 {strides = array<i32>} : memref<6x18x16x4xbf16, #tpu.memory_space<vmem>>, vector<2x16x15x4xbf16>,
    %c0_113 = arith.constant 0 : index
    %c0_114 = arith.constant 0 : index
    %c0_115 = arith.constant 0 : index
    %c0_116 = arith.constant 0 : index
    %65 = vector.load %arg13[%c0_113, %c0_114, %c0_115, %c0_116] : memref<6x18x16x4xbf16, #tpu.memory_space<vmem>>, vector<2x16x16x4xbf16>
    %66 = vector.shape_cast %65 : vector<2x16x16x4xbf16> to vector<512x4xbf16>
    %c0_117 = arith.constant 0 : index
    %c0_118 = arith.constant 0 : index
    %67 = vector.load %arg14[%c0_117, %c0_118] : memref<512x36xbf16, #tpu.memory_space<vmem>>, vector<512x4xbf16>
    tpu.vector_store %arg14[%c0_117, %c0_118], %66 {strides = array<i32>} : memref<512x36xbf16, #tpu.memory_space<vmem>>, vector<512x4xbf16>,
    %c2_119 = arith.constant 2 : index
    %c0_120 = arith.constant 0 : index
    %c0_121 = arith.constant 0 : index
    %c0_122 = arith.constant 0 : index
    %68 = vector.load %arg13[%c2_119, %c0_120, %c0_121, %c0_122] : memref<6x18x16x4xbf16, #tpu.memory_space<vmem>>, vector<2x16x16x4xbf16>
    %69 = vector.shape_cast %68 : vector<2x16x16x4xbf16> to vector<512x4xbf16>
    %c0_123 = arith.constant 0 : index
    %c4_124 = arith.constant 4 : index
    %70 = vector.load %arg14[%c0_123, %c4_124] : memref<512x36xbf16, #tpu.memory_space<vmem>>, vector<512x4xbf16>
    tpu.vector_store %arg14[%c0_123, %c4_124], %69 {strides = array<i32>} : memref<512x36xbf16, #tpu.memory_space<vmem>>, vector<512x4xbf16>,
    %c4_125 = arith.constant 4 : index
    %c0_126 = arith.constant 0 : index
    %c0_127 = arith.constant 0 : index
    %c0_128 = arith.constant 0 : index
    %71 = vector.load %arg13[%c4_125, %c0_126, %c0_127, %c0_128] : memref<6x18x16x4xbf16, #tpu.memory_space<vmem>>, vector<2x16x16x4xbf16>
    %72 = vector.shape_cast %71 : vector<2x16x16x4xbf16> to vector<512x4xbf16>
    %c0_129 = arith.constant 0 : index
    %c8_130 = arith.constant 8 : index
    %73 = vector.load %arg14[%c0_129, %c8_130] : memref<512x36xbf16, #tpu.memory_space<vmem>>, vector<512x4xbf16>
    tpu.vector_store %arg14[%c0_129, %c8_130], %72 {strides = array<i32>} : memref<512x36xbf16, #tpu.memory_space<vmem>>, vector<512x4xbf16>,
    %c0_131 = arith.constant 0 : index
    %c1_132 = arith.constant 1 : index
    %c0_133 = arith.constant 0 : index
    %c0_134 = arith.constant 0 : index
    %74 = vector.load %arg13[%c0_131, %c1_132, %c0_133, %c0_134] : memref<6x18x16x4xbf16, #tpu.memory_space<vmem>>, vector<2x16x16x4xbf16>
    %75 = vector.shape_cast %74 : vector<2x16x16x4xbf16> to vector<512x4xbf16>
    %c0_135 = arith.constant 0 : index
    %c12 = arith.constant 12 : index
    %76 = vector.load %arg14[%c0_135, %c12] : memref<512x36xbf16, #tpu.memory_space<vmem>>, vector<512x4xbf16>
    tpu.vector_store %arg14[%c0_135, %c12], %75 {strides = array<i32>} : memref<512x36xbf16, #tpu.memory_space<vmem>>, vector<512x4xbf16>,
    %c2_136 = arith.constant 2 : index
    %c1_137 = arith.constant 1 : index
    %c0_138 = arith.constant 0 : index
    %c0_139 = arith.constant 0 : index
    %77 = vector.load %arg13[%c2_136, %c1_137, %c0_138, %c0_139] : memref<6x18x16x4xbf16, #tpu.memory_space<vmem>>, vector<2x16x16x4xbf16>
    %78 = vector.shape_cast %77 : vector<2x16x16x4xbf16> to vector<512x4xbf16>
    %c0_140 = arith.constant 0 : index
    %c16_141 = arith.constant 16 : index
    %79 = vector.load %arg14[%c0_140, %c16_141] : memref<512x36xbf16, #tpu.memory_space<vmem>>, vector<512x4xbf16>
    tpu.vector_store %arg14[%c0_140, %c16_141], %78 {strides = array<i32>} : memref<512x36xbf16, #tpu.memory_space<vmem>>, vector<512x4xbf16>,
    %c4_142 = arith.constant 4 : index
    %c1_143 = arith.constant 1 : index
    %c0_144 = arith.constant 0 : index
    %c0_145 = arith.constant 0 : index
    %80 = vector.load %arg13[%c4_142, %c1_143, %c0_144, %c0_145] : memref<6x18x16x4xbf16, #tpu.memory_space<vmem>>, vector<2x16x16x4xbf16>
    %81 = vector.shape_cast %80 : vector<2x16x16x4xbf16> to vector<512x4xbf16>
    %c0_146 = arith.constant 0 : index
    %c20 = arith.constant 20 : index
    %82 = vector.load %arg14[%c0_146, %c20] : memref<512x36xbf16, #tpu.memory_space<vmem>>, vector<512x4xbf16>
    tpu.vector_store %arg14[%c0_146, %c20], %81 {strides = array<i32>} : memref<512x36xbf16, #tpu.memory_space<vmem>>, vector<512x4xbf16>,
    %c0_147 = arith.constant 0 : index
    %c2_148 = arith.constant 2 : index
    %c0_149 = arith.constant 0 : index
    %c0_150 = arith.constant 0 : index
    %83 = vector.load %arg13[%c0_147, %c2_148, %c0_149, %c0_150] : memref<6x18x16x4xbf16, #tpu.memory_space<vmem>>, vector<2x16x16x4xbf16>
    %84 = vector.shape_cast %83 : vector<2x16x16x4xbf16> to vector<512x4xbf16>
    %c0_151 = arith.constant 0 : index
    %c24_152 = arith.constant 24 : index
    %85 = vector.load %arg14[%c0_151, %c24_152] : memref<512x36xbf16, #tpu.memory_space<vmem>>, vector<512x4xbf16>
    tpu.vector_store %arg14[%c0_151, %c24_152], %84 {strides = array<i32>} : memref<512x36xbf16, #tpu.memory_space<vmem>>, vector<512x4xbf16>,
    %c2_153 = arith.constant 2 : index
    %c2_154 = arith.constant 2 : index
    %c0_155 = arith.constant 0 : index
    %c0_156 = arith.constant 0 : index
    %86 = vector.load %arg13[%c2_153, %c2_154, %c0_155, %c0_156] : memref<6x18x16x4xbf16, #tpu.memory_space<vmem>>, vector<2x16x16x4xbf16>
    %87 = vector.shape_cast %86 : vector<2x16x16x4xbf16> to vector<512x4xbf16>
    %c0_157 = arith.constant 0 : index
    %c28 = arith.constant 28 : index
    %88 = vector.load %arg14[%c0_157, %c28] : memref<512x36xbf16, #tpu.memory_space<vmem>>, vector<512x4xbf16>
    tpu.vector_store %arg14[%c0_157, %c28], %87 {strides = array<i32>} : memref<512x36xbf16, #tpu.memory_space<vmem>>, vector<512x4xbf16>,
    %c4_158 = arith.constant 4 : index
    %c2_159 = arith.constant 2 : index
    %c0_160 = arith.constant 0 : index
    %c0_161 = arith.constant 0 : index
    %89 = vector.load %arg13[%c4_158, %c2_159, %c0_160, %c0_161] : memref<6x18x16x4xbf16, #tpu.memory_space<vmem>>, vector<2x16x16x4xbf16>
    %90 = vector.shape_cast %89 : vector<2x16x16x4xbf16> to vector<512x4xbf16>
    %c0_162 = arith.constant 0 : index
    %c32_163 = arith.constant 32 : index
    %91 = vector.load %arg14[%c0_162, %c32_163] : memref<512x36xbf16, #tpu.memory_space<vmem>>, vector<512x4xbf16>
    tpu.vector_store %arg14[%c0_162, %c32_163], %90 {strides = array<i32>} : memref<512x36xbf16, #tpu.memory_space<vmem>>, vector<512x4xbf16>,
    %c0_164 = arith.constant 0 : index
    %c0_165 = arith.constant 0 : index
    %92 = vector.load %arg14[%c0_164, %c0_165] : memref<512x36xbf16, #tpu.memory_space<vmem>>, vector<512x36xbf16>
    %c0_166 = arith.constant 0 : index
    %c0_167 = arith.constant 0 : index
    %93 = vector.load %arg5[%c0_166, %c0_167] : memref<36x4xbf16, #tpu.memory_space<vmem>>, vector<36x4xbf16>
    %cst_168 = arith.constant dense<0.000000e+00> : vector<512x4xf32>
    %94 = tpu.matmul %92, %93, %cst_168 {dimension_numbers = #tpu.dot_dimension_numbers<[1], [0], [0], [1], [0, 0, 1, 1], [], []>} : vector<512x36xbf16>, vector<36x4xbf16>, vector<512x4xf32> -> vector<512x4xf32>
    %c0_169 = arith.constant 0 : index
    %c0_170 = arith.constant 0 : index
    %95 = vector.load %arg6[%c0_169, %c0_170] : memref<1x4xf32, #tpu.memory_space<vmem>>, vector<1x4xf32>
    %96 = vector.broadcast %95 : vector<1x4xf32> to vector<512x4xf32>
    %97 = arith.mulf %94, %96 : vector<512x4xf32>
    %c0_171 = arith.constant 0 : index
    %c0_172 = arith.constant 0 : index
    %98 = vector.load %arg7[%c0_171, %c0_172] : memref<1x4xf32, #tpu.memory_space<vmem>>, vector<1x4xf32>
    %99 = vector.broadcast %98 : vector<1x4xf32> to vector<512x4xf32>
    %100 = arith.addf %97, %99 : vector<512x4xf32>
    %cst_173 = arith.constant 0.000000e+00 : f32
    %101 = vector.broadcast %cst_173 : f32 to vector<512x4xf32>
    %102 = arith.maximumf %100, %101 : vector<512x4xf32>
    %103 = arith.truncf %102 : vector<512x4xf32> to vector<512x4xbf16>
    %c0_174 = arith.constant 0 : index
    %c0_175 = arith.constant 0 : index
    %104 = vector.load %arg8[%c0_174, %c0_175] : memref<4x128xbf16, #tpu.memory_space<vmem>>, vector<4x128xbf16>
    %cst_176 = arith.constant dense<0.000000e+00> : vector<512x128xf32>
    %105 = tpu.matmul %103, %104, %cst_176 {dimension_numbers = #tpu.dot_dimension_numbers<[1], [0], [0], [1], [0, 0, 1, 1], [], []>} : vector<512x4xbf16>, vector<4x128xbf16>, vector<512x128xf32> -> vector<512x128xf32>
    %c0_177 = arith.constant 0 : index
    %c0_178 = arith.constant 0 : index
    %106 = vector.load %arg9[%c0_177, %c0_178] : memref<1x128xf32, #tpu.memory_space<vmem>>, vector<1x128xf32>
    %107 = vector.broadcast %106 : vector<1x128xf32> to vector<512x128xf32>
    %108 = arith.addf %105, %107 : vector<512x128xf32>
    %c0_179 = arith.constant 0 : index
    %c0_180 = arith.constant 0 : index
    %c0_181 = arith.constant 0 : index
    %109 = vector.load %arg10[%c0_179, %c0_180, %c0_181] : memref<1x512x128xf32, #tpu.memory_space<vmem>>, vector<1x512x128xf32>
    %110 = vector.shape_cast %109 : vector<1x512x128xf32> to vector<512x128xf32>
    %111 = vector.shape_cast %108 : vector<512x128xf32> to vector<1x512x128xf32>
    tpu.vector_store %arg10[%c0_179, %c0_180, %c0_181], %111 {strides = array<i32>} : memref<1x512x128xf32, #tpu.memory_space<vmem>>, vector<1x512x128xf32>,
    return
  }
  func.func @transform_0(%arg0: i32) -> (i32, i32, i32, i32) {
    %c0_i32 = arith.constant 0 : i32
    %c0_i32_0 = arith.constant 0 : i32
    %c0_i32_1 = arith.constant 0 : i32
    %c0_i32_2 = arith.constant 0 : i32
    return %arg0, %c0_i32, %c0_i32_0, %c0_i32_1 : i32, i32, i32, i32
  }
  func.func @transform_1(%arg0: i32) -> (i32, i32) {
    %c0_i32 = arith.constant 0 : i32
    %c0_i32_0 = arith.constant 0 : i32
    %c0_i32_1 = arith.constant 0 : i32
    return %c0_i32, %c0_i32_0 : i32, i32
  }
  func.func @transform_2(%arg0: i32) -> (i32, i32) {
    %c0_i32 = arith.constant 0 : i32
    %c0_i32_0 = arith.constant 0 : i32
    %c0_i32_1 = arith.constant 0 : i32
    return %c0_i32, %c0_i32_0 : i32, i32
  }
  func.func @transform_3(%arg0: i32) -> (i32, i32) {
    %c0_i32 = arith.constant 0 : i32
    %c0_i32_0 = arith.constant 0 : i32
    %c0_i32_1 = arith.constant 0 : i32
    return %c0_i32, %c0_i32_0 : i32, i32
  }
  func.func @transform_4(%arg0: i32) -> (i32, i32) {
    %c0_i32 = arith.constant 0 : i32
    %c0_i32_0 = arith.constant 0 : i32
    %c0_i32_1 = arith.constant 0 : i32
    return %c0_i32, %c0_i32_0 : i32, i32
  }
  func.func @transform_5(%arg0: i32) -> (i32, i32) {
    %c0_i32 = arith.constant 0 : i32
    %c0_i32_0 = arith.constant 0 : i32
    %c0_i32_1 = arith.constant 0 : i32
    return %c0_i32, %c0_i32_0 : i32, i32
  }
  func.func @transform_6(%arg0: i32) -> (i32, i32) {
    %c0_i32 = arith.constant 0 : i32
    %c0_i32_0 = arith.constant 0 : i32
    %c0_i32_1 = arith.constant 0 : i32
    return %c0_i32, %c0_i32_0 : i32, i32
  }
  func.func @transform_7(%arg0: i32) -> (i32, i32) {
    %c0_i32 = arith.constant 0 : i32
    %c0_i32_0 = arith.constant 0 : i32
    %c0_i32_1 = arith.constant 0 : i32
    return %c0_i32, %c0_i32_0 : i32, i32
  }
  func.func @transform_8(%arg0: i32) -> (i32, i32) {
    %c0_i32 = arith.constant 0 : i32
    %c0_i32_0 = arith.constant 0 : i32
    %c0_i32_1 = arith.constant 0 : i32
    return %c0_i32, %c0_i32_0 : i32, i32
  }
  func.func @transform_9(%arg0: i32) -> (i32, i32, i32) {
    %c0_i32 = arith.constant 0 : i32
    %c0_i32_0 = arith.constant 0 : i32
    %c0_i32_1 = arith.constant 0 : i32
    return %arg0, %c0_i32, %c0_i32_0 : i32, i32, i32
  }
}

</mosaic_0001>

<llo_original>
// kernel: tpu_custom_call.1
$region0: #{tpu_custom_call.1}
  #allocation0 [shape = 'u32[]', space=smem, size = 0x4, offset = 0x4, fixed_abs, tag = 'smem constant byte address 0x4 - core index']
  #allocation1 [shape = 'u32[72,128]{1,0:T(1,128)}', space=vmem, size = 0x9000, scoped, tag = 'internal scratch']
  #allocation2 [shape = 'bf16[6,18,16,8]{3,2,1,0:T(8,128)(2,1)}', space=vmem, size = 0x6c000, scoped, tag = 'scratch operand']
  #allocation3 [shape = 'bf16[512,72]{1,0:T(8,128)(2,1)}', space=vmem, size = 0x20000, scoped, tag = 'scratch operand']
  #allocation4 [shape = 'bf16[6,18,16,4]{3,2,1,0:T(8,128)(2,1)}', space=vmem, size = 0x6c000, scoped, tag = 'scratch operand']
  #allocation5 [shape = 'bf16[512,36]{1,0:T(8,128)(2,1)}', space=vmem, size = 0x20000, scoped, tag = 'scratch operand']
  %s0 = inlined_call_operand.vmem [shape: bf16[1,32,16,8], index: 0, kind: input, shape index: {}]
  %s1 = inlined_call_operand.vmem [shape: bf16[72,4], index: 1, kind: input, shape index: {}]
  %s2 = inlined_call_operand.vmem [shape: f32[1,4], index: 2, kind: input, shape index: {}]
  %s3 = inlined_call_operand.vmem [shape: f32[1,4], index: 3, kind: input, shape index: {}]
  %s4 = inlined_call_operand.vmem [shape: bf16[36,4], index: 4, kind: input, shape index: {}]
  %s5 = inlined_call_operand.vmem [shape: f32[1,4], index: 5, kind: input, shape index: {}]
  %s6 = inlined_call_operand.vmem [shape: f32[1,4], index: 6, kind: input, shape index: {}]
  %s7 = inlined_call_operand.vmem [shape: bf16[4,128], index: 7, kind: input, shape index: {}]
  %s8 = inlined_call_operand.vmem [shape: f32[1,128], index: 8, kind: input, shape index: {}]
  %s9 = inlined_call_operand.hbm [shape: f32[1,512,128], index: 9, kind: output, shape index: {}]
  %s10 = sld [smem:[#allocation0]]
  $region46: #{tpu_custom_call.1} parent=0
    _
  %s12 = ssub.s32 1, %s10
  %s13 = scalar_select 0, %s12, %s10
  $region1: #{tpu_custom_call.1} parent=0
    #allocation6 [shape = 'u8[262144]{0}', space=vmem, size = 0x40000, scoped, tag = 'output window, operand 0, single buffered']
    #allocation7 [shape = 's32[1]{0}', space=sflag, size = 0x4, scoped, tag = 'scoped memory for tpu_custom_call.1']
    %14 = vsyncpa [#allocation7], 0
    // Predicated region
    $region2: #{tpu_custom_call.1} parent=1 // pred_check
      _
    $region3: #{tpu_custom_call.1} parent=1 // pred_check_branch
      %16 = sbr.rel (0) target = $region5
    $region4: #{tpu_custom_call.1} parent=1 // pred_region
      _
    $region5: #{tpu_custom_call.1} parent=1 // pred_fallthru
      _
    // Predicated region
    $region6: #{tpu_custom_call.1} parent=1 // pred_check
      _
    $region7: #{tpu_custom_call.1} parent=1 // pred_check_branch
      %18 = sbr.rel (0) target = $region9
    $region8: #{tpu_custom_call.1} parent=1 // pred_region
      _
    $region9: #{tpu_custom_call.1} parent=1 // pred_fallthru
      _
    // Predicated region
    $region10: #{tpu_custom_call.1} parent=1 // pred_check
      _
    $region11: #{tpu_custom_call.1} parent=1 // pred_check_branch
      %20 = sbr.rel (0) target = $region13
    $region12: #{tpu_custom_call.1} parent=1 // pred_region
      _
    $region13: #{tpu_custom_call.1} parent=1 // pred_fallthru
      _
    // Predicated region
    $region14: #{tpu_custom_call.1} parent=1 // pred_check
      _
    $region15: #{tpu_custom_call.1} parent=1 // pred_check_branch
      %22 = sbr.rel (0) target = $region17
    $region16: #{tpu_custom_call.1} parent=1 // pred_region
      _
    $region17: #{tpu_custom_call.1} parent=1 // pred_fallthru
      _
    // Predicated region
    $region18: #{tpu_custom_call.1} parent=1 // pred_check
      _
    $region19: #{tpu_custom_call.1} parent=1 // pred_check_branch
      %24 = sbr.rel (0) target = $region21
    $region20: #{tpu_custom_call.1} parent=1 // pred_region
      _
    $region21: #{tpu_custom_call.1} parent=1 // pred_fallthru
      _
    // Predicated region
    $region22: #{tpu_custom_call.1} parent=1 // pred_check
      _
    $region23: #{tpu_custom_call.1} parent=1 // pred_check_branch
      %26 = sbr.rel (0) target = $region25
    $region24: #{tpu_custom_call.1} parent=1 // pred_region
      _
    $region25: #{tpu_custom_call.1} parent=1 // pred_fallthru
      _
    // Predicated region
    $region26: #{tpu_custom_call.1} parent=1 // pred_check
      _
    $region27: #{tpu_custom_call.1} parent=1 // pred_check_branch
      %28 = sbr.rel (0) target = $region29
    $region28: #{tpu_custom_call.1} parent=1 // pred_region
      _
    $region29: #{tpu_custom_call.1} parent=1 // pred_fallthru
      _
    // Predicated region
    $region30: #{tpu_custom_call.1} parent=1 // pred_check
      _
    $region31: #{tpu_custom_call.1} parent=1 // pred_check_branch
      %30 = sbr.rel (0) target = $region33
    $region32: #{tpu_custom_call.1} parent=1 // pred_region
      _
    $region33: #{tpu_custom_call.1} parent=1 // pred_fallthru
      _
    // Predicated region
    $region34: #{tpu_custom_call.1} parent=1 // pred_check
      _
    $region35: #{tpu_custom_call.1} parent=1 // pred_check_branch
      %32 = sbr.rel (0) target = $region37
    $region36: #{tpu_custom_call.1} parent=1 // pred_region
      _
    $region37: #{tpu_custom_call.1} parent=1 // pred_fallthru
      _
    %v34 = vld [vmem:[%s0] sm:$0xf]
    %v35 = vld [vmem:[%s0 + $0x4] sm:$0xf]
    %v36 = vld [vmem:[%s0 + $0x8] sm:$0xf]
    %v37 = vld [vmem:[%s0 + $0xc] sm:$0xf]
    %v38 = vld [vmem:[%s0 + $0x10] sm:$0xf]
    %v39 = vld [vmem:[%s0 + $0x14] sm:$0xf]
    %v40 = vld [vmem:[%s0 + $0x18] sm:$0xf]
    %v41 = vld [vmem:[%s0 + $0x1c] sm:$0xf]
    %v42 = vld [vmem:[%s0 + $0x20] sm:$0xf]
    %v43 = vld [vmem:[%s0 + $0x24] sm:$0xf]
    %v44 = vld [vmem:[%s0 + $0x28] sm:$0xf]
    %v45 = vld [vmem:[%s0 + $0x2c] sm:$0xf]
    %v46 = vld [vmem:[%s0 + $0x30] sm:$0xf]
    %v47 = vld [vmem:[%s0 + $0x34] sm:$0xf]
    %v48 = vld [vmem:[%s0 + $0x38] sm:$0xf]
    %v49 = vld [vmem:[%s0 + $0x3c] sm:$0xf]
    %v50 = vld [vmem:[%s0 + $0x40] sm:$0xf]
    %v51 = vld [vmem:[%s0 + $0x44] sm:$0xf]
    %v52 = vld [vmem:[%s0 + $0x48] sm:$0xf]
    %v53 = vld [vmem:[%s0 + $0x4c] sm:$0xf]
    %v54 = vld [vmem:[%s0 + $0x50] sm:$0xf]
    %v55 = vld [vmem:[%s0 + $0x54] sm:$0xf]
    %v56 = vld [vmem:[%s0 + $0x58] sm:$0xf]
    %v57 = vld [vmem:[%s0 + $0x5c] sm:$0xf]
    %v58 = vld [vmem:[%s0 + $0x60] sm:$0xf]
    %v59 = vld [vmem:[%s0 + $0x64] sm:$0xf]
    %v60 = vld [vmem:[%s0 + $0x68] sm:$0xf]
    %v61 = vld [vmem:[%s0 + $0x6c] sm:$0xf]
    %v62 = vld [vmem:[%s0 + $0x70] sm:$0xf]
    %v63 = vld [vmem:[%s0 + $0x74] sm:$0xf]
    %v64 = vld [vmem:[%s0 + $0x78] sm:$0xf]
    %v65 = vld [vmem:[%s0 + $0x7c] sm:$0xf]
    %v66 = vld [vmem:[%s0 + $0x80] sm:$0xf]
    %v67 = vld [vmem:[%s0 + $0x84] sm:$0xf]
    %v68 = vld [vmem:[%s0 + $0x88] sm:$0xf]
    %v69 = vld [vmem:[%s0 + $0x8c] sm:$0xf]
    %v70 = vld [vmem:[%s0 + $0x90] sm:$0xf]
    %v71 = vld [vmem:[%s0 + $0x94] sm:$0xf]
    %v72 = vld [vmem:[%s0 + $0x98] sm:$0xf]
    %v73 = vld [vmem:[%s0 + $0x9c] sm:$0xf]
    %v74 = vld [vmem:[%s0 + $0xa0] sm:$0xf]
    %v75 = vld [vmem:[%s0 + $0xa4] sm:$0xf]
    %v76 = vld [vmem:[%s0 + $0xa8] sm:$0xf]
    %v77 = vld [vmem:[%s0 + $0xac] sm:$0xf]
    %v78 = vld [vmem:[%s0 + $0xb0] sm:$0xf]
    %v79 = vld [vmem:[%s0 + $0xb4] sm:$0xf]
    %v80 = vld [vmem:[%s0 + $0xb8] sm:$0xf]
    %v81 = vld [vmem:[%s0 + $0xbc] sm:$0xf]
    %v82 = vld [vmem:[%s0 + $0xc0] sm:$0xf]
    %v83 = vld [vmem:[%s0 + $0xc4] sm:$0xf]
    %v84 = vld [vmem:[%s0 + $0xc8] sm:$0xf]
    %v85 = vld [vmem:[%s0 + $0xcc] sm:$0xf]
    %v86 = vld [vmem:[%s0 + $0xd0] sm:$0xf]
    %v87 = vld [vmem:[%s0 + $0xd4] sm:$0xf]
    %v88 = vld [vmem:[%s0 + $0xd8] sm:$0xf]
    %v89 = vld [vmem:[%s0 + $0xdc] sm:$0xf]
    %v90 = vld [vmem:[%s0 + $0xe0] sm:$0xf]
    %v91 = vld [vmem:[%s0 + $0xe4] sm:$0xf]
    %v92 = vld [vmem:[%s0 + $0xe8] sm:$0xf]
    %v93 = vld [vmem:[%s0 + $0xec] sm:$0xf]
    %v94 = vld [vmem:[%s0 + $0xf0] sm:$0xf]
    %v95 = vld [vmem:[%s0 + $0xf4] sm:$0xf]
    %v96 = vld [vmem:[%s0 + $0xf8] sm:$0xf]
    %v97 = vld [vmem:[%s0 + $0xfc] sm:$0xf]
    %vm98 = vcmask 60416
    %99 = vst.msk [vmem:[#allocation2] sm:$0xf] %vm98, 0
    %100 = vst.msk [vmem:[#allocation2 + $0x4] sm:$0xf] %vm98, 0
    %101 = vst.msk [vmem:[#allocation2 + $0x90] sm:$0xf] %vm98, 0
    %102 = vst.msk [vmem:[#allocation2 + $0x94] sm:$0xf] %vm98, 0
    %103 = vst.msk [vmem:[#allocation2 + $0x120] sm:$0xf] %vm98, 0
    %104 = vst.msk [vmem:[#allocation2 + $0x124] sm:$0xf] %vm98, 0
    %105 = vst.msk [vmem:[#allocation2 + $0x1b0] sm:$0xf] %vm98, 0
    %106 = vst.msk [vmem:[#allocation2 + $0x1b4] sm:$0xf] %vm98, 0
    %107 = vst.msk [vmem:[#allocation2 + $0x240] sm:$0xf] %vm98, 0
    %108 = vst.msk [vmem:[#allocation2 + $0x244] sm:$0xf] %vm98, 0
    %109 = vst.msk [vmem:[#allocation2 + $0x2d0] sm:$0xf] %vm98, 0
    %110 = vst.msk [vmem:[#allocation2 + $0x2d4] sm:$0xf] %vm98, 0
    %s111 = scalar_lea.vmem [#allocation2], 136
    %112 = vst.msk [vmem:[%s111] sm:$0xf] %vm98, 0
    %113 = vst.msk [vmem:[%s111 + $0x4] sm:$0xf] %vm98, 0
    %114 = vst.msk [vmem:[%s111 + $0x90] sm:$0xf] %vm98, 0
    %115 = vst.msk [vmem:[%s111 + $0x94] sm:$0xf] %vm98, 0
    %116 = vst.msk [vmem:[%s111 + $0x120] sm:$0xf] %vm98, 0
    %117 = vst.msk [vmem:[%s111 + $0x124] sm:$0xf] %vm98, 0
    %118 = vst.msk [vmem:[%s111 + $0x1b0] sm:$0xf] %vm98, 0
    %119 = vst.msk [vmem:[%s111 + $0x1b4] sm:$0xf] %vm98, 0
    %120 = vst.msk [vmem:[%s111 + $0x240] sm:$0xf] %vm98, 0
    %121 = vst.msk [vmem:[%s111 + $0x244] sm:$0xf] %vm98, 0
    %122 = vst.msk [vmem:[%s111 + $0x2d0] sm:$0xf] %vm98, 0
    %123 = vst.msk [vmem:[%s111 + $0x2d4] sm:$0xf] %vm98, 0
    %s124 = scalar_lea.vmem [#allocation2], 8
    %vm125 = vcmask 57344
    %vm126 = vsmask.f32 256
    %vm127 = vmand %vm125, %vm126
    %v128 = vld [vmem:[%s124] sm:$0x1]
    %v129 = vsel %vm127, 0, %v128
    %130 = vst [vmem:[%s124] sm:$0x1] %v129
    %v131 = vld [vmem:[%s124 + $0x8] sm:$0x1]
    %v132 = vsel %vm127, 0, %v131
    %133 = vst [vmem:[%s124 + $0x8] sm:$0x1] %v132
    %v134 = vld [vmem:[%s124 + $0x10] sm:$0x1]
    %v135 = vsel %vm127, 0, %v134
    %136 = vst [vmem:[%s124 + $0x10] sm:$0x1] %v135
    %v137 = vld [vmem:[%s124 + $0x18] sm:$0x1]
    %v138 = vsel %vm127, 0, %v137
    %139 = vst [vmem:[%s124 + $0x18] sm:$0x1] %v138
    %v140 = vld [vmem:[%s124 + $0x20] sm:$0x1]
    %v141 = vsel %vm127, 0, %v140
    %142 = vst [vmem:[%s124 + $0x20] sm:$0x1] %v141
    %v143 = vld [vmem:[%s124 + $0x28] sm:$0x1]
    %v144 = vsel %vm127, 0, %v143
    %145 = vst [vmem:[%s124 + $0x28] sm:$0x1] %v144
    %v146 = vld [vmem:[%s124 + $0x30] sm:$0x1]
    %v147 = vsel %vm127, 0, %v146
    %148 = vst [vmem:[%s124 + $0x30] sm:$0x1] %v147
    %v149 = vld [vmem:[%s124 + $0x38] sm:$0x1]
    %v150 = vsel %vm127, 0, %v149
    %151 = vst [vmem:[%s124 + $0x38] sm:$0x1] %v150
    %v152 = vld [vmem:[%s124 + $0x40] sm:$0x1]
    %v153 = vsel %vm127, 0, %v152
    %154 = vst [vmem:[%s124 + $0x40] sm:$0x1] %v153
    %v155 = vld [vmem:[%s124 + $0x48] sm:$0x1]
    %v156 = vsel %vm127, 0, %v155
    %157 = vst [vmem:[%s124 + $0x48] sm:$0x1] %v156
    %v158 = vld [vmem:[%s124 + $0x50] sm:$0x1]
    %v159 = vsel %vm127, 0, %v158
    %160 = vst [vmem:[%s124 + $0x50] sm:$0x1] %v159
    %v161 = vld [vmem:[%s124 + $0x58] sm:$0x1]
    %v162 = vsel %vm127, 0, %v161
    %163 = vst [vmem:[%s124 + $0x58] sm:$0x1] %v162
    %v164 = vld [vmem:[%s124 + $0x60] sm:$0x1]
    %v165 = vsel %vm127, 0, %v164
    %166 = vst [vmem:[%s124 + $0x60] sm:$0x1] %v165
    %v167 = vld [vmem:[%s124 + $0x68] sm:$0x1]
    %v168 = vsel %vm127, 0, %v167
    %169 = vst [vmem:[%s124 + $0x68] sm:$0x1] %v168
    %v170 = vld [vmem:[%s124 + $0x70] sm:$0x1]
    %v171 = vsel %vm127, 0, %v170
    %172 = vst [vmem:[%s124 + $0x70] sm:$0x1] %v171
    %v173 = vld [vmem:[%s124 + $0x78] sm:$0x1]
    %v174 = vsel %vm127, 0, %v173
    %175 = vst [vmem:[%s124 + $0x78] sm:$0x1] %v174
    %v176 = vld [vmem:[%s124 + $0x90] sm:$0x1]
    %v177 = vsel %vm127, 0, %v176
    %178 = vst [vmem:[%s124 + $0x90] sm:$0x1] %v177
    %v179 = vld [vmem:[%s124 + $0x98] sm:$0x1]
    %v180 = vsel %vm127, 0, %v179
    %181 = vst [vmem:[%s124 + $0x98] sm:$0x1] %v180
    %v182 = vld [vmem:[%s124 + $0xa0] sm:$0x1]
    %v183 = vsel %vm127, 0, %v182
    %184 = vst [vmem:[%s124 + $0xa0] sm:$0x1] %v183
    %v185 = vld [vmem:[%s124 + $0xa8] sm:$0x1]
    %v186 = vsel %vm127, 0, %v185
    %187 = vst [vmem:[%s124 + $0xa8] sm:$0x1] %v186
    %v188 = vld [vmem:[%s124 + $0xb0] sm:$0x1]
    %v189 = vsel %vm127, 0, %v188
    %190 = vst [vmem:[%s124 + $0xb0] sm:$0x1] %v189
    %v191 = vld [vmem:[%s124 + $0xb8] sm:$0x1]
    %v192 = vsel %vm127, 0, %v191
    %193 = vst [vmem:[%s124 + $0xb8] sm:$0x1] %v192
    %v194 = vld [vmem:[%s124 + $0xc0] sm:$0x1]
    %v195 = vsel %vm127, 0, %v194
    %196 = vst [vmem:[%s124 + $0xc0] sm:$0x1] %v195
    %v197 = vld [vmem:[%s124 + $0xc8] sm:$0x1]
    %v198 = vsel %vm127, 0, %v197
    %199 = vst [vmem:[%s124 + $0xc8] sm:$0x1] %v198
    %v200 = vld [vmem:[%s124 + $0xd0] sm:$0x1]
    %v201 = vsel %vm127, 0, %v200
    %202 = vst [vmem:[%s124 + $0xd0] sm:$0x1] %v201
    %v203 = vld [vmem:[%s124 + $0xd8] sm:$0x1]
    %v204 = vsel %vm127, 0, %v203
    %205 = vst [vmem:[%s124 + $0xd8] sm:$0x1] %v204
    %v206 = vld [vmem:[%s124 + $0xe0] sm:$0x1]
    %v207 = vsel %vm127, 0, %v206
    %208 = vst [vmem:[%s124 + $0xe0] sm:$0x1] %v207
    %v209 = vld [vmem:[%s124 + $0xe8] sm:$0x1]
    %v210 = vsel %vm127, 0, %v209
    %211 = vst [vmem:[%s124 + $0xe8] sm:$0x1] %v210
    %v212 = vld [vmem:[%s124 + $0xf0] sm:$0x1]
    %v213 = vsel %vm127, 0, %v212
    %214 = vst [vmem:[%s124 + $0xf0] sm:$0x1] %v213
    %v215 = vld [vmem:[%s124 + $0xf8] sm:$0x1]
    %v216 = vsel %vm127, 0, %v215
    %217 = vst [vmem:[%s124 + $0xf8] sm:$0x1] %v216
    %v218 = vld [vmem:[%s124 + $0x100] sm:$0x1]
    %v219 = vsel %vm127, 0, %v218
    %220 = vst [vmem:[%s124 + $0x100] sm:$0x1] %v219
    %v221 = vld [vmem:[%s124 + $0x108] sm:$0x1]
    %v222 = vsel %vm127, 0, %v221
    %223 = vst [vmem:[%s124 + $0x108] sm:$0x1] %v222
    %s224 = scalar_lea.vmem [#allocation2], 584
    %vm225 = vcmask 60419
    %vm226 = vsmask.f32 7950
    %vm227 = vmand %vm225, %vm226
    %v228 = vld [vmem:[%s224 + $0x4] sm:$0x8]
    %v229 = vsel %vm227, 0, %v228
    %230 = vst [vmem:[%s224 + $0x4] sm:$0x8] %v229
    %v231 = vld [vmem:[%s224 + $0xc] sm:$0x8]
    %v232 = vsel %vm227, 0, %v231
    %233 = vst [vmem:[%s224 + $0xc] sm:$0x8] %v232
    %v234 = vld [vmem:[%s224 + $0x14] sm:$0x8]
    %v235 = vsel %vm227, 0, %v234
    %236 = vst [vmem:[%s224 + $0x14] sm:$0x8] %v235
    %v237 = vld [vmem:[%s224 + $0x1c] sm:$0x8]
    %v238 = vsel %vm227, 0, %v237
    %239 = vst [vmem:[%s224 + $0x1c] sm:$0x8] %v238
    %v240 = vld [vmem:[%s224 + $0x24] sm:$0x8]
    %v241 = vsel %vm227, 0, %v240
    %242 = vst [vmem:[%s224 + $0x24] sm:$0x8] %v241
    %v243 = vld [vmem:[%s224 + $0x2c] sm:$0x8]
    %v244 = vsel %vm227, 0, %v243
    %245 = vst [vmem:[%s224 + $0x2c] sm:$0x8] %v244
    %v246 = vld [vmem:[%s224 + $0x34] sm:$0x8]
    %v247 = vsel %vm227, 0, %v246
    %248 = vst [vmem:[%s224 + $0x34] sm:$0x8] %v247
    %v249 = vld [vmem:[%s224 + $0x3c] sm:$0x8]
    %v250 = vsel %vm227, 0, %v249
    %251 = vst [vmem:[%s224 + $0x3c] sm:$0x8] %v250
    %v252 = vld [vmem:[%s224 + $0x44] sm:$0x8]
    %v253 = vsel %vm227, 0, %v252
    %254 = vst [vmem:[%s224 + $0x44] sm:$0x8] %v253
    %v255 = vld [vmem:[%s224 + $0x4c] sm:$0x8]
    %v256 = vsel %vm227, 0, %v255
    %257 = vst [vmem:[%s224 + $0x4c] sm:$0x8] %v256
    %v258 = vld [vmem:[%s224 + $0x54] sm:$0x8]
    %v259 = vsel %vm227, 0, %v258
    %260 = vst [vmem:[%s224 + $0x54] sm:$0x8] %v259
    %v261 = vld [vmem:[%s224 + $0x5c] sm:$0x8]
    %v262 = vsel %vm227, 0, %v261
    %263 = vst [vmem:[%s224 + $0x5c] sm:$0x8] %v262
    %v264 = vld [vmem:[%s224 + $0x64] sm:$0x8]
    %v265 = vsel %vm227, 0, %v264
    %266 = vst [vmem:[%s224 + $0x64] sm:$0x8] %v265
    %v267 = vld [vmem:[%s224 + $0x6c] sm:$0x8]
    %v268 = vsel %vm227, 0, %v267
    %269 = vst [vmem:[%s224 + $0x6c] sm:$0x8] %v268
    %v270 = vld [vmem:[%s224 + $0x74] sm:$0x8]
    %v271 = vsel %vm227, 0, %v270
    %272 = vst [vmem:[%s224 + $0x74] sm:$0x8] %v271
    %v273 = vld [vmem:[%s224 + $0x7c] sm:$0x8]
    %v274 = vsel %vm227, 0, %v273
    %275 = vst [vmem:[%s224 + $0x7c] sm:$0x8] %v274
    %v276 = vld [vmem:[%s224 + $0x94] sm:$0x8]
    %v277 = vsel %vm227, 0, %v276
    %278 = vst [vmem:[%s224 + $0x94] sm:$0x8] %v277
    %v279 = vld [vmem:[%s224 + $0x9c] sm:$0x8]
    %v280 = vsel %vm227, 0, %v279
    %281 = vst [vmem:[%s224 + $0x9c] sm:$0x8] %v280
    %v282 = vld [vmem:[%s224 + $0xa4] sm:$0x8]
    %v283 = vsel %vm227, 0, %v282
    %284 = vst [vmem:[%s224 + $0xa4] sm:$0x8] %v283
    %v285 = vld [vmem:[%s224 + $0xac] sm:$0x8]
    %v286 = vsel %vm227, 0, %v285
    %287 = vst [vmem:[%s224 + $0xac] sm:$0x8] %v286
    %v288 = vld [vmem:[%s224 + $0xb4] sm:$0x8]
    %v289 = vsel %vm227, 0, %v288
    %290 = vst [vmem:[%s224 + $0xb4] sm:$0x8] %v289
    %v291 = vld [vmem:[%s224 + $0xbc] sm:$0x8]
    %v292 = vsel %vm227, 0, %v291
    %293 = vst [vmem:[%s224 + $0xbc] sm:$0x8] %v292
    %v294 = vld [vmem:[%s224 + $0xc4] sm:$0x8]
    %v295 = vsel %vm227, 0, %v294
    %296 = vst [vmem:[%s224 + $0xc4] sm:$0x8] %v295
    %v297 = vld [vmem:[%s224 + $0xcc] sm:$0x8]
    %v298 = vsel %vm227, 0, %v297
    %299 = vst [vmem:[%s224 + $0xcc] sm:$0x8] %v298
    %v300 = vld [vmem:[%s224 + $0xd4] sm:$0x8]
    %v301 = vsel %vm227, 0, %v300
    %302 = vst [vmem:[%s224 + $0xd4] sm:$0x8] %v301
    %v303 = vld [vmem:[%s224 + $0xdc] sm:$0x8]
    %v304 = vsel %vm227, 0, %v303
    %305 = vst [vmem:[%s224 + $0xdc] sm:$0x8] %v304
    %v306 = vld [vmem:[%s224 + $0xe4] sm:$0x8]
    %v307 = vsel %vm227, 0, %v306
    %308 = vst [vmem:[%s224 + $0xe4] sm:$0x8] %v307
    %v309 = vld [vmem:[%s224 + $0xec] sm:$0x8]
    %v310 = vsel %vm227, 0, %v309
    %311 = vst [vmem:[%s224 + $0xec] sm:$0x8] %v310
    %v312 = vld [vmem:[%s224 + $0xf4] sm:$0x8]
    %v313 = vsel %vm227, 0, %v312
    %314 = vst [vmem:[%s224 + $0xf4] sm:$0x8] %v313
    %v315 = vld [vmem:[%s224 + $0xfc] sm:$0x8]
    %v316 = vsel %vm227, 0, %v315
    %317 = vst [vmem:[%s224 + $0xfc] sm:$0x8] %v316
    %v318 = vld [vmem:[%s224 + $0x104] sm:$0x8]
    %v319 = vsel %vm227, 0, %v318
    %320 = vst [vmem:[%s224 + $0x104] sm:$0x8] %v319
    %v321 = vld [vmem:[%s224 + $0x10c] sm:$0x8]
    %v322 = vsel %vm227, 0, %v321
    %323 = vst [vmem:[%s224 + $0x10c] sm:$0x8] %v322
    %s324 = scalar_lea.vmem [#allocation2], 296
    %325 = vst.msk [vmem:[%s324] sm:$0xf] %vm98, %v34
    %326 = vst.msk [vmem:[%s324 + $0x4] sm:$0xf] %vm98, %v35
    %327 = vst.msk [vmem:[%s324 + $0x8] sm:$0xf] %vm98, %v36
    %328 = vst.msk [vmem:[%s324 + $0xc] sm:$0xf] %vm98, %v37
    %329 = vst.msk [vmem:[%s324 + $0x10] sm:$0xf] %vm98, %v38
    %330 = vst.msk [vmem:[%s324 + $0x14] sm:$0xf] %vm98, %v39
    %331 = vst.msk [vmem:[%s324 + $0x18] sm:$0xf] %vm98, %v40
    %332 = vst.msk [vmem:[%s324 + $0x1c] sm:$0xf] %vm98, %v41
    %333 = vst.msk [vmem:[%s324 + $0x20] sm:$0xf] %vm98, %v42
    %334 = vst.msk [vmem:[%s324 + $0x24] sm:$0xf] %vm98, %v43
    %335 = vst.msk [vmem:[%s324 + $0x28] sm:$0xf] %vm98, %v44
    %336 = vst.msk [vmem:[%s324 + $0x2c] sm:$0xf] %vm98, %v45
    %337 = vst.msk [vmem:[%s324 + $0x30] sm:$0xf] %vm98, %v46
    %338 = vst.msk [vmem:[%s324 + $0x34] sm:$0xf] %vm98, %v47
    %339 = vst.msk [vmem:[%s324 + $0x38] sm:$0xf] %vm98, %v48
    %340 = vst.msk [vmem:[%s324 + $0x3c] sm:$0xf] %vm98, %v49
    %341 = vst.msk [vmem:[%s324 + $0x40] sm:$0xf] %vm98, %v50
    %342 = vst.msk [vmem:[%s324 + $0x44] sm:$0xf] %vm98, %v51
    %343 = vst.msk [vmem:[%s324 + $0x48] sm:$0xf] %vm98, %v52
    %344 = vst.msk [vmem:[%s324 + $0x4c] sm:$0xf] %vm98, %v53
    %345 = vst.msk [vmem:[%s324 + $0x50] sm:$0xf] %vm98, %v54
    %346 = vst.msk [vmem:[%s324 + $0x54] sm:$0xf] %vm98, %v55
    %347 = vst.msk [vmem:[%s324 + $0x58] sm:$0xf] %vm98, %v56
    %348 = vst.msk [vmem:[%s324 + $0x5c] sm:$0xf] %vm98, %v57
    %349 = vst.msk [vmem:[%s324 + $0x60] sm:$0xf] %vm98, %v58
    %350 = vst.msk [vmem:[%s324 + $0x64] sm:$0xf] %vm98, %v59
    %351 = vst.msk [vmem:[%s324 + $0x68] sm:$0xf] %vm98, %v60
    %352 = vst.msk [vmem:[%s324 + $0x6c] sm:$0xf] %vm98, %v61
    %353 = vst.msk [vmem:[%s324 + $0x70] sm:$0xf] %vm98, %v62
    %354 = vst.msk [vmem:[%s324 + $0x74] sm:$0xf] %vm98, %v63
    %355 = vst.msk [vmem:[%s324 + $0x78] sm:$0xf] %vm98, %v64
    %356 = vst.msk [vmem:[%s324 + $0x7c] sm:$0xf] %vm98, %v65
    %357 = vst.msk [vmem:[%s324 + $0x90] sm:$0xf] %vm98, %v66
    %358 = vst.msk [vmem:[%s324 + $0x94] sm:$0xf] %vm98, %v67
    %359 = vst.msk [vmem:[%s324 + $0x98] sm:$0xf] %vm98, %v68
    %360 = vst.msk [vmem:[%s324 + $0x9c] sm:$0xf] %vm98, %v69
    %361 = vst.msk [vmem:[%s324 + $0xa0] sm:$0xf] %vm98, %v70
    %362 = vst.msk [vmem:[%s324 + $0xa4] sm:$0xf] %vm98, %v71
    %363 = vst.msk [vmem:[%s324 + $0xa8] sm:$0xf] %vm98, %v72
    %364 = vst.msk [vmem:[%s324 + $0xac] sm:$0xf] %vm98, %v73
    %365 = vst.msk [vmem:[%s324 + $0xb0] sm:$0xf] %vm98, %v74
    %366 = vst.msk [vmem:[%s324 + $0xb4] sm:$0xf] %vm98, %v75
    %367 = vst.msk [vmem:[%s324 + $0xb8] sm:$0xf] %vm98, %v76
    %368 = vst.msk [vmem:[%s324 + $0xbc] sm:$0xf] %vm98, %v77
    %369 = vst.msk [vmem:[%s324 + $0xc0] sm:$0xf] %vm98, %v78
    %370 = vst.msk [vmem:[%s324 + $0xc4] sm:$0xf] %vm98, %v79
    %371 = vst.msk [vmem:[%s324 + $0xc8] sm:$0xf] %vm98, %v80
    %372 = vst.msk [vmem:[%s324 + $0xcc] sm:$0xf] %vm98, %v81
    %373 = vst.msk [vmem:[%s324 + $0xd0] sm:$0xf] %vm98, %v82
    %374 = vst.msk [vmem:[%s324 + $0xd4] sm:$0xf] %vm98, %v83
    %375 = vst.msk [vmem:[%s324 + $0xd8] sm:$0xf] %vm98, %v84
    %376 = vst.msk [vmem:[%s324 + $0xdc] sm:$0xf] %vm98, %v85
    %377 = vst.msk [vmem:[%s324 + $0xe0] sm:$0xf] %vm98, %v86
    %378 = vst.msk [vmem:[%s324 + $0xe4] sm:$0xf] %vm98, %v87
    %379 = vst.msk [vmem:[%s324 + $0xe8] sm:$0xf] %vm98, %v88
    %380 = vst.msk [vmem:[%s324 + $0xec] sm:$0xf] %vm98, %v89
    %381 = vst.msk [vmem:[%s324 + $0xf0] sm:$0xf] %vm98, %v90
    %382 = vst.msk [vmem:[%s324 + $0xf4] sm:$0xf] %vm98, %v91
    %383 = vst.msk [vmem:[%s324 + $0xf8] sm:$0xf] %vm98, %v92
    %384 = vst.msk [vmem:[%s324 + $0xfc] sm:$0xf] %vm98, %v93
    %385 = vst.msk [vmem:[%s324 + $0x100] sm:$0xf] %vm98, %v94
    %386 = vst.msk [vmem:[%s324 + $0x104] sm:$0xf] %vm98, %v95
    %387 = vst.msk [vmem:[%s324 + $0x108] sm:$0xf] %vm98, %v96
    %388 = vst.msk [vmem:[%s324 + $0x10c] sm:$0xf] %vm98, %v97
    %vm389 = vsmask.f32 4368
    %vm390 = vmor %vm126, %vm389
    %v392 = vshrl.u32 %v34, 16
    %v394 = vrot.slane %v392, 7
    %v395 = vshll.u32 %v34, 16
    %v397 = vor.u32 %v394, %v395
    %v398 = vrot.slane %v394, 4
    %v400 = vshrl.u32 %v35, 16
    %v402 = vrot.slane %v400, 7
    %v403 = vshll.u32 %v35, 16
    %v405 = vor.u32 %v402, %v403
    %v406 = vsel %vm390, %v398, %v405
    %v408 = vshrl.u32 %v36, 16
    %v410 = vrot.slane %v408, 7
    %v411 = vshll.u32 %v36, 16
    %v413 = vor.u32 %v410, %v411
    %v414 = vrot.slane %v410, 4
    %v416 = vshrl.u32 %v37, 16
    %v418 = vrot.slane %v416, 7
    %v419 = vshll.u32 %v37, 16
    %v421 = vor.u32 %v418, %v419
    %v422 = vsel %vm390, %v414, %v421
    %v424 = vshrl.u32 %v38, 16
    %v426 = vrot.slane %v424, 7
    %v427 = vshll.u32 %v38, 16
    %v429 = vor.u32 %v426, %v427
    %v430 = vrot.slane %v426, 4
    %v432 = vshrl.u32 %v39, 16
    %v434 = vrot.slane %v432, 7
    %v435 = vshll.u32 %v39, 16
    %v437 = vor.u32 %v434, %v435
    %v438 = vsel %vm390, %v430, %v437
    %v440 = vshrl.u32 %v40, 16
    %v442 = vrot.slane %v440, 7
    %v443 = vshll.u32 %v40, 16
    %v445 = vor.u32 %v442, %v443
    %v446 = vrot.slane %v442, 4
    %v448 = vshrl.u32 %v41, 16
    %v450 = vrot.slane %v448, 7
    %v451 = vshll.u32 %v41, 16
    %v453 = vor.u32 %v450, %v451
    %v454 = vsel %vm390, %v446, %v453
    %v456 = vshrl.u32 %v42, 16
    %v458 = vrot.slane %v456, 7
    %v459 = vshll.u32 %v42, 16
    %v461 = vor.u32 %v458, %v459
    %v462 = vrot.slane %v458, 4
    %v464 = vshrl.u32 %v43, 16
    %v466 = vrot.slane %v464, 7
    %v467 = vshll.u32 %v43, 16
    %v469 = vor.u32 %v466, %v467
    %v470 = vsel %vm390, %v462, %v469
    %v472 = vshrl.u32 %v44, 16
    %v474 = vrot.slane %v472, 7
    %v475 = vshll.u32 %v44, 16
    %v477 = vor.u32 %v474, %v475
    %v478 = vrot.slane %v474, 4
    %v480 = vshrl.u32 %v45, 16
    %v482 = vrot.slane %v480, 7
    %v483 = vshll.u32 %v45, 16
    %v485 = vor.u32 %v482, %v483
    %v486 = vsel %vm390, %v478, %v485
    %v488 = vshrl.u32 %v46, 16
    %v490 = vrot.slane %v488, 7
    %v491 = vshll.u32 %v46, 16
    %v493 = vor.u32 %v490, %v491
    %v494 = vrot.slane %v490, 4
    %v496 = vshrl.u32 %v47, 16
    %v498 = vrot.slane %v496, 7
    %v499 = vshll.u32 %v47, 16
    %v501 = vor.u32 %v498, %v499
    %v502 = vsel %vm390, %v494, %v501
    %v504 = vshrl.u32 %v48, 16
    %v506 = vrot.slane %v504, 7
    %v507 = vshll.u32 %v48, 16
    %v509 = vor.u32 %v506, %v507
    %v510 = vrot.slane %v506, 4
    %v512 = vshrl.u32 %v49, 16
    %v514 = vrot.slane %v512, 7
    %v515 = vshll.u32 %v49, 16
    %v517 = vor.u32 %v514, %v515
    %v518 = vsel %vm390, %v510, %v517
    %v520 = vshrl.u32 %v50, 16
    %v522 = vrot.slane %v520, 7
    %v523 = vshll.u32 %v50, 16
    %v525 = vor.u32 %v522, %v523
    %v526 = vrot.slane %v522, 4
    %v528 = vshrl.u32 %v51, 16
    %v530 = vrot.slane %v528, 7
    %v531 = vshll.u32 %v51, 16
    %v533 = vor.u32 %v530, %v531
    %v534 = vsel %vm390, %v526, %v533
    %v536 = vshrl.u32 %v52, 16
    %v538 = vrot.slane %v536, 7
    %v539 = vshll.u32 %v52, 16
    %v541 = vor.u32 %v538, %v539
    %v542 = vrot.slane %v538, 4
    %v544 = vshrl.u32 %v53, 16
    %v546 = vrot.slane %v544, 7
    %v547 = vshll.u32 %v53, 16
    %v549 = vor.u32 %v546, %v547
    %v550 = vsel %vm390, %v542, %v549
    %v552 = vshrl.u32 %v54, 16
    %v554 = vrot.slane %v552, 7
    %v555 = vshll.u32 %v54, 16
    %v557 = vor.u32 %v554, %v555
    %v558 = vrot.slane %v554, 4
    %v560 = vshrl.u32 %v55, 16
    %v562 = vrot.slane %v560, 7
    %v563 = vshll.u32 %v55, 16
    %v565 = vor.u32 %v562, %v563
    %v566 = vsel %vm390, %v558, %v565
    %v568 = vshrl.u32 %v56, 16
    %v570 = vrot.slane %v568, 7
    %v571 = vshll.u32 %v56, 16
    %v573 = vor.u32 %v570, %v571
    %v574 = vrot.slane %v570, 4
    %v576 = vshrl.u32 %v57, 16
    %v578 = vrot.slane %v576, 7
    %v579 = vshll.u32 %v57, 16
    %v581 = vor.u32 %v578, %v579
    %v582 = vsel %vm390, %v574, %v581
    %v584 = vshrl.u32 %v58, 16
    %v586 = vrot.slane %v584, 7
    %v587 = vshll.u32 %v58, 16
    %v589 = vor.u32 %v586, %v587
    %v590 = vrot.slane %v586, 4
    %v592 = vshrl.u32 %v59, 16
    %v594 = vrot.slane %v592, 7
    %v595 = vshll.u32 %v59, 16
    %v597 = vor.u32 %v594, %v595
    %v598 = vsel %vm390, %v590, %v597
    %v600 = vshrl.u32 %v60, 16
    %v602 = vrot.slane %v600, 7
    %v603 = vshll.u32 %v60, 16
    %v605 = vor.u32 %v602, %v603
    %v606 = vrot.slane %v602, 4
    %v608 = vshrl.u32 %v61, 16
    %v610 = vrot.slane %v608, 7
    %v611 = vshll.u32 %v61, 16
    %v613 = vor.u32 %v610, %v611
    %v614 = vsel %vm390, %v606, %v613
    %v616 = vshrl.u32 %v62, 16
    %v618 = vrot.slane %v616, 7
    %v619 = vshll.u32 %v62, 16
    %v621 = vor.u32 %v618, %v619
    %v622 = vrot.slane %v618, 4
    %v624 = vshrl.u32 %v63, 16
    %v626 = vrot.slane %v624, 7
    %v627 = vshll.u32 %v63, 16
    %v629 = vor.u32 %v626, %v627
    %v630 = vsel %vm390, %v622, %v629
    %v632 = vshrl.u32 %v64, 16
    %v634 = vrot.slane %v632, 7
    %v635 = vshll.u32 %v64, 16
    %v637 = vor.u32 %v634, %v635
    %v638 = vrot.slane %v634, 4
    %v640 = vshrl.u32 %v65, 16
    %v642 = vrot.slane %v640, 7
    %v643 = vshll.u32 %v65, 16
    %v645 = vor.u32 %v642, %v643
    %v646 = vsel %vm390, %v638, %v645
    %v648 = vshrl.u32 %v66, 16
    %v650 = vrot.slane %v648, 7
    %v651 = vshll.u32 %v66, 16
    %v653 = vor.u32 %v650, %v651
    %v654 = vrot.slane %v650, 4
    %v656 = vshrl.u32 %v67, 16
    %v658 = vrot.slane %v656, 7
    %v659 = vshll.u32 %v67, 16
    %v661 = vor.u32 %v658, %v659
    %v662 = vsel %vm390, %v654, %v661
    %v664 = vshrl.u32 %v68, 16
    %v666 = vrot.slane %v664, 7
    %v667 = vshll.u32 %v68, 16
    %v669 = vor.u32 %v666, %v667
    %v670 = vrot.slane %v666, 4
    %v672 = vshrl.u32 %v69, 16
    %v674 = vrot.slane %v672, 7
    %v675 = vshll.u32 %v69, 16
    %v677 = vor.u32 %v674, %v675
    %v678 = vsel %vm390, %v670, %v677
    %v680 = vshrl.u32 %v70, 16
    %v682 = vrot.slane %v680, 7
    %v683 = vshll.u32 %v70, 16
    %v685 = vor.u32 %v682, %v683
    %v686 = vrot.slane %v682, 4
    %v688 = vshrl.u32 %v71, 16
    %v690 = vrot.slane %v688, 7
    %v691 = vshll.u32 %v71, 16
    %v693 = vor.u32 %v690, %v691
    %v694 = vsel %vm390, %v686, %v693
    %v696 = vshrl.u32 %v72, 16
    %v698 = vrot.slane %v696, 7
    %v699 = vshll.u32 %v72, 16
    %v701 = vor.u32 %v698, %v699
    %v702 = vrot.slane %v698, 4
    %v704 = vshrl.u32 %v73, 16
    %v706 = vrot.slane %v704, 7
    %v707 = vshll.u32 %v73, 16
    %v709 = vor.u32 %v706, %v707
    %v710 = vsel %vm390, %v702, %v709
    %v712 = vshrl.u32 %v74, 16
    %v714 = vrot.slane %v712, 7
    %v715 = vshll.u32 %v74, 16
    %v717 = vor.u32 %v714, %v715
    %v718 = vrot.slane %v714, 4
    %v720 = vshrl.u32 %v75, 16
    %v722 = vrot.slane %v720, 7
    %v723 = vshll.u32 %v75, 16
    %v725 = vor.u32 %v722, %v723
    %v726 = vsel %vm390, %v718, %v725
    %v728 = vshrl.u32 %v76, 16
    %v730 = vrot.slane %v728, 7
    %v731 = vshll.u32 %v76, 16
    %v733 = vor.u32 %v730, %v731
    %v734 = vrot.slane %v730, 4
    %v736 = vshrl.u32 %v77, 16
    %v738 = vrot.slane %v736, 7
    %v739 = vshll.u32 %v77, 16
    %v741 = vor.u32 %v738, %v739
    %v742 = vsel %vm390, %v734, %v741
    %v744 = vshrl.u32 %v78, 16
    %v746 = vrot.slane %v744, 7
    %v747 = vshll.u32 %v78, 16
    %v749 = vor.u32 %v746, %v747
    %v750 = vrot.slane %v746, 4
    %v752 = vshrl.u32 %v79, 16
    %v754 = vrot.slane %v752, 7
    %v755 = vshll.u32 %v79, 16
    %v757 = vor.u32 %v754, %v755
    %v758 = vsel %vm390, %v750, %v757
    %v760 = vshrl.u32 %v80, 16
    %v762 = vrot.slane %v760, 7
    %v763 = vshll.u32 %v80, 16
    %v765 = vor.u32 %v762, %v763
    %v766 = vrot.slane %v762, 4
    %v768 = vshrl.u32 %v81, 16
    %v770 = vrot.slane %v768, 7
    %v771 = vshll.u32 %v81, 16
    %v773 = vor.u32 %v770, %v771
    %v774 = vsel %vm390, %v766, %v773
    %v776 = vshrl.u32 %v82, 16
    %v778 = vrot.slane %v776, 7
    %v779 = vshll.u32 %v82, 16
    %v781 = vor.u32 %v778, %v779
    %v782 = vrot.slane %v778, 4
    %v784 = vshrl.u32 %v83, 16
    %v786 = vrot.slane %v784, 7
    %v787 = vshll.u32 %v83, 16
    %v789 = vor.u32 %v786, %v787
    %v790 = vsel %vm390, %v782, %v789
    %v792 = vshrl.u32 %v84, 16
    %v794 = vrot.slane %v792, 7
    %v795 = vshll.u32 %v84, 16
    %v797 = vor.u32 %v794, %v795
    %v798 = vrot.slane %v794, 4
    %v800 = vshrl.u32 %v85, 16
    %v802 = vrot.slane %v800, 7
    %v803 = vshll.u32 %v85, 16
    %v805 = vor.u32 %v802, %v803
    %v806 = vsel %vm390, %v798, %v805
    %v808 = vshrl.u32 %v86, 16
    %v810 = vrot.slane %v808, 7
    %v811 = vshll.u32 %v86, 16
    %v813 = vor.u32 %v810, %v811
    %v814 = vrot.slane %v810, 4
    %v816 = vshrl.u32 %v87, 16
    %v818 = vrot.slane %v816, 7
    %v819 = vshll.u32 %v87, 16
    %v821 = vor.u32 %v818, %v819
    %v822 = vsel %vm390, %v814, %v821
    %v824 = vshrl.u32 %v88, 16
    %v826 = vrot.slane %v824, 7
    %v827 = vshll.u32 %v88, 16
    %v829 = vor.u32 %v826, %v827
    %v830 = vrot.slane %v826, 4
    %v832 = vshrl.u32 %v89, 16
    %v834 = vrot.slane %v832, 7
    %v835 = vshll.u32 %v89, 16
    %v837 = vor.u32 %v834, %v835
    %v838 = vsel %vm390, %v830, %v837
    %v840 = vshrl.u32 %v90, 16
    %v842 = vrot.slane %v840, 7
    %v843 = vshll.u32 %v90, 16
    %v845 = vor.u32 %v842, %v843
    %v846 = vrot.slane %v842, 4
    %v848 = vshrl.u32 %v91, 16
    %v850 = vrot.slane %v848, 7
    %v851 = vshll.u32 %v91, 16
    %v853 = vor.u32 %v850, %v851
    %v854 = vsel %vm390, %v846, %v853
    %v856 = vshrl.u32 %v92, 16
    %v858 = vrot.slane %v856, 7
    %v859 = vshll.u32 %v92, 16
    %v861 = vor.u32 %v858, %v859
    %v862 = vrot.slane %v858, 4
    %v864 = vshrl.u32 %v93, 16
    %v866 = vrot.slane %v864, 7
    %v867 = vshll.u32 %v93, 16
    %v869 = vor.u32 %v866, %v867
    %v870 = vsel %vm390, %v862, %v869
    %v872 = vshrl.u32 %v94, 16
    %v874 = vrot.slane %v872, 7
    %v875 = vshll.u32 %v94, 16
    %v877 = vor.u32 %v874, %v875
    %v878 = vrot.slane %v874, 4
    %v880 = vshrl.u32 %v95, 16
    %v882 = vrot.slane %v880, 7
    %v883 = vshll.u32 %v95, 16
    %v885 = vor.u32 %v882, %v883
    %v886 = vsel %vm390, %v878, %v885
    %v888 = vshrl.u32 %v96, 16
    %v890 = vrot.slane %v888, 7
    %v891 = vshll.u32 %v96, 16
    %v893 = vor.u32 %v890, %v891
    %v894 = vrot.slane %v890, 4
    %v896 = vshrl.u32 %v97, 16
    %v898 = vrot.slane %v896, 7
    %v899 = vshll.u32 %v97, 16
    %v901 = vor.u32 %v898, %v899
    %v902 = vsel %vm390, %v894, %v901
    %vm967 = vcmask 60416
    %vm968 = vsmask.f32 7938
    %vm969 = vmand %vm967, %vm968
    %v970 = vld [vmem:[%s124] sm:$0xf]
    %v971 = vsel %vm969, %v397, %v970
    %972 = vst [vmem:[%s124] sm:$0xf] %v971
    %973 = vst.msk [vmem:[%s124 + $0x4] sm:$0xf] %vm98, %v406
    %v974 = vld [vmem:[%s124 + $0x8] sm:$0xf]
    %v975 = vsel %vm969, %v413, %v974
    %976 = vst [vmem:[%s124 + $0x8] sm:$0xf] %v975
    %977 = vst.msk [vmem:[%s124 + $0xc] sm:$0xf] %vm98, %v422
    %v978 = vld [vmem:[%s124 + $0x10] sm:$0xf]
    %v979 = vsel %vm969, %v429, %v978
    %980 = vst [vmem:[%s124 + $0x10] sm:$0xf] %v979
    %981 = vst.msk [vmem:[%s124 + $0x14] sm:$0xf] %vm98, %v438
    %v982 = vld [vmem:[%s124 + $0x18] sm:$0xf]
    %v983 = vsel %vm969, %v445, %v982
    %984 = vst [vmem:[%s124 + $0x18] sm:$0xf] %v983
    %985 = vst.msk [vmem:[%s124 + $0x1c] sm:$0xf] %vm98, %v454
    %v986 = vld [vmem:[%s124 + $0x20] sm:$0xf]
    %v987 = vsel %vm969, %v461, %v986
    %988 = vst [vmem:[%s124 + $0x20] sm:$0xf] %v987
    %989 = vst.msk [vmem:[%s124 + $0x24] sm:$0xf] %vm98, %v470
    %v990 = vld [vmem:[%s124 + $0x28] sm:$0xf]
    %v991 = vsel %vm969, %v477, %v990
    %992 = vst [vmem:[%s124 + $0x28] sm:$0xf] %v991
    %993 = vst.msk [vmem:[%s124 + $0x2c] sm:$0xf] %vm98, %v486
    %v994 = vld [vmem:[%s124 + $0x30] sm:$0xf]
    %v995 = vsel %vm969, %v493, %v994
    %996 = vst [vmem:[%s124 + $0x30] sm:$0xf] %v995
    %997 = vst.msk [vmem:[%s124 + $0x34] sm:$0xf] %vm98, %v502
    %v998 = vld [vmem:[%s124 + $0x38] sm:$0xf]
    %v999 = vsel %vm969, %v509, %v998
    %1000 = vst [vmem:[%s124 + $0x38] sm:$0xf] %v999
    %1001 = vst.msk [vmem:[%s124 + $0x3c] sm:$0xf] %vm98, %v518
    %v1002 = vld [vmem:[%s124 + $0x40] sm:$0xf]
    %v1003 = vsel %vm969, %v525, %v1002
    %1004 = vst [vmem:[%s124 + $0x40] sm:$0xf] %v1003
    %1005 = vst.msk [vmem:[%s124 + $0x44] sm:$0xf] %vm98, %v534
    %v1006 = vld [vmem:[%s124 + $0x48] sm:$0xf]
    %v1007 = vsel %vm969, %v541, %v1006
    %1008 = vst [vmem:[%s124 + $0x48] sm:$0xf] %v1007
    %1009 = vst.msk [vmem:[%s124 + $0x4c] sm:$0xf] %vm98, %v550
    %v1010 = vld [vmem:[%s124 + $0x50] sm:$0xf]
    %v1011 = vsel %vm969, %v557, %v1010
    %1012 = vst [vmem:[%s124 + $0x50] sm:$0xf] %v1011
    %1013 = vst.msk [vmem:[%s124 + $0x54] sm:$0xf] %vm98, %v566
    %v1014 = vld [vmem:[%s124 + $0x58] sm:$0xf]
    %v1015 = vsel %vm969, %v573, %v1014
    %1016 = vst [vmem:[%s124 + $0x58] sm:$0xf] %v1015
    %1017 = vst.msk [vmem:[%s124 + $0x5c] sm:$0xf] %vm98, %v582
    %v1018 = vld [vmem:[%s124 + $0x60] sm:$0xf]
    %v1019 = vsel %vm969, %v589, %v1018
    %1020 = vst [vmem:[%s124 + $0x60] sm:$0xf] %v1019
    %1021 = vst.msk [vmem:[%s124 + $0x64] sm:$0xf] %vm98, %v598
    %v1022 = vld [vmem:[%s124 + $0x68] sm:$0xf]
    %v1023 = vsel %vm969, %v605, %v1022
    %1024 = vst [vmem:[%s124 + $0x68] sm:$0xf] %v1023
    %1025 = vst.msk [vmem:[%s124 + $0x6c] sm:$0xf] %vm98, %v614
    %v1026 = vld [vmem:[%s124 + $0x70] sm:$0xf]
    %v1027 = vsel %vm969, %v621, %v1026
    %1028 = vst [vmem:[%s124 + $0x70] sm:$0xf] %v1027
    %1029 = vst.msk [vmem:[%s124 + $0x74] sm:$0xf] %vm98, %v630
    %v1030 = vld [vmem:[%s124 + $0x78] sm:$0xf]
    %v1031 = vsel %vm969, %v637, %v1030
    %1032 = vst [vmem:[%s124 + $0x78] sm:$0xf] %v1031
    %1033 = vst.msk [vmem:[%s124 + $0x7c] sm:$0xf] %vm98, %v646
    %v1034 = vld [vmem:[%s124 + $0x90] sm:$0xf]
    %v1035 = vsel %vm969, %v653, %v1034
    %1036 = vst [vmem:[%s124 + $0x90] sm:$0xf] %v1035
    %1037 = vst.msk [vmem:[%s124 + $0x94] sm:$0xf] %vm98, %v662
    %v1038 = vld [vmem:[%s124 + $0x98] sm:$0xf]
    %v1039 = vsel %vm969, %v669, %v1038
    %1040 = vst [vmem:[%s124 + $0x98] sm:$0xf] %v1039
    %1041 = vst.msk [vmem:[%s124 + $0x9c] sm:$0xf] %vm98, %v678
    %v1042 = vld [vmem:[%s124 + $0xa0] sm:$0xf]
    %v1043 = vsel %vm969, %v685, %v1042
    %1044 = vst [vmem:[%s124 + $0xa0] sm:$0xf] %v1043
    %1045 = vst.msk [vmem:[%s124 + $0xa4] sm:$0xf] %vm98, %v694
    %v1046 = vld [vmem:[%s124 + $0xa8] sm:$0xf]
    %v1047 = vsel %vm969, %v701, %v1046
    %1048 = vst [vmem:[%s124 + $0xa8] sm:$0xf] %v1047
    %1049 = vst.msk [vmem:[%s124 + $0xac] sm:$0xf] %vm98, %v710
    %v1050 = vld [vmem:[%s124 + $0xb0] sm:$0xf]
    %v1051 = vsel %vm969, %v717, %v1050
    %1052 = vst [vmem:[%s124 + $0xb0] sm:$0xf] %v1051
    %1053 = vst.msk [vmem:[%s124 + $0xb4] sm:$0xf] %vm98, %v726
    %v1054 = vld [vmem:[%s124 + $0xb8] sm:$0xf]
    %v1055 = vsel %vm969, %v733, %v1054
    %1056 = vst [vmem:[%s124 + $0xb8] sm:$0xf] %v1055
    %1057 = vst.msk [vmem:[%s124 + $0xbc] sm:$0xf] %vm98, %v742
    %v1058 = vld [vmem:[%s124 + $0xc0] sm:$0xf]
    %v1059 = vsel %vm969, %v749, %v1058
    %1060 = vst [vmem:[%s124 + $0xc0] sm:$0xf] %v1059
    %1061 = vst.msk [vmem:[%s124 + $0xc4] sm:$0xf] %vm98, %v758
    %v1062 = vld [vmem:[%s124 + $0xc8] sm:$0xf]
    %v1063 = vsel %vm969, %v765, %v1062
    %1064 = vst [vmem:[%s124 + $0xc8] sm:$0xf] %v1063
    %1065 = vst.msk [vmem:[%s124 + $0xcc] sm:$0xf] %vm98, %v774
    %v1066 = vld [vmem:[%s124 + $0xd0] sm:$0xf]
    %v1067 = vsel %vm969, %v781, %v1066
    %1068 = vst [vmem:[%s124 + $0xd0] sm:$0xf] %v1067
    %1069 = vst.msk [vmem:[%s124 + $0xd4] sm:$0xf] %vm98, %v790
    %v1070 = vld [vmem:[%s124 + $0xd8] sm:$0xf]
    %v1071 = vsel %vm969, %v797, %v1070
    %1072 = vst [vmem:[%s124 + $0xd8] sm:$0xf] %v1071
    %1073 = vst.msk [vmem:[%s124 + $0xdc] sm:$0xf] %vm98, %v806
    %v1074 = vld [vmem:[%s124 + $0xe0] sm:$0xf]
    %v1075 = vsel %vm969, %v813, %v1074
    %1076 = vst [vmem:[%s124 + $0xe0] sm:$0xf] %v1075
    %1077 = vst.msk [vmem:[%s124 + $0xe4] sm:$0xf] %vm98, %v822
    %v1078 = vld [vmem:[%s124 + $0xe8] sm:$0xf]
    %v1079 = vsel %vm969, %v829, %v1078
    %1080 = vst [vmem:[%s124 + $0xe8] sm:$0xf] %v1079
    %1081 = vst.msk [vmem:[%s124 + $0xec] sm:$0xf] %vm98, %v838
    %v1082 = vld [vmem:[%s124 + $0xf0] sm:$0xf]
    %v1083 = vsel %vm969, %v845, %v1082
    %1084 = vst [vmem:[%s124 + $0xf0] sm:$0xf] %v1083
    %1085 = vst.msk [vmem:[%s124 + $0xf4] sm:$0xf] %vm98, %v854
    %v1086 = vld [vmem:[%s124 + $0xf8] sm:$0xf]
    %v1087 = vsel %vm969, %v861, %v1086
    %1088 = vst [vmem:[%s124 + $0xf8] sm:$0xf] %v1087
    %1089 = vst.msk [vmem:[%s124 + $0xfc] sm:$0xf] %vm98, %v870
    %v1090 = vld [vmem:[%s124 + $0x100] sm:$0xf]
    %v1091 = vsel %vm969, %v877, %v1090
    %1092 = vst [vmem:[%s124 + $0x100] sm:$0xf] %v1091
    %1093 = vst.msk [vmem:[%s124 + $0x104] sm:$0xf] %vm98, %v886
    %v1094 = vld [vmem:[%s124 + $0x108] sm:$0xf]
    %v1095 = vsel %vm969, %v893, %v1094
    %1096 = vst [vmem:[%s124 + $0x108] sm:$0xf] %v1095
    %1097 = vst.msk [vmem:[%s124 + $0x10c] sm:$0xf] %vm98, %v902
    %vm1098 = vsmask.f32 3328
    %vm1099 = vsmask.f32 7440
    %vm1100 = vmor %vm1098, %vm1099
    %v1101 = vrot.slane %v392, 4
    %v1102 = vrot.slane %v395, 5
    %v1103 = vor.u32 %v1101, %v1102
    %v1104 = vrot.slane %v1103, 4
    %v1105 = vrot.slane %v403, 5
    %v1106 = vsel %vm1100, %v1104, %v1105
    %v1107 = vrot.slane %v400, 4
    %v1108 = vor.u32 %v1107, %v1105
    %v1109 = vrot.slane %v1108, 4
    %v1110 = vrot.slane %v408, 4
    %v1111 = vrot.slane %v411, 5
    %v1112 = vor.u32 %v1110, %v1111
    %v1113 = vrot.slane %v1112, 4
    %v1114 = vrot.slane %v419, 5
    %v1115 = vsel %vm1100, %v1113, %v1114
    %v1116 = vrot.slane %v416, 4
    %v1117 = vor.u32 %v1116, %v1114
    %v1118 = vrot.slane %v1117, 4
    %v1119 = vrot.slane %v424, 4
    %v1120 = vrot.slane %v427, 5
    %v1121 = vor.u32 %v1119, %v1120
    %v1122 = vrot.slane %v1121, 4
    %v1123 = vrot.slane %v435, 5
    %v1124 = vsel %vm1100, %v1122, %v1123
    %v1125 = vrot.slane %v432, 4
    %v1126 = vor.u32 %v1125, %v1123
    %v1127 = vrot.slane %v1126, 4
    %v1128 = vrot.slane %v440, 4
    %v1129 = vrot.slane %v443, 5
    %v1130 = vor.u32 %v1128, %v1129
    %v1131 = vrot.slane %v1130, 4
    %v1132 = vrot.slane %v451, 5
    %v1133 = vsel %vm1100, %v1131, %v1132
    %v1134 = vrot.slane %v448, 4
    %v1135 = vor.u32 %v1134, %v1132
    %v1136 = vrot.slane %v1135, 4
    %v1137 = vrot.slane %v456, 4
    %v1138 = vrot.slane %v459, 5
    %v1139 = vor.u32 %v1137, %v1138
    %v1140 = vrot.slane %v1139, 4
    %v1141 = vrot.slane %v467, 5
    %v1142 = vsel %vm1100, %v1140, %v1141
    %v1143 = vrot.slane %v464, 4
    %v1144 = vor.u32 %v1143, %v1141
    %v1145 = vrot.slane %v1144, 4
    %v1146 = vrot.slane %v472, 4
    %v1147 = vrot.slane %v475, 5
    %v1148 = vor.u32 %v1146, %v1147
    %v1149 = vrot.slane %v1148, 4
    %v1150 = vrot.slane %v483, 5
    %v1151 = vsel %vm1100, %v1149, %v1150
    %v1152 = vrot.slane %v480, 4
    %v1153 = vor.u32 %v1152, %v1150
    %v1154 = vrot.slane %v1153, 4
    %v1155 = vrot.slane %v488, 4
    %v1156 = vrot.slane %v491, 5
    %v1157 = vor.u32 %v1155, %v1156
    %v1158 = vrot.slane %v1157, 4
    %v1159 = vrot.slane %v499, 5
    %v1160 = vsel %vm1100, %v1158, %v1159
    %v1161 = vrot.slane %v496, 4
    %v1162 = vor.u32 %v1161, %v1159
    %v1163 = vrot.slane %v1162, 4
    %v1164 = vrot.slane %v504, 4
    %v1165 = vrot.slane %v507, 5
    %v1166 = vor.u32 %v1164, %v1165
    %v1167 = vrot.slane %v1166, 4
    %v1168 = vrot.slane %v515, 5
    %v1169 = vsel %vm1100, %v1167, %v1168
    %v1170 = vrot.slane %v512, 4
    %v1171 = vor.u32 %v1170, %v1168
    %v1172 = vrot.slane %v1171, 4
    %v1173 = vrot.slane %v520, 4
    %v1174 = vrot.slane %v523, 5
    %v1175 = vor.u32 %v1173, %v1174
    %v1176 = vrot.slane %v1175, 4
    %v1177 = vrot.slane %v531, 5
    %v1178 = vsel %vm1100, %v1176, %v1177
    %v1179 = vrot.slane %v528, 4
    %v1180 = vor.u32 %v1179, %v1177
    %v1181 = vrot.slane %v1180, 4
    %v1182 = vrot.slane %v536, 4
    %v1183 = vrot.slane %v539, 5
    %v1184 = vor.u32 %v1182, %v1183
    %v1185 = vrot.slane %v1184, 4
    %v1186 = vrot.slane %v547, 5
    %v1187 = vsel %vm1100, %v1185, %v1186
    %v1188 = vrot.slane %v544, 4
    %v1189 = vor.u32 %v1188, %v1186
    %v1190 = vrot.slane %v1189, 4
    %v1191 = vrot.slane %v552, 4
    %v1192 = vrot.slane %v555, 5
    %v1193 = vor.u32 %v1191, %v1192
    %v1194 = vrot.slane %v1193, 4
    %v1195 = vrot.slane %v563, 5
    %v1196 = vsel %vm1100, %v1194, %v1195
    %v1197 = vrot.slane %v560, 4
    %v1198 = vor.u32 %v1197, %v1195
    %v1199 = vrot.slane %v1198, 4
    %v1200 = vrot.slane %v568, 4
    %v1201 = vrot.slane %v571, 5
    %v1202 = vor.u32 %v1200, %v1201
    %v1203 = vrot.slane %v1202, 4
    %v1204 = vrot.slane %v579, 5
    %v1205 = vsel %vm1100, %v1203, %v1204
    %v1206 = vrot.slane %v576, 4
    %v1207 = vor.u32 %v1206, %v1204
    %v1208 = vrot.slane %v1207, 4
    %v1209 = vrot.slane %v584, 4
    %v1210 = vrot.slane %v587, 5
    %v1211 = vor.u32 %v1209, %v1210
    %v1212 = vrot.slane %v1211, 4
    %v1213 = vrot.slane %v595, 5
    %v1214 = vsel %vm1100, %v1212, %v1213
    %v1215 = vrot.slane %v592, 4
    %v1216 = vor.u32 %v1215, %v1213
    %v1217 = vrot.slane %v1216, 4
    %v1218 = vrot.slane %v600, 4
    %v1219 = vrot.slane %v603, 5
    %v1220 = vor.u32 %v1218, %v1219
    %v1221 = vrot.slane %v1220, 4
    %v1222 = vrot.slane %v611, 5
    %v1223 = vsel %vm1100, %v1221, %v1222
    %v1224 = vrot.slane %v608, 4
    %v1225 = vor.u32 %v1224, %v1222
    %v1226 = vrot.slane %v1225, 4
    %v1227 = vrot.slane %v616, 4
    %v1228 = vrot.slane %v619, 5
    %v1229 = vor.u32 %v1227, %v1228
    %v1230 = vrot.slane %v1229, 4
    %v1231 = vrot.slane %v627, 5
    %v1232 = vsel %vm1100, %v1230, %v1231
    %v1233 = vrot.slane %v624, 4
    %v1234 = vor.u32 %v1233, %v1231
    %v1235 = vrot.slane %v1234, 4
    %v1236 = vrot.slane %v632, 4
    %v1237 = vrot.slane %v635, 5
    %v1238 = vor.u32 %v1236, %v1237
    %v1239 = vrot.slane %v1238, 4
    %v1240 = vrot.slane %v643, 5
    %v1241 = vsel %vm1100, %v1239, %v1240
    %v1242 = vrot.slane %v640, 4
    %v1243 = vor.u32 %v1242, %v1240
    %v1244 = vrot.slane %v1243, 4
    %v1245 = vrot.slane %v648, 4
    %v1246 = vrot.slane %v651, 5
    %v1247 = vor.u32 %v1245, %v1246
    %v1248 = vrot.slane %v1247, 4
    %v1249 = vrot.slane %v659, 5
    %v1250 = vsel %vm1100, %v1248, %v1249
    %v1251 = vrot.slane %v656, 4
    %v1252 = vor.u32 %v1251, %v1249
    %v1253 = vrot.slane %v1252, 4
    %v1254 = vrot.slane %v664, 4
    %v1255 = vrot.slane %v667, 5
    %v1256 = vor.u32 %v1254, %v1255
    %v1257 = vrot.slane %v1256, 4
    %v1258 = vrot.slane %v675, 5
    %v1259 = vsel %vm1100, %v1257, %v1258
    %v1260 = vrot.slane %v672, 4
    %v1261 = vor.u32 %v1260, %v1258
    %v1262 = vrot.slane %v1261, 4
    %v1263 = vrot.slane %v680, 4
    %v1264 = vrot.slane %v683, 5
    %v1265 = vor.u32 %v1263, %v1264
    %v1266 = vrot.slane %v1265, 4
    %v1267 = vrot.slane %v691, 5
    %v1268 = vsel %vm1100, %v1266, %v1267
    %v1269 = vrot.slane %v688, 4
    %v1270 = vor.u32 %v1269, %v1267
    %v1271 = vrot.slane %v1270, 4
    %v1272 = vrot.slane %v696, 4
    %v1273 = vrot.slane %v699, 5
    %v1274 = vor.u32 %v1272, %v1273
    %v1275 = vrot.slane %v1274, 4
    %v1276 = vrot.slane %v707, 5
    %v1277 = vsel %vm1100, %v1275, %v1276
    %v1278 = vrot.slane %v704, 4
    %v1279 = vor.u32 %v1278, %v1276
    %v1280 = vrot.slane %v1279, 4
    %v1281 = vrot.slane %v712, 4
    %v1282 = vrot.slane %v715, 5
    %v1283 = vor.u32 %v1281, %v1282
    %v1284 = vrot.slane %v1283, 4
    %v1285 = vrot.slane %v723, 5
    %v1286 = vsel %vm1100, %v1284, %v1285
    %v1287 = vrot.slane %v720, 4
    %v1288 = vor.u32 %v1287, %v1285
    %v1289 = vrot.slane %v1288, 4
    %v1290 = vrot.slane %v728, 4
    %v1291 = vrot.slane %v731, 5
    %v1292 = vor.u32 %v1290, %v1291
    %v1293 = vrot.slane %v1292, 4
    %v1294 = vrot.slane %v739, 5
    %v1295 = vsel %vm1100, %v1293, %v1294
    %v1296 = vrot.slane %v736, 4
    %v1297 = vor.u32 %v1296, %v1294
    %v1298 = vrot.slane %v1297, 4
    %v1299 = vrot.slane %v744, 4
    %v1300 = vrot.slane %v747, 5
    %v1301 = vor.u32 %v1299, %v1300
    %v1302 = vrot.slane %v1301, 4
    %v1303 = vrot.slane %v755, 5
    %v1304 = vsel %vm1100, %v1302, %v1303
    %v1305 = vrot.slane %v752, 4
    %v1306 = vor.u32 %v1305, %v1303
    %v1307 = vrot.slane %v1306, 4
    %v1308 = vrot.slane %v760, 4
    %v1309 = vrot.slane %v763, 5
    %v1310 = vor.u32 %v1308, %v1309
    %v1311 = vrot.slane %v1310, 4
    %v1312 = vrot.slane %v771, 5
    %v1313 = vsel %vm1100, %v1311, %v1312
    %v1314 = vrot.slane %v768, 4
    %v1315 = vor.u32 %v1314, %v1312
    %v1316 = vrot.slane %v1315, 4
    %v1317 = vrot.slane %v776, 4
    %v1318 = vrot.slane %v779, 5
    %v1319 = vor.u32 %v1317, %v1318
    %v1320 = vrot.slane %v1319, 4
    %v1321 = vrot.slane %v787, 5
    %v1322 = vsel %vm1100, %v1320, %v1321
    %v1323 = vrot.slane %v784, 4
    %v1324 = vor.u32 %v1323, %v1321
    %v1325 = vrot.slane %v1324, 4
    %v1326 = vrot.slane %v792, 4
    %v1327 = vrot.slane %v795, 5
    %v1328 = vor.u32 %v1326, %v1327
    %v1329 = vrot.slane %v1328, 4
    %v1330 = vrot.slane %v803, 5
    %v1331 = vsel %vm1100, %v1329, %v1330
    %v1332 = vrot.slane %v800, 4
    %v1333 = vor.u32 %v1332, %v1330
    %v1334 = vrot.slane %v1333, 4
    %v1335 = vrot.slane %v808, 4
    %v1336 = vrot.slane %v811, 5
    %v1337 = vor.u32 %v1335, %v1336
    %v1338 = vrot.slane %v1337, 4
    %v1339 = vrot.slane %v819, 5
    %v1340 = vsel %vm1100, %v1338, %v1339
    %v1341 = vrot.slane %v816, 4
    %v1342 = vor.u32 %v1341, %v1339
    %v1343 = vrot.slane %v1342, 4
    %v1344 = vrot.slane %v824, 4
    %v1345 = vrot.slane %v827, 5
    %v1346 = vor.u32 %v1344, %v1345
    %v1347 = vrot.slane %v1346, 4
    %v1348 = vrot.slane %v835, 5
    %v1349 = vsel %vm1100, %v1347, %v1348
    %v1350 = vrot.slane %v832, 4
    %v1351 = vor.u32 %v1350, %v1348
    %v1352 = vrot.slane %v1351, 4
    %v1353 = vrot.slane %v840, 4
    %v1354 = vrot.slane %v843, 5
    %v1355 = vor.u32 %v1353, %v1354
    %v1356 = vrot.slane %v1355, 4
    %v1357 = vrot.slane %v851, 5
    %v1358 = vsel %vm1100, %v1356, %v1357
    %v1359 = vrot.slane %v848, 4
    %v1360 = vor.u32 %v1359, %v1357
    %v1361 = vrot.slane %v1360, 4
    %v1362 = vrot.slane %v856, 4
    %v1363 = vrot.slane %v859, 5
    %v1364 = vor.u32 %v1362, %v1363
    %v1365 = vrot.slane %v1364, 4
    %v1366 = vrot.slane %v867, 5
    %v1367 = vsel %vm1100, %v1365, %v1366
    %v1368 = vrot.slane %v864, 4
    %v1369 = vor.u32 %v1368, %v1366
    %v1370 = vrot.slane %v1369, 4
    %v1371 = vrot.slane %v872, 4
    %v1372 = vrot.slane %v875, 5
    %v1373 = vor.u32 %v1371, %v1372
    %v1374 = vrot.slane %v1373, 4
    %v1375 = vrot.slane %v883, 5
    %v1376 = vsel %vm1100, %v1374, %v1375
    %v1377 = vrot.slane %v880, 4
    %v1378 = vor.u32 %v1377, %v1375
    %v1379 = vrot.slane %v1378, 4
    %v1380 = vrot.slane %v888, 4
    %v1381 = vrot.slane %v891, 5
    %v1382 = vor.u32 %v1380, %v1381
    %v1383 = vrot.slane %v1382, 4
    %v1384 = vrot.slane %v899, 5
    %v1385 = vsel %vm1100, %v1383, %v1384
    %v1386 = vrot.slane %v896, 4
    %v1387 = vor.u32 %v1386, %v1384
    %v1388 = vrot.slane %v1387, 4
    %1453 = vst.msk [vmem:[%s224] sm:$0xf] %vm98, %v1106
    %vm1454 = vmand %vm967, %vm1098
    %v1455 = vld [vmem:[%s224 + $0x4] sm:$0xf]
    %v1456 = vsel %vm1454, %v1109, %v1455
    %1457 = vst [vmem:[%s224 + $0x4] sm:$0xf] %v1456
    %1458 = vst.msk [vmem:[%s224 + $0x8] sm:$0xf] %vm98, %v1115
    %v1459 = vld [vmem:[%s224 + $0xc] sm:$0xf]
    %v1460 = vsel %vm1454, %v1118, %v1459
    %1461 = vst [vmem:[%s224 + $0xc] sm:$0xf] %v1460
    %1462 = vst.msk [vmem:[%s224 + $0x10] sm:$0xf] %vm98, %v1124
    %v1463 = vld [vmem:[%s224 + $0x14] sm:$0xf]
    %v1464 = vsel %vm1454, %v1127, %v1463
    %1465 = vst [vmem:[%s224 + $0x14] sm:$0xf] %v1464
    %1466 = vst.msk [vmem:[%s224 + $0x18] sm:$0xf] %vm98, %v1133
    %v1467 = vld [vmem:[%s224 + $0x1c] sm:$0xf]
    %v1468 = vsel %vm1454, %v1136, %v1467
    %1469 = vst [vmem:[%s224 + $0x1c] sm:$0xf] %v1468
    %1470 = vst.msk [vmem:[%s224 + $0x20] sm:$0xf] %vm98, %v1142
    %v1471 = vld [vmem:[%s224 + $0x24] sm:$0xf]
    %v1472 = vsel %vm1454, %v1145, %v1471
    %1473 = vst [vmem:[%s224 + $0x24] sm:$0xf] %v1472
    %1474 = vst.msk [vmem:[%s224 + $0x28] sm:$0xf] %vm98, %v1151
    %v1475 = vld [vmem:[%s224 + $0x2c] sm:$0xf]
    %v1476 = vsel %vm1454, %v1154, %v1475
    %1477 = vst [vmem:[%s224 + $0x2c] sm:$0xf] %v1476
    %1478 = vst.msk [vmem:[%s224 + $0x30] sm:$0xf] %vm98, %v1160
    %v1479 = vld [vmem:[%s224 + $0x34] sm:$0xf]
    %v1480 = vsel %vm1454, %v1163, %v1479
    %1481 = vst [vmem:[%s224 + $0x34] sm:$0xf] %v1480
    %1482 = vst.msk [vmem:[%s224 + $0x38] sm:$0xf] %vm98, %v1169
    %v1483 = vld [vmem:[%s224 + $0x3c] sm:$0xf]
    %v1484 = vsel %vm1454, %v1172, %v1483
    %1485 = vst [vmem:[%s224 + $0x3c] sm:$0xf] %v1484
    %1486 = vst.msk [vmem:[%s224 + $0x40] sm:$0xf] %vm98, %v1178
    %v1487 = vld [vmem:[%s224 + $0x44] sm:$0xf]
    %v1488 = vsel %vm1454, %v1181, %v1487
    %1489 = vst [vmem:[%s224 + $0x44] sm:$0xf] %v1488
    %1490 = vst.msk [vmem:[%s224 + $0x48] sm:$0xf] %vm98, %v1187
    %v1491 = vld [vmem:[%s224 + $0x4c] sm:$0xf]
    %v1492 = vsel %vm1454, %v1190, %v1491
    %1493 = vst [vmem:[%s224 + $0x4c] sm:$0xf] %v1492
    %1494 = vst.msk [vmem:[%s224 + $0x50] sm:$0xf] %vm98, %v1196
    %v1495 = vld [vmem:[%s224 + $0x54] sm:$0xf]
    %v1496 = vsel %vm1454, %v1199, %v1495
    %1497 = vst [vmem:[%s224 + $0x54] sm:$0xf] %v1496
    %1498 = vst.msk [vmem:[%s224 + $0x58] sm:$0xf] %vm98, %v1205
    %v1499 = vld [vmem:[%s224 + $0x5c] sm:$0xf]
    %v1500 = vsel %vm1454, %v1208, %v1499
    %1501 = vst [vmem:[%s224 + $0x5c] sm:$0xf] %v1500
    %1502 = vst.msk [vmem:[%s224 + $0x60] sm:$0xf] %vm98, %v1214
    %v1503 = vld [vmem:[%s224 + $0x64] sm:$0xf]
    %v1504 = vsel %vm1454, %v1217, %v1503
    %1505 = vst [vmem:[%s224 + $0x64] sm:$0xf] %v1504
    %1506 = vst.msk [vmem:[%s224 + $0x68] sm:$0xf] %vm98, %v1223
    %v1507 = vld [vmem:[%s224 + $0x6c] sm:$0xf]
    %v1508 = vsel %vm1454, %v1226, %v1507
    %1509 = vst [vmem:[%s224 + $0x6c] sm:$0xf] %v1508
    %1510 = vst.msk [vmem:[%s224 + $0x70] sm:$0xf] %vm98, %v1232
    %v1511 = vld [vmem:[%s224 + $0x74] sm:$0xf]
    %v1512 = vsel %vm1454, %v1235, %v1511
    %1513 = vst [vmem:[%s224 + $0x74] sm:$0xf] %v1512
    %1514 = vst.msk [vmem:[%s224 + $0x78] sm:$0xf] %vm98, %v1241
    %v1515 = vld [vmem:[%s224 + $0x7c] sm:$0xf]
    %v1516 = vsel %vm1454, %v1244, %v1515
    %1517 = vst [vmem:[%s224 + $0x7c] sm:$0xf] %v1516
    %1518 = vst.msk [vmem:[%s224 + $0x90] sm:$0xf] %vm98, %v1250
    %v1519 = vld [vmem:[%s224 + $0x94] sm:$0xf]
    %v1520 = vsel %vm1454, %v1253, %v1519
    %1521 = vst [vmem:[%s224 + $0x94] sm:$0xf] %v1520
    %1522 = vst.msk [vmem:[%s224 + $0x98] sm:$0xf] %vm98, %v1259
    %v1523 = vld [vmem:[%s224 + $0x9c] sm:$0xf]
    %v1524 = vsel %vm1454, %v1262, %v1523
    %1525 = vst [vmem:[%s224 + $0x9c] sm:$0xf] %v1524
    %1526 = vst.msk [vmem:[%s224 + $0xa0] sm:$0xf] %vm98, %v1268
    %v1527 = vld [vmem:[%s224 + $0xa4] sm:$0xf]
    %v1528 = vsel %vm1454, %v1271, %v1527
    %1529 = vst [vmem:[%s224 + $0xa4] sm:$0xf] %v1528
    %1530 = vst.msk [vmem:[%s224 + $0xa8] sm:$0xf] %vm98, %v1277
    %v1531 = vld [vmem:[%s224 + $0xac] sm:$0xf]
    %v1532 = vsel %vm1454, %v1280, %v1531
    %1533 = vst [vmem:[%s224 + $0xac] sm:$0xf] %v1532
    %1534 = vst.msk [vmem:[%s224 + $0xb0] sm:$0xf] %vm98, %v1286
    %v1535 = vld [vmem:[%s224 + $0xb4] sm:$0xf]
    %v1536 = vsel %vm1454, %v1289, %v1535
    %1537 = vst [vmem:[%s224 + $0xb4] sm:$0xf] %v1536
    %1538 = vst.msk [vmem:[%s224 + $0xb8] sm:$0xf] %vm98, %v1295
    %v1539 = vld [vmem:[%s224 + $0xbc] sm:$0xf]
    %v1540 = vsel %vm1454, %v1298, %v1539
    %1541 = vst [vmem:[%s224 + $0xbc] sm:$0xf] %v1540
    %1542 = vst.msk [vmem:[%s224 + $0xc0] sm:$0xf] %vm98, %v1304
    %v1543 = vld [vmem:[%s224 + $0xc4] sm:$0xf]
    %v1544 = vsel %vm1454, %v1307, %v1543
    %1545 = vst [vmem:[%s224 + $0xc4] sm:$0xf] %v1544
    %1546 = vst.msk [vmem:[%s224 + $0xc8] sm:$0xf] %vm98, %v1313
    %v1547 = vld [vmem:[%s224 + $0xcc] sm:$0xf]
    %v1548 = vsel %vm1454, %v1316, %v1547
    %1549 = vst [vmem:[%s224 + $0xcc] sm:$0xf] %v1548
    %1550 = vst.msk [vmem:[%s224 + $0xd0] sm:$0xf] %vm98, %v1322
    %v1551 = vld [vmem:[%s224 + $0xd4] sm:$0xf]
    %v1552 = vsel %vm1454, %v1325, %v1551
    %1553 = vst [vmem:[%s224 + $0xd4] sm:$0xf] %v1552
    %1554 = vst.msk [vmem:[%s224 + $0xd8] sm:$0xf] %vm98, %v1331
    %v1555 = vld [vmem:[%s224 + $0xdc] sm:$0xf]
    %v1556 = vsel %vm1454, %v1334, %v1555
    %1557 = vst [vmem:[%s224 + $0xdc] sm:$0xf] %v1556
    %1558 = vst.msk [vmem:[%s224 + $0xe0] sm:$0xf] %vm98, %v1340
    %v1559 = vld [vmem:[%s224 + $0xe4] sm:$0xf]
    %v1560 = vsel %vm1454, %v1343, %v1559
    %1561 = vst [vmem:[%s224 + $0xe4] sm:$0xf] %v1560
    %1562 = vst.msk [vmem:[%s224 + $0xe8] sm:$0xf] %vm98, %v1349
    %v1563 = vld [vmem:[%s224 + $0xec] sm:$0xf]
    %v1564 = vsel %vm1454, %v1352, %v1563
    %1565 = vst [vmem:[%s224 + $0xec] sm:$0xf] %v1564
    %1566 = vst.msk [vmem:[%s224 + $0xf0] sm:$0xf] %vm98, %v1358
    %v1567 = vld [vmem:[%s224 + $0xf4] sm:$0xf]
    %v1568 = vsel %vm1454, %v1361, %v1567
    %1569 = vst [vmem:[%s224 + $0xf4] sm:$0xf] %v1568
    %1570 = vst.msk [vmem:[%s224 + $0xf8] sm:$0xf] %vm98, %v1367
    %v1571 = vld [vmem:[%s224 + $0xfc] sm:$0xf]
    %v1572 = vsel %vm1454, %v1370, %v1571
    %1573 = vst [vmem:[%s224 + $0xfc] sm:$0xf] %v1572
    %1574 = vst.msk [vmem:[%s224 + $0x100] sm:$0xf] %vm98, %v1376
    %v1575 = vld [vmem:[%s224 + $0x104] sm:$0xf]
    %v1576 = vsel %vm1454, %v1379, %v1575
    %1577 = vst [vmem:[%s224 + $0x104] sm:$0xf] %v1576
    %1578 = vst.msk [vmem:[%s224 + $0x108] sm:$0xf] %vm98, %v1385
    %v1579 = vld [vmem:[%s224 + $0x10c] sm:$0xf]
    %v1580 = vsel %vm1454, %v1388, %v1579
    %1581 = vst [vmem:[%s224 + $0x10c] sm:$0xf] %v1580
    %v1582 = vld [vmem:[#allocation2] sm:$0xf]
    %v1583 = vld [vmem:[#allocation2 + $0x4] sm:$0xf]
    %v1584 = vld [vmem:[#allocation2 + $0x8] sm:$0xf]
    %v1585 = vld [vmem:[#allocation2 + $0xc] sm:$0xf]
    %v1586 = vld [vmem:[#allocation2 + $0x10] sm:$0xf]
    %v1587 = vld [vmem:[#allocation2 + $0x14] sm:$0xf]
    %v1588 = vld [vmem:[#allocation2 + $0x18] sm:$0xf]
    %v1589 = vld [vmem:[#allocation2 + $0x1c] sm:$0xf]
    %v1590 = vld [vmem:[#allocation2 + $0x20] sm:$0xf]
    %v1591 = vld [vmem:[#allocation2 + $0x24] sm:$0xf]
    %v1592 = vld [vmem:[#allocation2 + $0x28] sm:$0xf]
    %v1593 = vld [vmem:[#allocation2 + $0x2c] sm:$0xf]
    %v1594 = vld [vmem:[#allocation2 + $0x30] sm:$0xf]
    %v1595 = vld [vmem:[#allocation2 + $0x34] sm:$0xf]
    %v1596 = vld [vmem:[#allocation2 + $0x38] sm:$0xf]
    %v1597 = vld [vmem:[#allocation2 + $0x3c] sm:$0xf]
    %v1598 = vld [vmem:[#allocation2 + $0x40] sm:$0xf]
    %v1599 = vld [vmem:[#allocation2 + $0x44] sm:$0xf]
    %v1600 = vld [vmem:[#allocation2 + $0x48] sm:$0xf]
    %v1601 = vld [vmem:[#allocation2 + $0x4c] sm:$0xf]
    %v1602 = vld [vmem:[#allocation2 + $0x50] sm:$0xf]
    %v1603 = vld [vmem:[#allocation2 + $0x54] sm:$0xf]
    %v1604 = vld [vmem:[#allocation2 + $0x58] sm:$0xf]
    %v1605 = vld [vmem:[#allocation2 + $0x5c] sm:$0xf]
    %v1606 = vld [vmem:[#allocation2 + $0x60] sm:$0xf]
    %v1607 = vld [vmem:[#allocation2 + $0x64] sm:$0xf]
    %v1608 = vld [vmem:[#allocation2 + $0x68] sm:$0xf]
    %v1609 = vld [vmem:[#allocation2 + $0x6c] sm:$0xf]
    %v1610 = vld [vmem:[#allocation2 + $0x70] sm:$0xf]
    %v1611 = vld [vmem:[#allocation2 + $0x74] sm:$0xf]
    %v1612 = vld [vmem:[#allocation2 + $0x78] sm:$0xf]
    %v1613 = vld [vmem:[#allocation2 + $0x7c] sm:$0xf]
    %v1614 = vld [vmem:[#allocation2 + $0x90] sm:$0xf]
    %v1615 = vld [vmem:[#allocation2 + $0x94] sm:$0xf]
    %v1616 = vld [vmem:[#allocation2 + $0x98] sm:$0xf]
    %v1617 = vld [vmem:[#allocation2 + $0x9c] sm:$0xf]
    %v1618 = vld [vmem:[#allocation2 + $0xa0] sm:$0xf]
    %v1619 = vld [vmem:[#allocation2 + $0xa4] sm:$0xf]
    %v1620 = vld [vmem:[#allocation2 + $0xa8] sm:$0xf]
    %v1621 = vld [vmem:[#allocation2 + $0xac] sm:$0xf]
    %v1622 = vld [vmem:[#allocation2 + $0xb0] sm:$0xf]
    %v1623 = vld [vmem:[#allocation2 + $0xb4] sm:$0xf]
    %v1624 = vld [vmem:[#allocation2 + $0xb8] sm:$0xf]
    %v1625 = vld [vmem:[#allocation2 + $0xbc] sm:$0xf]
    %v1626 = vld [vmem:[#allocation2 + $0xc0] sm:$0xf]
    %v1627 = vld [vmem:[#allocation2 + $0xc4] sm:$0xf]
    %v1628 = vld [vmem:[#allocation2 + $0xc8] sm:$0xf]
    %v1629 = vld [vmem:[#allocation2 + $0xcc] sm:$0xf]
    %v1630 = vld [vmem:[#allocation2 + $0xd0] sm:$0xf]
    %v1631 = vld [vmem:[#allocation2 + $0xd4] sm:$0xf]
    %v1632 = vld [vmem:[#allocation2 + $0xd8] sm:$0xf]
    %v1633 = vld [vmem:[#allocation2 + $0xdc] sm:$0xf]
    %v1634 = vld [vmem:[#allocation2 + $0xe0] sm:$0xf]
    %v1635 = vld [vmem:[#allocation2 + $0xe4] sm:$0xf]
    %v1636 = vld [vmem:[#allocation2 + $0xe8] sm:$0xf]
    %v1637 = vld [vmem:[#allocation2 + $0xec] sm:$0xf]
    %v1638 = vld [vmem:[#allocation2 + $0xf0] sm:$0xf]
    %v1639 = vld [vmem:[#allocation2 + $0xf4] sm:$0xf]
    %v1640 = vld [vmem:[#allocation2 + $0xf8] sm:$0xf]
    %v1641 = vld [vmem:[#allocation2 + $0xfc] sm:$0xf]
    %v1642 = vld [vmem:[#allocation2 + $0x100] sm:$0xf]
    %v1643 = vld [vmem:[#allocation2 + $0x104] sm:$0xf]
    %v1644 = vld [vmem:[#allocation2 + $0x108] sm:$0xf]
    %v1645 = vld [vmem:[#allocation2 + $0x10c] sm:$0xf]
    %1646 = vst.msk [vmem:[#allocation3] sm:$0xf] %vm98, %v1582
    %1647 = vst.msk [vmem:[#allocation3 + $0x4] sm:$0xf] %vm98, %v1583
    %1648 = vst.msk [vmem:[#allocation3 + $0x8] sm:$0xf] %vm98, %v1584
    %1649 = vst.msk [vmem:[#allocation3 + $0xc] sm:$0xf] %vm98, %v1585
    %1650 = vst.msk [vmem:[#allocation3 + $0x10] sm:$0xf] %vm98, %v1586
    %1651 = vst.msk [vmem:[#allocation3 + $0x14] sm:$0xf] %vm98, %v1587
    %1652 = vst.msk [vmem:[#allocation3 + $0x18] sm:$0xf] %vm98, %v1588
    %1653 = vst.msk [vmem:[#allocation3 + $0x1c] sm:$0xf] %vm98, %v1589
    %1654 = vst.msk [vmem:[#allocation3 + $0x20] sm:$0xf] %vm98, %v1590
    %1655 = vst.msk [vmem:[#allocation3 + $0x24] sm:$0xf] %vm98, %v1591
    %1656 = vst.msk [vmem:[#allocation3 + $0x28] sm:$0xf] %vm98, %v1592
    %1657 = vst.msk [vmem:[#allocation3 + $0x2c] sm:$0xf] %vm98, %v1593
    %1658 = vst.msk [vmem:[#allocation3 + $0x30] sm:$0xf] %vm98, %v1594
    %1659 = vst.msk [vmem:[#allocation3 + $0x34] sm:$0xf] %vm98, %v1595
    %1660 = vst.msk [vmem:[#allocation3 + $0x38] sm:$0xf] %vm98, %v1596
    %1661 = vst.msk [vmem:[#allocation3 + $0x3c] sm:$0xf] %vm98, %v1597
    %1662 = vst.msk [vmem:[#allocation3 + $0x40] sm:$0xf] %vm98, %v1598
    %1663 = vst.msk [vmem:[#allocation3 + $0x44] sm:$0xf] %vm98, %v1599
    %1664 = vst.msk [vmem:[#allocation3 + $0x48] sm:$0xf] %vm98, %v1600
    %1665 = vst.msk [vmem:[#allocation3 + $0x4c] sm:$0xf] %vm98, %v1601
    %1666 = vst.msk [vmem:[#allocation3 + $0x50] sm:$0xf] %vm98, %v1602
    %1667 = vst.msk [vmem:[#allocation3 + $0x54] sm:$0xf] %vm98, %v1603
    %1668 = vst.msk [vmem:[#allocation3 + $0x58] sm:$0xf] %vm98, %v1604
    %1669 = vst.msk [vmem:[#allocation3 + $0x5c] sm:$0xf] %vm98, %v1605
    %1670 = vst.msk [vmem:[#allocation3 + $0x60] sm:$0xf] %vm98, %v1606
    %1671 = vst.msk [vmem:[#allocation3 + $0x64] sm:$0xf] %vm98, %v1607
    %1672 = vst.msk [vmem:[#allocation3 + $0x68] sm:$0xf] %vm98, %v1608
    %1673 = vst.msk [vmem:[#allocation3 + $0x6c] sm:$0xf] %vm98, %v1609
    %1674 = vst.msk [vmem:[#allocation3 + $0x70] sm:$0xf] %vm98, %v1610
    %1675 = vst.msk [vmem:[#allocation3 + $0x74] sm:$0xf] %vm98, %v1611
    %1676 = vst.msk [vmem:[#allocation3 + $0x78] sm:$0xf] %vm98, %v1612
    %1677 = vst.msk [vmem:[#allocation3 + $0x7c] sm:$0xf] %vm98, %v1613
    %1678 = vst.msk [vmem:[#allocation3 + $0x80] sm:$0xf] %vm98, %v1614
    %1679 = vst.msk [vmem:[#allocation3 + $0x84] sm:$0xf] %vm98, %v1615
    %1680 = vst.msk [vmem:[#allocation3 + $0x88] sm:$0xf] %vm98, %v1616
    %1681 = vst.msk [vmem:[#allocation3 + $0x8c] sm:$0xf] %vm98, %v1617
    %1682 = vst.msk [vmem:[#allocation3 + $0x90] sm:$0xf] %vm98, %v1618
    %1683 = vst.msk [vmem:[#allocation3 + $0x94] sm:$0xf] %vm98, %v1619
    %1684 = vst.msk [vmem:[#allocation3 + $0x98] sm:$0xf] %vm98, %v1620
    %1685 = vst.msk [vmem:[#allocation3 + $0x9c] sm:$0xf] %vm98, %v1621
    %1686 = vst.msk [vmem:[#allocation3 + $0xa0] sm:$0xf] %vm98, %v1622
    %1687 = vst.msk [vmem:[#allocation3 + $0xa4] sm:$0xf] %vm98, %v1623
    %1688 = vst.msk [vmem:[#allocation3 + $0xa8] sm:$0xf] %vm98, %v1624
    %1689 = vst.msk [vmem:[#allocation3 + $0xac] sm:$0xf] %vm98, %v1625
    %1690 = vst.msk [vmem:[#allocation3 + $0xb0] sm:$0xf] %vm98, %v1626
    %1691 = vst.msk [vmem:[#allocation3 + $0xb4] sm:$0xf] %vm98, %v1627
    %1692 = vst.msk [vmem:[#allocation3 + $0xb8] sm:$0xf] %vm98, %v1628
    %1693 = vst.msk [vmem:[#allocation3 + $0xbc] sm:$0xf] %vm98, %v1629
    %1694 = vst.msk [vmem:[#allocation3 + $0xc0] sm:$0xf] %vm98, %v1630
    %1695 = vst.msk [vmem:[#allocation3 + $0xc4] sm:$0xf] %vm98, %v1631
    %1696 = vst.msk [vmem:[#allocation3 + $0xc8] sm:$0xf] %vm98, %v1632
    %1697 = vst.msk [vmem:[#allocation3 + $0xcc] sm:$0xf] %vm98, %v1633
    %1698 = vst.msk [vmem:[#allocation3 + $0xd0] sm:$0xf] %vm98, %v1634
    %1699 = vst.msk [vmem:[#allocation3 + $0xd4] sm:$0xf] %vm98, %v1635
    %1700 = vst.msk [vmem:[#allocation3 + $0xd8] sm:$0xf] %vm98, %v1636
    %1701 = vst.msk [vmem:[#allocation3 + $0xdc] sm:$0xf] %vm98, %v1637
    %1702 = vst.msk [vmem:[#allocation3 + $0xe0] sm:$0xf] %vm98, %v1638
    %1703 = vst.msk [vmem:[#allocation3 + $0xe4] sm:$0xf] %vm98, %v1639
    %1704 = vst.msk [vmem:[#allocation3 + $0xe8] sm:$0xf] %vm98, %v1640
    %1705 = vst.msk [vmem:[#allocation3 + $0xec] sm:$0xf] %vm98, %v1641
    %1706 = vst.msk [vmem:[#allocation3 + $0xf0] sm:$0xf] %vm98, %v1642
    %1707 = vst.msk [vmem:[#allocation3 + $0xf4] sm:$0xf] %vm98, %v1643
    %1708 = vst.msk [vmem:[#allocation3 + $0xf8] sm:$0xf] %vm98, %v1644
    %1709 = vst.msk [vmem:[#allocation3 + $0xfc] sm:$0xf] %vm98, %v1645
    %s1710 = scalar_lea.vmem [#allocation2], 288
    %v1711 = vld [vmem:[%s1710] sm:$0xf]
    %v1712 = vld [vmem:[%s1710 + $0x4] sm:$0xf]
    %v1713 = vld [vmem:[%s1710 + $0x8] sm:$0xf]
    %v1714 = vld [vmem:[%s1710 + $0xc] sm:$0xf]
    %v1715 = vld [vmem:[%s1710 + $0x10] sm:$0xf]
    %v1716 = vld [vmem:[%s1710 + $0x14] sm:$0xf]
    %v1717 = vld [vmem:[%s1710 + $0x18] sm:$0xf]
    %v1718 = vld [vmem:[%s1710 + $0x1c] sm:$0xf]
    %v1719 = vld [vmem:[%s1710 + $0x20] sm:$0xf]
    %v1720 = vld [vmem:[%s1710 + $0x24] sm:$0xf]
    %v1721 = vld [vmem:[%s1710 + $0x28] sm:$0xf]
    %v1722 = vld [vmem:[%s1710 + $0x2c] sm:$0xf]
    %v1723 = vld [vmem:[%s1710 + $0x30] sm:$0xf]
    %v1724 = vld [vmem:[%s1710 + $0x34] sm:$0xf]
    %v1725 = vld [vmem:[%s1710 + $0x38] sm:$0xf]
    %v1726 = vld [vmem:[%s1710 + $0x3c] sm:$0xf]
    %v1727 = vld [vmem:[%s1710 + $0x40] sm:$0xf]
    %v1728 = vld [vmem:[%s1710 + $0x44] sm:$0xf]
    %v1729 = vld [vmem:[%s1710 + $0x48] sm:$0xf]
    %v1730 = vld [vmem:[%s1710 + $0x4c] sm:$0xf]
    %v1731 = vld [vmem:[%s1710 + $0x50] sm:$0xf]
    %v1732 = vld [vmem:[%s1710 + $0x54] sm:$0xf]
    %v1733 = vld [vmem:[%s1710 + $0x58] sm:$0xf]
    %v1734 = vld [vmem:[%s1710 + $0x5c] sm:$0xf]
    %v1735 = vld [vmem:[%s1710 + $0x60] sm:$0xf]
    %v1736 = vld [vmem:[%s1710 + $0x64] sm:$0xf]
    %v1737 = vld [vmem:[%s1710 + $0x68] sm:$0xf]
    %v1738 = vld [vmem:[%s1710 + $0x6c] sm:$0xf]
    %v1739 = vld [vmem:[%s1710 + $0x70] sm:$0xf]
    %v1740 = vld [vmem:[%s1710 + $0x74] sm:$0xf]
    %v1741 = vld [vmem:[%s1710 + $0x78] sm:$0xf]
    %v1742 = vld [vmem:[%s1710 + $0x7c] sm:$0xf]
    %v1743 = vld [vmem:[%s1710 + $0x90] sm:$0xf]
    %v1744 = vld [vmem:[%s1710 + $0x94] sm:$0xf]
    %v1745 = vld [vmem:[%s1710 + $0x98] sm:$0xf]
    %v1746 = vld [vmem:[%s1710 + $0x9c] sm:$0xf]
    %v1747 = vld [vmem:[%s1710 + $0xa0] sm:$0xf]
    %v1748 = vld [vmem:[%s1710 + $0xa4] sm:$0xf]
    %v1749 = vld [vmem:[%s1710 + $0xa8] sm:$0xf]
    %v1750 = vld [vmem:[%s1710 + $0xac] sm:$0xf]
    %v1751 = vld [vmem:[%s1710 + $0xb0] sm:$0xf]
    %v1752 = vld [vmem:[%s1710 + $0xb4] sm:$0xf]
    %v1753 = vld [vmem:[%s1710 + $0xb8] sm:$0xf]
    %v1754 = vld [vmem:[%s1710 + $0xbc] sm:$0xf]
    %v1755 = vld [vmem:[%s1710 + $0xc0] sm:$0xf]
    %v1756 = vld [vmem:[%s1710 + $0xc4] sm:$0xf]
    %v1757 = vld [vmem:[%s1710 + $0xc8] sm:$0xf]
    %v1758 = vld [vmem:[%s1710 + $0xcc] sm:$0xf]
    %v1759 = vld [vmem:[%s1710 + $0xd0] sm:$0xf]
    %v1760 = vld [vmem:[%s1710 + $0xd4] sm:$0xf]
    %v1761 = vld [vmem:[%s1710 + $0xd8] sm:$0xf]
    %v1762 = vld [vmem:[%s1710 + $0xdc] sm:$0xf]
    %v1763 = vld [vmem:[%s1710 + $0xe0] sm:$0xf]
    %v1764 = vld [vmem:[%s1710 + $0xe4] sm:$0xf]
    %v1765 = vld [vmem:[%s1710 + $0xe8] sm:$0xf]
    %v1766 = vld [vmem:[%s1710 + $0xec] sm:$0xf]
    %v1767 = vld [vmem:[%s1710 + $0xf0] sm:$0xf]
    %v1768 = vld [vmem:[%s1710 + $0xf4] sm:$0xf]
    %v1769 = vld [vmem:[%s1710 + $0xf8] sm:$0xf]
    %v1770 = vld [vmem:[%s1710 + $0xfc] sm:$0xf]
    %v1771 = vld [vmem:[%s1710 + $0x100] sm:$0xf]
    %v1772 = vld [vmem:[%s1710 + $0x104] sm:$0xf]
    %v1773 = vld [vmem:[%s1710 + $0x108] sm:$0xf]
    %v1774 = vld [vmem:[%s1710 + $0x10c] sm:$0xf]
    %1839 = vrot.lane.b32.xlu0 %v1711, 8
    %v1840 = vpop.permute.xlu0 %1839
    %1841 = vrot.lane.b32.xlu0 %v1712, 8
    %v1842 = vpop.permute.xlu0 %1841
    %1843 = vrot.lane.b32.xlu0 %v1713, 8
    %v1844 = vpop.permute.xlu0 %1843
    %1845 = vrot.lane.b32.xlu0 %v1714, 8
    %v1846 = vpop.permute.xlu0 %1845
    %1847 = vrot.lane.b32.xlu0 %v1715, 8
    %v1848 = vpop.permute.xlu0 %1847
    %1849 = vrot.lane.b32.xlu0 %v1716, 8
    %v1850 = vpop.permute.xlu0 %1849
    %1851 = vrot.lane.b32.xlu0 %v1717, 8
    %v1852 = vpop.permute.xlu0 %1851
    %1853 = vrot.lane.b32.xlu0 %v1718, 8
    %v1854 = vpop.permute.xlu0 %1853
    %1855 = vrot.lane.b32.xlu0 %v1719, 8
    %v1856 = vpop.permute.xlu0 %1855
    %1857 = vrot.lane.b32.xlu0 %v1720, 8
    %v1858 = vpop.permute.xlu0 %1857
    %1859 = vrot.lane.b32.xlu0 %v1721, 8
    %v1860 = vpop.permute.xlu0 %1859
    %1861 = vrot.lane.b32.xlu0 %v1722, 8
    %v1862 = vpop.permute.xlu0 %1861
    %1863 = vrot.lane.b32.xlu0 %v1723, 8
    %v1864 = vpop.permute.xlu0 %1863
    %1865 = vrot.lane.b32.xlu0 %v1724, 8
    %v1866 = vpop.permute.xlu0 %1865
    %1867 = vrot.lane.b32.xlu0 %v1725, 8
    %v1868 = vpop.permute.xlu0 %1867
    %1869 = vrot.lane.b32.xlu0 %v1726, 8
    %v1870 = vpop.permute.xlu0 %1869
    %1871 = vrot.lane.b32.xlu0 %v1727, 8
    %v1872 = vpop.permute.xlu0 %1871
    %1873 = vrot.lane.b32.xlu0 %v1728, 8
    %v1874 = vpop.permute.xlu0 %1873
    %1875 = vrot.lane.b32.xlu0 %v1729, 8
    %v1876 = vpop.permute.xlu0 %1875
    %1877 = vrot.lane.b32.xlu0 %v1730, 8
    %v1878 = vpop.permute.xlu0 %1877
    %1879 = vrot.lane.b32.xlu0 %v1731, 8
    %v1880 = vpop.permute.xlu0 %1879
    %1881 = vrot.lane.b32.xlu0 %v1732, 8
    %v1882 = vpop.permute.xlu0 %1881
    %1883 = vrot.lane.b32.xlu0 %v1733, 8
    %v1884 = vpop.permute.xlu0 %1883
    %1885 = vrot.lane.b32.xlu0 %v1734, 8
    %v1886 = vpop.permute.xlu0 %1885
    %1887 = vrot.lane.b32.xlu0 %v1735, 8
    %v1888 = vpop.permute.xlu0 %1887
    %1889 = vrot.lane.b32.xlu0 %v1736, 8
    %v1890 = vpop.permute.xlu0 %1889
    %1891 = vrot.lane.b32.xlu0 %v1737, 8
    %v1892 = vpop.permute.xlu0 %1891
    %1893 = vrot.lane.b32.xlu0 %v1738, 8
    %v1894 = vpop.permute.xlu0 %1893
    %1895 = vrot.lane.b32.xlu0 %v1739, 8
    %v1896 = vpop.permute.xlu0 %1895
    %1897 = vrot.lane.b32.xlu0 %v1740, 8
    %v1898 = vpop.permute.xlu0 %1897
    %1899 = vrot.lane.b32.xlu0 %v1741, 8
    %v1900 = vpop.permute.xlu0 %1899
    %1901 = vrot.lane.b32.xlu0 %v1742, 8
    %v1902 = vpop.permute.xlu0 %1901
    %1903 = vrot.lane.b32.xlu0 %v1743, 8
    %v1904 = vpop.permute.xlu0 %1903
    %1905 = vrot.lane.b32.xlu0 %v1744, 8
    %v1906 = vpop.permute.xlu0 %1905
    %1907 = vrot.lane.b32.xlu0 %v1745, 8
    %v1908 = vpop.permute.xlu0 %1907
    %1909 = vrot.lane.b32.xlu0 %v1746, 8
    %v1910 = vpop.permute.xlu0 %1909
    %1911 = vrot.lane.b32.xlu0 %v1747, 8
    %v1912 = vpop.permute.xlu0 %1911
    %1913 = vrot.lane.b32.xlu0 %v1748, 8
    %v1914 = vpop.permute.xlu0 %1913
    %1915 = vrot.lane.b32.xlu0 %v1749, 8
    %v1916 = vpop.permute.xlu0 %1915
    %1917 = vrot.lane.b32.xlu0 %v1750, 8
    %v1918 = vpop.permute.xlu0 %1917
    %1919 = vrot.lane.b32.xlu0 %v1751, 8
    %v1920 = vpop.permute.xlu0 %1919
    %1921 = vrot.lane.b32.xlu0 %v1752, 8
    %v1922 = vpop.permute.xlu0 %1921
    %1923 = vrot.lane.b32.xlu0 %v1753, 8
    %v1924 = vpop.permute.xlu0 %1923
    %1925 = vrot.lane.b32.xlu0 %v1754, 8
    %v1926 = vpop.permute.xlu0 %1925
    %1927 = vrot.lane.b32.xlu0 %v1755, 8
    %v1928 = vpop.permute.xlu0 %1927
    %1929 = vrot.lane.b32.xlu0 %v1756, 8
    %v1930 = vpop.permute.xlu0 %1929
    %1931 = vrot.lane.b32.xlu0 %v1757, 8
    %v1932 = vpop.permute.xlu0 %1931
    %1933 = vrot.lane.b32.xlu0 %v1758, 8
    %v1934 = vpop.permute.xlu0 %1933
    %1935 = vrot.lane.b32.xlu0 %v1759, 8
    %v1936 = vpop.permute.xlu0 %1935
    %1937 = vrot.lane.b32.xlu0 %v1760, 8
    %v1938 = vpop.permute.xlu0 %1937
    %1939 = vrot.lane.b32.xlu0 %v1761, 8
    %v1940 = vpop.permute.xlu0 %1939
    %1941 = vrot.lane.b32.xlu0 %v1762, 8
    %v1942 = vpop.permute.xlu0 %1941
    %1943 = vrot.lane.b32.xlu0 %v1763, 8
    %v1944 = vpop.permute.xlu0 %1943
    %1945 = vrot.lane.b32.xlu0 %v1764, 8
    %v1946 = vpop.permute.xlu0 %1945
    %1947 = vrot.lane.b32.xlu0 %v1765, 8
    %v1948 = vpop.permute.xlu0 %1947
    %1949 = vrot.lane.b32.xlu0 %v1766, 8
    %v1950 = vpop.permute.xlu0 %1949
    %1951 = vrot.lane.b32.xlu0 %v1767, 8
    %v1952 = vpop.permute.xlu0 %1951
    %1953 = vrot.lane.b32.xlu0 %v1768, 8
    %v1954 = vpop.permute.xlu0 %1953
    %1955 = vrot.lane.b32.xlu0 %v1769, 8
    %v1956 = vpop.permute.xlu0 %1955
    %1957 = vrot.lane.b32.xlu0 %v1770, 8
    %v1958 = vpop.permute.xlu0 %1957
    %1959 = vrot.lane.b32.xlu0 %v1771, 8
    %v1960 = vpop.permute.xlu0 %1959
    %1961 = vrot.lane.b32.xlu0 %v1772, 8
    %v1962 = vpop.permute.xlu0 %1961
    %1963 = vrot.lane.b32.xlu0 %v1773, 8
    %v1964 = vpop.permute.xlu0 %1963
    %1965 = vrot.lane.b32.xlu0 %v1774, 8
    %v1966 = vpop.permute.xlu0 %1965
    %vm2031 = vcmask 126016
    %2032 = vst.msk [vmem:[#allocation3] sm:$0xf] %vm2031, %v1840
    %2033 = vst.msk [vmem:[#allocation3 + $0x4] sm:$0xf] %vm2031, %v1842
    %2034 = vst.msk [vmem:[#allocation3 + $0x8] sm:$0xf] %vm2031, %v1844
    %2035 = vst.msk [vmem:[#allocation3 + $0xc] sm:$0xf] %vm2031, %v1846
    %2036 = vst.msk [vmem:[#allocation3 + $0x10] sm:$0xf] %vm2031, %v1848
    %2037 = vst.msk [vmem:[#allocation3 + $0x14] sm:$0xf] %vm2031, %v1850
    %2038 = vst.msk [vmem:[#allocation3 + $0x18] sm:$0xf] %vm2031, %v1852
    %2039 = vst.msk [vmem:[#allocation3 + $0x1c] sm:$0xf] %vm2031, %v1854
    %2040 = vst.msk [vmem:[#allocation3 + $0x20] sm:$0xf] %vm2031, %v1856
    %2041 = vst.msk [vmem:[#allocation3 + $0x24] sm:$0xf] %vm2031, %v1858
    %2042 = vst.msk [vmem:[#allocation3 + $0x28] sm:$0xf] %vm2031, %v1860
    %2043 = vst.msk [vmem:[#allocation3 + $0x2c] sm:$0xf] %vm2031, %v1862
    %2044 = vst.msk [vmem:[#allocation3 + $0x30] sm:$0xf] %vm2031, %v1864
    %2045 = vst.msk [vmem:[#allocation3 + $0x34] sm:$0xf] %vm2031, %v1866
    %2046 = vst.msk [vmem:[#allocation3 + $0x38] sm:$0xf] %vm2031, %v1868
    %2047 = vst.msk [vmem:[#allocation3 + $0x3c] sm:$0xf] %vm2031, %v1870
    %2048 = vst.msk [vmem:[#allocation3 + $0x40] sm:$0xf] %vm2031, %v1872
    %2049 = vst.msk [vmem:[#allocation3 + $0x44] sm:$0xf] %vm2031, %v1874
    %2050 = vst.msk [vmem:[#allocation3 + $0x48] sm:$0xf] %vm2031, %v1876
    %2051 = vst.msk [vmem:[#allocation3 + $0x4c] sm:$0xf] %vm2031, %v1878
    %2052 = vst.msk [vmem:[#allocation3 + $0x50] sm:$0xf] %vm2031, %v1880
    %2053 = vst.msk [vmem:[#allocation3 + $0x54] sm:$0xf] %vm2031, %v1882
    %2054 = vst.msk [vmem:[#allocation3 + $0x58] sm:$0xf] %vm2031, %v1884
    %2055 = vst.msk [vmem:[#allocation3 + $0x5c] sm:$0xf] %vm2031, %v1886
    %2056 = vst.msk [vmem:[#allocation3 + $0x60] sm:$0xf] %vm2031, %v1888
    %2057 = vst.msk [vmem:[#allocation3 + $0x64] sm:$0xf] %vm2031, %v1890
    %2058 = vst.msk [vmem:[#allocation3 + $0x68] sm:$0xf] %vm2031, %v1892
    %2059 = vst.msk [vmem:[#allocation3 + $0x6c] sm:$0xf] %vm2031, %v1894
    %2060 = vst.msk [vmem:[#allocation3 + $0x70] sm:$0xf] %vm2031, %v1896
    %2061 = vst.msk [vmem:[#allocation3 + $0x74] sm:$0xf] %vm2031, %v1898
    %2062 = vst.msk [vmem:[#allocation3 + $0x78] sm:$0xf] %vm2031, %v1900
    %2063 = vst.msk [vmem:[#allocation3 + $0x7c] sm:$0xf] %vm2031, %v1902
    %2064 = vst.msk [vmem:[#allocation3 + $0x80] sm:$0xf] %vm2031, %v1904
    %2065 = vst.msk [vmem:[#allocation3 + $0x84] sm:$0xf] %vm2031, %v1906
    %2066 = vst.msk [vmem:[#allocation3 + $0x88] sm:$0xf] %vm2031, %v1908
    %2067 = vst.msk [vmem:[#allocation3 + $0x8c] sm:$0xf] %vm2031, %v1910
    %2068 = vst.msk [vmem:[#allocation3 + $0x90] sm:$0xf] %vm2031, %v1912
    %2069 = vst.msk [vmem:[#allocation3 + $0x94] sm:$0xf] %vm2031, %v1914
    %2070 = vst.msk [vmem:[#allocation3 + $0x98] sm:$0xf] %vm2031, %v1916
    %2071 = vst.msk [vmem:[#allocation3 + $0x9c] sm:$0xf] %vm2031, %v1918
    %2072 = vst.msk [vmem:[#allocation3 + $0xa0] sm:$0xf] %vm2031, %v1920
    %2073 = vst.msk [vmem:[#allocation3 + $0xa4] sm:$0xf] %vm2031, %v1922
    %2074 = vst.msk [vmem:[#allocation3 + $0xa8] sm:$0xf] %vm2031, %v1924
    %2075 = vst.msk [vmem:[#allocation3 + $0xac] sm:$0xf] %vm2031, %v1926
    %2076 = vst.msk [vmem:[#allocation3 + $0xb0] sm:$0xf] %vm2031, %v1928
    %2077 = vst.msk [vmem:[#allocation3 + $0xb4] sm:$0xf] %vm2031, %v1930
    %2078 = vst.msk [vmem:[#allocation3 + $0xb8] sm:$0xf] %vm2031, %v1932
    %2079 = vst.msk [vmem:[#allocation3 + $0xbc] sm:$0xf] %vm2031, %v1934
    %2080 = vst.msk [vmem:[#allocation3 + $0xc0] sm:$0xf] %vm2031, %v1936
    %2081 = vst.msk [vmem:[#allocation3 + $0xc4] sm:$0xf] %vm2031, %v1938
    %2082 = vst.msk [vmem:[#allocation3 + $0xc8] sm:$0xf] %vm2031, %v1940
    %2083 = vst.msk [vmem:[#allocation3 + $0xcc] sm:$0xf] %vm2031, %v1942
    %2084 = vst.msk [vmem:[#allocation3 + $0xd0] sm:$0xf] %vm2031, %v1944
    %2085 = vst.msk [vmem:[#allocation3 + $0xd4] sm:$0xf] %vm2031, %v1946
    %2086 = vst.msk [vmem:[#allocation3 + $0xd8] sm:$0xf] %vm2031, %v1948
    %2087 = vst.msk [vmem:[#allocation3 + $0xdc] sm:$0xf] %vm2031, %v1950
    %2088 = vst.msk [vmem:[#allocation3 + $0xe0] sm:$0xf] %vm2031, %v1952
    %2089 = vst.msk [vmem:[#allocation3 + $0xe4] sm:$0xf] %vm2031, %v1954
    %2090 = vst.msk [vmem:[#allocation3 + $0xe8] sm:$0xf] %vm2031, %v1956
    %2091 = vst.msk [vmem:[#allocation3 + $0xec] sm:$0xf] %vm2031, %v1958
    %2092 = vst.msk [vmem:[#allocation3 + $0xf0] sm:$0xf] %vm2031, %v1960
    %2093 = vst.msk [vmem:[#allocation3 + $0xf4] sm:$0xf] %vm2031, %v1962
    %2094 = vst.msk [vmem:[#allocation3 + $0xf8] sm:$0xf] %vm2031, %v1964
    %2095 = vst.msk [vmem:[#allocation3 + $0xfc] sm:$0xf] %vm2031, %v1966
    %s2096 = scalar_lea.vmem [#allocation2], 576
    %v2097 = vld [vmem:[%s2096] sm:$0xf]
    %v2098 = vld [vmem:[%s2096 + $0x4] sm:$0xf]
    %v2099 = vld [vmem:[%s2096 + $0x8] sm:$0xf]
    %v2100 = vld [vmem:[%s2096 + $0xc] sm:$0xf]
    %v2101 = vld [vmem:[%s2096 + $0x10] sm:$0xf]
    %v2102 = vld [vmem:[%s2096 + $0x14] sm:$0xf]
    %v2103 = vld [vmem:[%s2096 + $0x18] sm:$0xf]
    %v2104 = vld [vmem:[%s2096 + $0x1c] sm:$0xf]
    %v2105 = vld [vmem:[%s2096 + $0x20] sm:$0xf]
    %v2106 = vld [vmem:[%s2096 + $0x24] sm:$0xf]
    %v2107 = vld [vmem:[%s2096 + $0x28] sm:$0xf]
    %v2108 = vld [vmem:[%s2096 + $0x2c] sm:$0xf]
    %v2109 = vld [vmem:[%s2096 + $0x30] sm:$0xf]
    %v2110 = vld [vmem:[%s2096 + $0x34] sm:$0xf]
    %v2111 = vld [vmem:[%s2096 + $0x38] sm:$0xf]
    %v2112 = vld [vmem:[%s2096 + $0x3c] sm:$0xf]
    %v2113 = vld [vmem:[%s2096 + $0x40] sm:$0xf]
    %v2114 = vld [vmem:[%s2096 + $0x44] sm:$0xf]
    %v2115 = vld [vmem:[%s2096 + $0x48] sm:$0xf]
    %v2116 = vld [vmem:[%s2096 + $0x4c] sm:$0xf]
    %v2117 = vld [vmem:[%s2096 + $0x50] sm:$0xf]
    %v2118 = vld [vmem:[%s2096 + $0x54] sm:$0xf]
    %v2119 = vld [vmem:[%s2096 + $0x58] sm:$0xf]
    %v2120 = vld [vmem:[%s2096 + $0x5c] sm:$0xf]
    %v2121 = vld [vmem:[%s2096 + $0x60] sm:$0xf]
    %v2122 = vld [vmem:[%s2096 + $0x64] sm:$0xf]
    %v2123 = vld [vmem:[%s2096 + $0x68] sm:$0xf]
    %v2124 = vld [vmem:[%s2096 + $0x6c] sm:$0xf]
    %v2125 = vld [vmem:[%s2096 + $0x70] sm:$0xf]
    %v2126 = vld [vmem:[%s2096 + $0x74] sm:$0xf]
    %v2127 = vld [vmem:[%s2096 + $0x78] sm:$0xf]
    %v2128 = vld [vmem:[%s2096 + $0x7c] sm:$0xf]
    %v2129 = vld [vmem:[%s2096 + $0x90] sm:$0xf]
    %v2130 = vld [vmem:[%s2096 + $0x94] sm:$0xf]
    %v2131 = vld [vmem:[%s2096 + $0x98] sm:$0xf]
    %v2132 = vld [vmem:[%s2096 + $0x9c] sm:$0xf]
    %v2133 = vld [vmem:[%s2096 + $0xa0] sm:$0xf]
    %v2134 = vld [vmem:[%s2096 + $0xa4] sm:$0xf]
    %v2135 = vld [vmem:[%s2096 + $0xa8] sm:$0xf]
    %v2136 = vld [vmem:[%s2096 + $0xac] sm:$0xf]
    %v2137 = vld [vmem:[%s2096 + $0xb0] sm:$0xf]
    %v2138 = vld [vmem:[%s2096 + $0xb4] sm:$0xf]
    %v2139 = vld [vmem:[%s2096 + $0xb8] sm:$0xf]
    %v2140 = vld [vmem:[%s2096 + $0xbc] sm:$0xf]
    %v2141 = vld [vmem:[%s2096 + $0xc0] sm:$0xf]
    %v2142 = vld [vmem:[%s2096 + $0xc4] sm:$0xf]
    %v2143 = vld [vmem:[%s2096 + $0xc8] sm:$0xf]
    %v2144 = vld [vmem:[%s2096 + $0xcc] sm:$0xf]
    %v2145 = vld [vmem:[%s2096 + $0xd0] sm:$0xf]
    %v2146 = vld [vmem:[%s2096 + $0xd4] sm:$0xf]
    %v2147 = vld [vmem:[%s2096 + $0xd8] sm:$0xf]
    %v2148 = vld [vmem:[%s2096 + $0xdc] sm:$0xf]
    %v2149 = vld [vmem:[%s2096 + $0xe0] sm:$0xf]
    %v2150 = vld [vmem:[%s2096 + $0xe4] sm:$0xf]
    %v2151 = vld [vmem:[%s2096 + $0xe8] sm:$0xf]
    %v2152 = vld [vmem:[%s2096 + $0xec] sm:$0xf]
    %v2153 = vld [vmem:[%s2096 + $0xf0] sm:$0xf]
    %v2154 = vld [vmem:[%s2096 + $0xf4] sm:$0xf]
    %v2155 = vld [vmem:[%s2096 + $0xf8] sm:$0xf]
    %v2156 = vld [vmem:[%s2096 + $0xfc] sm:$0xf]
    %v2157 = vld [vmem:[%s2096 + $0x100] sm:$0xf]
    %v2158 = vld [vmem:[%s2096 + $0x104] sm:$0xf]
    %v2159 = vld [vmem:[%s2096 + $0x108] sm:$0xf]
    %v2160 = vld [vmem:[%s2096 + $0x10c] sm:$0xf]
    %2225 = vrot.lane.b32.xlu0 %v2097, 16
    %v2226 = vpop.permute.xlu0 %2225
    %2227 = vrot.lane.b32.xlu0 %v2098, 16
    %v2228 = vpop.permute.xlu0 %2227
    %2229 = vrot.lane.b32.xlu0 %v2099, 16
    %v2230 = vpop.permute.xlu0 %2229
    %2231 = vrot.lane.b32.xlu0 %v2100, 16
    %v2232 = vpop.permute.xlu0 %2231
    %2233 = vrot.lane.b32.xlu0 %v2101, 16
    %v2234 = vpop.permute.xlu0 %2233
    %2235 = vrot.lane.b32.xlu0 %v2102, 16
    %v2236 = vpop.permute.xlu0 %2235
    %2237 = vrot.lane.b32.xlu0 %v2103, 16
    %v2238 = vpop.permute.xlu0 %2237
    %2239 = vrot.lane.b32.xlu0 %v2104, 16
    %v2240 = vpop.permute.xlu0 %2239
    %2241 = vrot.lane.b32.xlu0 %v2105, 16
    %v2242 = vpop.permute.xlu0 %2241
    %2243 = vrot.lane.b32.xlu0 %v2106, 16
    %v2244 = vpop.permute.xlu0 %2243
    %2245 = vrot.lane.b32.xlu0 %v2107, 16
    %v2246 = vpop.permute.xlu0 %2245
    %2247 = vrot.lane.b32.xlu0 %v2108, 16
    %v2248 = vpop.permute.xlu0 %2247
    %2249 = vrot.lane.b32.xlu0 %v2109, 16
    %v2250 = vpop.permute.xlu0 %2249
    %2251 = vrot.lane.b32.xlu0 %v2110, 16
    %v2252 = vpop.permute.xlu0 %2251
    %2253 = vrot.lane.b32.xlu0 %v2111, 16
    %v2254 = vpop.permute.xlu0 %2253
    %2255 = vrot.lane.b32.xlu0 %v2112, 16
    %v2256 = vpop.permute.xlu0 %2255
    %2257 = vrot.lane.b32.xlu0 %v2113, 16
    %v2258 = vpop.permute.xlu0 %2257
    %2259 = vrot.lane.b32.xlu0 %v2114, 16
    %v2260 = vpop.permute.xlu0 %2259
    %2261 = vrot.lane.b32.xlu0 %v2115, 16
    %v2262 = vpop.permute.xlu0 %2261
    %2263 = vrot.lane.b32.xlu0 %v2116, 16
    %v2264 = vpop.permute.xlu0 %2263
    %2265 = vrot.lane.b32.xlu0 %v2117, 16
    %v2266 = vpop.permute.xlu0 %2265
    %2267 = vrot.lane.b32.xlu0 %v2118, 16
    %v2268 = vpop.permute.xlu0 %2267
    %2269 = vrot.lane.b32.xlu0 %v2119, 16
    %v2270 = vpop.permute.xlu0 %2269
    %2271 = vrot.lane.b32.xlu0 %v2120, 16
    %v2272 = vpop.permute.xlu0 %2271
    %2273 = vrot.lane.b32.xlu0 %v2121, 16
    %v2274 = vpop.permute.xlu0 %2273
    %2275 = vrot.lane.b32.xlu0 %v2122, 16
    %v2276 = vpop.permute.xlu0 %2275
    %2277 = vrot.lane.b32.xlu0 %v2123, 16
    %v2278 = vpop.permute.xlu0 %2277
    %2279 = vrot.lane.b32.xlu0 %v2124, 16
    %v2280 = vpop.permute.xlu0 %2279
    %2281 = vrot.lane.b32.xlu0 %v2125, 16
    %v2282 = vpop.permute.xlu0 %2281
    %2283 = vrot.lane.b32.xlu0 %v2126, 16
    %v2284 = vpop.permute.xlu0 %2283
    %2285 = vrot.lane.b32.xlu0 %v2127, 16
    %v2286 = vpop.permute.xlu0 %2285
    %2287 = vrot.lane.b32.xlu0 %v2128, 16
    %v2288 = vpop.permute.xlu0 %2287
    %2289 = vrot.lane.b32.xlu0 %v2129, 16
    %v2290 = vpop.permute.xlu0 %2289
    %2291 = vrot.lane.b32.xlu0 %v2130, 16
    %v2292 = vpop.permute.xlu0 %2291
    %2293 = vrot.lane.b32.xlu0 %v2131, 16
    %v2294 = vpop.permute.xlu0 %2293
    %2295 = vrot.lane.b32.xlu0 %v2132, 16
    %v2296 = vpop.permute.xlu0 %2295
    %2297 = vrot.lane.b32.xlu0 %v2133, 16
    %v2298 = vpop.permute.xlu0 %2297
    %2299 = vrot.lane.b32.xlu0 %v2134, 16
    %v2300 = vpop.permute.xlu0 %2299
    %2301 = vrot.lane.b32.xlu0 %v2135, 16
    %v2302 = vpop.permute.xlu0 %2301
    %2303 = vrot.lane.b32.xlu0 %v2136, 16
    %v2304 = vpop.permute.xlu0 %2303
    %2305 = vrot.lane.b32.xlu0 %v2137, 16
    %v2306 = vpop.permute.xlu0 %2305
    %2307 = vrot.lane.b32.xlu0 %v2138, 16
    %v2308 = vpop.permute.xlu0 %2307
    %2309 = vrot.lane.b32.xlu0 %v2139, 16
    %v2310 = vpop.permute.xlu0 %2309
    %2311 = vrot.lane.b32.xlu0 %v2140, 16
    %v2312 = vpop.permute.xlu0 %2311
    %2313 = vrot.lane.b32.xlu0 %v2141, 16
    %v2314 = vpop.permute.xlu0 %2313
    %2315 = vrot.lane.b32.xlu0 %v2142, 16
    %v2316 = vpop.permute.xlu0 %2315
    %2317 = vrot.lane.b32.xlu0 %v2143, 16
    %v2318 = vpop.permute.xlu0 %2317
    %2319 = vrot.lane.b32.xlu0 %v2144, 16
    %v2320 = vpop.permute.xlu0 %2319
    %2321 = vrot.lane.b32.xlu0 %v2145, 16
    %v2322 = vpop.permute.xlu0 %2321
    %2323 = vrot.lane.b32.xlu0 %v2146, 16
    %v2324 = vpop.permute.xlu0 %2323
    %2325 = vrot.lane.b32.xlu0 %v2147, 16
    %v2326 = vpop.permute.xlu0 %2325
    %2327 = vrot.lane.b32.xlu0 %v2148, 16
    %v2328 = vpop.permute.xlu0 %2327
    %2329 = vrot.lane.b32.xlu0 %v2149, 16
    %v2330 = vpop.permute.xlu0 %2329
    %2331 = vrot.lane.b32.xlu0 %v2150, 16
    %v2332 = vpop.permute.xlu0 %2331
    %2333 = vrot.lane.b32.xlu0 %v2151, 16
    %v2334 = vpop.permute.xlu0 %2333
    %2335 = vrot.lane.b32.xlu0 %v2152, 16
    %v2336 = vpop.permute.xlu0 %2335
    %2337 = vrot.lane.b32.xlu0 %v2153, 16
    %v2338 = vpop.permute.xlu0 %2337
    %2339 = vrot.lane.b32.xlu0 %v2154, 16
    %v2340 = vpop.permute.xlu0 %2339
    %2341 = vrot.lane.b32.xlu0 %v2155, 16
    %v2342 = vpop.permute.xlu0 %2341
    %2343 = vrot.lane.b32.xlu0 %v2156, 16
    %v2344 = vpop.permute.xlu0 %2343
    %2345 = vrot.lane.b32.xlu0 %v2157, 16
    %v2346 = vpop.permute.xlu0 %2345
    %2347 = vrot.lane.b32.xlu0 %v2158, 16
    %v2348 = vpop.permute.xlu0 %2347
    %2349 = vrot.lane.b32.xlu0 %v2159, 16
    %v2350 = vpop.permute.xlu0 %2349
    %2351 = vrot.lane.b32.xlu0 %v2160, 16
    %v2352 = vpop.permute.xlu0 %2351
    %vm2417 = vcmask 191616
    %2418 = vst.msk [vmem:[#allocation3] sm:$0xf] %vm2417, %v2226
    %2419 = vst.msk [vmem:[#allocation3 + $0x4] sm:$0xf] %vm2417, %v2228
    %2420 = vst.msk [vmem:[#allocation3 + $0x8] sm:$0xf] %vm2417, %v2230
    %2421 = vst.msk [vmem:[#allocation3 + $0xc] sm:$0xf] %vm2417, %v2232
    %2422 = vst.msk [vmem:[#allocation3 + $0x10] sm:$0xf] %vm2417, %v2234
    %2423 = vst.msk [vmem:[#allocation3 + $0x14] sm:$0xf] %vm2417, %v2236
    %2424 = vst.msk [vmem:[#allocation3 + $0x18] sm:$0xf] %vm2417, %v2238
    %2425 = vst.msk [vmem:[#allocation3 + $0x1c] sm:$0xf] %vm2417, %v2240
    %2426 = vst.msk [vmem:[#allocation3 + $0x20] sm:$0xf] %vm2417, %v2242
    %2427 = vst.msk [vmem:[#allocation3 + $0x24] sm:$0xf] %vm2417, %v2244
    %2428 = vst.msk [vmem:[#allocation3 + $0x28] sm:$0xf] %vm2417, %v2246
    %2429 = vst.msk [vmem:[#allocation3 + $0x2c] sm:$0xf] %vm2417, %v2248
    %2430 = vst.msk [vmem:[#allocation3 + $0x30] sm:$0xf] %vm2417, %v2250
    %2431 = vst.msk [vmem:[#allocation3 + $0x34] sm:$0xf] %vm2417, %v2252
    %2432 = vst.msk [vmem:[#allocation3 + $0x38] sm:$0xf] %vm2417, %v2254
    %2433 = vst.msk [vmem:[#allocation3 + $0x3c] sm:$0xf] %vm2417, %v2256
    %2434 = vst.msk [vmem:[#allocation3 + $0x40] sm:$0xf] %vm2417, %v2258
    %2435 = vst.msk [vmem:[#allocation3 + $0x44] sm:$0xf] %vm2417, %v2260
    %2436 = vst.msk [vmem:[#allocation3 + $0x48] sm:$0xf] %vm2417, %v2262
    %2437 = vst.msk [vmem:[#allocation3 + $0x4c] sm:$0xf] %vm2417, %v2264
    %2438 = vst.msk [vmem:[#allocation3 + $0x50] sm:$0xf] %vm2417, %v2266
    %2439 = vst.msk [vmem:[#allocation3 + $0x54] sm:$0xf] %vm2417, %v2268
    %2440 = vst.msk [vmem:[#allocation3 + $0x58] sm:$0xf] %vm2417, %v2270
    %2441 = vst.msk [vmem:[#allocation3 + $0x5c] sm:$0xf] %vm2417, %v2272
    %2442 = vst.msk [vmem:[#allocation3 + $0x60] sm:$0xf] %vm2417, %v2274
    %2443 = vst.msk [vmem:[#allocation3 + $0x64] sm:$0xf] %vm2417, %v2276
    %2444 = vst.msk [vmem:[#allocation3 + $0x68] sm:$0xf] %vm2417, %v2278
    %2445 = vst.msk [vmem:[#allocation3 + $0x6c] sm:$0xf] %vm2417, %v2280
    %2446 = vst.msk [vmem:[#allocation3 + $0x70] sm:$0xf] %vm2417, %v2282
    %2447 = vst.msk [vmem:[#allocation3 + $0x74] sm:$0xf] %vm2417, %v2284
    %2448 = vst.msk [vmem:[#allocation3 + $0x78] sm:$0xf] %vm2417, %v2286
    %2449 = vst.msk [vmem:[#allocation3 + $0x7c] sm:$0xf] %vm2417, %v2288
    %2450 = vst.msk [vmem:[#allocation3 + $0x80] sm:$0xf] %vm2417, %v2290
    %2451 = vst.msk [vmem:[#allocation3 + $0x84] sm:$0xf] %vm2417, %v2292
    %2452 = vst.msk [vmem:[#allocation3 + $0x88] sm:$0xf] %vm2417, %v2294
    %2453 = vst.msk [vmem:[#allocation3 + $0x8c] sm:$0xf] %vm2417, %v2296
    %2454 = vst.msk [vmem:[#allocation3 + $0x90] sm:$0xf] %vm2417, %v2298
    %2455 = vst.msk [vmem:[#allocation3 + $0x94] sm:$0xf] %vm2417, %v2300
    %2456 = vst.msk [vmem:[#allocation3 + $0x98] sm:$0xf] %vm2417, %v2302
    %2457 = vst.msk [vmem:[#allocation3 + $0x9c] sm:$0xf] %vm2417, %v2304
    %2458 = vst.msk [vmem:[#allocation3 + $0xa0] sm:$0xf] %vm2417, %v2306
    %2459 = vst.msk [vmem:[#allocation3 + $0xa4] sm:$0xf] %vm2417, %v2308
    %2460 = vst.msk [vmem:[#allocation3 + $0xa8] sm:$0xf] %vm2417, %v2310
    %2461 = vst.msk [vmem:[#allocation3 + $0xac] sm:$0xf] %vm2417, %v2312
    %2462 = vst.msk [vmem:[#allocation3 + $0xb0] sm:$0xf] %vm2417, %v2314
    %2463 = vst.msk [vmem:[#allocation3 + $0xb4] sm:$0xf] %vm2417, %v2316
    %2464 = vst.msk [vmem:[#allocation3 + $0xb8] sm:$0xf] %vm2417, %v2318
    %2465 = vst.msk [vmem:[#allocation3 + $0xbc] sm:$0xf] %vm2417, %v2320
    %2466 = vst.msk [vmem:[#allocation3 + $0xc0] sm:$0xf] %vm2417, %v2322
    %2467 = vst.msk [vmem:[#allocation3 + $0xc4] sm:$0xf] %vm2417, %v2324
    %2468 = vst.msk [vmem:[#allocation3 + $0xc8] sm:$0xf] %vm2417, %v2326
    %2469 = vst.msk [vmem:[#allocation3 + $0xcc] sm:$0xf] %vm2417, %v2328
    %2470 = vst.msk [vmem:[#allocation3 + $0xd0] sm:$0xf] %vm2417, %v2330
    %2471 = vst.msk [vmem:[#allocation3 + $0xd4] sm:$0xf] %vm2417, %v2332
    %2472 = vst.msk [vmem:[#allocation3 + $0xd8] sm:$0xf] %vm2417, %v2334
    %2473 = vst.msk [vmem:[#allocation3 + $0xdc] sm:$0xf] %vm2417, %v2336
    %2474 = vst.msk [vmem:[#allocation3 + $0xe0] sm:$0xf] %vm2417, %v2338
    %2475 = vst.msk [vmem:[#allocation3 + $0xe4] sm:$0xf] %vm2417, %v2340
    %2476 = vst.msk [vmem:[#allocation3 + $0xe8] sm:$0xf] %vm2417, %v2342
    %2477 = vst.msk [vmem:[#allocation3 + $0xec] sm:$0xf] %vm2417, %v2344
    %2478 = vst.msk [vmem:[#allocation3 + $0xf0] sm:$0xf] %vm2417, %v2346
    %2479 = vst.msk [vmem:[#allocation3 + $0xf4] sm:$0xf] %vm2417, %v2348
    %2480 = vst.msk [vmem:[#allocation3 + $0xf8] sm:$0xf] %vm2417, %v2350
    %2481 = vst.msk [vmem:[#allocation3 + $0xfc] sm:$0xf] %vm2417, %v2352
    %v2482 = vld [vmem:[%s124] sm:$0xf]
    %v2483 = vld [vmem:[%s124 + $0x4] sm:$0xf]
    %v2484 = vld [vmem:[%s124 + $0x8] sm:$0xf]
    %v2485 = vld [vmem:[%s124 + $0xc] sm:$0xf]
    %v2486 = vld [vmem:[%s124 + $0x10] sm:$0xf]
    %v2487 = vld [vmem:[%s124 + $0x14] sm:$0xf]
    %v2488 = vld [vmem:[%s124 + $0x18] sm:$0xf]
    %v2489 = vld [vmem:[%s124 + $0x1c] sm:$0xf]
    %v2490 = vld [vmem:[%s124 + $0x20] sm:$0xf]
    %v2491 = vld [vmem:[%s124 + $0x24] sm:$0xf]
    %v2492 = vld [vmem:[%s124 + $0x28] sm:$0xf]
    %v2493 = vld [vmem:[%s124 + $0x2c] sm:$0xf]
    %v2494 = vld [vmem:[%s124 + $0x30] sm:$0xf]
    %v2495 = vld [vmem:[%s124 + $0x34] sm:$0xf]
    %v2496 = vld [vmem:[%s124 + $0x38] sm:$0xf]
    %v2497 = vld [vmem:[%s124 + $0x3c] sm:$0xf]
    %v2498 = vld [vmem:[%s124 + $0x40] sm:$0xf]
    %v2499 = vld [vmem:[%s124 + $0x44] sm:$0xf]
    %v2500 = vld [vmem:[%s124 + $0x48] sm:$0xf]
    %v2501 = vld [vmem:[%s124 + $0x4c] sm:$0xf]
    %v2502 = vld [vmem:[%s124 + $0x50] sm:$0xf]
    %v2503 = vld [vmem:[%s124 + $0x54] sm:$0xf]
    %v2504 = vld [vmem:[%s124 + $0x58] sm:$0xf]
    %v2505 = vld [vmem:[%s124 + $0x5c] sm:$0xf]
    %v2506 = vld [vmem:[%s124 + $0x60] sm:$0xf]
    %v2507 = vld [vmem:[%s124 + $0x64] sm:$0xf]
    %v2508 = vld [vmem:[%s124 + $0x68] sm:$0xf]
    %v2509 = vld [vmem:[%s124 + $0x6c] sm:$0xf]
    %v2510 = vld [vmem:[%s124 + $0x70] sm:$0xf]
    %v2511 = vld [vmem:[%s124 + $0x74] sm:$0xf]
    %v2512 = vld [vmem:[%s124 + $0x78] sm:$0xf]
    %v2513 = vld [vmem:[%s124 + $0x7c] sm:$0xf]
    %v2514 = vld [vmem:[%s124 + $0x90] sm:$0xf]
    %v2515 = vld [vmem:[%s124 + $0x94] sm:$0xf]
    %v2516 = vld [vmem:[%s124 + $0x98] sm:$0xf]
    %v2517 = vld [vmem:[%s124 + $0x9c] sm:$0xf]
    %v2518 = vld [vmem:[%s124 + $0xa0] sm:$0xf]
    %v2519 = vld [vmem:[%s124 + $0xa4] sm:$0xf]
    %v2520 = vld [vmem:[%s124 + $0xa8] sm:$0xf]
    %v2521 = vld [vmem:[%s124 + $0xac] sm:$0xf]
    %v2522 = vld [vmem:[%s124 + $0xb0] sm:$0xf]
    %v2523 = vld [vmem:[%s124 + $0xb4] sm:$0xf]
    %v2524 = vld [vmem:[%s124 + $0xb8] sm:$0xf]
    %v2525 = vld [vmem:[%s124 + $0xbc] sm:$0xf]
    %v2526 = vld [vmem:[%s124 + $0xc0] sm:$0xf]
    %v2527 = vld [vmem:[%s124 + $0xc4] sm:$0xf]
    %v2528 = vld [vmem:[%s124 + $0xc8] sm:$0xf]
    %v2529 = vld [vmem:[%s124 + $0xcc] sm:$0xf]
    %v2530 = vld [vmem:[%s124 + $0xd0] sm:$0xf]
    %v2531 = vld [vmem:[%s124 + $0xd4] sm:$0xf]
    %v2532 = vld [vmem:[%s124 + $0xd8] sm:$0xf]
    %v2533 = vld [vmem:[%s124 + $0xdc] sm:$0xf]
    %v2534 = vld [vmem:[%s124 + $0xe0] sm:$0xf]
    %v2535 = vld [vmem:[%s124 + $0xe4] sm:$0xf]
    %v2536 = vld [vmem:[%s124 + $0xe8] sm:$0xf]
    %v2537 = vld [vmem:[%s124 + $0xec] sm:$0xf]
    %v2538 = vld [vmem:[%s124 + $0xf0] sm:$0xf]
    %v2539 = vld [vmem:[%s124 + $0xf4] sm:$0xf]
    %v2540 = vld [vmem:[%s124 + $0xf8] sm:$0xf]
    %v2541 = vld [vmem:[%s124 + $0xfc] sm:$0xf]
    %v2542 = vld [vmem:[%s124 + $0x100] sm:$0xf]
    %v2543 = vld [vmem:[%s124 + $0x104] sm:$0xf]
    %v2544 = vld [vmem:[%s124 + $0x108] sm:$0xf]
    %v2545 = vld [vmem:[%s124 + $0x10c] sm:$0xf]
    %2610 = vrot.lane.b32.xlu0 %v2482, 24
    %v2611 = vpop.permute.xlu0 %2610
    %2612 = vrot.lane.b32.xlu0 %v2483, 24
    %v2613 = vpop.permute.xlu0 %2612
    %2614 = vrot.lane.b32.xlu0 %v2484, 24
    %v2615 = vpop.permute.xlu0 %2614
    %2616 = vrot.lane.b32.xlu0 %v2485, 24
    %v2617 = vpop.permute.xlu0 %2616
    %2618 = vrot.lane.b32.xlu0 %v2486, 24
    %v2619 = vpop.permute.xlu0 %2618
    %2620 = vrot.lane.b32.xlu0 %v2487, 24
    %v2621 = vpop.permute.xlu0 %2620
    %2622 = vrot.lane.b32.xlu0 %v2488, 24
    %v2623 = vpop.permute.xlu0 %2622
    %2624 = vrot.lane.b32.xlu0 %v2489, 24
    %v2625 = vpop.permute.xlu0 %2624
    %2626 = vrot.lane.b32.xlu0 %v2490, 24
    %v2627 = vpop.permute.xlu0 %2626
    %2628 = vrot.lane.b32.xlu0 %v2491, 24
    %v2629 = vpop.permute.xlu0 %2628
    %2630 = vrot.lane.b32.xlu0 %v2492, 24
    %v2631 = vpop.permute.xlu0 %2630
    %2632 = vrot.lane.b32.xlu0 %v2493, 24
    %v2633 = vpop.permute.xlu0 %2632
    %2634 = vrot.lane.b32.xlu0 %v2494, 24
    %v2635 = vpop.permute.xlu0 %2634
    %2636 = vrot.lane.b32.xlu0 %v2495, 24
    %v2637 = vpop.permute.xlu0 %2636
    %2638 = vrot.lane.b32.xlu0 %v2496, 24
    %v2639 = vpop.permute.xlu0 %2638
    %2640 = vrot.lane.b32.xlu0 %v2497, 24
    %v2641 = vpop.permute.xlu0 %2640
    %2642 = vrot.lane.b32.xlu0 %v2498, 24
    %v2643 = vpop.permute.xlu0 %2642
    %2644 = vrot.lane.b32.xlu0 %v2499, 24
    %v2645 = vpop.permute.xlu0 %2644
    %2646 = vrot.lane.b32.xlu0 %v2500, 24
    %v2647 = vpop.permute.xlu0 %2646
    %2648 = vrot.lane.b32.xlu0 %v2501, 24
    %v2649 = vpop.permute.xlu0 %2648
    %2650 = vrot.lane.b32.xlu0 %v2502, 24
    %v2651 = vpop.permute.xlu0 %2650
    %2652 = vrot.lane.b32.xlu0 %v2503, 24
    %v2653 = vpop.permute.xlu0 %2652
    %2654 = vrot.lane.b32.xlu0 %v2504, 24
    %v2655 = vpop.permute.xlu0 %2654
    %2656 = vrot.lane.b32.xlu0 %v2505, 24
    %v2657 = vpop.permute.xlu0 %2656
    %2658 = vrot.lane.b32.xlu0 %v2506, 24
    %v2659 = vpop.permute.xlu0 %2658
    %2660 = vrot.lane.b32.xlu0 %v2507, 24
    %v2661 = vpop.permute.xlu0 %2660
    %2662 = vrot.lane.b32.xlu0 %v2508, 24
    %v2663 = vpop.permute.xlu0 %2662
    %2664 = vrot.lane.b32.xlu0 %v2509, 24
    %v2665 = vpop.permute.xlu0 %2664
    %2666 = vrot.lane.b32.xlu0 %v2510, 24
    %v2667 = vpop.permute.xlu0 %2666
    %2668 = vrot.lane.b32.xlu0 %v2511, 24
    %v2669 = vpop.permute.xlu0 %2668
    %2670 = vrot.lane.b32.xlu0 %v2512, 24
    %v2671 = vpop.permute.xlu0 %2670
    %2672 = vrot.lane.b32.xlu0 %v2513, 24
    %v2673 = vpop.permute.xlu0 %2672
    %2674 = vrot.lane.b32.xlu0 %v2514, 24
    %v2675 = vpop.permute.xlu0 %2674
    %2676 = vrot.lane.b32.xlu0 %v2515, 24
    %v2677 = vpop.permute.xlu0 %2676
    %2678 = vrot.lane.b32.xlu0 %v2516, 24
    %v2679 = vpop.permute.xlu0 %2678
    %2680 = vrot.lane.b32.xlu0 %v2517, 24
    %v2681 = vpop.permute.xlu0 %2680
    %2682 = vrot.lane.b32.xlu0 %v2518, 24
    %v2683 = vpop.permute.xlu0 %2682
    %2684 = vrot.lane.b32.xlu0 %v2519, 24
    %v2685 = vpop.permute.xlu0 %2684
    %2686 = vrot.lane.b32.xlu0 %v2520, 24
    %v2687 = vpop.permute.xlu0 %2686
    %2688 = vrot.lane.b32.xlu0 %v2521, 24
    %v2689 = vpop.permute.xlu0 %2688
    %2690 = vrot.lane.b32.xlu0 %v2522, 24
    %v2691 = vpop.permute.xlu0 %2690
    %2692 = vrot.lane.b32.xlu0 %v2523, 24
    %v2693 = vpop.permute.xlu0 %2692
    %2694 = vrot.lane.b32.xlu0 %v2524, 24
    %v2695 = vpop.permute.xlu0 %2694
    %2696 = vrot.lane.b32.xlu0 %v2525, 24
    %v2697 = vpop.permute.xlu0 %2696
    %2698 = vrot.lane.b32.xlu0 %v2526, 24
    %v2699 = vpop.permute.xlu0 %2698
    %2700 = vrot.lane.b32.xlu0 %v2527, 24
    %v2701 = vpop.permute.xlu0 %2700
    %2702 = vrot.lane.b32.xlu0 %v2528, 24
    %v2703 = vpop.permute.xlu0 %2702
    %2704 = vrot.lane.b32.xlu0 %v2529, 24
    %v2705 = vpop.permute.xlu0 %2704
    %2706 = vrot.lane.b32.xlu0 %v2530, 24
    %v2707 = vpop.permute.xlu0 %2706
    %2708 = vrot.lane.b32.xlu0 %v2531, 24
    %v2709 = vpop.permute.xlu0 %2708
    %2710 = vrot.lane.b32.xlu0 %v2532, 24
    %v2711 = vpop.permute.xlu0 %2710
    %2712 = vrot.lane.b32.xlu0 %v2533, 24
    %v2713 = vpop.permute.xlu0 %2712
    %2714 = vrot.lane.b32.xlu0 %v2534, 24
    %v2715 = vpop.permute.xlu0 %2714
    %2716 = vrot.lane.b32.xlu0 %v2535, 24
    %v2717 = vpop.permute.xlu0 %2716
    %2718 = vrot.lane.b32.xlu0 %v2536, 24
    %v2719 = vpop.permute.xlu0 %2718
    %2720 = vrot.lane.b32.xlu0 %v2537, 24
    %v2721 = vpop.permute.xlu0 %2720
    %2722 = vrot.lane.b32.xlu0 %v2538, 24
    %v2723 = vpop.permute.xlu0 %2722
    %2724 = vrot.lane.b32.xlu0 %v2539, 24
    %v2725 = vpop.permute.xlu0 %2724
    %2726 = vrot.lane.b32.xlu0 %v2540, 24
    %v2727 = vpop.permute.xlu0 %2726
    %2728 = vrot.lane.b32.xlu0 %v2541, 24
    %v2729 = vpop.permute.xlu0 %2728
    %2730 = vrot.lane.b32.xlu0 %v2542, 24
    %v2731 = vpop.permute.xlu0 %2730
    %2732 = vrot.lane.b32.xlu0 %v2543, 24
    %v2733 = vpop.permute.xlu0 %2732
    %2734 = vrot.lane.b32.xlu0 %v2544, 24
    %v2735 = vpop.permute.xlu0 %2734
    %2736 = vrot.lane.b32.xlu0 %v2545, 24
    %v2737 = vpop.permute.xlu0 %2736
    %vm2802 = vcmask 257216
    %2803 = vst.msk [vmem:[#allocation3] sm:$0xf] %vm2802, %v2611
    %2804 = vst.msk [vmem:[#allocation3 + $0x4] sm:$0xf] %vm2802, %v2613
    %2805 = vst.msk [vmem:[#allocation3 + $0x8] sm:$0xf] %vm2802, %v2615
    %2806 = vst.msk [vmem:[#allocation3 + $0xc] sm:$0xf] %vm2802, %v2617
    %2807 = vst.msk [vmem:[#allocation3 + $0x10] sm:$0xf] %vm2802, %v2619
    %2808 = vst.msk [vmem:[#allocation3 + $0x14] sm:$0xf] %vm2802, %v2621
    %2809 = vst.msk [vmem:[#allocation3 + $0x18] sm:$0xf] %vm2802, %v2623
    %2810 = vst.msk [vmem:[#allocation3 + $0x1c] sm:$0xf] %vm2802, %v2625
    %2811 = vst.msk [vmem:[#allocation3 + $0x20] sm:$0xf] %vm2802, %v2627
    %2812 = vst.msk [vmem:[#allocation3 + $0x24] sm:$0xf] %vm2802, %v2629
    %2813 = vst.msk [vmem:[#allocation3 + $0x28] sm:$0xf] %vm2802, %v2631
    %2814 = vst.msk [vmem:[#allocation3 + $0x2c] sm:$0xf] %vm2802, %v2633
    %2815 = vst.msk [vmem:[#allocation3 + $0x30] sm:$0xf] %vm2802, %v2635
    %2816 = vst.msk [vmem:[#allocation3 + $0x34] sm:$0xf] %vm2802, %v2637
    %2817 = vst.msk [vmem:[#allocation3 + $0x38] sm:$0xf] %vm2802, %v2639
    %2818 = vst.msk [vmem:[#allocation3 + $0x3c] sm:$0xf] %vm2802, %v2641
    %2819 = vst.msk [vmem:[#allocation3 + $0x40] sm:$0xf] %vm2802, %v2643
    %2820 = vst.msk [vmem:[#allocation3 + $0x44] sm:$0xf] %vm2802, %v2645
    %2821 = vst.msk [vmem:[#allocation3 + $0x48] sm:$0xf] %vm2802, %v2647
    %2822 = vst.msk [vmem:[#allocation3 + $0x4c] sm:$0xf] %vm2802, %v2649
    %2823 = vst.msk [vmem:[#allocation3 + $0x50] sm:$0xf] %vm2802, %v2651
    %2824 = vst.msk [vmem:[#allocation3 + $0x54] sm:$0xf] %vm2802, %v2653
    %2825 = vst.msk [vmem:[#allocation3 + $0x58] sm:$0xf] %vm2802, %v2655
    %2826 = vst.msk [vmem:[#allocation3 + $0x5c] sm:$0xf] %vm2802, %v2657
    %2827 = vst.msk [vmem:[#allocation3 + $0x60] sm:$0xf] %vm2802, %v2659
    %2828 = vst.msk [vmem:[#allocation3 + $0x64] sm:$0xf] %vm2802, %v2661
    %2829 = vst.msk [vmem:[#allocation3 + $0x68] sm:$0xf] %vm2802, %v2663
    %2830 = vst.msk [vmem:[#allocation3 + $0x6c] sm:$0xf] %vm2802, %v2665
    %2831 = vst.msk [vmem:[#allocation3 + $0x70] sm:$0xf] %vm2802, %v2667
    %2832 = vst.msk [vmem:[#allocation3 + $0x74] sm:$0xf] %vm2802, %v2669
    %2833 = vst.msk [vmem:[#allocation3 + $0x78] sm:$0xf] %vm2802, %v2671
    %2834 = vst.msk [vmem:[#allocation3 + $0x7c] sm:$0xf] %vm2802, %v2673
    %2835 = vst.msk [vmem:[#allocation3 + $0x80] sm:$0xf] %vm2802, %v2675
    %2836 = vst.msk [vmem:[#allocation3 + $0x84] sm:$0xf] %vm2802, %v2677
    %2837 = vst.msk [vmem:[#allocation3 + $0x88] sm:$0xf] %vm2802, %v2679
    %2838 = vst.msk [vmem:[#allocation3 + $0x8c] sm:$0xf] %vm2802, %v2681
    %2839 = vst.msk [vmem:[#allocation3 + $0x90] sm:$0xf] %vm2802, %v2683
    %2840 = vst.msk [vmem:[#allocation3 + $0x94] sm:$0xf] %vm2802, %v2685
    %2841 = vst.msk [vmem:[#allocation3 + $0x98] sm:$0xf] %vm2802, %v2687
    %2842 = vst.msk [vmem:[#allocation3 + $0x9c] sm:$0xf] %vm2802, %v2689
    %2843 = vst.msk [vmem:[#allocation3 + $0xa0] sm:$0xf] %vm2802, %v2691
    %2844 = vst.msk [vmem:[#allocation3 + $0xa4] sm:$0xf] %vm2802, %v2693
    %2845 = vst.msk [vmem:[#allocation3 + $0xa8] sm:$0xf] %vm2802, %v2695
    %2846 = vst.msk [vmem:[#allocation3 + $0xac] sm:$0xf] %vm2802, %v2697
    %2847 = vst.msk [vmem:[#allocation3 + $0xb0] sm:$0xf] %vm2802, %v2699
    %2848 = vst.msk [vmem:[#allocation3 + $0xb4] sm:$0xf] %vm2802, %v2701
    %2849 = vst.msk [vmem:[#allocation3 + $0xb8] sm:$0xf] %vm2802, %v2703
    %2850 = vst.msk [vmem:[#allocation3 + $0xbc] sm:$0xf] %vm2802, %v2705
    %2851 = vst.msk [vmem:[#allocation3 + $0xc0] sm:$0xf] %vm2802, %v2707
    %2852 = vst.msk [vmem:[#allocation3 + $0xc4] sm:$0xf] %vm2802, %v2709
    %2853 = vst.msk [vmem:[#allocation3 + $0xc8] sm:$0xf] %vm2802, %v2711
    %2854 = vst.msk [vmem:[#allocation3 + $0xcc] sm:$0xf] %vm2802, %v2713
    %2855 = vst.msk [vmem:[#allocation3 + $0xd0] sm:$0xf] %vm2802, %v2715
    %2856 = vst.msk [vmem:[#allocation3 + $0xd4] sm:$0xf] %vm2802, %v2717
    %2857 = vst.msk [vmem:[#allocation3 + $0xd8] sm:$0xf] %vm2802, %v2719
    %2858 = vst.msk [vmem:[#allocation3 + $0xdc] sm:$0xf] %vm2802, %v2721
    %2859 = vst.msk [vmem:[#allocation3 + $0xe0] sm:$0xf] %vm2802, %v2723
    %2860 = vst.msk [vmem:[#allocation3 + $0xe4] sm:$0xf] %vm2802, %v2725
    %2861 = vst.msk [vmem:[#allocation3 + $0xe8] sm:$0xf] %vm2802, %v2727
    %2862 = vst.msk [vmem:[#allocation3 + $0xec] sm:$0xf] %vm2802, %v2729
    %2863 = vst.msk [vmem:[#allocation3 + $0xf0] sm:$0xf] %vm2802, %v2731
    %2864 = vst.msk [vmem:[#allocation3 + $0xf4] sm:$0xf] %vm2802, %v2733
    %2865 = vst.msk [vmem:[#allocation3 + $0xf8] sm:$0xf] %vm2802, %v2735
    %2866 = vst.msk [vmem:[#allocation3 + $0xfc] sm:$0xf] %vm2802, %v2737
    %v2867 = vld [vmem:[%s324] sm:$0xf]
    %v2868 = vld [vmem:[%s324 + $0x4] sm:$0xf]
    %v2869 = vld [vmem:[%s324 + $0x8] sm:$0xf]
    %v2870 = vld [vmem:[%s324 + $0xc] sm:$0xf]
    %v2871 = vld [vmem:[%s324 + $0x10] sm:$0xf]
    %v2872 = vld [vmem:[%s324 + $0x14] sm:$0xf]
    %v2873 = vld [vmem:[%s324 + $0x18] sm:$0xf]
    %v2874 = vld [vmem:[%s324 + $0x1c] sm:$0xf]
    %v2875 = vld [vmem:[%s324 + $0x20] sm:$0xf]
    %v2876 = vld [vmem:[%s324 + $0x24] sm:$0xf]
    %v2877 = vld [vmem:[%s324 + $0x28] sm:$0xf]
    %v2878 = vld [vmem:[%s324 + $0x2c] sm:$0xf]
    %v2879 = vld [vmem:[%s324 + $0x30] sm:$0xf]
    %v2880 = vld [vmem:[%s324 + $0x34] sm:$0xf]
    %v2881 = vld [vmem:[%s324 + $0x38] sm:$0xf]
    %v2882 = vld [vmem:[%s324 + $0x3c] sm:$0xf]
    %v2883 = vld [vmem:[%s324 + $0x40] sm:$0xf]
    %v2884 = vld [vmem:[%s324 + $0x44] sm:$0xf]
    %v2885 = vld [vmem:[%s324 + $0x48] sm:$0xf]
    %v2886 = vld [vmem:[%s324 + $0x4c] sm:$0xf]
    %v2887 = vld [vmem:[%s324 + $0x50] sm:$0xf]
    %v2888 = vld [vmem:[%s324 + $0x54] sm:$0xf]
    %v2889 = vld [vmem:[%s324 + $0x58] sm:$0xf]
    %v2890 = vld [vmem:[%s324 + $0x5c] sm:$0xf]
    %v2891 = vld [vmem:[%s324 + $0x60] sm:$0xf]
    %v2892 = vld [vmem:[%s324 + $0x64] sm:$0xf]
    %v2893 = vld [vmem:[%s324 + $0x68] sm:$0xf]
    %v2894 = vld [vmem:[%s324 + $0x6c] sm:$0xf]
    %v2895 = vld [vmem:[%s324 + $0x70] sm:$0xf]
    %v2896 = vld [vmem:[%s324 + $0x74] sm:$0xf]
    %v2897 = vld [vmem:[%s324 + $0x78] sm:$0xf]
    %v2898 = vld [vmem:[%s324 + $0x7c] sm:$0xf]
    %v2899 = vld [vmem:[%s324 + $0x90] sm:$0xf]
    %v2900 = vld [vmem:[%s324 + $0x94] sm:$0xf]
    %v2901 = vld [vmem:[%s324 + $0x98] sm:$0xf]
    %v2902 = vld [vmem:[%s324 + $0x9c] sm:$0xf]
    %v2903 = vld [vmem:[%s324 + $0xa0] sm:$0xf]
    %v2904 = vld [vmem:[%s324 + $0xa4] sm:$0xf]
    %v2905 = vld [vmem:[%s324 + $0xa8] sm:$0xf]
    %v2906 = vld [vmem:[%s324 + $0xac] sm:$0xf]
    %v2907 = vld [vmem:[%s324 + $0xb0] sm:$0xf]
    %v2908 = vld [vmem:[%s324 + $0xb4] sm:$0xf]
    %v2909 = vld [vmem:[%s324 + $0xb8] sm:$0xf]
    %v2910 = vld [vmem:[%s324 + $0xbc] sm:$0xf]
    %v2911 = vld [vmem:[%s324 + $0xc0] sm:$0xf]
    %v2912 = vld [vmem:[%s324 + $0xc4] sm:$0xf]
    %v2913 = vld [vmem:[%s324 + $0xc8] sm:$0xf]
    %v2914 = vld [vmem:[%s324 + $0xcc] sm:$0xf]
    %v2915 = vld [vmem:[%s324 + $0xd0] sm:$0xf]
    %v2916 = vld [vmem:[%s324 + $0xd4] sm:$0xf]
    %v2917 = vld [vmem:[%s324 + $0xd8] sm:$0xf]
    %v2918 = vld [vmem:[%s324 + $0xdc] sm:$0xf]
    %v2919 = vld [vmem:[%s324 + $0xe0] sm:$0xf]
    %v2920 = vld [vmem:[%s324 + $0xe4] sm:$0xf]
    %v2921 = vld [vmem:[%s324 + $0xe8] sm:$0xf]
    %v2922 = vld [vmem:[%s324 + $0xec] sm:$0xf]
    %v2923 = vld [vmem:[%s324 + $0xf0] sm:$0xf]
    %v2924 = vld [vmem:[%s324 + $0xf4] sm:$0xf]
    %v2925 = vld [vmem:[%s324 + $0xf8] sm:$0xf]
    %v2926 = vld [vmem:[%s324 + $0xfc] sm:$0xf]
    %v2927 = vld [vmem:[%s324 + $0x100] sm:$0xf]
    %v2928 = vld [vmem:[%s324 + $0x104] sm:$0xf]
    %v2929 = vld [vmem:[%s324 + $0x108] sm:$0xf]
    %v2930 = vld [vmem:[%s324 + $0x10c] sm:$0xf]
    %2995 = vrot.lane.b32.xlu0 %v2867, 32
    %v2996 = vpop.permute.xlu0 %2995
    %2997 = vrot.lane.b32.xlu0 %v2868, 32
    %v2998 = vpop.permute.xlu0 %2997
    %2999 = vrot.lane.b32.xlu0 %v2869, 32
    %v3000 = vpop.permute.xlu0 %2999
    %3001 = vrot.lane.b32.xlu0 %v2870, 32
    %v3002 = vpop.permute.xlu0 %3001
    %3003 = vrot.lane.b32.xlu0 %v2871, 32
    %v3004 = vpop.permute.xlu0 %3003
    %3005 = vrot.lane.b32.xlu0 %v2872, 32
    %v3006 = vpop.permute.xlu0 %3005
    %3007 = vrot.lane.b32.xlu0 %v2873, 32
    %v3008 = vpop.permute.xlu0 %3007
    %3009 = vrot.lane.b32.xlu0 %v2874, 32
    %v3010 = vpop.permute.xlu0 %3009
    %3011 = vrot.lane.b32.xlu0 %v2875, 32
    %v3012 = vpop.permute.xlu0 %3011
    %3013 = vrot.lane.b32.xlu0 %v2876, 32
    %v3014 = vpop.permute.xlu0 %3013
    %3015 = vrot.lane.b32.xlu0 %v2877, 32
    %v3016 = vpop.permute.xlu0 %3015
    %3017 = vrot.lane.b32.xlu0 %v2878, 32
    %v3018 = vpop.permute.xlu0 %3017
    %3019 = vrot.lane.b32.xlu0 %v2879, 32
    %v3020 = vpop.permute.xlu0 %3019
    %3021 = vrot.lane.b32.xlu0 %v2880, 32
    %v3022 = vpop.permute.xlu0 %3021
    %3023 = vrot.lane.b32.xlu0 %v2881, 32
    %v3024 = vpop.permute.xlu0 %3023
    %3025 = vrot.lane.b32.xlu0 %v2882, 32
    %v3026 = vpop.permute.xlu0 %3025
    %3027 = vrot.lane.b32.xlu0 %v2883, 32
    %v3028 = vpop.permute.xlu0 %3027
    %3029 = vrot.lane.b32.xlu0 %v2884, 32
    %v3030 = vpop.permute.xlu0 %3029
    %3031 = vrot.lane.b32.xlu0 %v2885, 32
    %v3032 = vpop.permute.xlu0 %3031
    %3033 = vrot.lane.b32.xlu0 %v2886, 32
    %v3034 = vpop.permute.xlu0 %3033
    %3035 = vrot.lane.b32.xlu0 %v2887, 32
    %v3036 = vpop.permute.xlu0 %3035
    %3037 = vrot.lane.b32.xlu0 %v2888, 32
    %v3038 = vpop.permute.xlu0 %3037
    %3039 = vrot.lane.b32.xlu0 %v2889, 32
    %v3040 = vpop.permute.xlu0 %3039
    %3041 = vrot.lane.b32.xlu0 %v2890, 32
    %v3042 = vpop.permute.xlu0 %3041
    %3043 = vrot.lane.b32.xlu0 %v2891, 32
    %v3044 = vpop.permute.xlu0 %3043
    %3045 = vrot.lane.b32.xlu0 %v2892, 32
    %v3046 = vpop.permute.xlu0 %3045
    %3047 = vrot.lane.b32.xlu0 %v2893, 32
    %v3048 = vpop.permute.xlu0 %3047
    %3049 = vrot.lane.b32.xlu0 %v2894, 32
    %v3050 = vpop.permute.xlu0 %3049
    %3051 = vrot.lane.b32.xlu0 %v2895, 32
    %v3052 = vpop.permute.xlu0 %3051
    %3053 = vrot.lane.b32.xlu0 %v2896, 32
    %v3054 = vpop.permute.xlu0 %3053
    %3055 = vrot.lane.b32.xlu0 %v2897, 32
    %v3056 = vpop.permute.xlu0 %3055
    %3057 = vrot.lane.b32.xlu0 %v2898, 32
    %v3058 = vpop.permute.xlu0 %3057
    %3059 = vrot.lane.b32.xlu0 %v2899, 32
    %v3060 = vpop.permute.xlu0 %3059
    %3061 = vrot.lane.b32.xlu0 %v2900, 32
    %v3062 = vpop.permute.xlu0 %3061
    %3063 = vrot.lane.b32.xlu0 %v2901, 32
    %v3064 = vpop.permute.xlu0 %3063
    %3065 = vrot.lane.b32.xlu0 %v2902, 32
    %v3066 = vpop.permute.xlu0 %3065
    %3067 = vrot.lane.b32.xlu0 %v2903, 32
    %v3068 = vpop.permute.xlu0 %3067
    %3069 = vrot.lane.b32.xlu0 %v2904, 32
    %v3070 = vpop.permute.xlu0 %3069
    %3071 = vrot.lane.b32.xlu0 %v2905, 32
    %v3072 = vpop.permute.xlu0 %3071
    %3073 = vrot.lane.b32.xlu0 %v2906, 32
    %v3074 = vpop.permute.xlu0 %3073
    %3075 = vrot.lane.b32.xlu0 %v2907, 32
    %v3076 = vpop.permute.xlu0 %3075
    %3077 = vrot.lane.b32.xlu0 %v2908, 32
    %v3078 = vpop.permute.xlu0 %3077
    %3079 = vrot.lane.b32.xlu0 %v2909, 32
    %v3080 = vpop.permute.xlu0 %3079
    %3081 = vrot.lane.b32.xlu0 %v2910, 32
    %v3082 = vpop.permute.xlu0 %3081
    %3083 = vrot.lane.b32.xlu0 %v2911, 32
    %v3084 = vpop.permute.xlu0 %3083
    %3085 = vrot.lane.b32.xlu0 %v2912, 32
    %v3086 = vpop.permute.xlu0 %3085
    %3087 = vrot.lane.b32.xlu0 %v2913, 32
    %v3088 = vpop.permute.xlu0 %3087
    %3089 = vrot.lane.b32.xlu0 %v2914, 32
    %v3090 = vpop.permute.xlu0 %3089
    %3091 = vrot.lane.b32.xlu0 %v2915, 32
    %v3092 = vpop.permute.xlu0 %3091
    %3093 = vrot.lane.b32.xlu0 %v2916, 32
    %v3094 = vpop.permute.xlu0 %3093
    %3095 = vrot.lane.b32.xlu0 %v2917, 32
    %v3096 = vpop.permute.xlu0 %3095
    %3097 = vrot.lane.b32.xlu0 %v2918, 32
    %v3098 = vpop.permute.xlu0 %3097
    %3099 = vrot.lane.b32.xlu0 %v2919, 32
    %v3100 = vpop.permute.xlu0 %3099
    %3101 = vrot.lane.b32.xlu0 %v2920, 32
    %v3102 = vpop.permute.xlu0 %3101
    %3103 = vrot.lane.b32.xlu0 %v2921, 32
    %v3104 = vpop.permute.xlu0 %3103
    %3105 = vrot.lane.b32.xlu0 %v2922, 32
    %v3106 = vpop.permute.xlu0 %3105
    %3107 = vrot.lane.b32.xlu0 %v2923, 32
    %v3108 = vpop.permute.xlu0 %3107
    %3109 = vrot.lane.b32.xlu0 %v2924, 32
    %v3110 = vpop.permute.xlu0 %3109
    %3111 = vrot.lane.b32.xlu0 %v2925, 32
    %v3112 = vpop.permute.xlu0 %3111
    %3113 = vrot.lane.b32.xlu0 %v2926, 32
    %v3114 = vpop.permute.xlu0 %3113
    %3115 = vrot.lane.b32.xlu0 %v2927, 32
    %v3116 = vpop.permute.xlu0 %3115
    %3117 = vrot.lane.b32.xlu0 %v2928, 32
    %v3118 = vpop.permute.xlu0 %3117
    %3119 = vrot.lane.b32.xlu0 %v2929, 32
    %v3120 = vpop.permute.xlu0 %3119
    %3121 = vrot.lane.b32.xlu0 %v2930, 32
    %v3122 = vpop.permute.xlu0 %3121
    %vm3187 = vcmask 322816
    %3188 = vst.msk [vmem:[#allocation3] sm:$0xf] %vm3187, %v2996
    %3189 = vst.msk [vmem:[#allocation3 + $0x4] sm:$0xf] %vm3187, %v2998
    %3190 = vst.msk [vmem:[#allocation3 + $0x8] sm:$0xf] %vm3187, %v3000
    %3191 = vst.msk [vmem:[#allocation3 + $0xc] sm:$0xf] %vm3187, %v3002
    %3192 = vst.msk [vmem:[#allocation3 + $0x10] sm:$0xf] %vm3187, %v3004
    %3193 = vst.msk [vmem:[#allocation3 + $0x14] sm:$0xf] %vm3187, %v3006
    %3194 = vst.msk [vmem:[#allocation3 + $0x18] sm:$0xf] %vm3187, %v3008
    %3195 = vst.msk [vmem:[#allocation3 + $0x1c] sm:$0xf] %vm3187, %v3010
    %3196 = vst.msk [vmem:[#allocation3 + $0x20] sm:$0xf] %vm3187, %v3012
    %3197 = vst.msk [vmem:[#allocation3 + $0x24] sm:$0xf] %vm3187, %v3014
    %3198 = vst.msk [vmem:[#allocation3 + $0x28] sm:$0xf] %vm3187, %v3016
    %3199 = vst.msk [vmem:[#allocation3 + $0x2c] sm:$0xf] %vm3187, %v3018
    %3200 = vst.msk [vmem:[#allocation3 + $0x30] sm:$0xf] %vm3187, %v3020
    %3201 = vst.msk [vmem:[#allocation3 + $0x34] sm:$0xf] %vm3187, %v3022
    %3202 = vst.msk [vmem:[#allocation3 + $0x38] sm:$0xf] %vm3187, %v3024
    %3203 = vst.msk [vmem:[#allocation3 + $0x3c] sm:$0xf] %vm3187, %v3026
    %3204 = vst.msk [vmem:[#allocation3 + $0x40] sm:$0xf] %vm3187, %v3028
    %3205 = vst.msk [vmem:[#allocation3 + $0x44] sm:$0xf] %vm3187, %v3030
    %3206 = vst.msk [vmem:[#allocation3 + $0x48] sm:$0xf] %vm3187, %v3032
    %3207 = vst.msk [vmem:[#allocation3 + $0x4c] sm:$0xf] %vm3187, %v3034
    %3208 = vst.msk [vmem:[#allocation3 + $0x50] sm:$0xf] %vm3187, %v3036
    %3209 = vst.msk [vmem:[#allocation3 + $0x54] sm:$0xf] %vm3187, %v3038
    %3210 = vst.msk [vmem:[#allocation3 + $0x58] sm:$0xf] %vm3187, %v3040
    %3211 = vst.msk [vmem:[#allocation3 + $0x5c] sm:$0xf] %vm3187, %v3042
    %3212 = vst.msk [vmem:[#allocation3 + $0x60] sm:$0xf] %vm3187, %v3044
    %3213 = vst.msk [vmem:[#allocation3 + $0x64] sm:$0xf] %vm3187, %v3046
    %3214 = vst.msk [vmem:[#allocation3 + $0x68] sm:$0xf] %vm3187, %v3048
    %3215 = vst.msk [vmem:[#allocation3 + $0x6c] sm:$0xf] %vm3187, %v3050
    %3216 = vst.msk [vmem:[#allocation3 + $0x70] sm:$0xf] %vm3187, %v3052
    %3217 = vst.msk [vmem:[#allocation3 + $0x74] sm:$0xf] %vm3187, %v3054
    %3218 = vst.msk [vmem:[#allocation3 + $0x78] sm:$0xf] %vm3187, %v3056
    %3219 = vst.msk [vmem:[#allocation3 + $0x7c] sm:$0xf] %vm3187, %v3058
    %3220 = vst.msk [vmem:[#allocation3 + $0x80] sm:$0xf] %vm3187, %v3060
    %3221 = vst.msk [vmem:[#allocation3 + $0x84] sm:$0xf] %vm3187, %v3062
    %3222 = vst.msk [vmem:[#allocation3 + $0x88] sm:$0xf] %vm3187, %v3064
    %3223 = vst.msk [vmem:[#allocation3 + $0x8c] sm:$0xf] %vm3187, %v3066
    %3224 = vst.msk [vmem:[#allocation3 + $0x90] sm:$0xf] %vm3187, %v3068
    %3225 = vst.msk [vmem:[#allocation3 + $0x94] sm:$0xf] %vm3187, %v3070
    %3226 = vst.msk [vmem:[#allocation3 + $0x98] sm:$0xf] %vm3187, %v3072
    %3227 = vst.msk [vmem:[#allocation3 + $0x9c] sm:$0xf] %vm3187, %v3074
    %3228 = vst.msk [vmem:[#allocation3 + $0xa0] sm:$0xf] %vm3187, %v3076
    %3229 = vst.msk [vmem:[#allocation3 + $0xa4] sm:$0xf] %vm3187, %v3078
    %3230 = vst.msk [vmem:[#allocation3 + $0xa8] sm:$0xf] %vm3187, %v3080
    %3231 = vst.msk [vmem:[#allocation3 + $0xac] sm:$0xf] %vm3187, %v3082
    %3232 = vst.msk [vmem:[#allocation3 + $0xb0] sm:$0xf] %vm3187, %v3084
    %3233 = vst.msk [vmem:[#allocation3 + $0xb4] sm:$0xf] %vm3187, %v3086
    %3234 = vst.msk [vmem:[#allocation3 + $0xb8] sm:$0xf] %vm3187, %v3088
    %3235 = vst.msk [vmem:[#allocation3 + $0xbc] sm:$0xf] %vm3187, %v3090
    %3236 = vst.msk [vmem:[#allocation3 + $0xc0] sm:$0xf] %vm3187, %v3092
    %3237 = vst.msk [vmem:[#allocation3 + $0xc4] sm:$0xf] %vm3187, %v3094
    %3238 = vst.msk [vmem:[#allocation3 + $0xc8] sm:$0xf] %vm3187, %v3096
    %3239 = vst.msk [vmem:[#allocation3 + $0xcc] sm:$0xf] %vm3187, %v3098
    %3240 = vst.msk [vmem:[#allocation3 + $0xd0] sm:$0xf] %vm3187, %v3100
    %3241 = vst.msk [vmem:[#allocation3 + $0xd4] sm:$0xf] %vm3187, %v3102
    %3242 = vst.msk [vmem:[#allocation3 + $0xd8] sm:$0xf] %vm3187, %v3104
    %3243 = vst.msk [vmem:[#allocation3 + $0xdc] sm:$0xf] %vm3187, %v3106
    %3244 = vst.msk [vmem:[#allocation3 + $0xe0] sm:$0xf] %vm3187, %v3108
    %3245 = vst.msk [vmem:[#allocation3 + $0xe4] sm:$0xf] %vm3187, %v3110
    %3246 = vst.msk [vmem:[#allocation3 + $0xe8] sm:$0xf] %vm3187, %v3112
    %3247 = vst.msk [vmem:[#allocation3 + $0xec] sm:$0xf] %vm3187, %v3114
    %3248 = vst.msk [vmem:[#allocation3 + $0xf0] sm:$0xf] %vm3187, %v3116
    %3249 = vst.msk [vmem:[#allocation3 + $0xf4] sm:$0xf] %vm3187, %v3118
    %3250 = vst.msk [vmem:[#allocation3 + $0xf8] sm:$0xf] %vm3187, %v3120
    %3251 = vst.msk [vmem:[#allocation3 + $0xfc] sm:$0xf] %vm3187, %v3122
    %v3252 = vld [vmem:[%s224] sm:$0xf]
    %v3253 = vld [vmem:[%s224 + $0x4] sm:$0xf]
    %v3254 = vld [vmem:[%s224 + $0x8] sm:$0xf]
    %v3255 = vld [vmem:[%s224 + $0xc] sm:$0xf]
    %v3256 = vld [vmem:[%s224 + $0x10] sm:$0xf]
    %v3257 = vld [vmem:[%s224 + $0x14] sm:$0xf]
    %v3258 = vld [vmem:[%s224 + $0x18] sm:$0xf]
    %v3259 = vld [vmem:[%s224 + $0x1c] sm:$0xf]
    %v3260 = vld [vmem:[%s224 + $0x20] sm:$0xf]
    %v3261 = vld [vmem:[%s224 + $0x24] sm:$0xf]
    %v3262 = vld [vmem:[%s224 + $0x28] sm:$0xf]
    %v3263 = vld [vmem:[%s224 + $0x2c] sm:$0xf]
    %v3264 = vld [vmem:[%s224 + $0x30] sm:$0xf]
    %v3265 = vld [vmem:[%s224 + $0x34] sm:$0xf]
    %v3266 = vld [vmem:[%s224 + $0x38] sm:$0xf]
    %v3267 = vld [vmem:[%s224 + $0x3c] sm:$0xf]
    %v3268 = vld [vmem:[%s224 + $0x40] sm:$0xf]
    %v3269 = vld [vmem:[%s224 + $0x44] sm:$0xf]
    %v3270 = vld [vmem:[%s224 + $0x48] sm:$0xf]
    %v3271 = vld [vmem:[%s224 + $0x4c] sm:$0xf]
    %v3272 = vld [vmem:[%s224 + $0x50] sm:$0xf]
    %v3273 = vld [vmem:[%s224 + $0x54] sm:$0xf]
    %v3274 = vld [vmem:[%s224 + $0x58] sm:$0xf]
    %v3275 = vld [vmem:[%s224 + $0x5c] sm:$0xf]
    %v3276 = vld [vmem:[%s224 + $0x60] sm:$0xf]
    %v3277 = vld [vmem:[%s224 + $0x64] sm:$0xf]
    %v3278 = vld [vmem:[%s224 + $0x68] sm:$0xf]
    %v3279 = vld [vmem:[%s224 + $0x6c] sm:$0xf]
    %v3280 = vld [vmem:[%s224 + $0x70] sm:$0xf]
    %v3281 = vld [vmem:[%s224 + $0x74] sm:$0xf]
    %v3282 = vld [vmem:[%s224 + $0x78] sm:$0xf]
    %v3283 = vld [vmem:[%s224 + $0x7c] sm:$0xf]
    %v3284 = vld [vmem:[%s224 + $0x90] sm:$0xf]
    %v3285 = vld [vmem:[%s224 + $0x94] sm:$0xf]
    %v3286 = vld [vmem:[%s224 + $0x98] sm:$0xf]
    %v3287 = vld [vmem:[%s224 + $0x9c] sm:$0xf]
    %v3288 = vld [vmem:[%s224 + $0xa0] sm:$0xf]
    %v3289 = vld [vmem:[%s224 + $0xa4] sm:$0xf]
    %v3290 = vld [vmem:[%s224 + $0xa8] sm:$0xf]
    %v3291 = vld [vmem:[%s224 + $0xac] sm:$0xf]
    %v3292 = vld [vmem:[%s224 + $0xb0] sm:$0xf]
    %v3293 = vld [vmem:[%s224 + $0xb4] sm:$0xf]
    %v3294 = vld [vmem:[%s224 + $0xb8] sm:$0xf]
    %v3295 = vld [vmem:[%s224 + $0xbc] sm:$0xf]
    %v3296 = vld [vmem:[%s224 + $0xc0] sm:$0xf]
    %v3297 = vld [vmem:[%s224 + $0xc4] sm:$0xf]
    %v3298 = vld [vmem:[%s224 + $0xc8] sm:$0xf]
    %v3299 = vld [vmem:[%s224 + $0xcc] sm:$0xf]
    %v3300 = vld [vmem:[%s224 + $0xd0] sm:$0xf]
    %v3301 = vld [vmem:[%s224 + $0xd4] sm:$0xf]
    %v3302 = vld [vmem:[%s224 + $0xd8] sm:$0xf]
    %v3303 = vld [vmem:[%s224 + $0xdc] sm:$0xf]
    %v3304 = vld [vmem:[%s224 + $0xe0] sm:$0xf]
    %v3305 = vld [vmem:[%s224 + $0xe4] sm:$0xf]
    %v3306 = vld [vmem:[%s224 + $0xe8] sm:$0xf]
    %v3307 = vld [vmem:[%s224 + $0xec] sm:$0xf]
    %v3308 = vld [vmem:[%s224 + $0xf0] sm:$0xf]
    %v3309 = vld [vmem:[%s224 + $0xf4] sm:$0xf]
    %v3310 = vld [vmem:[%s224 + $0xf8] sm:$0xf]
    %v3311 = vld [vmem:[%s224 + $0xfc] sm:$0xf]
    %v3312 = vld [vmem:[%s224 + $0x100] sm:$0xf]
    %v3313 = vld [vmem:[%s224 + $0x104] sm:$0xf]
    %v3314 = vld [vmem:[%s224 + $0x108] sm:$0xf]
    %v3315 = vld [vmem:[%s224 + $0x10c] sm:$0xf]
    %3380 = vrot.lane.b32.xlu0 %v3252, 40
    %v3381 = vpop.permute.xlu0 %3380
    %3382 = vrot.lane.b32.xlu0 %v3253, 40
    %v3383 = vpop.permute.xlu0 %3382
    %3384 = vrot.lane.b32.xlu0 %v3254, 40
    %v3385 = vpop.permute.xlu0 %3384
    %3386 = vrot.lane.b32.xlu0 %v3255, 40
    %v3387 = vpop.permute.xlu0 %3386
    %3388 = vrot.lane.b32.xlu0 %v3256, 40
    %v3389 = vpop.permute.xlu0 %3388
    %3390 = vrot.lane.b32.xlu0 %v3257, 40
    %v3391 = vpop.permute.xlu0 %3390
    %3392 = vrot.lane.b32.xlu0 %v3258, 40
    %v3393 = vpop.permute.xlu0 %3392
    %3394 = vrot.lane.b32.xlu0 %v3259, 40
    %v3395 = vpop.permute.xlu0 %3394
    %3396 = vrot.lane.b32.xlu0 %v3260, 40
    %v3397 = vpop.permute.xlu0 %3396
    %3398 = vrot.lane.b32.xlu0 %v3261, 40
    %v3399 = vpop.permute.xlu0 %3398
    %3400 = vrot.lane.b32.xlu0 %v3262, 40
    %v3401 = vpop.permute.xlu0 %3400
    %3402 = vrot.lane.b32.xlu0 %v3263, 40
    %v3403 = vpop.permute.xlu0 %3402
    %3404 = vrot.lane.b32.xlu0 %v3264, 40
    %v3405 = vpop.permute.xlu0 %3404
    %3406 = vrot.lane.b32.xlu0 %v3265, 40
    %v3407 = vpop.permute.xlu0 %3406
    %3408 = vrot.lane.b32.xlu0 %v3266, 40
    %v3409 = vpop.permute.xlu0 %3408
    %3410 = vrot.lane.b32.xlu0 %v3267, 40
    %v3411 = vpop.permute.xlu0 %3410
    %3412 = vrot.lane.b32.xlu0 %v3268, 40
    %v3413 = vpop.permute.xlu0 %3412
    %3414 = vrot.lane.b32.xlu0 %v3269, 40
    %v3415 = vpop.permute.xlu0 %3414
    %3416 = vrot.lane.b32.xlu0 %v3270, 40
    %v3417 = vpop.permute.xlu0 %3416
    %3418 = vrot.lane.b32.xlu0 %v3271, 40
    %v3419 = vpop.permute.xlu0 %3418
    %3420 = vrot.lane.b32.xlu0 %v3272, 40
    %v3421 = vpop.permute.xlu0 %3420
    %3422 = vrot.lane.b32.xlu0 %v3273, 40
    %v3423 = vpop.permute.xlu0 %3422
    %3424 = vrot.lane.b32.xlu0 %v3274, 40
    %v3425 = vpop.permute.xlu0 %3424
    %3426 = vrot.lane.b32.xlu0 %v3275, 40
    %v3427 = vpop.permute.xlu0 %3426
    %3428 = vrot.lane.b32.xlu0 %v3276, 40
    %v3429 = vpop.permute.xlu0 %3428
    %3430 = vrot.lane.b32.xlu0 %v3277, 40
    %v3431 = vpop.permute.xlu0 %3430
    %3432 = vrot.lane.b32.xlu0 %v3278, 40
    %v3433 = vpop.permute.xlu0 %3432
    %3434 = vrot.lane.b32.xlu0 %v3279, 40
    %v3435 = vpop.permute.xlu0 %3434
    %3436 = vrot.lane.b32.xlu0 %v3280, 40
    %v3437 = vpop.permute.xlu0 %3436
    %3438 = vrot.lane.b32.xlu0 %v3281, 40
    %v3439 = vpop.permute.xlu0 %3438
    %3440 = vrot.lane.b32.xlu0 %v3282, 40
    %v3441 = vpop.permute.xlu0 %3440
    %3442 = vrot.lane.b32.xlu0 %v3283, 40
    %v3443 = vpop.permute.xlu0 %3442
    %3444 = vrot.lane.b32.xlu0 %v3284, 40
    %v3445 = vpop.permute.xlu0 %3444
    %3446 = vrot.lane.b32.xlu0 %v3285, 40
    %v3447 = vpop.permute.xlu0 %3446
    %3448 = vrot.lane.b32.xlu0 %v3286, 40
    %v3449 = vpop.permute.xlu0 %3448
    %3450 = vrot.lane.b32.xlu0 %v3287, 40
    %v3451 = vpop.permute.xlu0 %3450
    %3452 = vrot.lane.b32.xlu0 %v3288, 40
    %v3453 = vpop.permute.xlu0 %3452
    %3454 = vrot.lane.b32.xlu0 %v3289, 40
    %v3455 = vpop.permute.xlu0 %3454
    %3456 = vrot.lane.b32.xlu0 %v3290, 40
    %v3457 = vpop.permute.xlu0 %3456
    %3458 = vrot.lane.b32.xlu0 %v3291, 40
    %v3459 = vpop.permute.xlu0 %3458
    %3460 = vrot.lane.b32.xlu0 %v3292, 40
    %v3461 = vpop.permute.xlu0 %3460
    %3462 = vrot.lane.b32.xlu0 %v3293, 40
    %v3463 = vpop.permute.xlu0 %3462
    %3464 = vrot.lane.b32.xlu0 %v3294, 40
    %v3465 = vpop.permute.xlu0 %3464
    %3466 = vrot.lane.b32.xlu0 %v3295, 40
    %v3467 = vpop.permute.xlu0 %3466
    %3468 = vrot.lane.b32.xlu0 %v3296, 40
    %v3469 = vpop.permute.xlu0 %3468
    %3470 = vrot.lane.b32.xlu0 %v3297, 40
    %v3471 = vpop.permute.xlu0 %3470
    %3472 = vrot.lane.b32.xlu0 %v3298, 40
    %v3473 = vpop.permute.xlu0 %3472
    %3474 = vrot.lane.b32.xlu0 %v3299, 40
    %v3475 = vpop.permute.xlu0 %3474
    %3476 = vrot.lane.b32.xlu0 %v3300, 40
    %v3477 = vpop.permute.xlu0 %3476
    %3478 = vrot.lane.b32.xlu0 %v3301, 40
    %v3479 = vpop.permute.xlu0 %3478
    %3480 = vrot.lane.b32.xlu0 %v3302, 40
    %v3481 = vpop.permute.xlu0 %3480
    %3482 = vrot.lane.b32.xlu0 %v3303, 40
    %v3483 = vpop.permute.xlu0 %3482
    %3484 = vrot.lane.b32.xlu0 %v3304, 40
    %v3485 = vpop.permute.xlu0 %3484
    %3486 = vrot.lane.b32.xlu0 %v3305, 40
    %v3487 = vpop.permute.xlu0 %3486
    %3488 = vrot.lane.b32.xlu0 %v3306, 40
    %v3489 = vpop.permute.xlu0 %3488
    %3490 = vrot.lane.b32.xlu0 %v3307, 40
    %v3491 = vpop.permute.xlu0 %3490
    %3492 = vrot.lane.b32.xlu0 %v3308, 40
    %v3493 = vpop.permute.xlu0 %3492
    %3494 = vrot.lane.b32.xlu0 %v3309, 40
    %v3495 = vpop.permute.xlu0 %3494
    %3496 = vrot.lane.b32.xlu0 %v3310, 40
    %v3497 = vpop.permute.xlu0 %3496
    %3498 = vrot.lane.b32.xlu0 %v3311, 40
    %v3499 = vpop.permute.xlu0 %3498
    %3500 = vrot.lane.b32.xlu0 %v3312, 40
    %v3501 = vpop.permute.xlu0 %3500
    %3502 = vrot.lane.b32.xlu0 %v3313, 40
    %v3503 = vpop.permute.xlu0 %3502
    %3504 = vrot.lane.b32.xlu0 %v3314, 40
    %v3505 = vpop.permute.xlu0 %3504
    %3506 = vrot.lane.b32.xlu0 %v3315, 40
    %v3507 = vpop.permute.xlu0 %3506
    %vm3572 = vcmask 388416
    %3573 = vst.msk [vmem:[#allocation3] sm:$0xf] %vm3572, %v3381
    %3574 = vst.msk [vmem:[#allocation3 + $0x4] sm:$0xf] %vm3572, %v3383
    %3575 = vst.msk [vmem:[#allocation3 + $0x8] sm:$0xf] %vm3572, %v3385
    %3576 = vst.msk [vmem:[#allocation3 + $0xc] sm:$0xf] %vm3572, %v3387
    %3577 = vst.msk [vmem:[#allocation3 + $0x10] sm:$0xf] %vm3572, %v3389
    %3578 = vst.msk [vmem:[#allocation3 + $0x14] sm:$0xf] %vm3572, %v3391
    %3579 = vst.msk [vmem:[#allocation3 + $0x18] sm:$0xf] %vm3572, %v3393
    %3580 = vst.msk [vmem:[#allocation3 + $0x1c] sm:$0xf] %vm3572, %v3395
    %3581 = vst.msk [vmem:[#allocation3 + $0x20] sm:$0xf] %vm3572, %v3397
    %3582 = vst.msk [vmem:[#allocation3 + $0x24] sm:$0xf] %vm3572, %v3399
    %3583 = vst.msk [vmem:[#allocation3 + $0x28] sm:$0xf] %vm3572, %v3401
    %3584 = vst.msk [vmem:[#allocation3 + $0x2c] sm:$0xf] %vm3572, %v3403
    %3585 = vst.msk [vmem:[#allocation3 + $0x30] sm:$0xf] %vm3572, %v3405
    %3586 = vst.msk [vmem:[#allocation3 + $0x34] sm:$0xf] %vm3572, %v3407
    %3587 = vst.msk [vmem:[#allocation3 + $0x38] sm:$0xf] %vm3572, %v3409
    %3588 = vst.msk [vmem:[#allocation3 + $0x3c] sm:$0xf] %vm3572, %v3411
    %3589 = vst.msk [vmem:[#allocation3 + $0x40] sm:$0xf] %vm3572, %v3413
    %3590 = vst.msk [vmem:[#allocation3 + $0x44] sm:$0xf] %vm3572, %v3415
    %3591 = vst.msk [vmem:[#allocation3 + $0x48] sm:$0xf] %vm3572, %v3417
    %3592 = vst.msk [vmem:[#allocation3 + $0x4c] sm:$0xf] %vm3572, %v3419
    %3593 = vst.msk [vmem:[#allocation3 + $0x50] sm:$0xf] %vm3572, %v3421
    %3594 = vst.msk [vmem:[#allocation3 + $0x54] sm:$0xf] %vm3572, %v3423
    %3595 = vst.msk [vmem:[#allocation3 + $0x58] sm:$0xf] %vm3572, %v3425
    %3596 = vst.msk [vmem:[#allocation3 + $0x5c] sm:$0xf] %vm3572, %v3427
    %3597 = vst.msk [vmem:[#allocation3 + $0x60] sm:$0xf] %vm3572, %v3429
    %3598 = vst.msk [vmem:[#allocation3 + $0x64] sm:$0xf] %vm3572, %v3431
    %3599 = vst.msk [vmem:[#allocation3 + $0x68] sm:$0xf] %vm3572, %v3433
    %3600 = vst.msk [vmem:[#allocation3 + $0x6c] sm:$0xf] %vm3572, %v3435
    %3601 = vst.msk [vmem:[#allocation3 + $0x70] sm:$0xf] %vm3572, %v3437
    %3602 = vst.msk [vmem:[#allocation3 + $0x74] sm:$0xf] %vm3572, %v3439
    %3603 = vst.msk [vmem:[#allocation3 + $0x78] sm:$0xf] %vm3572, %v3441
    %3604 = vst.msk [vmem:[#allocation3 + $0x7c] sm:$0xf] %vm3572, %v3443
    %3605 = vst.msk [vmem:[#allocation3 + $0x80] sm:$0xf] %vm3572, %v3445
    %3606 = vst.msk [vmem:[#allocation3 + $0x84] sm:$0xf] %vm3572, %v3447
    %3607 = vst.msk [vmem:[#allocation3 + $0x88] sm:$0xf] %vm3572, %v3449
    %3608 = vst.msk [vmem:[#allocation3 + $0x8c] sm:$0xf] %vm3572, %v3451
    %3609 = vst.msk [vmem:[#allocation3 + $0x90] sm:$0xf] %vm3572, %v3453
    %3610 = vst.msk [vmem:[#allocation3 + $0x94] sm:$0xf] %vm3572, %v3455
    %3611 = vst.msk [vmem:[#allocation3 + $0x98] sm:$0xf] %vm3572, %v3457
    %3612 = vst.msk [vmem:[#allocation3 + $0x9c] sm:$0xf] %vm3572, %v3459
    %3613 = vst.msk [vmem:[#allocation3 + $0xa0] sm:$0xf] %vm3572, %v3461
    %3614 = vst.msk [vmem:[#allocation3 + $0xa4] sm:$0xf] %vm3572, %v3463
    %3615 = vst.msk [vmem:[#allocation3 + $0xa8] sm:$0xf] %vm3572, %v3465
    %3616 = vst.msk [vmem:[#allocation3 + $0xac] sm:$0xf] %vm3572, %v3467
    %3617 = vst.msk [vmem:[#allocation3 + $0xb0] sm:$0xf] %vm3572, %v3469
    %3618 = vst.msk [vmem:[#allocation3 + $0xb4] sm:$0xf] %vm3572, %v3471
    %3619 = vst.msk [vmem:[#allocation3 + $0xb8] sm:$0xf] %vm3572, %v3473
    %3620 = vst.msk [vmem:[#allocation3 + $0xbc] sm:$0xf] %vm3572, %v3475
    %3621 = vst.msk [vmem:[#allocation3 + $0xc0] sm:$0xf] %vm3572, %v3477
    %3622 = vst.msk [vmem:[#allocation3 + $0xc4] sm:$0xf] %vm3572, %v3479
    %3623 = vst.msk [vmem:[#allocation3 + $0xc8] sm:$0xf] %vm3572, %v3481
    %3624 = vst.msk [vmem:[#allocation3 + $0xcc] sm:$0xf] %vm3572, %v3483
    %3625 = vst.msk [vmem:[#allocation3 + $0xd0] sm:$0xf] %vm3572, %v3485
    %3626 = vst.msk [vmem:[#allocation3 + $0xd4] sm:$0xf] %vm3572, %v3487
    %3627 = vst.msk [vmem:[#allocation3 + $0xd8] sm:$0xf] %vm3572, %v3489
    %3628 = vst.msk [vmem:[#allocation3 + $0xdc] sm:$0xf] %vm3572, %v3491
    %3629 = vst.msk [vmem:[#allocation3 + $0xe0] sm:$0xf] %vm3572, %v3493
    %3630 = vst.msk [vmem:[#allocation3 + $0xe4] sm:$0xf] %vm3572, %v3495
    %3631 = vst.msk [vmem:[#allocation3 + $0xe8] sm:$0xf] %vm3572, %v3497
    %3632 = vst.msk [vmem:[#allocation3 + $0xec] sm:$0xf] %vm3572, %v3499
    %3633 = vst.msk [vmem:[#allocation3 + $0xf0] sm:$0xf] %vm3572, %v3501
    %3634 = vst.msk [vmem:[#allocation3 + $0xf4] sm:$0xf] %vm3572, %v3503
    %3635 = vst.msk [vmem:[#allocation3 + $0xf8] sm:$0xf] %vm3572, %v3505
    %3636 = vst.msk [vmem:[#allocation3 + $0xfc] sm:$0xf] %vm3572, %v3507
    %s3637 = scalar_lea.vmem [#allocation2], 16
    %v3638 = vld [vmem:[%s3637] sm:$0xf]
    %v3639 = vld [vmem:[%s3637 + $0x4] sm:$0xf]
    %v3640 = vld [vmem:[%s3637 + $0x8] sm:$0xf]
    %v3641 = vld [vmem:[%s3637 + $0xc] sm:$0xf]
    %v3642 = vld [vmem:[%s3637 + $0x10] sm:$0xf]
    %v3643 = vld [vmem:[%s3637 + $0x14] sm:$0xf]
    %v3644 = vld [vmem:[%s3637 + $0x18] sm:$0xf]
    %v3645 = vld [vmem:[%s3637 + $0x1c] sm:$0xf]
    %v3646 = vld [vmem:[%s3637 + $0x20] sm:$0xf]
    %v3647 = vld [vmem:[%s3637 + $0x24] sm:$0xf]
    %v3648 = vld [vmem:[%s3637 + $0x28] sm:$0xf]
    %v3649 = vld [vmem:[%s3637 + $0x2c] sm:$0xf]
    %v3650 = vld [vmem:[%s3637 + $0x30] sm:$0xf]
    %v3651 = vld [vmem:[%s3637 + $0x34] sm:$0xf]
    %v3652 = vld [vmem:[%s3637 + $0x38] sm:$0xf]
    %v3653 = vld [vmem:[%s3637 + $0x3c] sm:$0xf]
    %v3654 = vld [vmem:[%s3637 + $0x40] sm:$0xf]
    %v3655 = vld [vmem:[%s3637 + $0x44] sm:$0xf]
    %v3656 = vld [vmem:[%s3637 + $0x48] sm:$0xf]
    %v3657 = vld [vmem:[%s3637 + $0x4c] sm:$0xf]
    %v3658 = vld [vmem:[%s3637 + $0x50] sm:$0xf]
    %v3659 = vld [vmem:[%s3637 + $0x54] sm:$0xf]
    %v3660 = vld [vmem:[%s3637 + $0x58] sm:$0xf]
    %v3661 = vld [vmem:[%s3637 + $0x5c] sm:$0xf]
    %v3662 = vld [vmem:[%s3637 + $0x60] sm:$0xf]
    %v3663 = vld [vmem:[%s3637 + $0x64] sm:$0xf]
    %v3664 = vld [vmem:[%s3637 + $0x68] sm:$0xf]
    %v3665 = vld [vmem:[%s3637 + $0x6c] sm:$0xf]
    %v3666 = vld [vmem:[%s3637 + $0x70] sm:$0xf]
    %v3667 = vld [vmem:[%s3637 + $0x74] sm:$0xf]
    %v3668 = vld [vmem:[%s3637 + $0x78] sm:$0xf]
    %v3669 = vld [vmem:[%s3637 + $0x7c] sm:$0xf]
    %v3670 = vld [vmem:[%s3637 + $0x90] sm:$0xf]
    %v3671 = vld [vmem:[%s3637 + $0x94] sm:$0xf]
    %v3672 = vld [vmem:[%s3637 + $0x98] sm:$0xf]
    %v3673 = vld [vmem:[%s3637 + $0x9c] sm:$0xf]
    %v3674 = vld [vmem:[%s3637 + $0xa0] sm:$0xf]
    %v3675 = vld [vmem:[%s3637 + $0xa4] sm:$0xf]
    %v3676 = vld [vmem:[%s3637 + $0xa8] sm:$0xf]
    %v3677 = vld [vmem:[%s3637 + $0xac] sm:$0xf]
    %v3678 = vld [vmem:[%s3637 + $0xb0] sm:$0xf]
    %v3679 = vld [vmem:[%s3637 + $0xb4] sm:$0xf]
    %v3680 = vld [vmem:[%s3637 + $0xb8] sm:$0xf]
    %v3681 = vld [vmem:[%s3637 + $0xbc] sm:$0xf]
    %v3682 = vld [vmem:[%s3637 + $0xc0] sm:$0xf]
    %v3683 = vld [vmem:[%s3637 + $0xc4] sm:$0xf]
    %v3684 = vld [vmem:[%s3637 + $0xc8] sm:$0xf]
    %v3685 = vld [vmem:[%s3637 + $0xcc] sm:$0xf]
    %v3686 = vld [vmem:[%s3637 + $0xd0] sm:$0xf]
    %v3687 = vld [vmem:[%s3637 + $0xd4] sm:$0xf]
    %v3688 = vld [vmem:[%s3637 + $0xd8] sm:$0xf]
    %v3689 = vld [vmem:[%s3637 + $0xdc] sm:$0xf]
    %v3690 = vld [vmem:[%s3637 + $0xe0] sm:$0xf]
    %v3691 = vld [vmem:[%s3637 + $0xe4] sm:$0xf]
    %v3692 = vld [vmem:[%s3637 + $0xe8] sm:$0xf]
    %v3693 = vld [vmem:[%s3637 + $0xec] sm:$0xf]
    %v3694 = vld [vmem:[%s3637 + $0xf0] sm:$0xf]
    %v3695 = vld [vmem:[%s3637 + $0xf4] sm:$0xf]
    %v3696 = vld [vmem:[%s3637 + $0xf8] sm:$0xf]
    %v3697 = vld [vmem:[%s3637 + $0xfc] sm:$0xf]
    %v3698 = vld [vmem:[%s3637 + $0x100] sm:$0xf]
    %v3699 = vld [vmem:[%s3637 + $0x104] sm:$0xf]
    %v3700 = vld [vmem:[%s3637 + $0x108] sm:$0xf]
    %v3701 = vld [vmem:[%s3637 + $0x10c] sm:$0xf]
    %3766 = vrot.lane.b32.xlu0 %v3638, 48
    %v3767 = vpop.permute.xlu0 %3766
    %3768 = vrot.lane.b32.xlu0 %v3639, 48
    %v3769 = vpop.permute.xlu0 %3768
    %3770 = vrot.lane.b32.xlu0 %v3640, 48
    %v3771 = vpop.permute.xlu0 %3770
    %3772 = vrot.lane.b32.xlu0 %v3641, 48
    %v3773 = vpop.permute.xlu0 %3772
    %3774 = vrot.lane.b32.xlu0 %v3642, 48
    %v3775 = vpop.permute.xlu0 %3774
    %3776 = vrot.lane.b32.xlu0 %v3643, 48
    %v3777 = vpop.permute.xlu0 %3776
    %3778 = vrot.lane.b32.xlu0 %v3644, 48
    %v3779 = vpop.permute.xlu0 %3778
    %3780 = vrot.lane.b32.xlu0 %v3645, 48
    %v3781 = vpop.permute.xlu0 %3780
    %3782 = vrot.lane.b32.xlu0 %v3646, 48
    %v3783 = vpop.permute.xlu0 %3782
    %3784 = vrot.lane.b32.xlu0 %v3647, 48
    %v3785 = vpop.permute.xlu0 %3784
    %3786 = vrot.lane.b32.xlu0 %v3648, 48
    %v3787 = vpop.permute.xlu0 %3786
    %3788 = vrot.lane.b32.xlu0 %v3649, 48
    %v3789 = vpop.permute.xlu0 %3788
    %3790 = vrot.lane.b32.xlu0 %v3650, 48
    %v3791 = vpop.permute.xlu0 %3790
    %3792 = vrot.lane.b32.xlu0 %v3651, 48
    %v3793 = vpop.permute.xlu0 %3792
    %3794 = vrot.lane.b32.xlu0 %v3652, 48
    %v3795 = vpop.permute.xlu0 %3794
    %3796 = vrot.lane.b32.xlu0 %v3653, 48
    %v3797 = vpop.permute.xlu0 %3796
    %3798 = vrot.lane.b32.xlu0 %v3654, 48
    %v3799 = vpop.permute.xlu0 %3798
    %3800 = vrot.lane.b32.xlu0 %v3655, 48
    %v3801 = vpop.permute.xlu0 %3800
    %3802 = vrot.lane.b32.xlu0 %v3656, 48
    %v3803 = vpop.permute.xlu0 %3802
    %3804 = vrot.lane.b32.xlu0 %v3657, 48
    %v3805 = vpop.permute.xlu0 %3804
    %3806 = vrot.lane.b32.xlu0 %v3658, 48
    %v3807 = vpop.permute.xlu0 %3806
    %3808 = vrot.lane.b32.xlu0 %v3659, 48
    %v3809 = vpop.permute.xlu0 %3808
    %3810 = vrot.lane.b32.xlu0 %v3660, 48
    %v3811 = vpop.permute.xlu0 %3810
    %3812 = vrot.lane.b32.xlu0 %v3661, 48
    %v3813 = vpop.permute.xlu0 %3812
    %3814 = vrot.lane.b32.xlu0 %v3662, 48
    %v3815 = vpop.permute.xlu0 %3814
    %3816 = vrot.lane.b32.xlu0 %v3663, 48
    %v3817 = vpop.permute.xlu0 %3816
    %3818 = vrot.lane.b32.xlu0 %v3664, 48
    %v3819 = vpop.permute.xlu0 %3818
    %3820 = vrot.lane.b32.xlu0 %v3665, 48
    %v3821 = vpop.permute.xlu0 %3820
    %3822 = vrot.lane.b32.xlu0 %v3666, 48
    %v3823 = vpop.permute.xlu0 %3822
    %3824 = vrot.lane.b32.xlu0 %v3667, 48
    %v3825 = vpop.permute.xlu0 %3824
    %3826 = vrot.lane.b32.xlu0 %v3668, 48
    %v3827 = vpop.permute.xlu0 %3826
    %3828 = vrot.lane.b32.xlu0 %v3669, 48
    %v3829 = vpop.permute.xlu0 %3828
    %3830 = vrot.lane.b32.xlu0 %v3670, 48
    %v3831 = vpop.permute.xlu0 %3830
    %3832 = vrot.lane.b32.xlu0 %v3671, 48
    %v3833 = vpop.permute.xlu0 %3832
    %3834 = vrot.lane.b32.xlu0 %v3672, 48
    %v3835 = vpop.permute.xlu0 %3834
    %3836 = vrot.lane.b32.xlu0 %v3673, 48
    %v3837 = vpop.permute.xlu0 %3836
    %3838 = vrot.lane.b32.xlu0 %v3674, 48
    %v3839 = vpop.permute.xlu0 %3838
    %3840 = vrot.lane.b32.xlu0 %v3675, 48
    %v3841 = vpop.permute.xlu0 %3840
    %3842 = vrot.lane.b32.xlu0 %v3676, 48
    %v3843 = vpop.permute.xlu0 %3842
    %3844 = vrot.lane.b32.xlu0 %v3677, 48
    %v3845 = vpop.permute.xlu0 %3844
    %3846 = vrot.lane.b32.xlu0 %v3678, 48
    %v3847 = vpop.permute.xlu0 %3846
    %3848 = vrot.lane.b32.xlu0 %v3679, 48
    %v3849 = vpop.permute.xlu0 %3848
    %3850 = vrot.lane.b32.xlu0 %v3680, 48
    %v3851 = vpop.permute.xlu0 %3850
    %3852 = vrot.lane.b32.xlu0 %v3681, 48
    %v3853 = vpop.permute.xlu0 %3852
    %3854 = vrot.lane.b32.xlu0 %v3682, 48
    %v3855 = vpop.permute.xlu0 %3854
    %3856 = vrot.lane.b32.xlu0 %v3683, 48
    %v3857 = vpop.permute.xlu0 %3856
    %3858 = vrot.lane.b32.xlu0 %v3684, 48
    %v3859 = vpop.permute.xlu0 %3858
    %3860 = vrot.lane.b32.xlu0 %v3685, 48
    %v3861 = vpop.permute.xlu0 %3860
    %3862 = vrot.lane.b32.xlu0 %v3686, 48
    %v3863 = vpop.permute.xlu0 %3862
    %3864 = vrot.lane.b32.xlu0 %v3687, 48
    %v3865 = vpop.permute.xlu0 %3864
    %3866 = vrot.lane.b32.xlu0 %v3688, 48
    %v3867 = vpop.permute.xlu0 %3866
    %3868 = vrot.lane.b32.xlu0 %v3689, 48
    %v3869 = vpop.permute.xlu0 %3868
    %3870 = vrot.lane.b32.xlu0 %v3690, 48
    %v3871 = vpop.permute.xlu0 %3870
    %3872 = vrot.lane.b32.xlu0 %v3691, 48
    %v3873 = vpop.permute.xlu0 %3872
    %3874 = vrot.lane.b32.xlu0 %v3692, 48
    %v3875 = vpop.permute.xlu0 %3874
    %3876 = vrot.lane.b32.xlu0 %v3693, 48
    %v3877 = vpop.permute.xlu0 %3876
    %3878 = vrot.lane.b32.xlu0 %v3694, 48
    %v3879 = vpop.permute.xlu0 %3878
    %3880 = vrot.lane.b32.xlu0 %v3695, 48
    %v3881 = vpop.permute.xlu0 %3880
    %3882 = vrot.lane.b32.xlu0 %v3696, 48
    %v3883 = vpop.permute.xlu0 %3882
    %3884 = vrot.lane.b32.xlu0 %v3697, 48
    %v3885 = vpop.permute.xlu0 %3884
    %3886 = vrot.lane.b32.xlu0 %v3698, 48
    %v3887 = vpop.permute.xlu0 %3886
    %3888 = vrot.lane.b32.xlu0 %v3699, 48
    %v3889 = vpop.permute.xlu0 %3888
    %3890 = vrot.lane.b32.xlu0 %v3700, 48
    %v3891 = vpop.permute.xlu0 %3890
    %3892 = vrot.lane.b32.xlu0 %v3701, 48
    %v3893 = vpop.permute.xlu0 %3892
    %vm3958 = vcmask 454016
    %3959 = vst.msk [vmem:[#allocation3] sm:$0xf] %vm3958, %v3767
    %3960 = vst.msk [vmem:[#allocation3 + $0x4] sm:$0xf] %vm3958, %v3769
    %3961 = vst.msk [vmem:[#allocation3 + $0x8] sm:$0xf] %vm3958, %v3771
    %3962 = vst.msk [vmem:[#allocation3 + $0xc] sm:$0xf] %vm3958, %v3773
    %3963 = vst.msk [vmem:[#allocation3 + $0x10] sm:$0xf] %vm3958, %v3775
    %3964 = vst.msk [vmem:[#allocation3 + $0x14] sm:$0xf] %vm3958, %v3777
    %3965 = vst.msk [vmem:[#allocation3 + $0x18] sm:$0xf] %vm3958, %v3779
    %3966 = vst.msk [vmem:[#allocation3 + $0x1c] sm:$0xf] %vm3958, %v3781
    %3967 = vst.msk [vmem:[#allocation3 + $0x20] sm:$0xf] %vm3958, %v3783
    %3968 = vst.msk [vmem:[#allocation3 + $0x24] sm:$0xf] %vm3958, %v3785
    %3969 = vst.msk [vmem:[#allocation3 + $0x28] sm:$0xf] %vm3958, %v3787
    %3970 = vst.msk [vmem:[#allocation3 + $0x2c] sm:$0xf] %vm3958, %v3789
    %3971 = vst.msk [vmem:[#allocation3 + $0x30] sm:$0xf] %vm3958, %v3791
    %3972 = vst.msk [vmem:[#allocation3 + $0x34] sm:$0xf] %vm3958, %v3793
    %3973 = vst.msk [vmem:[#allocation3 + $0x38] sm:$0xf] %vm3958, %v3795
    %3974 = vst.msk [vmem:[#allocation3 + $0x3c] sm:$0xf] %vm3958, %v3797
    %3975 = vst.msk [vmem:[#allocation3 + $0x40] sm:$0xf] %vm3958, %v3799
    %3976 = vst.msk [vmem:[#allocation3 + $0x44] sm:$0xf] %vm3958, %v3801
    %3977 = vst.msk [vmem:[#allocation3 + $0x48] sm:$0xf] %vm3958, %v3803
    %3978 = vst.msk [vmem:[#allocation3 + $0x4c] sm:$0xf] %vm3958, %v3805
    %3979 = vst.msk [vmem:[#allocation3 + $0x50] sm:$0xf] %vm3958, %v3807
    %3980 = vst.msk [vmem:[#allocation3 + $0x54] sm:$0xf] %vm3958, %v3809
    %3981 = vst.msk [vmem:[#allocation3 + $0x58] sm:$0xf] %vm3958, %v3811
    %3982 = vst.msk [vmem:[#allocation3 + $0x5c] sm:$0xf] %vm3958, %v3813
    %3983 = vst.msk [vmem:[#allocation3 + $0x60] sm:$0xf] %vm3958, %v3815
    %3984 = vst.msk [vmem:[#allocation3 + $0x64] sm:$0xf] %vm3958, %v3817
    %3985 = vst.msk [vmem:[#allocation3 + $0x68] sm:$0xf] %vm3958, %v3819
    %3986 = vst.msk [vmem:[#allocation3 + $0x6c] sm:$0xf] %vm3958, %v3821
    %3987 = vst.msk [vmem:[#allocation3 + $0x70] sm:$0xf] %vm3958, %v3823
    %3988 = vst.msk [vmem:[#allocation3 + $0x74] sm:$0xf] %vm3958, %v3825
    %3989 = vst.msk [vmem:[#allocation3 + $0x78] sm:$0xf] %vm3958, %v3827
    %3990 = vst.msk [vmem:[#allocation3 + $0x7c] sm:$0xf] %vm3958, %v3829
    %3991 = vst.msk [vmem:[#allocation3 + $0x80] sm:$0xf] %vm3958, %v3831
    %3992 = vst.msk [vmem:[#allocation3 + $0x84] sm:$0xf] %vm3958, %v3833
    %3993 = vst.msk [vmem:[#allocation3 + $0x88] sm:$0xf] %vm3958, %v3835
    %3994 = vst.msk [vmem:[#allocation3 + $0x8c] sm:$0xf] %vm3958, %v3837
    %3995 = vst.msk [vmem:[#allocation3 + $0x90] sm:$0xf] %vm3958, %v3839
    %3996 = vst.msk [vmem:[#allocation3 + $0x94] sm:$0xf] %vm3958, %v3841
    %3997 = vst.msk [vmem:[#allocation3 + $0x98] sm:$0xf] %vm3958, %v3843
    %3998 = vst.msk [vmem:[#allocation3 + $0x9c] sm:$0xf] %vm3958, %v3845
    %3999 = vst.msk [vmem:[#allocation3 + $0xa0] sm:$0xf] %vm3958, %v3847
    %4000 = vst.msk [vmem:[#allocation3 + $0xa4] sm:$0xf] %vm3958, %v3849
    %4001 = vst.msk [vmem:[#allocation3 + $0xa8] sm:$0xf] %vm3958, %v3851
    %4002 = vst.msk [vmem:[#allocation3 + $0xac] sm:$0xf] %vm3958, %v3853
    %4003 = vst.msk [vmem:[#allocation3 + $0xb0] sm:$0xf] %vm3958, %v3855
    %4004 = vst.msk [vmem:[#allocation3 + $0xb4] sm:$0xf] %vm3958, %v3857
    %4005 = vst.msk [vmem:[#allocation3 + $0xb8] sm:$0xf] %vm3958, %v3859
    %4006 = vst.msk [vmem:[#allocation3 + $0xbc] sm:$0xf] %vm3958, %v3861
    %4007 = vst.msk [vmem:[#allocation3 + $0xc0] sm:$0xf] %vm3958, %v3863
    %4008 = vst.msk [vmem:[#allocation3 + $0xc4] sm:$0xf] %vm3958, %v3865
    %4009 = vst.msk [vmem:[#allocation3 + $0xc8] sm:$0xf] %vm3958, %v3867
    %4010 = vst.msk [vmem:[#allocation3 + $0xcc] sm:$0xf] %vm3958, %v3869
    %4011 = vst.msk [vmem:[#allocation3 + $0xd0] sm:$0xf] %vm3958, %v3871
    %4012 = vst.msk [vmem:[#allocation3 + $0xd4] sm:$0xf] %vm3958, %v3873
    %4013 = vst.msk [vmem:[#allocation3 + $0xd8] sm:$0xf] %vm3958, %v3875
    %4014 = vst.msk [vmem:[#allocation3 + $0xdc] sm:$0xf] %vm3958, %v3877
    %4015 = vst.msk [vmem:[#allocation3 + $0xe0] sm:$0xf] %vm3958, %v3879
    %4016 = vst.msk [vmem:[#allocation3 + $0xe4] sm:$0xf] %vm3958, %v3881
    %4017 = vst.msk [vmem:[#allocation3 + $0xe8] sm:$0xf] %vm3958, %v3883
    %4018 = vst.msk [vmem:[#allocation3 + $0xec] sm:$0xf] %vm3958, %v3885
    %4019 = vst.msk [vmem:[#allocation3 + $0xf0] sm:$0xf] %vm3958, %v3887
    %4020 = vst.msk [vmem:[#allocation3 + $0xf4] sm:$0xf] %vm3958, %v3889
    %4021 = vst.msk [vmem:[#allocation3 + $0xf8] sm:$0xf] %vm3958, %v3891
    %4022 = vst.msk [vmem:[#allocation3 + $0xfc] sm:$0xf] %vm3958, %v3893
    %s4023 = scalar_lea.vmem [#allocation2], 304
    %v4024 = vld [vmem:[%s4023] sm:$0xf]
    %v4025 = vld [vmem:[%s4023 + $0x4] sm:$0xf]
    %v4026 = vld [vmem:[%s4023 + $0x8] sm:$0xf]
    %v4027 = vld [vmem:[%s4023 + $0xc] sm:$0xf]
    %v4028 = vld [vmem:[%s4023 + $0x10] sm:$0xf]
    %v4029 = vld [vmem:[%s4023 + $0x14] sm:$0xf]
    %v4030 = vld [vmem:[%s4023 + $0x18] sm:$0xf]
    %v4031 = vld [vmem:[%s4023 + $0x1c] sm:$0xf]
    %v4032 = vld [vmem:[%s4023 + $0x20] sm:$0xf]
    %v4033 = vld [vmem:[%s4023 + $0x24] sm:$0xf]
    %v4034 = vld [vmem:[%s4023 + $0x28] sm:$0xf]
    %v4035 = vld [vmem:[%s4023 + $0x2c] sm:$0xf]
    %v4036 = vld [vmem:[%s4023 + $0x30] sm:$0xf]
    %v4037 = vld [vmem:[%s4023 + $0x34] sm:$0xf]
    %v4038 = vld [vmem:[%s4023 + $0x38] sm:$0xf]
    %v4039 = vld [vmem:[%s4023 + $0x3c] sm:$0xf]
    %v4040 = vld [vmem:[%s4023 + $0x40] sm:$0xf]
    %v4041 = vld [vmem:[%s4023 + $0x44] sm:$0xf]
    %v4042 = vld [vmem:[%s4023 + $0x48] sm:$0xf]
    %v4043 = vld [vmem:[%s4023 + $0x4c] sm:$0xf]
    %v4044 = vld [vmem:[%s4023 + $0x50] sm:$0xf]
    %v4045 = vld [vmem:[%s4023 + $0x54] sm:$0xf]
    %v4046 = vld [vmem:[%s4023 + $0x58] sm:$0xf]
    %v4047 = vld [vmem:[%s4023 + $0x5c] sm:$0xf]
    %v4048 = vld [vmem:[%s4023 + $0x60] sm:$0xf]
    %v4049 = vld [vmem:[%s4023 + $0x64] sm:$0xf]
    %v4050 = vld [vmem:[%s4023 + $0x68] sm:$0xf]
    %v4051 = vld [vmem:[%s4023 + $0x6c] sm:$0xf]
    %v4052 = vld [vmem:[%s4023 + $0x70] sm:$0xf]
    %v4053 = vld [vmem:[%s4023 + $0x74] sm:$0xf]
    %v4054 = vld [vmem:[%s4023 + $0x78] sm:$0xf]
    %v4055 = vld [vmem:[%s4023 + $0x7c] sm:$0xf]
    %v4056 = vld [vmem:[%s4023 + $0x90] sm:$0xf]
    %v4057 = vld [vmem:[%s4023 + $0x94] sm:$0xf]
    %v4058 = vld [vmem:[%s4023 + $0x98] sm:$0xf]
    %v4059 = vld [vmem:[%s4023 + $0x9c] sm:$0xf]
    %v4060 = vld [vmem:[%s4023 + $0xa0] sm:$0xf]
    %v4061 = vld [vmem:[%s4023 + $0xa4] sm:$0xf]
    %v4062 = vld [vmem:[%s4023 + $0xa8] sm:$0xf]
    %v4063 = vld [vmem:[%s4023 + $0xac] sm:$0xf]
    %v4064 = vld [vmem:[%s4023 + $0xb0] sm:$0xf]
    %v4065 = vld [vmem:[%s4023 + $0xb4] sm:$0xf]
    %v4066 = vld [vmem:[%s4023 + $0xb8] sm:$0xf]
    %v4067 = vld [vmem:[%s4023 + $0xbc] sm:$0xf]
    %v4068 = vld [vmem:[%s4023 + $0xc0] sm:$0xf]
    %v4069 = vld [vmem:[%s4023 + $0xc4] sm:$0xf]
    %v4070 = vld [vmem:[%s4023 + $0xc8] sm:$0xf]
    %v4071 = vld [vmem:[%s4023 + $0xcc] sm:$0xf]
    %v4072 = vld [vmem:[%s4023 + $0xd0] sm:$0xf]
    %v4073 = vld [vmem:[%s4023 + $0xd4] sm:$0xf]
    %v4074 = vld [vmem:[%s4023 + $0xd8] sm:$0xf]
    %v4075 = vld [vmem:[%s4023 + $0xdc] sm:$0xf]
    %v4076 = vld [vmem:[%s4023 + $0xe0] sm:$0xf]
    %v4077 = vld [vmem:[%s4023 + $0xe4] sm:$0xf]
    %v4078 = vld [vmem:[%s4023 + $0xe8] sm:$0xf]
    %v4079 = vld [vmem:[%s4023 + $0xec] sm:$0xf]
    %v4080 = vld [vmem:[%s4023 + $0xf0] sm:$0xf]
    %v4081 = vld [vmem:[%s4023 + $0xf4] sm:$0xf]
    %v4082 = vld [vmem:[%s4023 + $0xf8] sm:$0xf]
    %v4083 = vld [vmem:[%s4023 + $0xfc] sm:$0xf]
    %v4084 = vld [vmem:[%s4023 + $0x100] sm:$0xf]
    %v4085 = vld [vmem:[%s4023 + $0x104] sm:$0xf]
    %v4086 = vld [vmem:[%s4023 + $0x108] sm:$0xf]
    %v4087 = vld [vmem:[%s4023 + $0x10c] sm:$0xf]
    %4152 = vrot.lane.b32.xlu0 %v4024, 56
    %v4153 = vpop.permute.xlu0 %4152
    %4154 = vrot.lane.b32.xlu0 %v4025, 56
    %v4155 = vpop.permute.xlu0 %4154
    %4156 = vrot.lane.b32.xlu0 %v4026, 56
    %v4157 = vpop.permute.xlu0 %4156
    %4158 = vrot.lane.b32.xlu0 %v4027, 56
    %v4159 = vpop.permute.xlu0 %4158
    %4160 = vrot.lane.b32.xlu0 %v4028, 56
    %v4161 = vpop.permute.xlu0 %4160
    %4162 = vrot.lane.b32.xlu0 %v4029, 56
    %v4163 = vpop.permute.xlu0 %4162
    %4164 = vrot.lane.b32.xlu0 %v4030, 56
    %v4165 = vpop.permute.xlu0 %4164
    %4166 = vrot.lane.b32.xlu0 %v4031, 56
    %v4167 = vpop.permute.xlu0 %4166
    %4168 = vrot.lane.b32.xlu0 %v4032, 56
    %v4169 = vpop.permute.xlu0 %4168
    %4170 = vrot.lane.b32.xlu0 %v4033, 56
    %v4171 = vpop.permute.xlu0 %4170
    %4172 = vrot.lane.b32.xlu0 %v4034, 56
    %v4173 = vpop.permute.xlu0 %4172
    %4174 = vrot.lane.b32.xlu0 %v4035, 56
    %v4175 = vpop.permute.xlu0 %4174
    %4176 = vrot.lane.b32.xlu0 %v4036, 56
    %v4177 = vpop.permute.xlu0 %4176
    %4178 = vrot.lane.b32.xlu0 %v4037, 56
    %v4179 = vpop.permute.xlu0 %4178
    %4180 = vrot.lane.b32.xlu0 %v4038, 56
    %v4181 = vpop.permute.xlu0 %4180
    %4182 = vrot.lane.b32.xlu0 %v4039, 56
    %v4183 = vpop.permute.xlu0 %4182
    %4184 = vrot.lane.b32.xlu0 %v4040, 56
    %v4185 = vpop.permute.xlu0 %4184
    %4186 = vrot.lane.b32.xlu0 %v4041, 56
    %v4187 = vpop.permute.xlu0 %4186
    %4188 = vrot.lane.b32.xlu0 %v4042, 56
    %v4189 = vpop.permute.xlu0 %4188
    %4190 = vrot.lane.b32.xlu0 %v4043, 56
    %v4191 = vpop.permute.xlu0 %4190
    %4192 = vrot.lane.b32.xlu0 %v4044, 56
    %v4193 = vpop.permute.xlu0 %4192
    %4194 = vrot.lane.b32.xlu0 %v4045, 56
    %v4195 = vpop.permute.xlu0 %4194
    %4196 = vrot.lane.b32.xlu0 %v4046, 56
    %v4197 = vpop.permute.xlu0 %4196
    %4198 = vrot.lane.b32.xlu0 %v4047, 56
    %v4199 = vpop.permute.xlu0 %4198
    %4200 = vrot.lane.b32.xlu0 %v4048, 56
    %v4201 = vpop.permute.xlu0 %4200
    %4202 = vrot.lane.b32.xlu0 %v4049, 56
    %v4203 = vpop.permute.xlu0 %4202
    %4204 = vrot.lane.b32.xlu0 %v4050, 56
    %v4205 = vpop.permute.xlu0 %4204
    %4206 = vrot.lane.b32.xlu0 %v4051, 56
    %v4207 = vpop.permute.xlu0 %4206
    %4208 = vrot.lane.b32.xlu0 %v4052, 56
    %v4209 = vpop.permute.xlu0 %4208
    %4210 = vrot.lane.b32.xlu0 %v4053, 56
    %v4211 = vpop.permute.xlu0 %4210
    %4212 = vrot.lane.b32.xlu0 %v4054, 56
    %v4213 = vpop.permute.xlu0 %4212
    %4214 = vrot.lane.b32.xlu0 %v4055, 56
    %v4215 = vpop.permute.xlu0 %4214
    %4216 = vrot.lane.b32.xlu0 %v4056, 56
    %v4217 = vpop.permute.xlu0 %4216
    %4218 = vrot.lane.b32.xlu0 %v4057, 56
    %v4219 = vpop.permute.xlu0 %4218
    %4220 = vrot.lane.b32.xlu0 %v4058, 56
    %v4221 = vpop.permute.xlu0 %4220
    %4222 = vrot.lane.b32.xlu0 %v4059, 56
    %v4223 = vpop.permute.xlu0 %4222
    %4224 = vrot.lane.b32.xlu0 %v4060, 56
    %v4225 = vpop.permute.xlu0 %4224
    %4226 = vrot.lane.b32.xlu0 %v4061, 56
    %v4227 = vpop.permute.xlu0 %4226
    %4228 = vrot.lane.b32.xlu0 %v4062, 56
    %v4229 = vpop.permute.xlu0 %4228
    %4230 = vrot.lane.b32.xlu0 %v4063, 56
    %v4231 = vpop.permute.xlu0 %4230
    %4232 = vrot.lane.b32.xlu0 %v4064, 56
    %v4233 = vpop.permute.xlu0 %4232
    %4234 = vrot.lane.b32.xlu0 %v4065, 56
    %v4235 = vpop.permute.xlu0 %4234
    %4236 = vrot.lane.b32.xlu0 %v4066, 56
    %v4237 = vpop.permute.xlu0 %4236
    %4238 = vrot.lane.b32.xlu0 %v4067, 56
    %v4239 = vpop.permute.xlu0 %4238
    %4240 = vrot.lane.b32.xlu0 %v4068, 56
    %v4241 = vpop.permute.xlu0 %4240
    %4242 = vrot.lane.b32.xlu0 %v4069, 56
    %v4243 = vpop.permute.xlu0 %4242
    %4244 = vrot.lane.b32.xlu0 %v4070, 56
    %v4245 = vpop.permute.xlu0 %4244
    %4246 = vrot.lane.b32.xlu0 %v4071, 56
    %v4247 = vpop.permute.xlu0 %4246
    %4248 = vrot.lane.b32.xlu0 %v4072, 56
    %v4249 = vpop.permute.xlu0 %4248
    %4250 = vrot.lane.b32.xlu0 %v4073, 56
    %v4251 = vpop.permute.xlu0 %4250
    %4252 = vrot.lane.b32.xlu0 %v4074, 56
    %v4253 = vpop.permute.xlu0 %4252
    %4254 = vrot.lane.b32.xlu0 %v4075, 56
    %v4255 = vpop.permute.xlu0 %4254
    %4256 = vrot.lane.b32.xlu0 %v4076, 56
    %v4257 = vpop.permute.xlu0 %4256
    %4258 = vrot.lane.b32.xlu0 %v4077, 56
    %v4259 = vpop.permute.xlu0 %4258
    %4260 = vrot.lane.b32.xlu0 %v4078, 56
    %v4261 = vpop.permute.xlu0 %4260
    %4262 = vrot.lane.b32.xlu0 %v4079, 56
    %v4263 = vpop.permute.xlu0 %4262
    %4264 = vrot.lane.b32.xlu0 %v4080, 56
    %v4265 = vpop.permute.xlu0 %4264
    %4266 = vrot.lane.b32.xlu0 %v4081, 56
    %v4267 = vpop.permute.xlu0 %4266
    %4268 = vrot.lane.b32.xlu0 %v4082, 56
    %v4269 = vpop.permute.xlu0 %4268
    %4270 = vrot.lane.b32.xlu0 %v4083, 56
    %v4271 = vpop.permute.xlu0 %4270
    %4272 = vrot.lane.b32.xlu0 %v4084, 56
    %v4273 = vpop.permute.xlu0 %4272
    %4274 = vrot.lane.b32.xlu0 %v4085, 56
    %v4275 = vpop.permute.xlu0 %4274
    %4276 = vrot.lane.b32.xlu0 %v4086, 56
    %v4277 = vpop.permute.xlu0 %4276
    %4278 = vrot.lane.b32.xlu0 %v4087, 56
    %v4279 = vpop.permute.xlu0 %4278
    %vm4344 = vcmask 519616
    %4345 = vst.msk [vmem:[#allocation3] sm:$0xf] %vm4344, %v4153
    %4346 = vst.msk [vmem:[#allocation3 + $0x4] sm:$0xf] %vm4344, %v4155
    %4347 = vst.msk [vmem:[#allocation3 + $0x8] sm:$0xf] %vm4344, %v4157
    %4348 = vst.msk [vmem:[#allocation3 + $0xc] sm:$0xf] %vm4344, %v4159
    %4349 = vst.msk [vmem:[#allocation3 + $0x10] sm:$0xf] %vm4344, %v4161
    %4350 = vst.msk [vmem:[#allocation3 + $0x14] sm:$0xf] %vm4344, %v4163
    %4351 = vst.msk [vmem:[#allocation3 + $0x18] sm:$0xf] %vm4344, %v4165
    %4352 = vst.msk [vmem:[#allocation3 + $0x1c] sm:$0xf] %vm4344, %v4167
    %4353 = vst.msk [vmem:[#allocation3 + $0x20] sm:$0xf] %vm4344, %v4169
    %4354 = vst.msk [vmem:[#allocation3 + $0x24] sm:$0xf] %vm4344, %v4171
    %4355 = vst.msk [vmem:[#allocation3 + $0x28] sm:$0xf] %vm4344, %v4173
    %4356 = vst.msk [vmem:[#allocation3 + $0x2c] sm:$0xf] %vm4344, %v4175
    %4357 = vst.msk [vmem:[#allocation3 + $0x30] sm:$0xf] %vm4344, %v4177
    %4358 = vst.msk [vmem:[#allocation3 + $0x34] sm:$0xf] %vm4344, %v4179
    %4359 = vst.msk [vmem:[#allocation3 + $0x38] sm:$0xf] %vm4344, %v4181
    %4360 = vst.msk [vmem:[#allocation3 + $0x3c] sm:$0xf] %vm4344, %v4183
    %4361 = vst.msk [vmem:[#allocation3 + $0x40] sm:$0xf] %vm4344, %v4185
    %4362 = vst.msk [vmem:[#allocation3 + $0x44] sm:$0xf] %vm4344, %v4187
    %4363 = vst.msk [vmem:[#allocation3 + $0x48] sm:$0xf] %vm4344, %v4189
    %4364 = vst.msk [vmem:[#allocation3 + $0x4c] sm:$0xf] %vm4344, %v4191
    %4365 = vst.msk [vmem:[#allocation3 + $0x50] sm:$0xf] %vm4344, %v4193
    %4366 = vst.msk [vmem:[#allocation3 + $0x54] sm:$0xf] %vm4344, %v4195
    %4367 = vst.msk [vmem:[#allocation3 + $0x58] sm:$0xf] %vm4344, %v4197
    %4368 = vst.msk [vmem:[#allocation3 + $0x5c] sm:$0xf] %vm4344, %v4199
    %4369 = vst.msk [vmem:[#allocation3 + $0x60] sm:$0xf] %vm4344, %v4201
    %4370 = vst.msk [vmem:[#allocation3 + $0x64] sm:$0xf] %vm4344, %v4203
    %4371 = vst.msk [vmem:[#allocation3 + $0x68] sm:$0xf] %vm4344, %v4205
    %4372 = vst.msk [vmem:[#allocation3 + $0x6c] sm:$0xf] %vm4344, %v4207
    %4373 = vst.msk [vmem:[#allocation3 + $0x70] sm:$0xf] %vm4344, %v4209
    %4374 = vst.msk [vmem:[#allocation3 + $0x74] sm:$0xf] %vm4344, %v4211
    %4375 = vst.msk [vmem:[#allocation3 + $0x78] sm:$0xf] %vm4344, %v4213
    %4376 = vst.msk [vmem:[#allocation3 + $0x7c] sm:$0xf] %vm4344, %v4215
    %4377 = vst.msk [vmem:[#allocation3 + $0x80] sm:$0xf] %vm4344, %v4217
    %4378 = vst.msk [vmem:[#allocation3 + $0x84] sm:$0xf] %vm4344, %v4219
    %4379 = vst.msk [vmem:[#allocation3 + $0x88] sm:$0xf] %vm4344, %v4221
    %4380 = vst.msk [vmem:[#allocation3 + $0x8c] sm:$0xf] %vm4344, %v4223
    %4381 = vst.msk [vmem:[#allocation3 + $0x90] sm:$0xf] %vm4344, %v4225
    %4382 = vst.msk [vmem:[#allocation3 + $0x94] sm:$0xf] %vm4344, %v4227
    %4383 = vst.msk [vmem:[#allocation3 + $0x98] sm:$0xf] %vm4344, %v4229
    %4384 = vst.msk [vmem:[#allocation3 + $0x9c] sm:$0xf] %vm4344, %v4231
    %4385 = vst.msk [vmem:[#allocation3 + $0xa0] sm:$0xf] %vm4344, %v4233
    %4386 = vst.msk [vmem:[#allocation3 + $0xa4] sm:$0xf] %vm4344, %v4235
    %4387 = vst.msk [vmem:[#allocation3 + $0xa8] sm:$0xf] %vm4344, %v4237
    %4388 = vst.msk [vmem:[#allocation3 + $0xac] sm:$0xf] %vm4344, %v4239
    %4389 = vst.msk [vmem:[#allocation3 + $0xb0] sm:$0xf] %vm4344, %v4241
    %4390 = vst.msk [vmem:[#allocation3 + $0xb4] sm:$0xf] %vm4344, %v4243
    %4391 = vst.msk [vmem:[#allocation3 + $0xb8] sm:$0xf] %vm4344, %v4245
    %4392 = vst.msk [vmem:[#allocation3 + $0xbc] sm:$0xf] %vm4344, %v4247
    %4393 = vst.msk [vmem:[#allocation3 + $0xc0] sm:$0xf] %vm4344, %v4249
    %4394 = vst.msk [vmem:[#allocation3 + $0xc4] sm:$0xf] %vm4344, %v4251
    %4395 = vst.msk [vmem:[#allocation3 + $0xc8] sm:$0xf] %vm4344, %v4253
    %4396 = vst.msk [vmem:[#allocation3 + $0xcc] sm:$0xf] %vm4344, %v4255
    %4397 = vst.msk [vmem:[#allocation3 + $0xd0] sm:$0xf] %vm4344, %v4257
    %4398 = vst.msk [vmem:[#allocation3 + $0xd4] sm:$0xf] %vm4344, %v4259
    %4399 = vst.msk [vmem:[#allocation3 + $0xd8] sm:$0xf] %vm4344, %v4261
    %4400 = vst.msk [vmem:[#allocation3 + $0xdc] sm:$0xf] %vm4344, %v4263
    %4401 = vst.msk [vmem:[#allocation3 + $0xe0] sm:$0xf] %vm4344, %v4265
    %4402 = vst.msk [vmem:[#allocation3 + $0xe4] sm:$0xf] %vm4344, %v4267
    %4403 = vst.msk [vmem:[#allocation3 + $0xe8] sm:$0xf] %vm4344, %v4269
    %4404 = vst.msk [vmem:[#allocation3 + $0xec] sm:$0xf] %vm4344, %v4271
    %4405 = vst.msk [vmem:[#allocation3 + $0xf0] sm:$0xf] %vm4344, %v4273
    %4406 = vst.msk [vmem:[#allocation3 + $0xf4] sm:$0xf] %vm4344, %v4275
    %4407 = vst.msk [vmem:[#allocation3 + $0xf8] sm:$0xf] %vm4344, %v4277
    %4408 = vst.msk [vmem:[#allocation3 + $0xfc] sm:$0xf] %vm4344, %v4279
    %s4409 = scalar_lea.vmem [#allocation2], 592
    %v4410 = vld [vmem:[%s4409] sm:$0xf]
    %v4411 = vld [vmem:[%s4409 + $0x4] sm:$0xf]
    %v4412 = vld [vmem:[%s4409 + $0x8] sm:$0xf]
    %v4413 = vld [vmem:[%s4409 + $0xc] sm:$0xf]
    %v4414 = vld [vmem:[%s4409 + $0x10] sm:$0xf]
    %v4415 = vld [vmem:[%s4409 + $0x14] sm:$0xf]
    %v4416 = vld [vmem:[%s4409 + $0x18] sm:$0xf]
    %v4417 = vld [vmem:[%s4409 + $0x1c] sm:$0xf]
    %v4418 = vld [vmem:[%s4409 + $0x20] sm:$0xf]
    %v4419 = vld [vmem:[%s4409 + $0x24] sm:$0xf]
    %v4420 = vld [vmem:[%s4409 + $0x28] sm:$0xf]
    %v4421 = vld [vmem:[%s4409 + $0x2c] sm:$0xf]
    %v4422 = vld [vmem:[%s4409 + $0x30] sm:$0xf]
    %v4423 = vld [vmem:[%s4409 + $0x34] sm:$0xf]
    %v4424 = vld [vmem:[%s4409 + $0x38] sm:$0xf]
    %v4425 = vld [vmem:[%s4409 + $0x3c] sm:$0xf]
    %v4426 = vld [vmem:[%s4409 + $0x40] sm:$0xf]
    %v4427 = vld [vmem:[%s4409 + $0x44] sm:$0xf]
    %v4428 = vld [vmem:[%s4409 + $0x48] sm:$0xf]
    %v4429 = vld [vmem:[%s4409 + $0x4c] sm:$0xf]
    %v4430 = vld [vmem:[%s4409 + $0x50] sm:$0xf]
    %v4431 = vld [vmem:[%s4409 + $0x54] sm:$0xf]
    %v4432 = vld [vmem:[%s4409 + $0x58] sm:$0xf]
    %v4433 = vld [vmem:[%s4409 + $0x5c] sm:$0xf]
    %v4434 = vld [vmem:[%s4409 + $0x60] sm:$0xf]
    %v4435 = vld [vmem:[%s4409 + $0x64] sm:$0xf]
    %v4436 = vld [vmem:[%s4409 + $0x68] sm:$0xf]
    %v4437 = vld [vmem:[%s4409 + $0x6c] sm:$0xf]
    %v4438 = vld [vmem:[%s4409 + $0x70] sm:$0xf]
    %v4439 = vld [vmem:[%s4409 + $0x74] sm:$0xf]
    %v4440 = vld [vmem:[%s4409 + $0x78] sm:$0xf]
    %v4441 = vld [vmem:[%s4409 + $0x7c] sm:$0xf]
    %v4442 = vld [vmem:[%s4409 + $0x90] sm:$0xf]
    %v4443 = vld [vmem:[%s4409 + $0x94] sm:$0xf]
    %v4444 = vld [vmem:[%s4409 + $0x98] sm:$0xf]
    %v4445 = vld [vmem:[%s4409 + $0x9c] sm:$0xf]
    %v4446 = vld [vmem:[%s4409 + $0xa0] sm:$0xf]
    %v4447 = vld [vmem:[%s4409 + $0xa4] sm:$0xf]
    %v4448 = vld [vmem:[%s4409 + $0xa8] sm:$0xf]
    %v4449 = vld [vmem:[%s4409 + $0xac] sm:$0xf]
    %v4450 = vld [vmem:[%s4409 + $0xb0] sm:$0xf]
    %v4451 = vld [vmem:[%s4409 + $0xb4] sm:$0xf]
    %v4452 = vld [vmem:[%s4409 + $0xb8] sm:$0xf]
    %v4453 = vld [vmem:[%s4409 + $0xbc] sm:$0xf]
    %v4454 = vld [vmem:[%s4409 + $0xc0] sm:$0xf]
    %v4455 = vld [vmem:[%s4409 + $0xc4] sm:$0xf]
    %v4456 = vld [vmem:[%s4409 + $0xc8] sm:$0xf]
    %v4457 = vld [vmem:[%s4409 + $0xcc] sm:$0xf]
    %v4458 = vld [vmem:[%s4409 + $0xd0] sm:$0xf]
    %v4459 = vld [vmem:[%s4409 + $0xd4] sm:$0xf]
    %v4460 = vld [vmem:[%s4409 + $0xd8] sm:$0xf]
    %v4461 = vld [vmem:[%s4409 + $0xdc] sm:$0xf]
    %v4462 = vld [vmem:[%s4409 + $0xe0] sm:$0xf]
    %v4463 = vld [vmem:[%s4409 + $0xe4] sm:$0xf]
    %v4464 = vld [vmem:[%s4409 + $0xe8] sm:$0xf]
    %v4465 = vld [vmem:[%s4409 + $0xec] sm:$0xf]
    %v4466 = vld [vmem:[%s4409 + $0xf0] sm:$0xf]
    %v4467 = vld [vmem:[%s4409 + $0xf4] sm:$0xf]
    %v4468 = vld [vmem:[%s4409 + $0xf8] sm:$0xf]
    %v4469 = vld [vmem:[%s4409 + $0xfc] sm:$0xf]
    %v4470 = vld [vmem:[%s4409 + $0x100] sm:$0xf]
    %v4471 = vld [vmem:[%s4409 + $0x104] sm:$0xf]
    %v4472 = vld [vmem:[%s4409 + $0x108] sm:$0xf]
    %v4473 = vld [vmem:[%s4409 + $0x10c] sm:$0xf]
    %4538 = vrot.lane.b32.xlu0 %v4410, 64
    %v4539 = vpop.permute.xlu0 %4538
    %4540 = vrot.lane.b32.xlu0 %v4411, 64
    %v4541 = vpop.permute.xlu0 %4540
    %4542 = vrot.lane.b32.xlu0 %v4412, 64
    %v4543 = vpop.permute.xlu0 %4542
    %4544 = vrot.lane.b32.xlu0 %v4413, 64
    %v4545 = vpop.permute.xlu0 %4544
    %4546 = vrot.lane.b32.xlu0 %v4414, 64
    %v4547 = vpop.permute.xlu0 %4546
    %4548 = vrot.lane.b32.xlu0 %v4415, 64
    %v4549 = vpop.permute.xlu0 %4548
    %4550 = vrot.lane.b32.xlu0 %v4416, 64
    %v4551 = vpop.permute.xlu0 %4550
    %4552 = vrot.lane.b32.xlu0 %v4417, 64
    %v4553 = vpop.permute.xlu0 %4552
    %4554 = vrot.lane.b32.xlu0 %v4418, 64
    %v4555 = vpop.permute.xlu0 %4554
    %4556 = vrot.lane.b32.xlu0 %v4419, 64
    %v4557 = vpop.permute.xlu0 %4556
    %4558 = vrot.lane.b32.xlu0 %v4420, 64
    %v4559 = vpop.permute.xlu0 %4558
    %4560 = vrot.lane.b32.xlu0 %v4421, 64
    %v4561 = vpop.permute.xlu0 %4560
    %4562 = vrot.lane.b32.xlu0 %v4422, 64
    %v4563 = vpop.permute.xlu0 %4562
    %4564 = vrot.lane.b32.xlu0 %v4423, 64
    %v4565 = vpop.permute.xlu0 %4564
    %4566 = vrot.lane.b32.xlu0 %v4424, 64
    %v4567 = vpop.permute.xlu0 %4566
    %4568 = vrot.lane.b32.xlu0 %v4425, 64
    %v4569 = vpop.permute.xlu0 %4568
    %4570 = vrot.lane.b32.xlu0 %v4426, 64
    %v4571 = vpop.permute.xlu0 %4570
    %4572 = vrot.lane.b32.xlu0 %v4427, 64
    %v4573 = vpop.permute.xlu0 %4572
    %4574 = vrot.lane.b32.xlu0 %v4428, 64
    %v4575 = vpop.permute.xlu0 %4574
    %4576 = vrot.lane.b32.xlu0 %v4429, 64
    %v4577 = vpop.permute.xlu0 %4576
    %4578 = vrot.lane.b32.xlu0 %v4430, 64
    %v4579 = vpop.permute.xlu0 %4578
    %4580 = vrot.lane.b32.xlu0 %v4431, 64
    %v4581 = vpop.permute.xlu0 %4580
    %4582 = vrot.lane.b32.xlu0 %v4432, 64
    %v4583 = vpop.permute.xlu0 %4582
    %4584 = vrot.lane.b32.xlu0 %v4433, 64
    %v4585 = vpop.permute.xlu0 %4584
    %4586 = vrot.lane.b32.xlu0 %v4434, 64
    %v4587 = vpop.permute.xlu0 %4586
    %4588 = vrot.lane.b32.xlu0 %v4435, 64
    %v4589 = vpop.permute.xlu0 %4588
    %4590 = vrot.lane.b32.xlu0 %v4436, 64
    %v4591 = vpop.permute.xlu0 %4590
    %4592 = vrot.lane.b32.xlu0 %v4437, 64
    %v4593 = vpop.permute.xlu0 %4592
    %4594 = vrot.lane.b32.xlu0 %v4438, 64
    %v4595 = vpop.permute.xlu0 %4594
    %4596 = vrot.lane.b32.xlu0 %v4439, 64
    %v4597 = vpop.permute.xlu0 %4596
    %4598 = vrot.lane.b32.xlu0 %v4440, 64
    %v4599 = vpop.permute.xlu0 %4598
    %4600 = vrot.lane.b32.xlu0 %v4441, 64
    %v4601 = vpop.permute.xlu0 %4600
    %4602 = vrot.lane.b32.xlu0 %v4442, 64
    %v4603 = vpop.permute.xlu0 %4602
    %4604 = vrot.lane.b32.xlu0 %v4443, 64
    %v4605 = vpop.permute.xlu0 %4604
    %4606 = vrot.lane.b32.xlu0 %v4444, 64
    %v4607 = vpop.permute.xlu0 %4606
    %4608 = vrot.lane.b32.xlu0 %v4445, 64
    %v4609 = vpop.permute.xlu0 %4608
    %4610 = vrot.lane.b32.xlu0 %v4446, 64
    %v4611 = vpop.permute.xlu0 %4610
    %4612 = vrot.lane.b32.xlu0 %v4447, 64
    %v4613 = vpop.permute.xlu0 %4612
    %4614 = vrot.lane.b32.xlu0 %v4448, 64
    %v4615 = vpop.permute.xlu0 %4614
    %4616 = vrot.lane.b32.xlu0 %v4449, 64
    %v4617 = vpop.permute.xlu0 %4616
    %4618 = vrot.lane.b32.xlu0 %v4450, 64
    %v4619 = vpop.permute.xlu0 %4618
    %4620 = vrot.lane.b32.xlu0 %v4451, 64
    %v4621 = vpop.permute.xlu0 %4620
    %4622 = vrot.lane.b32.xlu0 %v4452, 64
    %v4623 = vpop.permute.xlu0 %4622
    %4624 = vrot.lane.b32.xlu0 %v4453, 64
    %v4625 = vpop.permute.xlu0 %4624
    %4626 = vrot.lane.b32.xlu0 %v4454, 64
    %v4627 = vpop.permute.xlu0 %4626
    %4628 = vrot.lane.b32.xlu0 %v4455, 64
    %v4629 = vpop.permute.xlu0 %4628
    %4630 = vrot.lane.b32.xlu0 %v4456, 64
    %v4631 = vpop.permute.xlu0 %4630
    %4632 = vrot.lane.b32.xlu0 %v4457, 64
    %v4633 = vpop.permute.xlu0 %4632
    %4634 = vrot.lane.b32.xlu0 %v4458, 64
    %v4635 = vpop.permute.xlu0 %4634
    %4636 = vrot.lane.b32.xlu0 %v4459, 64
    %v4637 = vpop.permute.xlu0 %4636
    %4638 = vrot.lane.b32.xlu0 %v4460, 64
    %v4639 = vpop.permute.xlu0 %4638
    %4640 = vrot.lane.b32.xlu0 %v4461, 64
    %v4641 = vpop.permute.xlu0 %4640
    %4642 = vrot.lane.b32.xlu0 %v4462, 64
    %v4643 = vpop.permute.xlu0 %4642
    %4644 = vrot.lane.b32.xlu0 %v4463, 64
    %v4645 = vpop.permute.xlu0 %4644
    %4646 = vrot.lane.b32.xlu0 %v4464, 64
    %v4647 = vpop.permute.xlu0 %4646
    %4648 = vrot.lane.b32.xlu0 %v4465, 64
    %v4649 = vpop.permute.xlu0 %4648
    %4650 = vrot.lane.b32.xlu0 %v4466, 64
    %v4651 = vpop.permute.xlu0 %4650
    %4652 = vrot.lane.b32.xlu0 %v4467, 64
    %v4653 = vpop.permute.xlu0 %4652
    %4654 = vrot.lane.b32.xlu0 %v4468, 64
    %v4655 = vpop.permute.xlu0 %4654
    %4656 = vrot.lane.b32.xlu0 %v4469, 64
    %v4657 = vpop.permute.xlu0 %4656
    %4658 = vrot.lane.b32.xlu0 %v4470, 64
    %v4659 = vpop.permute.xlu0 %4658
    %4660 = vrot.lane.b32.xlu0 %v4471, 64
    %v4661 = vpop.permute.xlu0 %4660
    %4662 = vrot.lane.b32.xlu0 %v4472, 64
    %v4663 = vpop.permute.xlu0 %4662
    %4664 = vrot.lane.b32.xlu0 %v4473, 64
    %v4665 = vpop.permute.xlu0 %4664
    %vm4730 = vcmask 585216
    %4731 = vst.msk [vmem:[#allocation3] sm:$0xf] %vm4730, %v4539
    %4732 = vst.msk [vmem:[#allocation3 + $0x4] sm:$0xf] %vm4730, %v4541
    %4733 = vst.msk [vmem:[#allocation3 + $0x8] sm:$0xf] %vm4730, %v4543
    %4734 = vst.msk [vmem:[#allocation3 + $0xc] sm:$0xf] %vm4730, %v4545
    %4735 = vst.msk [vmem:[#allocation3 + $0x10] sm:$0xf] %vm4730, %v4547
    %4736 = vst.msk [vmem:[#allocation3 + $0x14] sm:$0xf] %vm4730, %v4549
    %4737 = vst.msk [vmem:[#allocation3 + $0x18] sm:$0xf] %vm4730, %v4551
    %4738 = vst.msk [vmem:[#allocation3 + $0x1c] sm:$0xf] %vm4730, %v4553
    %4739 = vst.msk [vmem:[#allocation3 + $0x20] sm:$0xf] %vm4730, %v4555
    %4740 = vst.msk [vmem:[#allocation3 + $0x24] sm:$0xf] %vm4730, %v4557
    %4741 = vst.msk [vmem:[#allocation3 + $0x28] sm:$0xf] %vm4730, %v4559
    %4742 = vst.msk [vmem:[#allocation3 + $0x2c] sm:$0xf] %vm4730, %v4561
    %4743 = vst.msk [vmem:[#allocation3 + $0x30] sm:$0xf] %vm4730, %v4563
    %4744 = vst.msk [vmem:[#allocation3 + $0x34] sm:$0xf] %vm4730, %v4565
    %4745 = vst.msk [vmem:[#allocation3 + $0x38] sm:$0xf] %vm4730, %v4567
    %4746 = vst.msk [vmem:[#allocation3 + $0x3c] sm:$0xf] %vm4730, %v4569
    %4747 = vst.msk [vmem:[#allocation3 + $0x40] sm:$0xf] %vm4730, %v4571
    %4748 = vst.msk [vmem:[#allocation3 + $0x44] sm:$0xf] %vm4730, %v4573
    %4749 = vst.msk [vmem:[#allocation3 + $0x48] sm:$0xf] %vm4730, %v4575
    %4750 = vst.msk [vmem:[#allocation3 + $0x4c] sm:$0xf] %vm4730, %v4577
    %4751 = vst.msk [vmem:[#allocation3 + $0x50] sm:$0xf] %vm4730, %v4579
    %4752 = vst.msk [vmem:[#allocation3 + $0x54] sm:$0xf] %vm4730, %v4581
    %4753 = vst.msk [vmem:[#allocation3 + $0x58] sm:$0xf] %vm4730, %v4583
    %4754 = vst.msk [vmem:[#allocation3 + $0x5c] sm:$0xf] %vm4730, %v4585
    %4755 = vst.msk [vmem:[#allocation3 + $0x60] sm:$0xf] %vm4730, %v4587
    %4756 = vst.msk [vmem:[#allocation3 + $0x64] sm:$0xf] %vm4730, %v4589
    %4757 = vst.msk [vmem:[#allocation3 + $0x68] sm:$0xf] %vm4730, %v4591
    %4758 = vst.msk [vmem:[#allocation3 + $0x6c] sm:$0xf] %vm4730, %v4593
    %4759 = vst.msk [vmem:[#allocation3 + $0x70] sm:$0xf] %vm4730, %v4595
    %4760 = vst.msk [vmem:[#allocation3 + $0x74] sm:$0xf] %vm4730, %v4597
    %4761 = vst.msk [vmem:[#allocation3 + $0x78] sm:$0xf] %vm4730, %v4599
    %4762 = vst.msk [vmem:[#allocation3 + $0x7c] sm:$0xf] %vm4730, %v4601
    %4763 = vst.msk [vmem:[#allocation3 + $0x80] sm:$0xf] %vm4730, %v4603
    %4764 = vst.msk [vmem:[#allocation3 + $0x84] sm:$0xf] %vm4730, %v4605
    %4765 = vst.msk [vmem:[#allocation3 + $0x88] sm:$0xf] %vm4730, %v4607
    %4766 = vst.msk [vmem:[#allocation3 + $0x8c] sm:$0xf] %vm4730, %v4609
    %4767 = vst.msk [vmem:[#allocation3 + $0x90] sm:$0xf] %vm4730, %v4611
    %4768 = vst.msk [vmem:[#allocation3 + $0x94] sm:$0xf] %vm4730, %v4613
    %4769 = vst.msk [vmem:[#allocation3 + $0x98] sm:$0xf] %vm4730, %v4615
    %4770 = vst.msk [vmem:[#allocation3 + $0x9c] sm:$0xf] %vm4730, %v4617
    %4771 = vst.msk [vmem:[#allocation3 + $0xa0] sm:$0xf] %vm4730, %v4619
    %4772 = vst.msk [vmem:[#allocation3 + $0xa4] sm:$0xf] %vm4730, %v4621
    %4773 = vst.msk [vmem:[#allocation3 + $0xa8] sm:$0xf] %vm4730, %v4623
    %4774 = vst.msk [vmem:[#allocation3 + $0xac] sm:$0xf] %vm4730, %v4625
    %4775 = vst.msk [vmem:[#allocation3 + $0xb0] sm:$0xf] %vm4730, %v4627
    %4776 = vst.msk [vmem:[#allocation3 + $0xb4] sm:$0xf] %vm4730, %v4629
    %4777 = vst.msk [vmem:[#allocation3 + $0xb8] sm:$0xf] %vm4730, %v4631
    %4778 = vst.msk [vmem:[#allocation3 + $0xbc] sm:$0xf] %vm4730, %v4633
    %4779 = vst.msk [vmem:[#allocation3 + $0xc0] sm:$0xf] %vm4730, %v4635
    %4780 = vst.msk [vmem:[#allocation3 + $0xc4] sm:$0xf] %vm4730, %v4637
    %4781 = vst.msk [vmem:[#allocation3 + $0xc8] sm:$0xf] %vm4730, %v4639
    %4782 = vst.msk [vmem:[#allocation3 + $0xcc] sm:$0xf] %vm4730, %v4641
    %4783 = vst.msk [vmem:[#allocation3 + $0xd0] sm:$0xf] %vm4730, %v4643
    %4784 = vst.msk [vmem:[#allocation3 + $0xd4] sm:$0xf] %vm4730, %v4645
    %4785 = vst.msk [vmem:[#allocation3 + $0xd8] sm:$0xf] %vm4730, %v4647
    %4786 = vst.msk [vmem:[#allocation3 + $0xdc] sm:$0xf] %vm4730, %v4649
    %4787 = vst.msk [vmem:[#allocation3 + $0xe0] sm:$0xf] %vm4730, %v4651
    %4788 = vst.msk [vmem:[#allocation3 + $0xe4] sm:$0xf] %vm4730, %v4653
    %4789 = vst.msk [vmem:[#allocation3 + $0xe8] sm:$0xf] %vm4730, %v4655
    %4790 = vst.msk [vmem:[#allocation3 + $0xec] sm:$0xf] %vm4730, %v4657
    %4791 = vst.msk [vmem:[#allocation3 + $0xf0] sm:$0xf] %vm4730, %v4659
    %4792 = vst.msk [vmem:[#allocation3 + $0xf4] sm:$0xf] %vm4730, %v4661
    %4793 = vst.msk [vmem:[#allocation3 + $0xf8] sm:$0xf] %vm4730, %v4663
    %4794 = vst.msk [vmem:[#allocation3 + $0xfc] sm:$0xf] %vm4730, %v4665
    %v4795 = vld [vmem:[#allocation3] sm:$0xf]
    %v4796 = vld [vmem:[#allocation3 + $0x4] sm:$0xf]
    %v4797 = vld [vmem:[#allocation3 + $0x8] sm:$0xf]
    %v4798 = vld [vmem:[#allocation3 + $0xc] sm:$0xf]
    %v4799 = vld [vmem:[#allocation3 + $0x10] sm:$0xf]
    %v4800 = vld [vmem:[#allocation3 + $0x14] sm:$0xf]
    %v4801 = vld [vmem:[#allocation3 + $0x18] sm:$0xf]
    %v4802 = vld [vmem:[#allocation3 + $0x1c] sm:$0xf]
    %v4803 = vld [vmem:[#allocation3 + $0x20] sm:$0xf]
    %v4804 = vld [vmem:[#allocation3 + $0x24] sm:$0xf]
    %v4805 = vld [vmem:[#allocation3 + $0x28] sm:$0xf]
    %v4806 = vld [vmem:[#allocation3 + $0x2c] sm:$0xf]
    %v4807 = vld [vmem:[#allocation3 + $0x30] sm:$0xf]
    %v4808 = vld [vmem:[#allocation3 + $0x34] sm:$0xf]
    %v4809 = vld [vmem:[#allocation3 + $0x38] sm:$0xf]
    %v4810 = vld [vmem:[#allocation3 + $0x3c] sm:$0xf]
    %v4811 = vld [vmem:[#allocation3 + $0x40] sm:$0xf]
    %v4812 = vld [vmem:[#allocation3 + $0x44] sm:$0xf]
    %v4813 = vld [vmem:[#allocation3 + $0x48] sm:$0xf]
    %v4814 = vld [vmem:[#allocation3 + $0x4c] sm:$0xf]
    %v4815 = vld [vmem:[#allocation3 + $0x50] sm:$0xf]
    %v4816 = vld [vmem:[#allocation3 + $0x54] sm:$0xf]
    %v4817 = vld [vmem:[#allocation3 + $0x58] sm:$0xf]
    %v4818 = vld [vmem:[#allocation3 + $0x5c] sm:$0xf]
    %v4819 = vld [vmem:[#allocation3 + $0x60] sm:$0xf]
    %v4820 = vld [vmem:[#allocation3 + $0x64] sm:$0xf]
    %v4821 = vld [vmem:[#allocation3 + $0x68] sm:$0xf]
    %v4822 = vld [vmem:[#allocation3 + $0x6c] sm:$0xf]
    %v4823 = vld [vmem:[#allocation3 + $0x70] sm:$0xf]
    %v4824 = vld [vmem:[#allocation3 + $0x74] sm:$0xf]
    %v4825 = vld [vmem:[#allocation3 + $0x78] sm:$0xf]
    %v4826 = vld [vmem:[#allocation3 + $0x7c] sm:$0xf]
    %v4827 = vld [vmem:[#allocation3 + $0x80] sm:$0xf]
    %v4828 = vld [vmem:[#allocation3 + $0x84] sm:$0xf]
    %v4829 = vld [vmem:[#allocation3 + $0x88] sm:$0xf]
    %v4830 = vld [vmem:[#allocation3 + $0x8c] sm:$0xf]
    %v4831 = vld [vmem:[#allocation3 + $0x90] sm:$0xf]
    %v4832 = vld [vmem:[#allocation3 + $0x94] sm:$0xf]
    %v4833 = vld [vmem:[#allocation3 + $0x98] sm:$0xf]
    %v4834 = vld [vmem:[#allocation3 + $0x9c] sm:$0xf]
    %v4835 = vld [vmem:[#allocation3 + $0xa0] sm:$0xf]
    %v4836 = vld [vmem:[#allocation3 + $0xa4] sm:$0xf]
    %v4837 = vld [vmem:[#allocation3 + $0xa8] sm:$0xf]
    %v4838 = vld [vmem:[#allocation3 + $0xac] sm:$0xf]
    %v4839 = vld [vmem:[#allocation3 + $0xb0] sm:$0xf]
    %v4840 = vld [vmem:[#allocation3 + $0xb4] sm:$0xf]
    %v4841 = vld [vmem:[#allocation3 + $0xb8] sm:$0xf]
    %v4842 = vld [vmem:[#allocation3 + $0xbc] sm:$0xf]
    %v4843 = vld [vmem:[#allocation3 + $0xc0] sm:$0xf]
    %v4844 = vld [vmem:[#allocation3 + $0xc4] sm:$0xf]
    %v4845 = vld [vmem:[#allocation3 + $0xc8] sm:$0xf]
    %v4846 = vld [vmem:[#allocation3 + $0xcc] sm:$0xf]
    %v4847 = vld [vmem:[#allocation3 + $0xd0] sm:$0xf]
    %v4848 = vld [vmem:[#allocation3 + $0xd4] sm:$0xf]
    %v4849 = vld [vmem:[#allocation3 + $0xd8] sm:$0xf]
    %v4850 = vld [vmem:[#allocation3 + $0xdc] sm:$0xf]
    %v4851 = vld [vmem:[#allocation3 + $0xe0] sm:$0xf]
    %v4852 = vld [vmem:[#allocation3 + $0xe4] sm:$0xf]
    %v4853 = vld [vmem:[#allocation3 + $0xe8] sm:$0xf]
    %v4854 = vld [vmem:[#allocation3 + $0xec] sm:$0xf]
    %v4855 = vld [vmem:[#allocation3 + $0xf0] sm:$0xf]
    %v4856 = vld [vmem:[#allocation3 + $0xf4] sm:$0xf]
    %v4857 = vld [vmem:[#allocation3 + $0xf8] sm:$0xf]
    %v4858 = vld [vmem:[#allocation3 + $0xfc] sm:$0xf]
    %v4859 = vld [vmem:[%s1] sm:$0xf]
    %v4860 = vld [vmem:[%s1 + $0x4] sm:$0xf]
    %v4861 = vld [vmem:[%s1 + $0x8] sm:$0xf]
    %v4862 = vld [vmem:[%s1 + $0xc] sm:$0xf]
    %v4863 = vld [vmem:[%s1 + $0x10] sm:$0xf]
    %v4864 = vld [vmem:[%s1 + $0x14] sm:$0xf]
    %v4865 = vld [vmem:[%s1 + $0x18] sm:$0xf]
    %v4866 = vld [vmem:[%s1 + $0x1c] sm:$0xf]
    %v4867 = vld [vmem:[%s1 + $0x20] sm:$0xf]
    %v4932 = vunpack.c.l.b16 %v4795
    %v4933 = vunpack.c.l.b16 %v4796
    %v4934 = vunpack.c.l.b16 %v4797
    %v4935 = vunpack.c.l.b16 %v4798
    %v4936 = vunpack.c.l.b16 %v4799
    %v4937 = vunpack.c.l.b16 %v4800
    %v4938 = vunpack.c.l.b16 %v4801
    %v4939 = vunpack.c.l.b16 %v4802
    %v4940 = vunpack.c.l.b16 %v4803
    %v4941 = vunpack.c.l.b16 %v4804
    %v4942 = vunpack.c.l.b16 %v4805
    %v4943 = vunpack.c.l.b16 %v4806
    %v4944 = vunpack.c.l.b16 %v4807
    %v4945 = vunpack.c.l.b16 %v4808
    %v4946 = vunpack.c.l.b16 %v4809
    %v4947 = vunpack.c.l.b16 %v4810
    %v4948 = vunpack.c.l.b16 %v4811
    %v4949 = vunpack.c.l.b16 %v4812
    %v4950 = vunpack.c.l.b16 %v4813
    %v4951 = vunpack.c.l.b16 %v4814
    %v4952 = vunpack.c.l.b16 %v4815
    %v4953 = vunpack.c.l.b16 %v4816
    %v4954 = vunpack.c.l.b16 %v4817
    %v4955 = vunpack.c.l.b16 %v4818
    %v4956 = vunpack.c.l.b16 %v4819
    %v4957 = vunpack.c.l.b16 %v4820
    %v4958 = vunpack.c.l.b16 %v4821
    %v4959 = vunpack.c.l.b16 %v4822
    %v4960 = vunpack.c.l.b16 %v4823
    %v4961 = vunpack.c.l.b16 %v4824
    %v4962 = vunpack.c.l.b16 %v4825
    %v4963 = vunpack.c.l.b16 %v4826
    %v4964 = vunpack.c.l.b16 %v4827
    %v4965 = vunpack.c.l.b16 %v4828
    %v4966 = vunpack.c.l.b16 %v4829
    %v4967 = vunpack.c.l.b16 %v4830
    %v4968 = vunpack.c.l.b16 %v4831
    %v4969 = vunpack.c.l.b16 %v4832
    %v4970 = vunpack.c.l.b16 %v4833
    %v4971 = vunpack.c.l.b16 %v4834
    %v4972 = vunpack.c.l.b16 %v4835
    %v4973 = vunpack.c.l.b16 %v4836
    %v4974 = vunpack.c.l.b16 %v4837
    %v4975 = vunpack.c.l.b16 %v4838
    %v4976 = vunpack.c.l.b16 %v4839
    %v4977 = vunpack.c.l.b16 %v4840
    %v4978 = vunpack.c.l.b16 %v4841
    %v4979 = vunpack.c.l.b16 %v4842
    %v4980 = vunpack.c.l.b16 %v4843
    %v4981 = vunpack.c.l.b16 %v4844
    %v4982 = vunpack.c.l.b16 %v4845
    %v4983 = vunpack.c.l.b16 %v4846
    %v4984 = vunpack.c.l.b16 %v4847
    %v4985 = vunpack.c.l.b16 %v4848
    %v4986 = vunpack.c.l.b16 %v4849
    %v4987 = vunpack.c.l.b16 %v4850
    %v4988 = vunpack.c.l.b16 %v4851
    %v4989 = vunpack.c.l.b16 %v4852
    %v4990 = vunpack.c.l.b16 %v4853
    %v4991 = vunpack.c.l.b16 %v4854
    %v4992 = vunpack.c.l.b16 %v4855
    %v4993 = vunpack.c.l.b16 %v4856
    %v4994 = vunpack.c.l.b16 %v4857
    %v4995 = vunpack.c.l.b16 %v4858
    %v4996 = vpack.c.b16 %v4933, %v4932
    %v4997 = vpack.c.b16 %v4935, %v4934
    %v4998 = vpack.c.b16 %v4937, %v4936
    %v4999 = vpack.c.b16 %v4939, %v4938
    %v5000 = vpack.c.b16 %v4941, %v4940
    %v5001 = vpack.c.b16 %v4943, %v4942
    %v5002 = vpack.c.b16 %v4945, %v4944
    %v5003 = vpack.c.b16 %v4947, %v4946
    %v5004 = vpack.c.b16 %v4949, %v4948
    %v5005 = vpack.c.b16 %v4951, %v4950
    %v5006 = vpack.c.b16 %v4953, %v4952
    %v5007 = vpack.c.b16 %v4955, %v4954
    %v5008 = vpack.c.b16 %v4957, %v4956
    %v5009 = vpack.c.b16 %v4959, %v4958
    %v5010 = vpack.c.b16 %v4961, %v4960
    %v5011 = vpack.c.b16 %v4963, %v4962
    %v5012 = vpack.c.b16 %v4965, %v4964
    %v5013 = vpack.c.b16 %v4967, %v4966
    %v5014 = vpack.c.b16 %v4969, %v4968
    %v5015 = vpack.c.b16 %v4971, %v4970
    %v5016 = vpack.c.b16 %v4973, %v4972
    %v5017 = vpack.c.b16 %v4975, %v4974
    %v5018 = vpack.c.b16 %v4977, %v4976
    %v5019 = vpack.c.b16 %v4979, %v4978
    %v5020 = vpack.c.b16 %v4981, %v4980
    %v5021 = vpack.c.b16 %v4983, %v4982
    %v5022 = vpack.c.b16 %v4985, %v4984
    %v5023 = vpack.c.b16 %v4987, %v4986
    %v5024 = vpack.c.b16 %v4989, %v4988
    %v5025 = vpack.c.b16 %v4991, %v4990
    %v5026 = vpack.c.b16 %v4993, %v4992
    %v5027 = vpack.c.b16 %v4995, %v4994
    %v5037 = vunpack.c.l.b16 %v4859
    %v5038 = vunpack.c.l.b16 %v4860
    %v5039 = vunpack.c.l.b16 %v4861
    %v5040 = vunpack.c.l.b16 %v4862
    %v5041 = vunpack.c.l.b16 %v4863
    %v5042 = vunpack.c.l.b16 %v4864
    %v5043 = vunpack.c.l.b16 %v4865
    %v5044 = vunpack.c.l.b16 %v4866
    %v5045 = vunpack.c.l.b16 %v4867
    %v5046 = vpack.c.b16 %v5038, %v5037
    %v5047 = vpack.c.b16 %v5040, %v5039
    %v5048 = vpack.c.b16 %v5042, %v5041
    %v5049 = vpack.c.b16 %v5044, %v5043
    %v5050 = vpack.c.b16 %v5045, %v5045
    %vm5055 = vcmask 588800
    %v5057 = vsel %vm5055, %v4996, 0
    %v5060 = vsel %vm5055, %v4997, 0
    %v5063 = vsel %vm5055, %v4998, 0
    %v5066 = vsel %vm5055, %v4999, 0
    %v5069 = vsel %vm5055, %v5000, 0
    %v5072 = vsel %vm5055, %v5001, 0
    %v5075 = vsel %vm5055, %v5002, 0
    %v5078 = vsel %vm5055, %v5003, 0
    %v5081 = vsel %vm5055, %v5004, 0
    %v5084 = vsel %vm5055, %v5005, 0
    %v5087 = vsel %vm5055, %v5006, 0
    %v5090 = vsel %vm5055, %v5007, 0
    %v5093 = vsel %vm5055, %v5008, 0
    %v5096 = vsel %vm5055, %v5009, 0
    %v5099 = vsel %vm5055, %v5010, 0
    %v5102 = vsel %vm5055, %v5011, 0
    %v5105 = vsel %vm5055, %v5012, 0
    %v5108 = vsel %vm5055, %v5013, 0
    %v5111 = vsel %vm5055, %v5014, 0
    %v5114 = vsel %vm5055, %v5015, 0
    %v5117 = vsel %vm5055, %v5016, 0
    %v5120 = vsel %vm5055, %v5017, 0
    %v5123 = vsel %vm5055, %v5018, 0
    %v5126 = vsel %vm5055, %v5019, 0
    %v5129 = vsel %vm5055, %v5020, 0
    %v5132 = vsel %vm5055, %v5021, 0
    %v5135 = vsel %vm5055, %v5022, 0
    %v5138 = vsel %vm5055, %v5023, 0
    %v5141 = vsel %vm5055, %v5024, 0
    %v5144 = vsel %vm5055, %v5025, 0
    %v5147 = vsel %vm5055, %v5026, 0
    %v5150 = vsel %vm5055, %v5027, 0
    %vm5152 = vcmask 1043456
    %v5154 = vsel %vm5152, %v5050, 0
    %5156 = vmatpush.bf16.msra.mxu0 0
    %5157 = vmatpush.bf16.msra.mxu0 0
    %5158 = vmatpush.bf16.msra.mxu0 0
    %5159 = vmatpush.bf16.msra.mxu0 %v5154
    %5160 = vmatpush.bf16.msra.mxu0 %v5049
    %5161 = vmatpush.bf16.msra.mxu0 %v5048
    %5162 = vmatpush.bf16.msra.mxu0 %v5047
    %5163 = vmatpush.bf16.msra.mxu0 %v5046
    %5164 = vmatmul.bf16.gmra.mxu0 %v5057
    %v5165 = vpop.f32.mrf.mxu0
    %v5166 = vadd.f32 0.0, %v5165
    %v5167 = vpop.f32.mrf.mxu0
    %v5168 = vadd.f32 0.0, %v5167
    %5169 = vmatmul.bf16.gmra.mxu0 %v5060
    %v5170 = vpop.f32.mrf.mxu0
    %v5171 = vadd.f32 0.0, %v5170
    %v5172 = vpop.f32.mrf.mxu0
    %v5173 = vadd.f32 0.0, %v5172
    %5174 = vmatmul.bf16.gmra.mxu0 %v5063
    %v5175 = vpop.f32.mrf.mxu0
    %v5176 = vadd.f32 0.0, %v5175
    %v5177 = vpop.f32.mrf.mxu0
    %v5178 = vadd.f32 0.0, %v5177
    %5179 = vmatmul.bf16.gmra.mxu0 %v5066
    %v5180 = vpop.f32.mrf.mxu0
    %v5181 = vadd.f32 0.0, %v5180
    %v5182 = vpop.f32.mrf.mxu0
    %v5183 = vadd.f32 0.0, %v5182
    %5184 = vmatmul.bf16.gmra.mxu0 %v5069
    %v5185 = vpop.f32.mrf.mxu0
    %v5186 = vadd.f32 0.0, %v5185
    %v5187 = vpop.f32.mrf.mxu0
    %v5188 = vadd.f32 0.0, %v5187
    %5189 = vmatmul.bf16.gmra.mxu0 %v5072
    %v5190 = vpop.f32.mrf.mxu0
    %v5191 = vadd.f32 0.0, %v5190
    %v5192 = vpop.f32.mrf.mxu0
    %v5193 = vadd.f32 0.0, %v5192
    %5194 = vmatmul.bf16.gmra.mxu0 %v5075
    %v5195 = vpop.f32.mrf.mxu0
    %v5196 = vadd.f32 0.0, %v5195
    %v5197 = vpop.f32.mrf.mxu0
    %v5198 = vadd.f32 0.0, %v5197
    %5199 = vmatmul.bf16.gmra.mxu0 %v5078
    %v5200 = vpop.f32.mrf.mxu0
    %v5201 = vadd.f32 0.0, %v5200
    %v5202 = vpop.f32.mrf.mxu0
    %v5203 = vadd.f32 0.0, %v5202
    %5204 = vmatmul.bf16.gmra.mxu0 %v5081
    %v5205 = vpop.f32.mrf.mxu0
    %v5206 = vadd.f32 0.0, %v5205
    %v5207 = vpop.f32.mrf.mxu0
    %v5208 = vadd.f32 0.0, %v5207
    %5209 = vmatmul.bf16.gmra.mxu0 %v5084
    %v5210 = vpop.f32.mrf.mxu0
    %v5211 = vadd.f32 0.0, %v5210
    %v5212 = vpop.f32.mrf.mxu0
    %v5213 = vadd.f32 0.0, %v5212
    %5214 = vmatmul.bf16.gmra.mxu0 %v5087
    %v5215 = vpop.f32.mrf.mxu0
    %v5216 = vadd.f32 0.0, %v5215
    %v5217 = vpop.f32.mrf.mxu0
    %v5218 = vadd.f32 0.0, %v5217
    %5219 = vmatmul.bf16.gmra.mxu0 %v5090
    %v5220 = vpop.f32.mrf.mxu0
    %v5221 = vadd.f32 0.0, %v5220
    %v5222 = vpop.f32.mrf.mxu0
    %v5223 = vadd.f32 0.0, %v5222
    %5224 = vmatmul.bf16.gmra.mxu0 %v5093
    %v5225 = vpop.f32.mrf.mxu0
    %v5226 = vadd.f32 0.0, %v5225
    %v5227 = vpop.f32.mrf.mxu0
    %v5228 = vadd.f32 0.0, %v5227
    %5229 = vmatmul.bf16.gmra.mxu0 %v5096
    %v5230 = vpop.f32.mrf.mxu0
    %v5231 = vadd.f32 0.0, %v5230
    %v5232 = vpop.f32.mrf.mxu0
    %v5233 = vadd.f32 0.0, %v5232
    %5234 = vmatmul.bf16.gmra.mxu0 %v5099
    %v5235 = vpop.f32.mrf.mxu0
    %v5236 = vadd.f32 0.0, %v5235
    %v5237 = vpop.f32.mrf.mxu0
    %v5238 = vadd.f32 0.0, %v5237
    %5239 = vmatmul.bf16.gmra.mxu0 %v5102
    %v5240 = vpop.f32.mrf.mxu0
    %v5241 = vadd.f32 0.0, %v5240
    %v5242 = vpop.f32.mrf.mxu0
    %v5243 = vadd.f32 0.0, %v5242
    %5244 = vmatmul.bf16.gmra.mxu0 %v5105
    %v5245 = vpop.f32.mrf.mxu0
    %v5246 = vadd.f32 0.0, %v5245
    %v5247 = vpop.f32.mrf.mxu0
    %v5248 = vadd.f32 0.0, %v5247
    %5249 = vmatmul.bf16.gmra.mxu0 %v5108
    %v5250 = vpop.f32.mrf.mxu0
    %v5251 = vadd.f32 0.0, %v5250
    %v5252 = vpop.f32.mrf.mxu0
    %v5253 = vadd.f32 0.0, %v5252
    %5254 = vmatmul.bf16.gmra.mxu0 %v5111
    %v5255 = vpop.f32.mrf.mxu0
    %v5256 = vadd.f32 0.0, %v5255
    %v5257 = vpop.f32.mrf.mxu0
    %v5258 = vadd.f32 0.0, %v5257
    %5259 = vmatmul.bf16.gmra.mxu0 %v5114
    %v5260 = vpop.f32.mrf.mxu0
    %v5261 = vadd.f32 0.0, %v5260
    %v5262 = vpop.f32.mrf.mxu0
    %v5263 = vadd.f32 0.0, %v5262
    %5264 = vmatmul.bf16.gmra.mxu0 %v5117
    %v5265 = vpop.f32.mrf.mxu0
    %v5266 = vadd.f32 0.0, %v5265
    %v5267 = vpop.f32.mrf.mxu0
    %v5268 = vadd.f32 0.0, %v5267
    %5269 = vmatmul.bf16.gmra.mxu0 %v5120
    %v5270 = vpop.f32.mrf.mxu0
    %v5271 = vadd.f32 0.0, %v5270
    %v5272 = vpop.f32.mrf.mxu0
    %v5273 = vadd.f32 0.0, %v5272
    %5274 = vmatmul.bf16.gmra.mxu0 %v5123
    %v5275 = vpop.f32.mrf.mxu0
    %v5276 = vadd.f32 0.0, %v5275
    %v5277 = vpop.f32.mrf.mxu0
    %v5278 = vadd.f32 0.0, %v5277
    %5279 = vmatmul.bf16.gmra.mxu0 %v5126
    %v5280 = vpop.f32.mrf.mxu0
    %v5281 = vadd.f32 0.0, %v5280
    %v5282 = vpop.f32.mrf.mxu0
    %v5283 = vadd.f32 0.0, %v5282
    %5284 = vmatmul.bf16.gmra.mxu0 %v5129
    %v5285 = vpop.f32.mrf.mxu0
    %v5286 = vadd.f32 0.0, %v5285
    %v5287 = vpop.f32.mrf.mxu0
    %v5288 = vadd.f32 0.0, %v5287
    %5289 = vmatmul.bf16.gmra.mxu0 %v5132
    %v5290 = vpop.f32.mrf.mxu0
    %v5291 = vadd.f32 0.0, %v5290
    %v5292 = vpop.f32.mrf.mxu0
    %v5293 = vadd.f32 0.0, %v5292
    %5294 = vmatmul.bf16.gmra.mxu0 %v5135
    %v5295 = vpop.f32.mrf.mxu0
    %v5296 = vadd.f32 0.0, %v5295
    %v5297 = vpop.f32.mrf.mxu0
    %v5298 = vadd.f32 0.0, %v5297
    %5299 = vmatmul.bf16.gmra.mxu0 %v5138
    %v5300 = vpop.f32.mrf.mxu0
    %v5301 = vadd.f32 0.0, %v5300
    %v5302 = vpop.f32.mrf.mxu0
    %v5303 = vadd.f32 0.0, %v5302
    %5304 = vmatmul.bf16.gmra.mxu0 %v5141
    %v5305 = vpop.f32.mrf.mxu0
    %v5306 = vadd.f32 0.0, %v5305
    %v5307 = vpop.f32.mrf.mxu0
    %v5308 = vadd.f32 0.0, %v5307
    %5309 = vmatmul.bf16.gmra.mxu0 %v5144
    %v5310 = vpop.f32.mrf.mxu0
    %v5311 = vadd.f32 0.0, %v5310
    %v5312 = vpop.f32.mrf.mxu0
    %v5313 = vadd.f32 0.0, %v5312
    %5314 = vmatmul.bf16.gmra.mxu0 %v5147
    %v5315 = vpop.f32.mrf.mxu0
    %v5316 = vadd.f32 0.0, %v5315
    %v5317 = vpop.f32.mrf.mxu0
    %v5318 = vadd.f32 0.0, %v5317
    %5319 = vmatmul.bf16.gmra.mxu0 %v5150
    %v5320 = vpop.f32.mrf.mxu0
    %v5321 = vadd.f32 0.0, %v5320
    %v5322 = vpop.f32.mrf.mxu0
    %v5323 = vadd.f32 0.0, %v5322
    %5324 = vdwg.mxu0
    %v5325 = vld [vmem:[%s2] sm:$0x1]
    %v5327 = vperm.slane %v5325, 0
    %v5329 = vmul.f32 %v5166, %v5327
    %v5330 = vmul.f32 %v5168, %v5327
    %v5331 = vmul.f32 %v5171, %v5327
    %v5332 = vmul.f32 %v5173, %v5327
    %v5333 = vmul.f32 %v5176, %v5327
    %v5334 = vmul.f32 %v5178, %v5327
    %v5335 = vmul.f32 %v5181, %v5327
    %v5336 = vmul.f32 %v5183, %v5327
    %v5337 = vmul.f32 %v5186, %v5327
    %v5338 = vmul.f32 %v5188, %v5327
    %v5339 = vmul.f32 %v5191, %v5327
    %v5340 = vmul.f32 %v5193, %v5327
    %v5341 = vmul.f32 %v5196, %v5327
    %v5342 = vmul.f32 %v5198, %v5327
    %v5343 = vmul.f32 %v5201, %v5327
    %v5344 = vmul.f32 %v5203, %v5327
    %v5345 = vmul.f32 %v5206, %v5327
    %v5346 = vmul.f32 %v5208, %v5327
    %v5347 = vmul.f32 %v5211, %v5327
    %v5348 = vmul.f32 %v5213, %v5327
    %v5349 = vmul.f32 %v5216, %v5327
    %v5350 = vmul.f32 %v5218, %v5327
    %v5351 = vmul.f32 %v5221, %v5327
    %v5352 = vmul.f32 %v5223, %v5327
    %v5353 = vmul.f32 %v5226, %v5327
    %v5354 = vmul.f32 %v5228, %v5327
    %v5355 = vmul.f32 %v5231, %v5327
    %v5356 = vmul.f32 %v5233, %v5327
    %v5357 = vmul.f32 %v5236, %v5327
    %v5358 = vmul.f32 %v5238, %v5327
    %v5359 = vmul.f32 %v5241, %v5327
    %v5360 = vmul.f32 %v5243, %v5327
    %v5361 = vmul.f32 %v5246, %v5327
    %v5362 = vmul.f32 %v5248, %v5327
    %v5363 = vmul.f32 %v5251, %v5327
    %v5364 = vmul.f32 %v5253, %v5327
    %v5365 = vmul.f32 %v5256, %v5327
    %v5366 = vmul.f32 %v5258, %v5327
    %v5367 = vmul.f32 %v5261, %v5327
    %v5368 = vmul.f32 %v5263, %v5327
    %v5369 = vmul.f32 %v5266, %v5327
    %v5370 = vmul.f32 %v5268, %v5327
    %v5371 = vmul.f32 %v5271, %v5327
    %v5372 = vmul.f32 %v5273, %v5327
    %v5373 = vmul.f32 %v5276, %v5327
    %v5374 = vmul.f32 %v5278, %v5327
    %v5375 = vmul.f32 %v5281, %v5327
    %v5376 = vmul.f32 %v5283, %v5327
    %v5377 = vmul.f32 %v5286, %v5327
    %v5378 = vmul.f32 %v5288, %v5327
    %v5379 = vmul.f32 %v5291, %v5327
    %v5380 = vmul.f32 %v5293, %v5327
    %v5381 = vmul.f32 %v5296, %v5327
    %v5382 = vmul.f32 %v5298, %v5327
    %v5383 = vmul.f32 %v5301, %v5327
    %v5384 = vmul.f32 %v5303, %v5327
    %v5385 = vmul.f32 %v5306, %v5327
    %v5386 = vmul.f32 %v5308, %v5327
    %v5387 = vmul.f32 %v5311, %v5327
    %v5388 = vmul.f32 %v5313, %v5327
    %v5389 = vmul.f32 %v5316, %v5327
    %v5390 = vmul.f32 %v5318, %v5327
    %v5391 = vmul.f32 %v5321, %v5327
    %v5392 = vmul.f32 %v5323, %v5327
    %v5393 = vld [vmem:[%s3] sm:$0x1]
    %v5395 = vperm.slane %v5393, 0
    %v5397 = vadd.f32 %v5329, %v5395
    %v5398 = vadd.f32 %v5330, %v5395
    %v5399 = vadd.f32 %v5331, %v5395
    %v5400 = vadd.f32 %v5332, %v5395
    %v5401 = vadd.f32 %v5333, %v5395
    %v5402 = vadd.f32 %v5334, %v5395
    %v5403 = vadd.f32 %v5335, %v5395
    %v5404 = vadd.f32 %v5336, %v5395
    %v5405 = vadd.f32 %v5337, %v5395
    %v5406 = vadd.f32 %v5338, %v5395
    %v5407 = vadd.f32 %v5339, %v5395
    %v5408 = vadd.f32 %v5340, %v5395
    %v5409 = vadd.f32 %v5341, %v5395
    %v5410 = vadd.f32 %v5342, %v5395
    %v5411 = vadd.f32 %v5343, %v5395
    %v5412 = vadd.f32 %v5344, %v5395
    %v5413 = vadd.f32 %v5345, %v5395
    %v5414 = vadd.f32 %v5346, %v5395
    %v5415 = vadd.f32 %v5347, %v5395
    %v5416 = vadd.f32 %v5348, %v5395
    %v5417 = vadd.f32 %v5349, %v5395
    %v5418 = vadd.f32 %v5350, %v5395
    %v5419 = vadd.f32 %v5351, %v5395
    %v5420 = vadd.f32 %v5352, %v5395
    %v5421 = vadd.f32 %v5353, %v5395
    %v5422 = vadd.f32 %v5354, %v5395
    %v5423 = vadd.f32 %v5355, %v5395
    %v5424 = vadd.f32 %v5356, %v5395
    %v5425 = vadd.f32 %v5357, %v5395
    %v5426 = vadd.f32 %v5358, %v5395
    %v5427 = vadd.f32 %v5359, %v5395
    %v5428 = vadd.f32 %v5360, %v5395
    %v5429 = vadd.f32 %v5361, %v5395
    %v5430 = vadd.f32 %v5362, %v5395
    %v5431 = vadd.f32 %v5363, %v5395
    %v5432 = vadd.f32 %v5364, %v5395
    %v5433 = vadd.f32 %v5365, %v5395
    %v5434 = vadd.f32 %v5366, %v5395
    %v5435 = vadd.f32 %v5367, %v5395
    %v5436 = vadd.f32 %v5368, %v5395
    %v5437 = vadd.f32 %v5369, %v5395
    %v5438 = vadd.f32 %v5370, %v5395
    %v5439 = vadd.f32 %v5371, %v5395
    %v5440 = vadd.f32 %v5372, %v5395
    %v5441 = vadd.f32 %v5373, %v5395
    %v5442 = vadd.f32 %v5374, %v5395
    %v5443 = vadd.f32 %v5375, %v5395
    %v5444 = vadd.f32 %v5376, %v5395
    %v5445 = vadd.f32 %v5377, %v5395
    %v5446 = vadd.f32 %v5378, %v5395
    %v5447 = vadd.f32 %v5379, %v5395
    %v5448 = vadd.f32 %v5380, %v5395
    %v5449 = vadd.f32 %v5381, %v5395
    %v5450 = vadd.f32 %v5382, %v5395
    %v5451 = vadd.f32 %v5383, %v5395
    %v5452 = vadd.f32 %v5384, %v5395
    %v5453 = vadd.f32 %v5385, %v5395
    %v5454 = vadd.f32 %v5386, %v5395
    %v5455 = vadd.f32 %v5387, %v5395
    %v5456 = vadd.f32 %v5388, %v5395
    %v5457 = vadd.f32 %v5389, %v5395
    %v5458 = vadd.f32 %v5390, %v5395
    %v5459 = vadd.f32 %v5391, %v5395
    %v5460 = vadd.f32 %v5392, %v5395
    %v5461 = vmax.f32 %v5397, 0.0
    %v5462 = vmax.f32 %v5398, 0.0
    %v5463 = vmax.f32 %v5399, 0.0
    %v5464 = vmax.f32 %v5400, 0.0
    %v5465 = vmax.f32 %v5401, 0.0
    %v5466 = vmax.f32 %v5402, 0.0
    %v5467 = vmax.f32 %v5403, 0.0
    %v5468 = vmax.f32 %v5404, 0.0
    %v5469 = vmax.f32 %v5405, 0.0
    %v5470 = vmax.f32 %v5406, 0.0
    %v5471 = vmax.f32 %v5407, 0.0
    %v5472 = vmax.f32 %v5408, 0.0
    %v5473 = vmax.f32 %v5409, 0.0
    %v5474 = vmax.f32 %v5410, 0.0
    %v5475 = vmax.f32 %v5411, 0.0
    %v5476 = vmax.f32 %v5412, 0.0
    %v5477 = vmax.f32 %v5413, 0.0
    %v5478 = vmax.f32 %v5414, 0.0
    %v5479 = vmax.f32 %v5415, 0.0
    %v5480 = vmax.f32 %v5416, 0.0
    %v5481 = vmax.f32 %v5417, 0.0
    %v5482 = vmax.f32 %v5418, 0.0
    %v5483 = vmax.f32 %v5419, 0.0
    %v5484 = vmax.f32 %v5420, 0.0
    %v5485 = vmax.f32 %v5421, 0.0
    %v5486 = vmax.f32 %v5422, 0.0
    %v5487 = vmax.f32 %v5423, 0.0
    %v5488 = vmax.f32 %v5424, 0.0
    %v5489 = vmax.f32 %v5425, 0.0
    %v5490 = vmax.f32 %v5426, 0.0
    %v5491 = vmax.f32 %v5427, 0.0
    %v5492 = vmax.f32 %v5428, 0.0
    %v5493 = vmax.f32 %v5429, 0.0
    %v5494 = vmax.f32 %v5430, 0.0
    %v5495 = vmax.f32 %v5431, 0.0
    %v5496 = vmax.f32 %v5432, 0.0
    %v5497 = vmax.f32 %v5433, 0.0
    %v5498 = vmax.f32 %v5434, 0.0
    %v5499 = vmax.f32 %v5435, 0.0
    %v5500 = vmax.f32 %v5436, 0.0
    %v5501 = vmax.f32 %v5437, 0.0
    %v5502 = vmax.f32 %v5438, 0.0
    %v5503 = vmax.f32 %v5439, 0.0
    %v5504 = vmax.f32 %v5440, 0.0
    %v5505 = vmax.f32 %v5441, 0.0
    %v5506 = vmax.f32 %v5442, 0.0
    %v5507 = vmax.f32 %v5443, 0.0
    %v5508 = vmax.f32 %v5444, 0.0
    %v5509 = vmax.f32 %v5445, 0.0
    %v5510 = vmax.f32 %v5446, 0.0
    %v5511 = vmax.f32 %v5447, 0.0
    %v5512 = vmax.f32 %v5448, 0.0
    %v5513 = vmax.f32 %v5449, 0.0
    %v5514 = vmax.f32 %v5450, 0.0
    %v5515 = vmax.f32 %v5451, 0.0
    %v5516 = vmax.f32 %v5452, 0.0
    %v5517 = vmax.f32 %v5453, 0.0
    %v5518 = vmax.f32 %v5454, 0.0
    %v5519 = vmax.f32 %v5455, 0.0
    %v5520 = vmax.f32 %v5456, 0.0
    %v5521 = vmax.f32 %v5457, 0.0
    %v5522 = vmax.f32 %v5458, 0.0
    %v5523 = vmax.f32 %v5459, 0.0
    %v5524 = vmax.f32 %v5460, 0.0
    %v5525 = vpack.c.bf16 %v5461, %v5461
    %v5526 = vpack.c.bf16 %v5462, %v5462
    %v5527 = vpack.c.bf16 %v5463, %v5463
    %v5528 = vpack.c.bf16 %v5464, %v5464
    %v5529 = vpack.c.bf16 %v5465, %v5465
    %v5530 = vpack.c.bf16 %v5466, %v5466
    %v5531 = vpack.c.bf16 %v5467, %v5467
    %v5532 = vpack.c.bf16 %v5468, %v5468
    %v5533 = vpack.c.bf16 %v5469, %v5469
    %v5534 = vpack.c.bf16 %v5470, %v5470
    %v5535 = vpack.c.bf16 %v5471, %v5471
    %v5536 = vpack.c.bf16 %v5472, %v5472
    %v5537 = vpack.c.bf16 %v5473, %v5473
    %v5538 = vpack.c.bf16 %v5474, %v5474
    %v5539 = vpack.c.bf16 %v5475, %v5475
    %v5540 = vpack.c.bf16 %v5476, %v5476
    %v5541 = vpack.c.bf16 %v5477, %v5477
    %v5542 = vpack.c.bf16 %v5478, %v5478
    %v5543 = vpack.c.bf16 %v5479, %v5479
    %v5544 = vpack.c.bf16 %v5480, %v5480
    %v5545 = vpack.c.bf16 %v5481, %v5481
    %v5546 = vpack.c.bf16 %v5482, %v5482
    %v5547 = vpack.c.bf16 %v5483, %v5483
    %v5548 = vpack.c.bf16 %v5484, %v5484
    %v5549 = vpack.c.bf16 %v5485, %v5485
    %v5550 = vpack.c.bf16 %v5486, %v5486
    %v5551 = vpack.c.bf16 %v5487, %v5487
    %v5552 = vpack.c.bf16 %v5488, %v5488
    %v5553 = vpack.c.bf16 %v5489, %v5489
    %v5554 = vpack.c.bf16 %v5490, %v5490
    %v5555 = vpack.c.bf16 %v5491, %v5491
    %v5556 = vpack.c.bf16 %v5492, %v5492
    %v5557 = vpack.c.bf16 %v5493, %v5493
    %v5558 = vpack.c.bf16 %v5494, %v5494
    %v5559 = vpack.c.bf16 %v5495, %v5495
    %v5560 = vpack.c.bf16 %v5496, %v5496
    %v5561 = vpack.c.bf16 %v5497, %v5497
    %v5562 = vpack.c.bf16 %v5498, %v5498
    %v5563 = vpack.c.bf16 %v5499, %v5499
    %v5564 = vpack.c.bf16 %v5500, %v5500
    %v5565 = vpack.c.bf16 %v5501, %v5501
    %v5566 = vpack.c.bf16 %v5502, %v5502
    %v5567 = vpack.c.bf16 %v5503, %v5503
    %v5568 = vpack.c.bf16 %v5504, %v5504
    %v5569 = vpack.c.bf16 %v5505, %v5505
    %v5570 = vpack.c.bf16 %v5506, %v5506
    %v5571 = vpack.c.bf16 %v5507, %v5507
    %v5572 = vpack.c.bf16 %v5508, %v5508
    %v5573 = vpack.c.bf16 %v5509, %v5509
    %v5574 = vpack.c.bf16 %v5510, %v5510
    %v5575 = vpack.c.bf16 %v5511, %v5511
    %v5576 = vpack.c.bf16 %v5512, %v5512
    %v5577 = vpack.c.bf16 %v5513, %v5513
    %v5578 = vpack.c.bf16 %v5514, %v5514
    %v5579 = vpack.c.bf16 %v5515, %v5515
    %v5580 = vpack.c.bf16 %v5516, %v5516
    %v5581 = vpack.c.bf16 %v5517, %v5517
    %v5582 = vpack.c.bf16 %v5518, %v5518
    %v5583 = vpack.c.bf16 %v5519, %v5519
    %v5584 = vpack.c.bf16 %v5520, %v5520
    %v5585 = vpack.c.bf16 %v5521, %v5521
    %v5586 = vpack.c.bf16 %v5522, %v5522
    %v5587 = vpack.c.bf16 %v5523, %v5523
    %v5588 = vpack.c.bf16 %v5524, %v5524
    %vm5589 = vcmask 27648
    %5590 = vst.msk [vmem:[#allocation4] sm:$0xf] %vm5589, 0
    %5591 = vst.msk [vmem:[#allocation4 + $0x4] sm:$0xf] %vm5589, 0
    %5592 = vst.msk [vmem:[#allocation4 + $0x90] sm:$0xf] %vm5589, 0
    %5593 = vst.msk [vmem:[#allocation4 + $0x94] sm:$0xf] %vm5589, 0
    %5594 = vst.msk [vmem:[#allocation4 + $0x120] sm:$0xf] %vm5589, 0
    %5595 = vst.msk [vmem:[#allocation4 + $0x124] sm:$0xf] %vm5589, 0
    %5596 = vst.msk [vmem:[#allocation4 + $0x1b0] sm:$0xf] %vm5589, 0
    %5597 = vst.msk [vmem:[#allocation4 + $0x1b4] sm:$0xf] %vm5589, 0
    %5598 = vst.msk [vmem:[#allocation4 + $0x240] sm:$0xf] %vm5589, 0
    %5599 = vst.msk [vmem:[#allocation4 + $0x244] sm:$0xf] %vm5589, 0
    %5600 = vst.msk [vmem:[#allocation4 + $0x2d0] sm:$0xf] %vm5589, 0
    %5601 = vst.msk [vmem:[#allocation4 + $0x2d4] sm:$0xf] %vm5589, 0
    %s5602 = scalar_lea.vmem [#allocation4], 136
    %5603 = vst.msk [vmem:[%s5602] sm:$0xf] %vm5589, 0
    %5604 = vst.msk [vmem:[%s5602 + $0x4] sm:$0xf] %vm5589, 0
    %5605 = vst.msk [vmem:[%s5602 + $0x90] sm:$0xf] %vm5589, 0
    %5606 = vst.msk [vmem:[%s5602 + $0x94] sm:$0xf] %vm5589, 0
    %5607 = vst.msk [vmem:[%s5602 + $0x120] sm:$0xf] %vm5589, 0
    %5608 = vst.msk [vmem:[%s5602 + $0x124] sm:$0xf] %vm5589, 0
    %5609 = vst.msk [vmem:[%s5602 + $0x1b0] sm:$0xf] %vm5589, 0
    %5610 = vst.msk [vmem:[%s5602 + $0x1b4] sm:$0xf] %vm5589, 0
    %5611 = vst.msk [vmem:[%s5602 + $0x240] sm:$0xf] %vm5589, 0
    %5612 = vst.msk [vmem:[%s5602 + $0x244] sm:$0xf] %vm5589, 0
    %5613 = vst.msk [vmem:[%s5602 + $0x2d0] sm:$0xf] %vm5589, 0
    %5614 = vst.msk [vmem:[%s5602 + $0x2d4] sm:$0xf] %vm5589, 0
    %s5615 = scalar_lea.vmem [#allocation4], 8
    %vm5616 = vcmask 24576
    %vm5617 = vmand %vm5616, %vm126
    %v5618 = vld [vmem:[%s5615] sm:$0x1]
    %v5619 = vsel %vm5617, 0, %v5618
    %5620 = vst [vmem:[%s5615] sm:$0x1] %v5619
    %v5621 = vld [vmem:[%s5615 + $0x8] sm:$0x1]
    %v5622 = vsel %vm5617, 0, %v5621
    %5623 = vst [vmem:[%s5615 + $0x8] sm:$0x1] %v5622
    %v5624 = vld [vmem:[%s5615 + $0x10] sm:$0x1]
    %v5625 = vsel %vm5617, 0, %v5624
    %5626 = vst [vmem:[%s5615 + $0x10] sm:$0x1] %v5625
    %v5627 = vld [vmem:[%s5615 + $0x18] sm:$0x1]
    %v5628 = vsel %vm5617, 0, %v5627
    %5629 = vst [vmem:[%s5615 + $0x18] sm:$0x1] %v5628
    %v5630 = vld [vmem:[%s5615 + $0x20] sm:$0x1]
    %v5631 = vsel %vm5617, 0, %v5630
    %5632 = vst [vmem:[%s5615 + $0x20] sm:$0x1] %v5631
    %v5633 = vld [vmem:[%s5615 + $0x28] sm:$0x1]
    %v5634 = vsel %vm5617, 0, %v5633
    %5635 = vst [vmem:[%s5615 + $0x28] sm:$0x1] %v5634
    %v5636 = vld [vmem:[%s5615 + $0x30] sm:$0x1]
    %v5637 = vsel %vm5617, 0, %v5636
    %5638 = vst [vmem:[%s5615 + $0x30] sm:$0x1] %v5637
    %v5639 = vld [vmem:[%s5615 + $0x38] sm:$0x1]
    %v5640 = vsel %vm5617, 0, %v5639
    %5641 = vst [vmem:[%s5615 + $0x38] sm:$0x1] %v5640
    %v5642 = vld [vmem:[%s5615 + $0x40] sm:$0x1]
    %v5643 = vsel %vm5617, 0, %v5642
    %5644 = vst [vmem:[%s5615 + $0x40] sm:$0x1] %v5643
    %v5645 = vld [vmem:[%s5615 + $0x48] sm:$0x1]
    %v5646 = vsel %vm5617, 0, %v5645
    %5647 = vst [vmem:[%s5615 + $0x48] sm:$0x1] %v5646
    %v5648 = vld [vmem:[%s5615 + $0x50] sm:$0x1]
    %v5649 = vsel %vm5617, 0, %v5648
    %5650 = vst [vmem:[%s5615 + $0x50] sm:$0x1] %v5649
    %v5651 = vld [vmem:[%s5615 + $0x58] sm:$0x1]
    %v5652 = vsel %vm5617, 0, %v5651
    %5653 = vst [vmem:[%s5615 + $0x58] sm:$0x1] %v5652
    %v5654 = vld [vmem:[%s5615 + $0x60] sm:$0x1]
    %v5655 = vsel %vm5617, 0, %v5654
    %5656 = vst [vmem:[%s5615 + $0x60] sm:$0x1] %v5655
    %v5657 = vld [vmem:[%s5615 + $0x68] sm:$0x1]
    %v5658 = vsel %vm5617, 0, %v5657
    %5659 = vst [vmem:[%s5615 + $0x68] sm:$0x1] %v5658
    %v5660 = vld [vmem:[%s5615 + $0x70] sm:$0x1]
    %v5661 = vsel %vm5617, 0, %v5660
    %5662 = vst [vmem:[%s5615 + $0x70] sm:$0x1] %v5661
    %v5663 = vld [vmem:[%s5615 + $0x78] sm:$0x1]
    %v5664 = vsel %vm5617, 0, %v5663
    %5665 = vst [vmem:[%s5615 + $0x78] sm:$0x1] %v5664
    %v5666 = vld [vmem:[%s5615 + $0x90] sm:$0x1]
    %v5667 = vsel %vm5617, 0, %v5666
    %5668 = vst [vmem:[%s5615 + $0x90] sm:$0x1] %v5667
    %v5669 = vld [vmem:[%s5615 + $0x98] sm:$0x1]
    %v5670 = vsel %vm5617, 0, %v5669
    %5671 = vst [vmem:[%s5615 + $0x98] sm:$0x1] %v5670
    %v5672 = vld [vmem:[%s5615 + $0xa0] sm:$0x1]
    %v5673 = vsel %vm5617, 0, %v5672
    %5674 = vst [vmem:[%s5615 + $0xa0] sm:$0x1] %v5673
    %v5675 = vld [vmem:[%s5615 + $0xa8] sm:$0x1]
    %v5676 = vsel %vm5617, 0, %v5675
    %5677 = vst [vmem:[%s5615 + $0xa8] sm:$0x1] %v5676
    %v5678 = vld [vmem:[%s5615 + $0xb0] sm:$0x1]
    %v5679 = vsel %vm5617, 0, %v5678
    %5680 = vst [vmem:[%s5615 + $0xb0] sm:$0x1] %v5679
    %v5681 = vld [vmem:[%s5615 + $0xb8] sm:$0x1]
    %v5682 = vsel %vm5617, 0, %v5681
    %5683 = vst [vmem:[%s5615 + $0xb8] sm:$0x1] %v5682
    %v5684 = vld [vmem:[%s5615 + $0xc0] sm:$0x1]
    %v5685 = vsel %vm5617, 0, %v5684
    %5686 = vst [vmem:[%s5615 + $0xc0] sm:$0x1] %v5685
    %v5687 = vld [vmem:[%s5615 + $0xc8] sm:$0x1]
    %v5688 = vsel %vm5617, 0, %v5687
    %5689 = vst [vmem:[%s5615 + $0xc8] sm:$0x1] %v5688
    %v5690 = vld [vmem:[%s5615 + $0xd0] sm:$0x1]
    %v5691 = vsel %vm5617, 0, %v5690
    %5692 = vst [vmem:[%s5615 + $0xd0] sm:$0x1] %v5691
    %v5693 = vld [vmem:[%s5615 + $0xd8] sm:$0x1]
    %v5694 = vsel %vm5617, 0, %v5693
    %5695 = vst [vmem:[%s5615 + $0xd8] sm:$0x1] %v5694
    %v5696 = vld [vmem:[%s5615 + $0xe0] sm:$0x1]
    %v5697 = vsel %vm5617, 0, %v5696
    %5698 = vst [vmem:[%s5615 + $0xe0] sm:$0x1] %v5697
    %v5699 = vld [vmem:[%s5615 + $0xe8] sm:$0x1]
    %v5700 = vsel %vm5617, 0, %v5699
    %5701 = vst [vmem:[%s5615 + $0xe8] sm:$0x1] %v5700
    %v5702 = vld [vmem:[%s5615 + $0xf0] sm:$0x1]
    %v5703 = vsel %vm5617, 0, %v5702
    %5704 = vst [vmem:[%s5615 + $0xf0] sm:$0x1] %v5703
    %v5705 = vld [vmem:[%s5615 + $0xf8] sm:$0x1]
    %v5706 = vsel %vm5617, 0, %v5705
    %5707 = vst [vmem:[%s5615 + $0xf8] sm:$0x1] %v5706
    %v5708 = vld [vmem:[%s5615 + $0x100] sm:$0x1]
    %v5709 = vsel %vm5617, 0, %v5708
    %5710 = vst [vmem:[%s5615 + $0x100] sm:$0x1] %v5709
    %v5711 = vld [vmem:[%s5615 + $0x108] sm:$0x1]
    %v5712 = vsel %vm5617, 0, %v5711
    %5713 = vst [vmem:[%s5615 + $0x108] sm:$0x1] %v5712
    %s5714 = scalar_lea.vmem [#allocation4], 584
    %vm5715 = vcmask 27651
    %vm5716 = vmand %vm5715, %vm226
    %v5717 = vld [vmem:[%s5714 + $0x4] sm:$0x8]
    %v5718 = vsel %vm5716, 0, %v5717
    %5719 = vst [vmem:[%s5714 + $0x4] sm:$0x8] %v5718
    %v5720 = vld [vmem:[%s5714 + $0xc] sm:$0x8]
    %v5721 = vsel %vm5716, 0, %v5720
    %5722 = vst [vmem:[%s5714 + $0xc] sm:$0x8] %v5721
    %v5723 = vld [vmem:[%s5714 + $0x14] sm:$0x8]
    %v5724 = vsel %vm5716, 0, %v5723
    %5725 = vst [vmem:[%s5714 + $0x14] sm:$0x8] %v5724
    %v5726 = vld [vmem:[%s5714 + $0x1c] sm:$0x8]
    %v5727 = vsel %vm5716, 0, %v5726
    %5728 = vst [vmem:[%s5714 + $0x1c] sm:$0x8] %v5727
    %v5729 = vld [vmem:[%s5714 + $0x24] sm:$0x8]
    %v5730 = vsel %vm5716, 0, %v5729
    %5731 = vst [vmem:[%s5714 + $0x24] sm:$0x8] %v5730
    %v5732 = vld [vmem:[%s5714 + $0x2c] sm:$0x8]
    %v5733 = vsel %vm5716, 0, %v5732
    %5734 = vst [vmem:[%s5714 + $0x2c] sm:$0x8] %v5733
    %v5735 = vld [vmem:[%s5714 + $0x34] sm:$0x8]
    %v5736 = vsel %vm5716, 0, %v5735
    %5737 = vst [vmem:[%s5714 + $0x34] sm:$0x8] %v5736
    %v5738 = vld [vmem:[%s5714 + $0x3c] sm:$0x8]
    %v5739 = vsel %vm5716, 0, %v5738
    %5740 = vst [vmem:[%s5714 + $0x3c] sm:$0x8] %v5739
    %v5741 = vld [vmem:[%s5714 + $0x44] sm:$0x8]
    %v5742 = vsel %vm5716, 0, %v5741
    %5743 = vst [vmem:[%s5714 + $0x44] sm:$0x8] %v5742
    %v5744 = vld [vmem:[%s5714 + $0x4c] sm:$0x8]
    %v5745 = vsel %vm5716, 0, %v5744
    %5746 = vst [vmem:[%s5714 + $0x4c] sm:$0x8] %v5745
    %v5747 = vld [vmem:[%s5714 + $0x54] sm:$0x8]
    %v5748 = vsel %vm5716, 0, %v5747
    %5749 = vst [vmem:[%s5714 + $0x54] sm:$0x8] %v5748
    %v5750 = vld [vmem:[%s5714 + $0x5c] sm:$0x8]
    %v5751 = vsel %vm5716, 0, %v5750
    %5752 = vst [vmem:[%s5714 + $0x5c] sm:$0x8] %v5751
    %v5753 = vld [vmem:[%s5714 + $0x64] sm:$0x8]
    %v5754 = vsel %vm5716, 0, %v5753
    %5755 = vst [vmem:[%s5714 + $0x64] sm:$0x8] %v5754
    %v5756 = vld [vmem:[%s5714 + $0x6c] sm:$0x8]
    %v5757 = vsel %vm5716, 0, %v5756
    %5758 = vst [vmem:[%s5714 + $0x6c] sm:$0x8] %v5757
    %v5759 = vld [vmem:[%s5714 + $0x74] sm:$0x8]
    %v5760 = vsel %vm5716, 0, %v5759
    %5761 = vst [vmem:[%s5714 + $0x74] sm:$0x8] %v5760
    %v5762 = vld [vmem:[%s5714 + $0x7c] sm:$0x8]
    %v5763 = vsel %vm5716, 0, %v5762
    %5764 = vst [vmem:[%s5714 + $0x7c] sm:$0x8] %v5763
    %v5765 = vld [vmem:[%s5714 + $0x94] sm:$0x8]
    %v5766 = vsel %vm5716, 0, %v5765
    %5767 = vst [vmem:[%s5714 + $0x94] sm:$0x8] %v5766
    %v5768 = vld [vmem:[%s5714 + $0x9c] sm:$0x8]
    %v5769 = vsel %vm5716, 0, %v5768
    %5770 = vst [vmem:[%s5714 + $0x9c] sm:$0x8] %v5769
    %v5771 = vld [vmem:[%s5714 + $0xa4] sm:$0x8]
    %v5772 = vsel %vm5716, 0, %v5771
    %5773 = vst [vmem:[%s5714 + $0xa4] sm:$0x8] %v5772
    %v5774 = vld [vmem:[%s5714 + $0xac] sm:$0x8]
    %v5775 = vsel %vm5716, 0, %v5774
    %5776 = vst [vmem:[%s5714 + $0xac] sm:$0x8] %v5775
    %v5777 = vld [vmem:[%s5714 + $0xb4] sm:$0x8]
    %v5778 = vsel %vm5716, 0, %v5777
    %5779 = vst [vmem:[%s5714 + $0xb4] sm:$0x8] %v5778
    %v5780 = vld [vmem:[%s5714 + $0xbc] sm:$0x8]
    %v5781 = vsel %vm5716, 0, %v5780
    %5782 = vst [vmem:[%s5714 + $0xbc] sm:$0x8] %v5781
    %v5783 = vld [vmem:[%s5714 + $0xc4] sm:$0x8]
    %v5784 = vsel %vm5716, 0, %v5783
    %5785 = vst [vmem:[%s5714 + $0xc4] sm:$0x8] %v5784
    %v5786 = vld [vmem:[%s5714 + $0xcc] sm:$0x8]
    %v5787 = vsel %vm5716, 0, %v5786
    %5788 = vst [vmem:[%s5714 + $0xcc] sm:$0x8] %v5787
    %v5789 = vld [vmem:[%s5714 + $0xd4] sm:$0x8]
    %v5790 = vsel %vm5716, 0, %v5789
    %5791 = vst [vmem:[%s5714 + $0xd4] sm:$0x8] %v5790
    %v5792 = vld [vmem:[%s5714 + $0xdc] sm:$0x8]
    %v5793 = vsel %vm5716, 0, %v5792
    %5794 = vst [vmem:[%s5714 + $0xdc] sm:$0x8] %v5793
    %v5795 = vld [vmem:[%s5714 + $0xe4] sm:$0x8]
    %v5796 = vsel %vm5716, 0, %v5795
    %5797 = vst [vmem:[%s5714 + $0xe4] sm:$0x8] %v5796
    %v5798 = vld [vmem:[%s5714 + $0xec] sm:$0x8]
    %v5799 = vsel %vm5716, 0, %v5798
    %5800 = vst [vmem:[%s5714 + $0xec] sm:$0x8] %v5799
    %v5801 = vld [vmem:[%s5714 + $0xf4] sm:$0x8]
    %v5802 = vsel %vm5716, 0, %v5801
    %5803 = vst [vmem:[%s5714 + $0xf4] sm:$0x8] %v5802
    %v5804 = vld [vmem:[%s5714 + $0xfc] sm:$0x8]
    %v5805 = vsel %vm5716, 0, %v5804
    %5806 = vst [vmem:[%s5714 + $0xfc] sm:$0x8] %v5805
    %v5807 = vld [vmem:[%s5714 + $0x104] sm:$0x8]
    %v5808 = vsel %vm5716, 0, %v5807
    %5809 = vst [vmem:[%s5714 + $0x104] sm:$0x8] %v5808
    %v5810 = vld [vmem:[%s5714 + $0x10c] sm:$0x8]
    %v5811 = vsel %vm5716, 0, %v5810
    %5812 = vst [vmem:[%s5714 + $0x10c] sm:$0x8] %v5811
    %s5813 = scalar_lea.vmem [#allocation4], 296
    %5814 = vst.msk [vmem:[%s5813] sm:$0xf] %vm5589, %v5525
    %5815 = vst.msk [vmem:[%s5813 + $0x4] sm:$0xf] %vm5589, %v5526
    %5816 = vst.msk [vmem:[%s5813 + $0x8] sm:$0xf] %vm5589, %v5527
    %5817 = vst.msk [vmem:[%s5813 + $0xc] sm:$0xf] %vm5589, %v5528
    %5818 = vst.msk [vmem:[%s5813 + $0x10] sm:$0xf] %vm5589, %v5529
    %5819 = vst.msk [vmem:[%s5813 + $0x14] sm:$0xf] %vm5589, %v5530
    %5820 = vst.msk [vmem:[%s5813 + $0x18] sm:$0xf] %vm5589, %v5531
    %5821 = vst.msk [vmem:[%s5813 + $0x1c] sm:$0xf] %vm5589, %v5532
    %5822 = vst.msk [vmem:[%s5813 + $0x20] sm:$0xf] %vm5589, %v5533
    %5823 = vst.msk [vmem:[%s5813 + $0x24] sm:$0xf] %vm5589, %v5534
    %5824 = vst.msk [vmem:[%s5813 + $0x28] sm:$0xf] %vm5589, %v5535
    %5825 = vst.msk [vmem:[%s5813 + $0x2c] sm:$0xf] %vm5589, %v5536
    %5826 = vst.msk [vmem:[%s5813 + $0x30] sm:$0xf] %vm5589, %v5537
    %5827 = vst.msk [vmem:[%s5813 + $0x34] sm:$0xf] %vm5589, %v5538
    %5828 = vst.msk [vmem:[%s5813 + $0x38] sm:$0xf] %vm5589, %v5539
    %5829 = vst.msk [vmem:[%s5813 + $0x3c] sm:$0xf] %vm5589, %v5540
    %5830 = vst.msk [vmem:[%s5813 + $0x40] sm:$0xf] %vm5589, %v5541
    %5831 = vst.msk [vmem:[%s5813 + $0x44] sm:$0xf] %vm5589, %v5542
    %5832 = vst.msk [vmem:[%s5813 + $0x48] sm:$0xf] %vm5589, %v5543
    %5833 = vst.msk [vmem:[%s5813 + $0x4c] sm:$0xf] %vm5589, %v5544
    %5834 = vst.msk [vmem:[%s5813 + $0x50] sm:$0xf] %vm5589, %v5545
    %5835 = vst.msk [vmem:[%s5813 + $0x54] sm:$0xf] %vm5589, %v5546
    %5836 = vst.msk [vmem:[%s5813 + $0x58] sm:$0xf] %vm5589, %v5547
    %5837 = vst.msk [vmem:[%s5813 + $0x5c] sm:$0xf] %vm5589, %v5548
    %5838 = vst.msk [vmem:[%s5813 + $0x60] sm:$0xf] %vm5589, %v5549
    %5839 = vst.msk [vmem:[%s5813 + $0x64] sm:$0xf] %vm5589, %v5550
    %5840 = vst.msk [vmem:[%s5813 + $0x68] sm:$0xf] %vm5589, %v5551
    %5841 = vst.msk [vmem:[%s5813 + $0x6c] sm:$0xf] %vm5589, %v5552
    %5842 = vst.msk [vmem:[%s5813 + $0x70] sm:$0xf] %vm5589, %v5553
    %5843 = vst.msk [vmem:[%s5813 + $0x74] sm:$0xf] %vm5589, %v5554
    %5844 = vst.msk [vmem:[%s5813 + $0x78] sm:$0xf] %vm5589, %v5555
    %5845 = vst.msk [vmem:[%s5813 + $0x7c] sm:$0xf] %vm5589, %v5556
    %5846 = vst.msk [vmem:[%s5813 + $0x90] sm:$0xf] %vm5589, %v5557
    %5847 = vst.msk [vmem:[%s5813 + $0x94] sm:$0xf] %vm5589, %v5558
    %5848 = vst.msk [vmem:[%s5813 + $0x98] sm:$0xf] %vm5589, %v5559
    %5849 = vst.msk [vmem:[%s5813 + $0x9c] sm:$0xf] %vm5589, %v5560
    %5850 = vst.msk [vmem:[%s5813 + $0xa0] sm:$0xf] %vm5589, %v5561
    %5851 = vst.msk [vmem:[%s5813 + $0xa4] sm:$0xf] %vm5589, %v5562
    %5852 = vst.msk [vmem:[%s5813 + $0xa8] sm:$0xf] %vm5589, %v5563
    %5853 = vst.msk [vmem:[%s5813 + $0xac] sm:$0xf] %vm5589, %v5564
    %5854 = vst.msk [vmem:[%s5813 + $0xb0] sm:$0xf] %vm5589, %v5565
    %5855 = vst.msk [vmem:[%s5813 + $0xb4] sm:$0xf] %vm5589, %v5566
    %5856 = vst.msk [vmem:[%s5813 + $0xb8] sm:$0xf] %vm5589, %v5567
    %5857 = vst.msk [vmem:[%s5813 + $0xbc] sm:$0xf] %vm5589, %v5568
    %5858 = vst.msk [vmem:[%s5813 + $0xc0] sm:$0xf] %vm5589, %v5569
    %5859 = vst.msk [vmem:[%s5813 + $0xc4] sm:$0xf] %vm5589, %v5570
    %5860 = vst.msk [vmem:[%s5813 + $0xc8] sm:$0xf] %vm5589, %v5571
    %5861 = vst.msk [vmem:[%s5813 + $0xcc] sm:$0xf] %vm5589, %v5572
    %5862 = vst.msk [vmem:[%s5813 + $0xd0] sm:$0xf] %vm5589, %v5573
    %5863 = vst.msk [vmem:[%s5813 + $0xd4] sm:$0xf] %vm5589, %v5574
    %5864 = vst.msk [vmem:[%s5813 + $0xd8] sm:$0xf] %vm5589, %v5575
    %5865 = vst.msk [vmem:[%s5813 + $0xdc] sm:$0xf] %vm5589, %v5576
    %5866 = vst.msk [vmem:[%s5813 + $0xe0] sm:$0xf] %vm5589, %v5577
    %5867 = vst.msk [vmem:[%s5813 + $0xe4] sm:$0xf] %vm5589, %v5578
    %5868 = vst.msk [vmem:[%s5813 + $0xe8] sm:$0xf] %vm5589, %v5579
    %5869 = vst.msk [vmem:[%s5813 + $0xec] sm:$0xf] %vm5589, %v5580
    %5870 = vst.msk [vmem:[%s5813 + $0xf0] sm:$0xf] %vm5589, %v5581
    %5871 = vst.msk [vmem:[%s5813 + $0xf4] sm:$0xf] %vm5589, %v5582
    %5872 = vst.msk [vmem:[%s5813 + $0xf8] sm:$0xf] %vm5589, %v5583
    %5873 = vst.msk [vmem:[%s5813 + $0xfc] sm:$0xf] %vm5589, %v5584
    %5874 = vst.msk [vmem:[%s5813 + $0x100] sm:$0xf] %vm5589, %v5585
    %5875 = vst.msk [vmem:[%s5813 + $0x104] sm:$0xf] %vm5589, %v5586
    %5876 = vst.msk [vmem:[%s5813 + $0x108] sm:$0xf] %vm5589, %v5587
    %5877 = vst.msk [vmem:[%s5813 + $0x10c] sm:$0xf] %vm5589, %v5588
    %v5879 = vshrl.u32 %v5525, 16
    %v5881 = vrot.slane %v5879, 7
    %v5882 = vshll.u32 %v5525, 16
    %v5884 = vor.u32 %v5881, %v5882
    %v5885 = vrot.slane %v5881, 4
    %v5887 = vshrl.u32 %v5526, 16
    %v5889 = vrot.slane %v5887, 7
    %v5890 = vshll.u32 %v5526, 16
    %v5892 = vor.u32 %v5889, %v5890
    %v5893 = vsel %vm390, %v5885, %v5892
    %v5895 = vshrl.u32 %v5527, 16
    %v5897 = vrot.slane %v5895, 7
    %v5898 = vshll.u32 %v5527, 16
    %v5900 = vor.u32 %v5897, %v5898
    %v5901 = vrot.slane %v5897, 4
    %v5903 = vshrl.u32 %v5528, 16
    %v5905 = vrot.slane %v5903, 7
    %v5906 = vshll.u32 %v5528, 16
    %v5908 = vor.u32 %v5905, %v5906
    %v5909 = vsel %vm390, %v5901, %v5908
    %v5911 = vshrl.u32 %v5529, 16
    %v5913 = vrot.slane %v5911, 7
    %v5914 = vshll.u32 %v5529, 16
    %v5916 = vor.u32 %v5913, %v5914
    %v5917 = vrot.slane %v5913, 4
    %v5919 = vshrl.u32 %v5530, 16
    %v5921 = vrot.slane %v5919, 7
    %v5922 = vshll.u32 %v5530, 16
    %v5924 = vor.u32 %v5921, %v5922
    %v5925 = vsel %vm390, %v5917, %v5924
    %v5927 = vshrl.u32 %v5531, 16
    %v5929 = vrot.slane %v5927, 7
    %v5930 = vshll.u32 %v5531, 16
    %v5932 = vor.u32 %v5929, %v5930
    %v5933 = vrot.slane %v5929, 4
    %v5935 = vshrl.u32 %v5532, 16
    %v5937 = vrot.slane %v5935, 7
    %v5938 = vshll.u32 %v5532, 16
    %v5940 = vor.u32 %v5937, %v5938
    %v5941 = vsel %vm390, %v5933, %v5940
    %v5943 = vshrl.u32 %v5533, 16
    %v5945 = vrot.slane %v5943, 7
    %v5946 = vshll.u32 %v5533, 16
    %v5948 = vor.u32 %v5945, %v5946
    %v5949 = vrot.slane %v5945, 4
    %v5951 = vshrl.u32 %v5534, 16
    %v5953 = vrot.slane %v5951, 7
    %v5954 = vshll.u32 %v5534, 16
    %v5956 = vor.u32 %v5953, %v5954
    %v5957 = vsel %vm390, %v5949, %v5956
    %v5959 = vshrl.u32 %v5535, 16
    %v5961 = vrot.slane %v5959, 7
    %v5962 = vshll.u32 %v5535, 16
    %v5964 = vor.u32 %v5961, %v5962
    %v5965 = vrot.slane %v5961, 4
    %v5967 = vshrl.u32 %v5536, 16
    %v5969 = vrot.slane %v5967, 7
    %v5970 = vshll.u32 %v5536, 16
    %v5972 = vor.u32 %v5969, %v5970
    %v5973 = vsel %vm390, %v5965, %v5972
    %v5975 = vshrl.u32 %v5537, 16
    %v5977 = vrot.slane %v5975, 7
    %v5978 = vshll.u32 %v5537, 16
    %v5980 = vor.u32 %v5977, %v5978
    %v5981 = vrot.slane %v5977, 4
    %v5983 = vshrl.u32 %v5538, 16
    %v5985 = vrot.slane %v5983, 7
    %v5986 = vshll.u32 %v5538, 16
    %v5988 = vor.u32 %v5985, %v5986
    %v5989 = vsel %vm390, %v5981, %v5988
    %v5991 = vshrl.u32 %v5539, 16
    %v5993 = vrot.slane %v5991, 7
    %v5994 = vshll.u32 %v5539, 16
    %v5996 = vor.u32 %v5993, %v5994
    %v5997 = vrot.slane %v5993, 4
    %v5999 = vshrl.u32 %v5540, 16
    %v6001 = vrot.slane %v5999, 7
    %v6002 = vshll.u32 %v5540, 16
    %v6004 = vor.u32 %v6001, %v6002
    %v6005 = vsel %vm390, %v5997, %v6004
    %v6007 = vshrl.u32 %v5541, 16
    %v6009 = vrot.slane %v6007, 7
    %v6010 = vshll.u32 %v5541, 16
    %v6012 = vor.u32 %v6009, %v6010
    %v6013 = vrot.slane %v6009, 4
    %v6015 = vshrl.u32 %v5542, 16
    %v6017 = vrot.slane %v6015, 7
    %v6018 = vshll.u32 %v5542, 16
    %v6020 = vor.u32 %v6017, %v6018
    %v6021 = vsel %vm390, %v6013, %v6020
    %v6023 = vshrl.u32 %v5543, 16
    %v6025 = vrot.slane %v6023, 7
    %v6026 = vshll.u32 %v5543, 16
    %v6028 = vor.u32 %v6025, %v6026
    %v6029 = vrot.slane %v6025, 4
    %v6031 = vshrl.u32 %v5544, 16
    %v6033 = vrot.slane %v6031, 7
    %v6034 = vshll.u32 %v5544, 16
    %v6036 = vor.u32 %v6033, %v6034
    %v6037 = vsel %vm390, %v6029, %v6036
    %v6039 = vshrl.u32 %v5545, 16
    %v6041 = vrot.slane %v6039, 7
    %v6042 = vshll.u32 %v5545, 16
    %v6044 = vor.u32 %v6041, %v6042
    %v6045 = vrot.slane %v6041, 4
    %v6047 = vshrl.u32 %v5546, 16
    %v6049 = vrot.slane %v6047, 7
    %v6050 = vshll.u32 %v5546, 16
    %v6052 = vor.u32 %v6049, %v6050
    %v6053 = vsel %vm390, %v6045, %v6052
    %v6055 = vshrl.u32 %v5547, 16
    %v6057 = vrot.slane %v6055, 7
    %v6058 = vshll.u32 %v5547, 16
    %v6060 = vor.u32 %v6057, %v6058
    %v6061 = vrot.slane %v6057, 4
    %v6063 = vshrl.u32 %v5548, 16
    %v6065 = vrot.slane %v6063, 7
    %v6066 = vshll.u32 %v5548, 16
    %v6068 = vor.u32 %v6065, %v6066
    %v6069 = vsel %vm390, %v6061, %v6068
    %v6071 = vshrl.u32 %v5549, 16
    %v6073 = vrot.slane %v6071, 7
    %v6074 = vshll.u32 %v5549, 16
    %v6076 = vor.u32 %v6073, %v6074
    %v6077 = vrot.slane %v6073, 4
    %v6079 = vshrl.u32 %v5550, 16
    %v6081 = vrot.slane %v6079, 7
    %v6082 = vshll.u32 %v5550, 16
    %v6084 = vor.u32 %v6081, %v6082
    %v6085 = vsel %vm390, %v6077, %v6084
    %v6087 = vshrl.u32 %v5551, 16
    %v6089 = vrot.slane %v6087, 7
    %v6090 = vshll.u32 %v5551, 16
    %v6092 = vor.u32 %v6089, %v6090
    %v6093 = vrot.slane %v6089, 4
    %v6095 = vshrl.u32 %v5552, 16
    %v6097 = vrot.slane %v6095, 7
    %v6098 = vshll.u32 %v5552, 16
    %v6100 = vor.u32 %v6097, %v6098
    %v6101 = vsel %vm390, %v6093, %v6100
    %v6103 = vshrl.u32 %v5553, 16
    %v6105 = vrot.slane %v6103, 7
    %v6106 = vshll.u32 %v5553, 16
    %v6108 = vor.u32 %v6105, %v6106
    %v6109 = vrot.slane %v6105, 4
    %v6111 = vshrl.u32 %v5554, 16
    %v6113 = vrot.slane %v6111, 7
    %v6114 = vshll.u32 %v5554, 16
    %v6116 = vor.u32 %v6113, %v6114
    %v6117 = vsel %vm390, %v6109, %v6116
    %v6119 = vshrl.u32 %v5555, 16
    %v6121 = vrot.slane %v6119, 7
    %v6122 = vshll.u32 %v5555, 16
    %v6124 = vor.u32 %v6121, %v6122
    %v6125 = vrot.slane %v6121, 4
    %v6127 = vshrl.u32 %v5556, 16
    %v6129 = vrot.slane %v6127, 7
    %v6130 = vshll.u32 %v5556, 16
    %v6132 = vor.u32 %v6129, %v6130
    %v6133 = vsel %vm390, %v6125, %v6132
    %v6135 = vshrl.u32 %v5557, 16
    %v6137 = vrot.slane %v6135, 7
    %v6138 = vshll.u32 %v5557, 16
    %v6140 = vor.u32 %v6137, %v6138
    %v6141 = vrot.slane %v6137, 4
    %v6143 = vshrl.u32 %v5558, 16
    %v6145 = vrot.slane %v6143, 7
    %v6146 = vshll.u32 %v5558, 16
    %v6148 = vor.u32 %v6145, %v6146
    %v6149 = vsel %vm390, %v6141, %v6148
    %v6151 = vshrl.u32 %v5559, 16
    %v6153 = vrot.slane %v6151, 7
    %v6154 = vshll.u32 %v5559, 16
    %v6156 = vor.u32 %v6153, %v6154
    %v6157 = vrot.slane %v6153, 4
    %v6159 = vshrl.u32 %v5560, 16
    %v6161 = vrot.slane %v6159, 7
    %v6162 = vshll.u32 %v5560, 16
    %v6164 = vor.u32 %v6161, %v6162
    %v6165 = vsel %vm390, %v6157, %v6164
    %v6167 = vshrl.u32 %v5561, 16
    %v6169 = vrot.slane %v6167, 7
    %v6170 = vshll.u32 %v5561, 16
    %v6172 = vor.u32 %v6169, %v6170
    %v6173 = vrot.slane %v6169, 4
    %v6175 = vshrl.u32 %v5562, 16
    %v6177 = vrot.slane %v6175, 7
    %v6178 = vshll.u32 %v5562, 16
    %v6180 = vor.u32 %v6177, %v6178
    %v6181 = vsel %vm390, %v6173, %v6180
    %v6183 = vshrl.u32 %v5563, 16
    %v6185 = vrot.slane %v6183, 7
    %v6186 = vshll.u32 %v5563, 16
    %v6188 = vor.u32 %v6185, %v6186
    %v6189 = vrot.slane %v6185, 4
    %v6191 = vshrl.u32 %v5564, 16
    %v6193 = vrot.slane %v6191, 7
    %v6194 = vshll.u32 %v5564, 16
    %v6196 = vor.u32 %v6193, %v6194
    %v6197 = vsel %vm390, %v6189, %v6196
    %v6199 = vshrl.u32 %v5565, 16
    %v6201 = vrot.slane %v6199, 7
    %v6202 = vshll.u32 %v5565, 16
    %v6204 = vor.u32 %v6201, %v6202
    %v6205 = vrot.slane %v6201, 4
    %v6207 = vshrl.u32 %v5566, 16
    %v6209 = vrot.slane %v6207, 7
    %v6210 = vshll.u32 %v5566, 16
    %v6212 = vor.u32 %v6209, %v6210
    %v6213 = vsel %vm390, %v6205, %v6212
    %v6215 = vshrl.u32 %v5567, 16
    %v6217 = vrot.slane %v6215, 7
    %v6218 = vshll.u32 %v5567, 16
    %v6220 = vor.u32 %v6217, %v6218
    %v6221 = vrot.slane %v6217, 4
    %v6223 = vshrl.u32 %v5568, 16
    %v6225 = vrot.slane %v6223, 7
    %v6226 = vshll.u32 %v5568, 16
    %v6228 = vor.u32 %v6225, %v6226
    %v6229 = vsel %vm390, %v6221, %v6228
    %v6231 = vshrl.u32 %v5569, 16
    %v6233 = vrot.slane %v6231, 7
    %v6234 = vshll.u32 %v5569, 16
    %v6236 = vor.u32 %v6233, %v6234
    %v6237 = vrot.slane %v6233, 4
    %v6239 = vshrl.u32 %v5570, 16
    %v6241 = vrot.slane %v6239, 7
    %v6242 = vshll.u32 %v5570, 16
    %v6244 = vor.u32 %v6241, %v6242
    %v6245 = vsel %vm390, %v6237, %v6244
    %v6247 = vshrl.u32 %v5571, 16
    %v6249 = vrot.slane %v6247, 7
    %v6250 = vshll.u32 %v5571, 16
    %v6252 = vor.u32 %v6249, %v6250
    %v6253 = vrot.slane %v6249, 4
    %v6255 = vshrl.u32 %v5572, 16
    %v6257 = vrot.slane %v6255, 7
    %v6258 = vshll.u32 %v5572, 16
    %v6260 = vor.u32 %v6257, %v6258
    %v6261 = vsel %vm390, %v6253, %v6260
    %v6263 = vshrl.u32 %v5573, 16
    %v6265 = vrot.slane %v6263, 7
    %v6266 = vshll.u32 %v5573, 16
    %v6268 = vor.u32 %v6265, %v6266
    %v6269 = vrot.slane %v6265, 4
    %v6271 = vshrl.u32 %v5574, 16
    %v6273 = vrot.slane %v6271, 7
    %v6274 = vshll.u32 %v5574, 16
    %v6276 = vor.u32 %v6273, %v6274
    %v6277 = vsel %vm390, %v6269, %v6276
    %v6279 = vshrl.u32 %v5575, 16
    %v6281 = vrot.slane %v6279, 7
    %v6282 = vshll.u32 %v5575, 16
    %v6284 = vor.u32 %v6281, %v6282
    %v6285 = vrot.slane %v6281, 4
    %v6287 = vshrl.u32 %v5576, 16
    %v6289 = vrot.slane %v6287, 7
    %v6290 = vshll.u32 %v5576, 16
    %v6292 = vor.u32 %v6289, %v6290
    %v6293 = vsel %vm390, %v6285, %v6292
    %v6295 = vshrl.u32 %v5577, 16
    %v6297 = vrot.slane %v6295, 7
    %v6298 = vshll.u32 %v5577, 16
    %v6300 = vor.u32 %v6297, %v6298
    %v6301 = vrot.slane %v6297, 4
    %v6303 = vshrl.u32 %v5578, 16
    %v6305 = vrot.slane %v6303, 7
    %v6306 = vshll.u32 %v5578, 16
    %v6308 = vor.u32 %v6305, %v6306
    %v6309 = vsel %vm390, %v6301, %v6308
    %v6311 = vshrl.u32 %v5579, 16
    %v6313 = vrot.slane %v6311, 7
    %v6314 = vshll.u32 %v5579, 16
    %v6316 = vor.u32 %v6313, %v6314
    %v6317 = vrot.slane %v6313, 4
    %v6319 = vshrl.u32 %v5580, 16
    %v6321 = vrot.slane %v6319, 7
    %v6322 = vshll.u32 %v5580, 16
    %v6324 = vor.u32 %v6321, %v6322
    %v6325 = vsel %vm390, %v6317, %v6324
    %v6327 = vshrl.u32 %v5581, 16
    %v6329 = vrot.slane %v6327, 7
    %v6330 = vshll.u32 %v5581, 16
    %v6332 = vor.u32 %v6329, %v6330
    %v6333 = vrot.slane %v6329, 4
    %v6335 = vshrl.u32 %v5582, 16
    %v6337 = vrot.slane %v6335, 7
    %v6338 = vshll.u32 %v5582, 16
    %v6340 = vor.u32 %v6337, %v6338
    %v6341 = vsel %vm390, %v6333, %v6340
    %v6343 = vshrl.u32 %v5583, 16
    %v6345 = vrot.slane %v6343, 7
    %v6346 = vshll.u32 %v5583, 16
    %v6348 = vor.u32 %v6345, %v6346
    %v6349 = vrot.slane %v6345, 4
    %v6351 = vshrl.u32 %v5584, 16
    %v6353 = vrot.slane %v6351, 7
    %v6354 = vshll.u32 %v5584, 16
    %v6356 = vor.u32 %v6353, %v6354
    %v6357 = vsel %vm390, %v6349, %v6356
    %v6359 = vshrl.u32 %v5585, 16
    %v6361 = vrot.slane %v6359, 7
    %v6362 = vshll.u32 %v5585, 16
    %v6364 = vor.u32 %v6361, %v6362
    %v6365 = vrot.slane %v6361, 4
    %v6367 = vshrl.u32 %v5586, 16
    %v6369 = vrot.slane %v6367, 7
    %v6370 = vshll.u32 %v5586, 16
    %v6372 = vor.u32 %v6369, %v6370
    %v6373 = vsel %vm390, %v6365, %v6372
    %v6375 = vshrl.u32 %v5587, 16
    %v6377 = vrot.slane %v6375, 7
    %v6378 = vshll.u32 %v5587, 16
    %v6380 = vor.u32 %v6377, %v6378
    %v6381 = vrot.slane %v6377, 4
    %v6383 = vshrl.u32 %v5588, 16
    %v6385 = vrot.slane %v6383, 7
    %v6386 = vshll.u32 %v5588, 16
    %v6388 = vor.u32 %v6385, %v6386
    %v6389 = vsel %vm390, %v6381, %v6388
    %vm6454 = vcmask 27648
    %vm6455 = vmand %vm6454, %vm968
    %v6456 = vld [vmem:[%s5615] sm:$0xf]
    %v6457 = vsel %vm6455, %v5884, %v6456
    %6458 = vst [vmem:[%s5615] sm:$0xf] %v6457
    %6459 = vst.msk [vmem:[%s5615 + $0x4] sm:$0xf] %vm5589, %v5893
    %v6460 = vld [vmem:[%s5615 + $0x8] sm:$0xf]
    %v6461 = vsel %vm6455, %v5900, %v6460
    %6462 = vst [vmem:[%s5615 + $0x8] sm:$0xf] %v6461
    %6463 = vst.msk [vmem:[%s5615 + $0xc] sm:$0xf] %vm5589, %v5909
    %v6464 = vld [vmem:[%s5615 + $0x10] sm:$0xf]
    %v6465 = vsel %vm6455, %v5916, %v6464
    %6466 = vst [vmem:[%s5615 + $0x10] sm:$0xf] %v6465
    %6467 = vst.msk [vmem:[%s5615 + $0x14] sm:$0xf] %vm5589, %v5925
    %v6468 = vld [vmem:[%s5615 + $0x18] sm:$0xf]
    %v6469 = vsel %vm6455, %v5932, %v6468
    %6470 = vst [vmem:[%s5615 + $0x18] sm:$0xf] %v6469
    %6471 = vst.msk [vmem:[%s5615 + $0x1c] sm:$0xf] %vm5589, %v5941
    %v6472 = vld [vmem:[%s5615 + $0x20] sm:$0xf]
    %v6473 = vsel %vm6455, %v5948, %v6472
    %6474 = vst [vmem:[%s5615 + $0x20] sm:$0xf] %v6473
    %6475 = vst.msk [vmem:[%s5615 + $0x24] sm:$0xf] %vm5589, %v5957
    %v6476 = vld [vmem:[%s5615 + $0x28] sm:$0xf]
    %v6477 = vsel %vm6455, %v5964, %v6476
    %6478 = vst [vmem:[%s5615 + $0x28] sm:$0xf] %v6477
    %6479 = vst.msk [vmem:[%s5615 + $0x2c] sm:$0xf] %vm5589, %v5973
    %v6480 = vld [vmem:[%s5615 + $0x30] sm:$0xf]
    %v6481 = vsel %vm6455, %v5980, %v6480
    %6482 = vst [vmem:[%s5615 + $0x30] sm:$0xf] %v6481
    %6483 = vst.msk [vmem:[%s5615 + $0x34] sm:$0xf] %vm5589, %v5989
    %v6484 = vld [vmem:[%s5615 + $0x38] sm:$0xf]
    %v6485 = vsel %vm6455, %v5996, %v6484
    %6486 = vst [vmem:[%s5615 + $0x38] sm:$0xf] %v6485
    %6487 = vst.msk [vmem:[%s5615 + $0x3c] sm:$0xf] %vm5589, %v6005
    %v6488 = vld [vmem:[%s5615 + $0x40] sm:$0xf]
    %v6489 = vsel %vm6455, %v6012, %v6488
    %6490 = vst [vmem:[%s5615 + $0x40] sm:$0xf] %v6489
    %6491 = vst.msk [vmem:[%s5615 + $0x44] sm:$0xf] %vm5589, %v6021
    %v6492 = vld [vmem:[%s5615 + $0x48] sm:$0xf]
    %v6493 = vsel %vm6455, %v6028, %v6492
    %6494 = vst [vmem:[%s5615 + $0x48] sm:$0xf] %v6493
    %6495 = vst.msk [vmem:[%s5615 + $0x4c] sm:$0xf] %vm5589, %v6037
    %v6496 = vld [vmem:[%s5615 + $0x50] sm:$0xf]
    %v6497 = vsel %vm6455, %v6044, %v6496
    %6498 = vst [vmem:[%s5615 + $0x50] sm:$0xf] %v6497
    %6499 = vst.msk [vmem:[%s5615 + $0x54] sm:$0xf] %vm5589, %v6053
    %v6500 = vld [vmem:[%s5615 + $0x58] sm:$0xf]
    %v6501 = vsel %vm6455, %v6060, %v6500
    %6502 = vst [vmem:[%s5615 + $0x58] sm:$0xf] %v6501
    %6503 = vst.msk [vmem:[%s5615 + $0x5c] sm:$0xf] %vm5589, %v6069
    %v6504 = vld [vmem:[%s5615 + $0x60] sm:$0xf]
    %v6505 = vsel %vm6455, %v6076, %v6504
    %6506 = vst [vmem:[%s5615 + $0x60] sm:$0xf] %v6505
    %6507 = vst.msk [vmem:[%s5615 + $0x64] sm:$0xf] %vm5589, %v6085
    %v6508 = vld [vmem:[%s5615 + $0x68] sm:$0xf]
    %v6509 = vsel %vm6455, %v6092, %v6508
    %6510 = vst [vmem:[%s5615 + $0x68] sm:$0xf] %v6509
    %6511 = vst.msk [vmem:[%s5615 + $0x6c] sm:$0xf] %vm5589, %v6101
    %v6512 = vld [vmem:[%s5615 + $0x70] sm:$0xf]
    %v6513 = vsel %vm6455, %v6108, %v6512
    %6514 = vst [vmem:[%s5615 + $0x70] sm:$0xf] %v6513
    %6515 = vst.msk [vmem:[%s5615 + $0x74] sm:$0xf] %vm5589, %v6117
    %v6516 = vld [vmem:[%s5615 + $0x78] sm:$0xf]
    %v6517 = vsel %vm6455, %v6124, %v6516
    %6518 = vst [vmem:[%s5615 + $0x78] sm:$0xf] %v6517
    %6519 = vst.msk [vmem:[%s5615 + $0x7c] sm:$0xf] %vm5589, %v6133
    %v6520 = vld [vmem:[%s5615 + $0x90] sm:$0xf]
    %v6521 = vsel %vm6455, %v6140, %v6520
    %6522 = vst [vmem:[%s5615 + $0x90] sm:$0xf] %v6521
    %6523 = vst.msk [vmem:[%s5615 + $0x94] sm:$0xf] %vm5589, %v6149
    %v6524 = vld [vmem:[%s5615 + $0x98] sm:$0xf]
    %v6525 = vsel %vm6455, %v6156, %v6524
    %6526 = vst [vmem:[%s5615 + $0x98] sm:$0xf] %v6525
    %6527 = vst.msk [vmem:[%s5615 + $0x9c] sm:$0xf] %vm5589, %v6165
    %v6528 = vld [vmem:[%s5615 + $0xa0] sm:$0xf]
    %v6529 = vsel %vm6455, %v6172, %v6528
    %6530 = vst [vmem:[%s5615 + $0xa0] sm:$0xf] %v6529
    %6531 = vst.msk [vmem:[%s5615 + $0xa4] sm:$0xf] %vm5589, %v6181
    %v6532 = vld [vmem:[%s5615 + $0xa8] sm:$0xf]
    %v6533 = vsel %vm6455, %v6188, %v6532
    %6534 = vst [vmem:[%s5615 + $0xa8] sm:$0xf] %v6533
    %6535 = vst.msk [vmem:[%s5615 + $0xac] sm:$0xf] %vm5589, %v6197
    %v6536 = vld [vmem:[%s5615 + $0xb0] sm:$0xf]
    %v6537 = vsel %vm6455, %v6204, %v6536
    %6538 = vst [vmem:[%s5615 + $0xb0] sm:$0xf] %v6537
    %6539 = vst.msk [vmem:[%s5615 + $0xb4] sm:$0xf] %vm5589, %v6213
    %v6540 = vld [vmem:[%s5615 + $0xb8] sm:$0xf]
    %v6541 = vsel %vm6455, %v6220, %v6540
    %6542 = vst [vmem:[%s5615 + $0xb8] sm:$0xf] %v6541
    %6543 = vst.msk [vmem:[%s5615 + $0xbc] sm:$0xf] %vm5589, %v6229
    %v6544 = vld [vmem:[%s5615 + $0xc0] sm:$0xf]
    %v6545 = vsel %vm6455, %v6236, %v6544
    %6546 = vst [vmem:[%s5615 + $0xc0] sm:$0xf] %v6545
    %6547 = vst.msk [vmem:[%s5615 + $0xc4] sm:$0xf] %vm5589, %v6245
    %v6548 = vld [vmem:[%s5615 + $0xc8] sm:$0xf]
    %v6549 = vsel %vm6455, %v6252, %v6548
    %6550 = vst [vmem:[%s5615 + $0xc8] sm:$0xf] %v6549
    %6551 = vst.msk [vmem:[%s5615 + $0xcc] sm:$0xf] %vm5589, %v6261
    %v6552 = vld [vmem:[%s5615 + $0xd0] sm:$0xf]
    %v6553 = vsel %vm6455, %v6268, %v6552
    %6554 = vst [vmem:[%s5615 + $0xd0] sm:$0xf] %v6553
    %6555 = vst.msk [vmem:[%s5615 + $0xd4] sm:$0xf] %vm5589, %v6277
    %v6556 = vld [vmem:[%s5615 + $0xd8] sm:$0xf]
    %v6557 = vsel %vm6455, %v6284, %v6556
    %6558 = vst [vmem:[%s5615 + $0xd8] sm:$0xf] %v6557
    %6559 = vst.msk [vmem:[%s5615 + $0xdc] sm:$0xf] %vm5589, %v6293
    %v6560 = vld [vmem:[%s5615 + $0xe0] sm:$0xf]
    %v6561 = vsel %vm6455, %v6300, %v6560
    %6562 = vst [vmem:[%s5615 + $0xe0] sm:$0xf] %v6561
    %6563 = vst.msk [vmem:[%s5615 + $0xe4] sm:$0xf] %vm5589, %v6309
    %v6564 = vld [vmem:[%s5615 + $0xe8] sm:$0xf]
    %v6565 = vsel %vm6455, %v6316, %v6564
    %6566 = vst [vmem:[%s5615 + $0xe8] sm:$0xf] %v6565
    %6567 = vst.msk [vmem:[%s5615 + $0xec] sm:$0xf] %vm5589, %v6325
    %v6568 = vld [vmem:[%s5615 + $0xf0] sm:$0xf]
    %v6569 = vsel %vm6455, %v6332, %v6568
    %6570 = vst [vmem:[%s5615 + $0xf0] sm:$0xf] %v6569
    %6571 = vst.msk [vmem:[%s5615 + $0xf4] sm:$0xf] %vm5589, %v6341
    %v6572 = vld [vmem:[%s5615 + $0xf8] sm:$0xf]
    %v6573 = vsel %vm6455, %v6348, %v6572
    %6574 = vst [vmem:[%s5615 + $0xf8] sm:$0xf] %v6573
    %6575 = vst.msk [vmem:[%s5615 + $0xfc] sm:$0xf] %vm5589, %v6357
    %v6576 = vld [vmem:[%s5615 + $0x100] sm:$0xf]
    %v6577 = vsel %vm6455, %v6364, %v6576
    %6578 = vst [vmem:[%s5615 + $0x100] sm:$0xf] %v6577
    %6579 = vst.msk [vmem:[%s5615 + $0x104] sm:$0xf] %vm5589, %v6373
    %v6580 = vld [vmem:[%s5615 + $0x108] sm:$0xf]
    %v6581 = vsel %vm6455, %v6380, %v6580
    %6582 = vst [vmem:[%s5615 + $0x108] sm:$0xf] %v6581
    %6583 = vst.msk [vmem:[%s5615 + $0x10c] sm:$0xf] %vm5589, %v6389
    %v6584 = vrot.slane %v5879, 4
    %v6585 = vrot.slane %v5882, 5
    %v6586 = vor.u32 %v6584, %v6585
    %v6587 = vrot.slane %v6586, 4
    %v6588 = vrot.slane %v5890, 5
    %v6589 = vsel %vm1100, %v6587, %v6588
    %v6590 = vrot.slane %v5887, 4
    %v6591 = vor.u32 %v6590, %v6588
    %v6592 = vrot.slane %v6591, 4
    %v6593 = vrot.slane %v5895, 4
    %v6594 = vrot.slane %v5898, 5
    %v6595 = vor.u32 %v6593, %v6594
    %v6596 = vrot.slane %v6595, 4
    %v6597 = vrot.slane %v5906, 5
    %v6598 = vsel %vm1100, %v6596, %v6597
    %v6599 = vrot.slane %v5903, 4
    %v6600 = vor.u32 %v6599, %v6597
    %v6601 = vrot.slane %v6600, 4
    %v6602 = vrot.slane %v5911, 4
    %v6603 = vrot.slane %v5914, 5
    %v6604 = vor.u32 %v6602, %v6603
    %v6605 = vrot.slane %v6604, 4
    %v6606 = vrot.slane %v5922, 5
    %v6607 = vsel %vm1100, %v6605, %v6606
    %v6608 = vrot.slane %v5919, 4
    %v6609 = vor.u32 %v6608, %v6606
    %v6610 = vrot.slane %v6609, 4
    %v6611 = vrot.slane %v5927, 4
    %v6612 = vrot.slane %v5930, 5
    %v6613 = vor.u32 %v6611, %v6612
    %v6614 = vrot.slane %v6613, 4
    %v6615 = vrot.slane %v5938, 5
    %v6616 = vsel %vm1100, %v6614, %v6615
    %v6617 = vrot.slane %v5935, 4
    %v6618 = vor.u32 %v6617, %v6615
    %v6619 = vrot.slane %v6618, 4
    %v6620 = vrot.slane %v5943, 4
    %v6621 = vrot.slane %v5946, 5
    %v6622 = vor.u32 %v6620, %v6621
    %v6623 = vrot.slane %v6622, 4
    %v6624 = vrot.slane %v5954, 5
    %v6625 = vsel %vm1100, %v6623, %v6624
    %v6626 = vrot.slane %v5951, 4
    %v6627 = vor.u32 %v6626, %v6624
    %v6628 = vrot.slane %v6627, 4
    %v6629 = vrot.slane %v5959, 4
    %v6630 = vrot.slane %v5962, 5
    %v6631 = vor.u32 %v6629, %v6630
    %v6632 = vrot.slane %v6631, 4
    %v6633 = vrot.slane %v5970, 5
    %v6634 = vsel %vm1100, %v6632, %v6633
    %v6635 = vrot.slane %v5967, 4
    %v6636 = vor.u32 %v6635, %v6633
    %v6637 = vrot.slane %v6636, 4
    %v6638 = vrot.slane %v5975, 4
    %v6639 = vrot.slane %v5978, 5
    %v6640 = vor.u32 %v6638, %v6639
    %v6641 = vrot.slane %v6640, 4
    %v6642 = vrot.slane %v5986, 5
    %v6643 = vsel %vm1100, %v6641, %v6642
    %v6644 = vrot.slane %v5983, 4
    %v6645 = vor.u32 %v6644, %v6642
    %v6646 = vrot.slane %v6645, 4
    %v6647 = vrot.slane %v5991, 4
    %v6648 = vrot.slane %v5994, 5
    %v6649 = vor.u32 %v6647, %v6648
    %v6650 = vrot.slane %v6649, 4
    %v6651 = vrot.slane %v6002, 5
    %v6652 = vsel %vm1100, %v6650, %v6651
    %v6653 = vrot.slane %v5999, 4
    %v6654 = vor.u32 %v6653, %v6651
    %v6655 = vrot.slane %v6654, 4
    %v6656 = vrot.slane %v6007, 4
    %v6657 = vrot.slane %v6010, 5
    %v6658 = vor.u32 %v6656, %v6657
    %v6659 = vrot.slane %v6658, 4
    %v6660 = vrot.slane %v6018, 5
    %v6661 = vsel %vm1100, %v6659, %v6660
    %v6662 = vrot.slane %v6015, 4
    %v6663 = vor.u32 %v6662, %v6660
    %v6664 = vrot.slane %v6663, 4
    %v6665 = vrot.slane %v6023, 4
    %v6666 = vrot.slane %v6026, 5
    %v6667 = vor.u32 %v6665, %v6666
    %v6668 = vrot.slane %v6667, 4
    %v6669 = vrot.slane %v6034, 5
    %v6670 = vsel %vm1100, %v6668, %v6669
    %v6671 = vrot.slane %v6031, 4
    %v6672 = vor.u32 %v6671, %v6669
    %v6673 = vrot.slane %v6672, 4
    %v6674 = vrot.slane %v6039, 4
    %v6675 = vrot.slane %v6042, 5
    %v6676 = vor.u32 %v6674, %v6675
    %v6677 = vrot.slane %v6676, 4
    %v6678 = vrot.slane %v6050, 5
    %v6679 = vsel %vm1100, %v6677, %v6678
    %v6680 = vrot.slane %v6047, 4
    %v6681 = vor.u32 %v6680, %v6678
    %v6682 = vrot.slane %v6681, 4
    %v6683 = vrot.slane %v6055, 4
    %v6684 = vrot.slane %v6058, 5
    %v6685 = vor.u32 %v6683, %v6684
    %v6686 = vrot.slane %v6685, 4
    %v6687 = vrot.slane %v6066, 5
    %v6688 = vsel %vm1100, %v6686, %v6687
    %v6689 = vrot.slane %v6063, 4
    %v6690 = vor.u32 %v6689, %v6687
    %v6691 = vrot.slane %v6690, 4
    %v6692 = vrot.slane %v6071, 4
    %v6693 = vrot.slane %v6074, 5
    %v6694 = vor.u32 %v6692, %v6693
    %v6695 = vrot.slane %v6694, 4
    %v6696 = vrot.slane %v6082, 5
    %v6697 = vsel %vm1100, %v6695, %v6696
    %v6698 = vrot.slane %v6079, 4
    %v6699 = vor.u32 %v6698, %v6696
    %v6700 = vrot.slane %v6699, 4
    %v6701 = vrot.slane %v6087, 4
    %v6702 = vrot.slane %v6090, 5
    %v6703 = vor.u32 %v6701, %v6702
    %v6704 = vrot.slane %v6703, 4
    %v6705 = vrot.slane %v6098, 5
    %v6706 = vsel %vm1100, %v6704, %v6705
    %v6707 = vrot.slane %v6095, 4
    %v6708 = vor.u32 %v6707, %v6705
    %v6709 = vrot.slane %v6708, 4
    %v6710 = vrot.slane %v6103, 4
    %v6711 = vrot.slane %v6106, 5
    %v6712 = vor.u32 %v6710, %v6711
    %v6713 = vrot.slane %v6712, 4
    %v6714 = vrot.slane %v6114, 5
    %v6715 = vsel %vm1100, %v6713, %v6714
    %v6716 = vrot.slane %v6111, 4
    %v6717 = vor.u32 %v6716, %v6714
    %v6718 = vrot.slane %v6717, 4
    %v6719 = vrot.slane %v6119, 4
    %v6720 = vrot.slane %v6122, 5
    %v6721 = vor.u32 %v6719, %v6720
    %v6722 = vrot.slane %v6721, 4
    %v6723 = vrot.slane %v6130, 5
    %v6724 = vsel %vm1100, %v6722, %v6723
    %v6725 = vrot.slane %v6127, 4
    %v6726 = vor.u32 %v6725, %v6723
    %v6727 = vrot.slane %v6726, 4
    %v6728 = vrot.slane %v6135, 4
    %v6729 = vrot.slane %v6138, 5
    %v6730 = vor.u32 %v6728, %v6729
    %v6731 = vrot.slane %v6730, 4
    %v6732 = vrot.slane %v6146, 5
    %v6733 = vsel %vm1100, %v6731, %v6732
    %v6734 = vrot.slane %v6143, 4
    %v6735 = vor.u32 %v6734, %v6732
    %v6736 = vrot.slane %v6735, 4
    %v6737 = vrot.slane %v6151, 4
    %v6738 = vrot.slane %v6154, 5
    %v6739 = vor.u32 %v6737, %v6738
    %v6740 = vrot.slane %v6739, 4
    %v6741 = vrot.slane %v6162, 5
    %v6742 = vsel %vm1100, %v6740, %v6741
    %v6743 = vrot.slane %v6159, 4
    %v6744 = vor.u32 %v6743, %v6741
    %v6745 = vrot.slane %v6744, 4
    %v6746 = vrot.slane %v6167, 4
    %v6747 = vrot.slane %v6170, 5
    %v6748 = vor.u32 %v6746, %v6747
    %v6749 = vrot.slane %v6748, 4
    %v6750 = vrot.slane %v6178, 5
    %v6751 = vsel %vm1100, %v6749, %v6750
    %v6752 = vrot.slane %v6175, 4
    %v6753 = vor.u32 %v6752, %v6750
    %v6754 = vrot.slane %v6753, 4
    %v6755 = vrot.slane %v6183, 4
    %v6756 = vrot.slane %v6186, 5
    %v6757 = vor.u32 %v6755, %v6756
    %v6758 = vrot.slane %v6757, 4
    %v6759 = vrot.slane %v6194, 5
    %v6760 = vsel %vm1100, %v6758, %v6759
    %v6761 = vrot.slane %v6191, 4
    %v6762 = vor.u32 %v6761, %v6759
    %v6763 = vrot.slane %v6762, 4
    %v6764 = vrot.slane %v6199, 4
    %v6765 = vrot.slane %v6202, 5
    %v6766 = vor.u32 %v6764, %v6765
    %v6767 = vrot.slane %v6766, 4
    %v6768 = vrot.slane %v6210, 5
    %v6769 = vsel %vm1100, %v6767, %v6768
    %v6770 = vrot.slane %v6207, 4
    %v6771 = vor.u32 %v6770, %v6768
    %v6772 = vrot.slane %v6771, 4
    %v6773 = vrot.slane %v6215, 4
    %v6774 = vrot.slane %v6218, 5
    %v6775 = vor.u32 %v6773, %v6774
    %v6776 = vrot.slane %v6775, 4
    %v6777 = vrot.slane %v6226, 5
    %v6778 = vsel %vm1100, %v6776, %v6777
    %v6779 = vrot.slane %v6223, 4
    %v6780 = vor.u32 %v6779, %v6777
    %v6781 = vrot.slane %v6780, 4
    %v6782 = vrot.slane %v6231, 4
    %v6783 = vrot.slane %v6234, 5
    %v6784 = vor.u32 %v6782, %v6783
    %v6785 = vrot.slane %v6784, 4
    %v6786 = vrot.slane %v6242, 5
    %v6787 = vsel %vm1100, %v6785, %v6786
    %v6788 = vrot.slane %v6239, 4
    %v6789 = vor.u32 %v6788, %v6786
    %v6790 = vrot.slane %v6789, 4
    %v6791 = vrot.slane %v6247, 4
    %v6792 = vrot.slane %v6250, 5
    %v6793 = vor.u32 %v6791, %v6792
    %v6794 = vrot.slane %v6793, 4
    %v6795 = vrot.slane %v6258, 5
    %v6796 = vsel %vm1100, %v6794, %v6795
    %v6797 = vrot.slane %v6255, 4
    %v6798 = vor.u32 %v6797, %v6795
    %v6799 = vrot.slane %v6798, 4
    %v6800 = vrot.slane %v6263, 4
    %v6801 = vrot.slane %v6266, 5
    %v6802 = vor.u32 %v6800, %v6801
    %v6803 = vrot.slane %v6802, 4
    %v6804 = vrot.slane %v6274, 5
    %v6805 = vsel %vm1100, %v6803, %v6804
    %v6806 = vrot.slane %v6271, 4
    %v6807 = vor.u32 %v6806, %v6804
    %v6808 = vrot.slane %v6807, 4
    %v6809 = vrot.slane %v6279, 4
    %v6810 = vrot.slane %v6282, 5
    %v6811 = vor.u32 %v6809, %v6810
    %v6812 = vrot.slane %v6811, 4
    %v6813 = vrot.slane %v6290, 5
    %v6814 = vsel %vm1100, %v6812, %v6813
    %v6815 = vrot.slane %v6287, 4
    %v6816 = vor.u32 %v6815, %v6813
    %v6817 = vrot.slane %v6816, 4
    %v6818 = vrot.slane %v6295, 4
    %v6819 = vrot.slane %v6298, 5
    %v6820 = vor.u32 %v6818, %v6819
    %v6821 = vrot.slane %v6820, 4
    %v6822 = vrot.slane %v6306, 5
    %v6823 = vsel %vm1100, %v6821, %v6822
    %v6824 = vrot.slane %v6303, 4
    %v6825 = vor.u32 %v6824, %v6822
    %v6826 = vrot.slane %v6825, 4
    %v6827 = vrot.slane %v6311, 4
    %v6828 = vrot.slane %v6314, 5
    %v6829 = vor.u32 %v6827, %v6828
    %v6830 = vrot.slane %v6829, 4
    %v6831 = vrot.slane %v6322, 5
    %v6832 = vsel %vm1100, %v6830, %v6831
    %v6833 = vrot.slane %v6319, 4
    %v6834 = vor.u32 %v6833, %v6831
    %v6835 = vrot.slane %v6834, 4
    %v6836 = vrot.slane %v6327, 4
    %v6837 = vrot.slane %v6330, 5
    %v6838 = vor.u32 %v6836, %v6837
    %v6839 = vrot.slane %v6838, 4
    %v6840 = vrot.slane %v6338, 5
    %v6841 = vsel %vm1100, %v6839, %v6840
    %v6842 = vrot.slane %v6335, 4
    %v6843 = vor.u32 %v6842, %v6840
    %v6844 = vrot.slane %v6843, 4
    %v6845 = vrot.slane %v6343, 4
    %v6846 = vrot.slane %v6346, 5
    %v6847 = vor.u32 %v6845, %v6846
    %v6848 = vrot.slane %v6847, 4
    %v6849 = vrot.slane %v6354, 5
    %v6850 = vsel %vm1100, %v6848, %v6849
    %v6851 = vrot.slane %v6351, 4
    %v6852 = vor.u32 %v6851, %v6849
    %v6853 = vrot.slane %v6852, 4
    %v6854 = vrot.slane %v6359, 4
    %v6855 = vrot.slane %v6362, 5
    %v6856 = vor.u32 %v6854, %v6855
    %v6857 = vrot.slane %v6856, 4
    %v6858 = vrot.slane %v6370, 5
    %v6859 = vsel %vm1100, %v6857, %v6858
    %v6860 = vrot.slane %v6367, 4
    %v6861 = vor.u32 %v6860, %v6858
    %v6862 = vrot.slane %v6861, 4
    %v6863 = vrot.slane %v6375, 4
    %v6864 = vrot.slane %v6378, 5
    %v6865 = vor.u32 %v6863, %v6864
    %v6866 = vrot.slane %v6865, 4
    %v6867 = vrot.slane %v6386, 5
    %v6868 = vsel %vm1100, %v6866, %v6867
    %v6869 = vrot.slane %v6383, 4
    %v6870 = vor.u32 %v6869, %v6867
    %v6871 = vrot.slane %v6870, 4
    %6936 = vst.msk [vmem:[%s5714] sm:$0xf] %vm5589, %v6589
    %vm6937 = vmand %vm6454, %vm1098
    %v6938 = vld [vmem:[%s5714 + $0x4] sm:$0xf]
    %v6939 = vsel %vm6937, %v6592, %v6938
    %6940 = vst [vmem:[%s5714 + $0x4] sm:$0xf] %v6939
    %6941 = vst.msk [vmem:[%s5714 + $0x8] sm:$0xf] %vm5589, %v6598
    %v6942 = vld [vmem:[%s5714 + $0xc] sm:$0xf]
    %v6943 = vsel %vm6937, %v6601, %v6942
    %6944 = vst [vmem:[%s5714 + $0xc] sm:$0xf] %v6943
    %6945 = vst.msk [vmem:[%s5714 + $0x10] sm:$0xf] %vm5589, %v6607
    %v6946 = vld [vmem:[%s5714 + $0x14] sm:$0xf]
    %v6947 = vsel %vm6937, %v6610, %v6946
    %6948 = vst [vmem:[%s5714 + $0x14] sm:$0xf] %v6947
    %6949 = vst.msk [vmem:[%s5714 + $0x18] sm:$0xf] %vm5589, %v6616
    %v6950 = vld [vmem:[%s5714 + $0x1c] sm:$0xf]
    %v6951 = vsel %vm6937, %v6619, %v6950
    %6952 = vst [vmem:[%s5714 + $0x1c] sm:$0xf] %v6951
    %6953 = vst.msk [vmem:[%s5714 + $0x20] sm:$0xf] %vm5589, %v6625
    %v6954 = vld [vmem:[%s5714 + $0x24] sm:$0xf]
    %v6955 = vsel %vm6937, %v6628, %v6954
    %6956 = vst [vmem:[%s5714 + $0x24] sm:$0xf] %v6955
    %6957 = vst.msk [vmem:[%s5714 + $0x28] sm:$0xf] %vm5589, %v6634
    %v6958 = vld [vmem:[%s5714 + $0x2c] sm:$0xf]
    %v6959 = vsel %vm6937, %v6637, %v6958
    %6960 = vst [vmem:[%s5714 + $0x2c] sm:$0xf] %v6959
    %6961 = vst.msk [vmem:[%s5714 + $0x30] sm:$0xf] %vm5589, %v6643
    %v6962 = vld [vmem:[%s5714 + $0x34] sm:$0xf]
    %v6963 = vsel %vm6937, %v6646, %v6962
    %6964 = vst [vmem:[%s5714 + $0x34] sm:$0xf] %v6963
    %6965 = vst.msk [vmem:[%s5714 + $0x38] sm:$0xf] %vm5589, %v6652
    %v6966 = vld [vmem:[%s5714 + $0x3c] sm:$0xf]
    %v6967 = vsel %vm6937, %v6655, %v6966
    %6968 = vst [vmem:[%s5714 + $0x3c] sm:$0xf] %v6967
    %6969 = vst.msk [vmem:[%s5714 + $0x40] sm:$0xf] %vm5589, %v6661
    %v6970 = vld [vmem:[%s5714 + $0x44] sm:$0xf]
    %v6971 = vsel %vm6937, %v6664, %v6970
    %6972 = vst [vmem:[%s5714 + $0x44] sm:$0xf] %v6971
    %6973 = vst.msk [vmem:[%s5714 + $0x48] sm:$0xf] %vm5589, %v6670
    %v6974 = vld [vmem:[%s5714 + $0x4c] sm:$0xf]
    %v6975 = vsel %vm6937, %v6673, %v6974
    %6976 = vst [vmem:[%s5714 + $0x4c] sm:$0xf] %v6975
    %6977 = vst.msk [vmem:[%s5714 + $0x50] sm:$0xf] %vm5589, %v6679
    %v6978 = vld [vmem:[%s5714 + $0x54] sm:$0xf]
    %v6979 = vsel %vm6937, %v6682, %v6978
    %6980 = vst [vmem:[%s5714 + $0x54] sm:$0xf] %v6979
    %6981 = vst.msk [vmem:[%s5714 + $0x58] sm:$0xf] %vm5589, %v6688
    %v6982 = vld [vmem:[%s5714 + $0x5c] sm:$0xf]
    %v6983 = vsel %vm6937, %v6691, %v6982
    %6984 = vst [vmem:[%s5714 + $0x5c] sm:$0xf] %v6983
    %6985 = vst.msk [vmem:[%s5714 + $0x60] sm:$0xf] %vm5589, %v6697
    %v6986 = vld [vmem:[%s5714 + $0x64] sm:$0xf]
    %v6987 = vsel %vm6937, %v6700, %v6986
    %6988 = vst [vmem:[%s5714 + $0x64] sm:$0xf] %v6987
    %6989 = vst.msk [vmem:[%s5714 + $0x68] sm:$0xf] %vm5589, %v6706
    %v6990 = vld [vmem:[%s5714 + $0x6c] sm:$0xf]
    %v6991 = vsel %vm6937, %v6709, %v6990
    %6992 = vst [vmem:[%s5714 + $0x6c] sm:$0xf] %v6991
    %6993 = vst.msk [vmem:[%s5714 + $0x70] sm:$0xf] %vm5589, %v6715
    %v6994 = vld [vmem:[%s5714 + $0x74] sm:$0xf]
    %v6995 = vsel %vm6937, %v6718, %v6994
    %6996 = vst [vmem:[%s5714 + $0x74] sm:$0xf] %v6995
    %6997 = vst.msk [vmem:[%s5714 + $0x78] sm:$0xf] %vm5589, %v6724
    %v6998 = vld [vmem:[%s5714 + $0x7c] sm:$0xf]
    %v6999 = vsel %vm6937, %v6727, %v6998
    %7000 = vst [vmem:[%s5714 + $0x7c] sm:$0xf] %v6999
    %7001 = vst.msk [vmem:[%s5714 + $0x90] sm:$0xf] %vm5589, %v6733
    %v7002 = vld [vmem:[%s5714 + $0x94] sm:$0xf]
    %v7003 = vsel %vm6937, %v6736, %v7002
    %7004 = vst [vmem:[%s5714 + $0x94] sm:$0xf] %v7003
    %7005 = vst.msk [vmem:[%s5714 + $0x98] sm:$0xf] %vm5589, %v6742
    %v7006 = vld [vmem:[%s5714 + $0x9c] sm:$0xf]
    %v7007 = vsel %vm6937, %v6745, %v7006
    %7008 = vst [vmem:[%s5714 + $0x9c] sm:$0xf] %v7007
    %7009 = vst.msk [vmem:[%s5714 + $0xa0] sm:$0xf] %vm5589, %v6751
    %v7010 = vld [vmem:[%s5714 + $0xa4] sm:$0xf]
    %v7011 = vsel %vm6937, %v6754, %v7010
    %7012 = vst [vmem:[%s5714 + $0xa4] sm:$0xf] %v7011
    %7013 = vst.msk [vmem:[%s5714 + $0xa8] sm:$0xf] %vm5589, %v6760
    %v7014 = vld [vmem:[%s5714 + $0xac] sm:$0xf]
    %v7015 = vsel %vm6937, %v6763, %v7014
    %7016 = vst [vmem:[%s5714 + $0xac] sm:$0xf] %v7015
    %7017 = vst.msk [vmem:[%s5714 + $0xb0] sm:$0xf] %vm5589, %v6769
    %v7018 = vld [vmem:[%s5714 + $0xb4] sm:$0xf]
    %v7019 = vsel %vm6937, %v6772, %v7018
    %7020 = vst [vmem:[%s5714 + $0xb4] sm:$0xf] %v7019
    %7021 = vst.msk [vmem:[%s5714 + $0xb8] sm:$0xf] %vm5589, %v6778
    %v7022 = vld [vmem:[%s5714 + $0xbc] sm:$0xf]
    %v7023 = vsel %vm6937, %v6781, %v7022
    %7024 = vst [vmem:[%s5714 + $0xbc] sm:$0xf] %v7023
    %7025 = vst.msk [vmem:[%s5714 + $0xc0] sm:$0xf] %vm5589, %v6787
    %v7026 = vld [vmem:[%s5714 + $0xc4] sm:$0xf]
    %v7027 = vsel %vm6937, %v6790, %v7026
    %7028 = vst [vmem:[%s5714 + $0xc4] sm:$0xf] %v7027
    %7029 = vst.msk [vmem:[%s5714 + $0xc8] sm:$0xf] %vm5589, %v6796
    %v7030 = vld [vmem:[%s5714 + $0xcc] sm:$0xf]
    %v7031 = vsel %vm6937, %v6799, %v7030
    %7032 = vst [vmem:[%s5714 + $0xcc] sm:$0xf] %v7031
    %7033 = vst.msk [vmem:[%s5714 + $0xd0] sm:$0xf] %vm5589, %v6805
    %v7034 = vld [vmem:[%s5714 + $0xd4] sm:$0xf]
    %v7035 = vsel %vm6937, %v6808, %v7034
    %7036 = vst [vmem:[%s5714 + $0xd4] sm:$0xf] %v7035
    %7037 = vst.msk [vmem:[%s5714 + $0xd8] sm:$0xf] %vm5589, %v6814
    %v7038 = vld [vmem:[%s5714 + $0xdc] sm:$0xf]
    %v7039 = vsel %vm6937, %v6817, %v7038
    %7040 = vst [vmem:[%s5714 + $0xdc] sm:$0xf] %v7039
    %7041 = vst.msk [vmem:[%s5714 + $0xe0] sm:$0xf] %vm5589, %v6823
    %v7042 = vld [vmem:[%s5714 + $0xe4] sm:$0xf]
    %v7043 = vsel %vm6937, %v6826, %v7042
    %7044 = vst [vmem:[%s5714 + $0xe4] sm:$0xf] %v7043
    %7045 = vst.msk [vmem:[%s5714 + $0xe8] sm:$0xf] %vm5589, %v6832
    %v7046 = vld [vmem:[%s5714 + $0xec] sm:$0xf]
    %v7047 = vsel %vm6937, %v6835, %v7046
    %7048 = vst [vmem:[%s5714 + $0xec] sm:$0xf] %v7047
    %7049 = vst.msk [vmem:[%s5714 + $0xf0] sm:$0xf] %vm5589, %v6841
    %v7050 = vld [vmem:[%s5714 + $0xf4] sm:$0xf]
    %v7051 = vsel %vm6937, %v6844, %v7050
    %7052 = vst [vmem:[%s5714 + $0xf4] sm:$0xf] %v7051
    %7053 = vst.msk [vmem:[%s5714 + $0xf8] sm:$0xf] %vm5589, %v6850
    %v7054 = vld [vmem:[%s5714 + $0xfc] sm:$0xf]
    %v7055 = vsel %vm6937, %v6853, %v7054
    %7056 = vst [vmem:[%s5714 + $0xfc] sm:$0xf] %v7055
    %7057 = vst.msk [vmem:[%s5714 + $0x100] sm:$0xf] %vm5589, %v6859
    %v7058 = vld [vmem:[%s5714 + $0x104] sm:$0xf]
    %v7059 = vsel %vm6937, %v6862, %v7058
    %7060 = vst [vmem:[%s5714 + $0x104] sm:$0xf] %v7059
    %7061 = vst.msk [vmem:[%s5714 + $0x108] sm:$0xf] %vm5589, %v6868
    %v7062 = vld [vmem:[%s5714 + $0x10c] sm:$0xf]
    %v7063 = vsel %vm6937, %v6871, %v7062
    %7064 = vst [vmem:[%s5714 + $0x10c] sm:$0xf] %v7063
    %v7065 = vld [vmem:[#allocation4] sm:$0xf]
    %v7066 = vld [vmem:[#allocation4 + $0x4] sm:$0xf]
    %v7067 = vld [vmem:[#allocation4 + $0x8] sm:$0xf]
    %v7068 = vld [vmem:[#allocation4 + $0xc] sm:$0xf]
    %v7069 = vld [vmem:[#allocation4 + $0x10] sm:$0xf]
    %v7070 = vld [vmem:[#allocation4 + $0x14] sm:$0xf]
    %v7071 = vld [vmem:[#allocation4 + $0x18] sm:$0xf]
    %v7072 = vld [vmem:[#allocation4 + $0x1c] sm:$0xf]
    %v7073 = vld [vmem:[#allocation4 + $0x20] sm:$0xf]
    %v7074 = vld [vmem:[#allocation4 + $0x24] sm:$0xf]
    %v7075 = vld [vmem:[#allocation4 + $0x28] sm:$0xf]
    %v7076 = vld [vmem:[#allocation4 + $0x2c] sm:$0xf]
    %v7077 = vld [vmem:[#allocation4 + $0x30] sm:$0xf]
    %v7078 = vld [vmem:[#allocation4 + $0x34] sm:$0xf]
    %v7079 = vld [vmem:[#allocation4 + $0x38] sm:$0xf]
    %v7080 = vld [vmem:[#allocation4 + $0x3c] sm:$0xf]
    %v7081 = vld [vmem:[#allocation4 + $0x40] sm:$0xf]
    %v7082 = vld [vmem:[#allocation4 + $0x44] sm:$0xf]
    %v7083 = vld [vmem:[#allocation4 + $0x48] sm:$0xf]
    %v7084 = vld [vmem:[#allocation4 + $0x4c] sm:$0xf]
    %v7085 = vld [vmem:[#allocation4 + $0x50] sm:$0xf]
    %v7086 = vld [vmem:[#allocation4 + $0x54] sm:$0xf]
    %v7087 = vld [vmem:[#allocation4 + $0x58] sm:$0xf]
    %v7088 = vld [vmem:[#allocation4 + $0x5c] sm:$0xf]
    %v7089 = vld [vmem:[#allocation4 + $0x60] sm:$0xf]
    %v7090 = vld [vmem:[#allocation4 + $0x64] sm:$0xf]
    %v7091 = vld [vmem:[#allocation4 + $0x68] sm:$0xf]
    %v7092 = vld [vmem:[#allocation4 + $0x6c] sm:$0xf]
    %v7093 = vld [vmem:[#allocation4 + $0x70] sm:$0xf]
    %v7094 = vld [vmem:[#allocation4 + $0x74] sm:$0xf]
    %v7095 = vld [vmem:[#allocation4 + $0x78] sm:$0xf]
    %v7096 = vld [vmem:[#allocation4 + $0x7c] sm:$0xf]
    %v7097 = vld [vmem:[#allocation4 + $0x90] sm:$0xf]
    %v7098 = vld [vmem:[#allocation4 + $0x94] sm:$0xf]
    %v7099 = vld [vmem:[#allocation4 + $0x98] sm:$0xf]
    %v7100 = vld [vmem:[#allocation4 + $0x9c] sm:$0xf]
    %v7101 = vld [vmem:[#allocation4 + $0xa0] sm:$0xf]
    %v7102 = vld [vmem:[#allocation4 + $0xa4] sm:$0xf]
    %v7103 = vld [vmem:[#allocation4 + $0xa8] sm:$0xf]
    %v7104 = vld [vmem:[#allocation4 + $0xac] sm:$0xf]
    %v7105 = vld [vmem:[#allocation4 + $0xb0] sm:$0xf]
    %v7106 = vld [vmem:[#allocation4 + $0xb4] sm:$0xf]
    %v7107 = vld [vmem:[#allocation4 + $0xb8] sm:$0xf]
    %v7108 = vld [vmem:[#allocation4 + $0xbc] sm:$0xf]
    %v7109 = vld [vmem:[#allocation4 + $0xc0] sm:$0xf]
    %v7110 = vld [vmem:[#allocation4 + $0xc4] sm:$0xf]
    %v7111 = vld [vmem:[#allocation4 + $0xc8] sm:$0xf]
    %v7112 = vld [vmem:[#allocation4 + $0xcc] sm:$0xf]
    %v7113 = vld [vmem:[#allocation4 + $0xd0] sm:$0xf]
    %v7114 = vld [vmem:[#allocation4 + $0xd4] sm:$0xf]
    %v7115 = vld [vmem:[#allocation4 + $0xd8] sm:$0xf]
    %v7116 = vld [vmem:[#allocation4 + $0xdc] sm:$0xf]
    %v7117 = vld [vmem:[#allocation4 + $0xe0] sm:$0xf]
    %v7118 = vld [vmem:[#allocation4 + $0xe4] sm:$0xf]
    %v7119 = vld [vmem:[#allocation4 + $0xe8] sm:$0xf]
    %v7120 = vld [vmem:[#allocation4 + $0xec] sm:$0xf]
    %v7121 = vld [vmem:[#allocation4 + $0xf0] sm:$0xf]
    %v7122 = vld [vmem:[#allocation4 + $0xf4] sm:$0xf]
    %v7123 = vld [vmem:[#allocation4 + $0xf8] sm:$0xf]
    %v7124 = vld [vmem:[#allocation4 + $0xfc] sm:$0xf]
    %v7125 = vld [vmem:[#allocation4 + $0x100] sm:$0xf]
    %v7126 = vld [vmem:[#allocation4 + $0x104] sm:$0xf]
    %v7127 = vld [vmem:[#allocation4 + $0x108] sm:$0xf]
    %v7128 = vld [vmem:[#allocation4 + $0x10c] sm:$0xf]
    %7129 = vst.msk [vmem:[#allocation5] sm:$0xf] %vm5589, %v7065
    %7130 = vst.msk [vmem:[#allocation5 + $0x4] sm:$0xf] %vm5589, %v7066
    %7131 = vst.msk [vmem:[#allocation5 + $0x8] sm:$0xf] %vm5589, %v7067
    %7132 = vst.msk [vmem:[#allocation5 + $0xc] sm:$0xf] %vm5589, %v7068
    %7133 = vst.msk [vmem:[#allocation5 + $0x10] sm:$0xf] %vm5589, %v7069
    %7134 = vst.msk [vmem:[#allocation5 + $0x14] sm:$0xf] %vm5589, %v7070
    %7135 = vst.msk [vmem:[#allocation5 + $0x18] sm:$0xf] %vm5589, %v7071
    %7136 = vst.msk [vmem:[#allocation5 + $0x1c] sm:$0xf] %vm5589, %v7072
    %7137 = vst.msk [vmem:[#allocation5 + $0x20] sm:$0xf] %vm5589, %v7073
    %7138 = vst.msk [vmem:[#allocation5 + $0x24] sm:$0xf] %vm5589, %v7074
    %7139 = vst.msk [vmem:[#allocation5 + $0x28] sm:$0xf] %vm5589, %v7075
    %7140 = vst.msk [vmem:[#allocation5 + $0x2c] sm:$0xf] %vm5589, %v7076
    %7141 = vst.msk [vmem:[#allocation5 + $0x30] sm:$0xf] %vm5589, %v7077
    %7142 = vst.msk [vmem:[#allocation5 + $0x34] sm:$0xf] %vm5589, %v7078
    %7143 = vst.msk [vmem:[#allocation5 + $0x38] sm:$0xf] %vm5589, %v7079
    %7144 = vst.msk [vmem:[#allocation5 + $0x3c] sm:$0xf] %vm5589, %v7080
    %7145 = vst.msk [vmem:[#allocation5 + $0x40] sm:$0xf] %vm5589, %v7081
    %7146 = vst.msk [vmem:[#allocation5 + $0x44] sm:$0xf] %vm5589, %v7082
    %7147 = vst.msk [vmem:[#allocation5 + $0x48] sm:$0xf] %vm5589, %v7083
    %7148 = vst.msk [vmem:[#allocation5 + $0x4c] sm:$0xf] %vm5589, %v7084
    %7149 = vst.msk [vmem:[#allocation5 + $0x50] sm:$0xf] %vm5589, %v7085
    %7150 = vst.msk [vmem:[#allocation5 + $0x54] sm:$0xf] %vm5589, %v7086
    %7151 = vst.msk [vmem:[#allocation5 + $0x58] sm:$0xf] %vm5589, %v7087
    %7152 = vst.msk [vmem:[#allocation5 + $0x5c] sm:$0xf] %vm5589, %v7088
    %7153 = vst.msk [vmem:[#allocation5 + $0x60] sm:$0xf] %vm5589, %v7089
    %7154 = vst.msk [vmem:[#allocation5 + $0x64] sm:$0xf] %vm5589, %v7090
    %7155 = vst.msk [vmem:[#allocation5 + $0x68] sm:$0xf] %vm5589, %v7091
    %7156 = vst.msk [vmem:[#allocation5 + $0x6c] sm:$0xf] %vm5589, %v7092
    %7157 = vst.msk [vmem:[#allocation5 + $0x70] sm:$0xf] %vm5589, %v7093
    %7158 = vst.msk [vmem:[#allocation5 + $0x74] sm:$0xf] %vm5589, %v7094
    %7159 = vst.msk [vmem:[#allocation5 + $0x78] sm:$0xf] %vm5589, %v7095
    %7160 = vst.msk [vmem:[#allocation5 + $0x7c] sm:$0xf] %vm5589, %v7096
    %7161 = vst.msk [vmem:[#allocation5 + $0x80] sm:$0xf] %vm5589, %v7097
    %7162 = vst.msk [vmem:[#allocation5 + $0x84] sm:$0xf] %vm5589, %v7098
    %7163 = vst.msk [vmem:[#allocation5 + $0x88] sm:$0xf] %vm5589, %v7099
    %7164 = vst.msk [vmem:[#allocation5 + $0x8c] sm:$0xf] %vm5589, %v7100
    %7165 = vst.msk [vmem:[#allocation5 + $0x90] sm:$0xf] %vm5589, %v7101
    %7166 = vst.msk [vmem:[#allocation5 + $0x94] sm:$0xf] %vm5589, %v7102
    %7167 = vst.msk [vmem:[#allocation5 + $0x98] sm:$0xf] %vm5589, %v7103
    %7168 = vst.msk [vmem:[#allocation5 + $0x9c] sm:$0xf] %vm5589, %v7104
    %7169 = vst.msk [vmem:[#allocation5 + $0xa0] sm:$0xf] %vm5589, %v7105
    %7170 = vst.msk [vmem:[#allocation5 + $0xa4] sm:$0xf] %vm5589, %v7106
    %7171 = vst.msk [vmem:[#allocation5 + $0xa8] sm:$0xf] %vm5589, %v7107
    %7172 = vst.msk [vmem:[#allocation5 + $0xac] sm:$0xf] %vm5589, %v7108
    %7173 = vst.msk [vmem:[#allocation5 + $0xb0] sm:$0xf] %vm5589, %v7109
    %7174 = vst.msk [vmem:[#allocation5 + $0xb4] sm:$0xf] %vm5589, %v7110
    %7175 = vst.msk [vmem:[#allocation5 + $0xb8] sm:$0xf] %vm5589, %v7111
    %7176 = vst.msk [vmem:[#allocation5 + $0xbc] sm:$0xf] %vm5589, %v7112
    %7177 = vst.msk [vmem:[#allocation5 + $0xc0] sm:$0xf] %vm5589, %v7113
    %7178 = vst.msk [vmem:[#allocation5 + $0xc4] sm:$0xf] %vm5589, %v7114
    %7179 = vst.msk [vmem:[#allocation5 + $0xc8] sm:$0xf] %vm5589, %v7115
    %7180 = vst.msk [vmem:[#allocation5 + $0xcc] sm:$0xf] %vm5589, %v7116
    %7181 = vst.msk [vmem:[#allocation5 + $0xd0] sm:$0xf] %vm5589, %v7117
    %7182 = vst.msk [vmem:[#allocation5 + $0xd4] sm:$0xf] %vm5589, %v7118
    %7183 = vst.msk [vmem:[#allocation5 + $0xd8] sm:$0xf] %vm5589, %v7119
    %7184 = vst.msk [vmem:[#allocation5 + $0xdc] sm:$0xf] %vm5589, %v7120
    %7185 = vst.msk [vmem:[#allocation5 + $0xe0] sm:$0xf] %vm5589, %v7121
    %7186 = vst.msk [vmem:[#allocation5 + $0xe4] sm:$0xf] %vm5589, %v7122
    %7187 = vst.msk [vmem:[#allocation5 + $0xe8] sm:$0xf] %vm5589, %v7123
    %7188 = vst.msk [vmem:[#allocation5 + $0xec] sm:$0xf] %vm5589, %v7124
    %7189 = vst.msk [vmem:[#allocation5 + $0xf0] sm:$0xf] %vm5589, %v7125
    %7190 = vst.msk [vmem:[#allocation5 + $0xf4] sm:$0xf] %vm5589, %v7126
    %7191 = vst.msk [vmem:[#allocation5 + $0xf8] sm:$0xf] %vm5589, %v7127
    %7192 = vst.msk [vmem:[#allocation5 + $0xfc] sm:$0xf] %vm5589, %v7128
    %s7193 = scalar_lea.vmem [#allocation4], 288
    %v7194 = vld [vmem:[%s7193] sm:$0xf]
    %v7195 = vld [vmem:[%s7193 + $0x4] sm:$0xf]
    %v7196 = vld [vmem:[%s7193 + $0x8] sm:$0xf]
    %v7197 = vld [vmem:[%s7193 + $0xc] sm:$0xf]
    %v7198 = vld [vmem:[%s7193 + $0x10] sm:$0xf]
    %v7199 = vld [vmem:[%s7193 + $0x14] sm:$0xf]
    %v7200 = vld [vmem:[%s7193 + $0x18] sm:$0xf]
    %v7201 = vld [vmem:[%s7193 + $0x1c] sm:$0xf]
    %v7202 = vld [vmem:[%s7193 + $0x20] sm:$0xf]
    %v7203 = vld [vmem:[%s7193 + $0x24] sm:$0xf]
    %v7204 = vld [vmem:[%s7193 + $0x28] sm:$0xf]
    %v7205 = vld [vmem:[%s7193 + $0x2c] sm:$0xf]
    %v7206 = vld [vmem:[%s7193 + $0x30] sm:$0xf]
    %v7207 = vld [vmem:[%s7193 + $0x34] sm:$0xf]
    %v7208 = vld [vmem:[%s7193 + $0x38] sm:$0xf]
    %v7209 = vld [vmem:[%s7193 + $0x3c] sm:$0xf]
    %v7210 = vld [vmem:[%s7193 + $0x40] sm:$0xf]
    %v7211 = vld [vmem:[%s7193 + $0x44] sm:$0xf]
    %v7212 = vld [vmem:[%s7193 + $0x48] sm:$0xf]
    %v7213 = vld [vmem:[%s7193 + $0x4c] sm:$0xf]
    %v7214 = vld [vmem:[%s7193 + $0x50] sm:$0xf]
    %v7215 = vld [vmem:[%s7193 + $0x54] sm:$0xf]
    %v7216 = vld [vmem:[%s7193 + $0x58] sm:$0xf]
    %v7217 = vld [vmem:[%s7193 + $0x5c] sm:$0xf]
    %v7218 = vld [vmem:[%s7193 + $0x60] sm:$0xf]
    %v7219 = vld [vmem:[%s7193 + $0x64] sm:$0xf]
    %v7220 = vld [vmem:[%s7193 + $0x68] sm:$0xf]
    %v7221 = vld [vmem:[%s7193 + $0x6c] sm:$0xf]
    %v7222 = vld [vmem:[%s7193 + $0x70] sm:$0xf]
    %v7223 = vld [vmem:[%s7193 + $0x74] sm:$0xf]
    %v7224 = vld [vmem:[%s7193 + $0x78] sm:$0xf]
    %v7225 = vld [vmem:[%s7193 + $0x7c] sm:$0xf]
    %v7226 = vld [vmem:[%s7193 + $0x90] sm:$0xf]
    %v7227 = vld [vmem:[%s7193 + $0x94] sm:$0xf]
    %v7228 = vld [vmem:[%s7193 + $0x98] sm:$0xf]
    %v7229 = vld [vmem:[%s7193 + $0x9c] sm:$0xf]
    %v7230 = vld [vmem:[%s7193 + $0xa0] sm:$0xf]
    %v7231 = vld [vmem:[%s7193 + $0xa4] sm:$0xf]
    %v7232 = vld [vmem:[%s7193 + $0xa8] sm:$0xf]
    %v7233 = vld [vmem:[%s7193 + $0xac] sm:$0xf]
    %v7234 = vld [vmem:[%s7193 + $0xb0] sm:$0xf]
    %v7235 = vld [vmem:[%s7193 + $0xb4] sm:$0xf]
    %v7236 = vld [vmem:[%s7193 + $0xb8] sm:$0xf]
    %v7237 = vld [vmem:[%s7193 + $0xbc] sm:$0xf]
    %v7238 = vld [vmem:[%s7193 + $0xc0] sm:$0xf]
    %v7239 = vld [vmem:[%s7193 + $0xc4] sm:$0xf]
    %v7240 = vld [vmem:[%s7193 + $0xc8] sm:$0xf]
    %v7241 = vld [vmem:[%s7193 + $0xcc] sm:$0xf]
    %v7242 = vld [vmem:[%s7193 + $0xd0] sm:$0xf]
    %v7243 = vld [vmem:[%s7193 + $0xd4] sm:$0xf]
    %v7244 = vld [vmem:[%s7193 + $0xd8] sm:$0xf]
    %v7245 = vld [vmem:[%s7193 + $0xdc] sm:$0xf]
    %v7246 = vld [vmem:[%s7193 + $0xe0] sm:$0xf]
    %v7247 = vld [vmem:[%s7193 + $0xe4] sm:$0xf]
    %v7248 = vld [vmem:[%s7193 + $0xe8] sm:$0xf]
    %v7249 = vld [vmem:[%s7193 + $0xec] sm:$0xf]
    %v7250 = vld [vmem:[%s7193 + $0xf0] sm:$0xf]
    %v7251 = vld [vmem:[%s7193 + $0xf4] sm:$0xf]
    %v7252 = vld [vmem:[%s7193 + $0xf8] sm:$0xf]
    %v7253 = vld [vmem:[%s7193 + $0xfc] sm:$0xf]
    %v7254 = vld [vmem:[%s7193 + $0x100] sm:$0xf]
    %v7255 = vld [vmem:[%s7193 + $0x104] sm:$0xf]
    %v7256 = vld [vmem:[%s7193 + $0x108] sm:$0xf]
    %v7257 = vld [vmem:[%s7193 + $0x10c] sm:$0xf]
    %7322 = vrot.lane.b32.xlu0 %v7194, 4
    %v7323 = vpop.permute.xlu0 %7322
    %7324 = vrot.lane.b32.xlu0 %v7195, 4
    %v7325 = vpop.permute.xlu0 %7324
    %7326 = vrot.lane.b32.xlu0 %v7196, 4
    %v7327 = vpop.permute.xlu0 %7326
    %7328 = vrot.lane.b32.xlu0 %v7197, 4
    %v7329 = vpop.permute.xlu0 %7328
    %7330 = vrot.lane.b32.xlu0 %v7198, 4
    %v7331 = vpop.permute.xlu0 %7330
    %7332 = vrot.lane.b32.xlu0 %v7199, 4
    %v7333 = vpop.permute.xlu0 %7332
    %7334 = vrot.lane.b32.xlu0 %v7200, 4
    %v7335 = vpop.permute.xlu0 %7334
    %7336 = vrot.lane.b32.xlu0 %v7201, 4
    %v7337 = vpop.permute.xlu0 %7336
    %7338 = vrot.lane.b32.xlu0 %v7202, 4
    %v7339 = vpop.permute.xlu0 %7338
    %7340 = vrot.lane.b32.xlu0 %v7203, 4
    %v7341 = vpop.permute.xlu0 %7340
    %7342 = vrot.lane.b32.xlu0 %v7204, 4
    %v7343 = vpop.permute.xlu0 %7342
    %7344 = vrot.lane.b32.xlu0 %v7205, 4
    %v7345 = vpop.permute.xlu0 %7344
    %7346 = vrot.lane.b32.xlu0 %v7206, 4
    %v7347 = vpop.permute.xlu0 %7346
    %7348 = vrot.lane.b32.xlu0 %v7207, 4
    %v7349 = vpop.permute.xlu0 %7348
    %7350 = vrot.lane.b32.xlu0 %v7208, 4
    %v7351 = vpop.permute.xlu0 %7350
    %7352 = vrot.lane.b32.xlu0 %v7209, 4
    %v7353 = vpop.permute.xlu0 %7352
    %7354 = vrot.lane.b32.xlu0 %v7210, 4
    %v7355 = vpop.permute.xlu0 %7354
    %7356 = vrot.lane.b32.xlu0 %v7211, 4
    %v7357 = vpop.permute.xlu0 %7356
    %7358 = vrot.lane.b32.xlu0 %v7212, 4
    %v7359 = vpop.permute.xlu0 %7358
    %7360 = vrot.lane.b32.xlu0 %v7213, 4
    %v7361 = vpop.permute.xlu0 %7360
    %7362 = vrot.lane.b32.xlu0 %v7214, 4
    %v7363 = vpop.permute.xlu0 %7362
    %7364 = vrot.lane.b32.xlu0 %v7215, 4
    %v7365 = vpop.permute.xlu0 %7364
    %7366 = vrot.lane.b32.xlu0 %v7216, 4
    %v7367 = vpop.permute.xlu0 %7366
    %7368 = vrot.lane.b32.xlu0 %v7217, 4
    %v7369 = vpop.permute.xlu0 %7368
    %7370 = vrot.lane.b32.xlu0 %v7218, 4
    %v7371 = vpop.permute.xlu0 %7370
    %7372 = vrot.lane.b32.xlu0 %v7219, 4
    %v7373 = vpop.permute.xlu0 %7372
    %7374 = vrot.lane.b32.xlu0 %v7220, 4
    %v7375 = vpop.permute.xlu0 %7374
    %7376 = vrot.lane.b32.xlu0 %v7221, 4
    %v7377 = vpop.permute.xlu0 %7376
    %7378 = vrot.lane.b32.xlu0 %v7222, 4
    %v7379 = vpop.permute.xlu0 %7378
    %7380 = vrot.lane.b32.xlu0 %v7223, 4
    %v7381 = vpop.permute.xlu0 %7380
    %7382 = vrot.lane.b32.xlu0 %v7224, 4
    %v7383 = vpop.permute.xlu0 %7382
    %7384 = vrot.lane.b32.xlu0 %v7225, 4
    %v7385 = vpop.permute.xlu0 %7384
    %7386 = vrot.lane.b32.xlu0 %v7226, 4
    %v7387 = vpop.permute.xlu0 %7386
    %7388 = vrot.lane.b32.xlu0 %v7227, 4
    %v7389 = vpop.permute.xlu0 %7388
    %7390 = vrot.lane.b32.xlu0 %v7228, 4
    %v7391 = vpop.permute.xlu0 %7390
    %7392 = vrot.lane.b32.xlu0 %v7229, 4
    %v7393 = vpop.permute.xlu0 %7392
    %7394 = vrot.lane.b32.xlu0 %v7230, 4
    %v7395 = vpop.permute.xlu0 %7394
    %7396 = vrot.lane.b32.xlu0 %v7231, 4
    %v7397 = vpop.permute.xlu0 %7396
    %7398 = vrot.lane.b32.xlu0 %v7232, 4
    %v7399 = vpop.permute.xlu0 %7398
    %7400 = vrot.lane.b32.xlu0 %v7233, 4
    %v7401 = vpop.permute.xlu0 %7400
    %7402 = vrot.lane.b32.xlu0 %v7234, 4
    %v7403 = vpop.permute.xlu0 %7402
    %7404 = vrot.lane.b32.xlu0 %v7235, 4
    %v7405 = vpop.permute.xlu0 %7404
    %7406 = vrot.lane.b32.xlu0 %v7236, 4
    %v7407 = vpop.permute.xlu0 %7406
    %7408 = vrot.lane.b32.xlu0 %v7237, 4
    %v7409 = vpop.permute.xlu0 %7408
    %7410 = vrot.lane.b32.xlu0 %v7238, 4
    %v7411 = vpop.permute.xlu0 %7410
    %7412 = vrot.lane.b32.xlu0 %v7239, 4
    %v7413 = vpop.permute.xlu0 %7412
    %7414 = vrot.lane.b32.xlu0 %v7240, 4
    %v7415 = vpop.permute.xlu0 %7414
    %7416 = vrot.lane.b32.xlu0 %v7241, 4
    %v7417 = vpop.permute.xlu0 %7416
    %7418 = vrot.lane.b32.xlu0 %v7242, 4
    %v7419 = vpop.permute.xlu0 %7418
    %7420 = vrot.lane.b32.xlu0 %v7243, 4
    %v7421 = vpop.permute.xlu0 %7420
    %7422 = vrot.lane.b32.xlu0 %v7244, 4
    %v7423 = vpop.permute.xlu0 %7422
    %7424 = vrot.lane.b32.xlu0 %v7245, 4
    %v7425 = vpop.permute.xlu0 %7424
    %7426 = vrot.lane.b32.xlu0 %v7246, 4
    %v7427 = vpop.permute.xlu0 %7426
    %7428 = vrot.lane.b32.xlu0 %v7247, 4
    %v7429 = vpop.permute.xlu0 %7428
    %7430 = vrot.lane.b32.xlu0 %v7248, 4
    %v7431 = vpop.permute.xlu0 %7430
    %7432 = vrot.lane.b32.xlu0 %v7249, 4
    %v7433 = vpop.permute.xlu0 %7432
    %7434 = vrot.lane.b32.xlu0 %v7250, 4
    %v7435 = vpop.permute.xlu0 %7434
    %7436 = vrot.lane.b32.xlu0 %v7251, 4
    %v7437 = vpop.permute.xlu0 %7436
    %7438 = vrot.lane.b32.xlu0 %v7252, 4
    %v7439 = vpop.permute.xlu0 %7438
    %7440 = vrot.lane.b32.xlu0 %v7253, 4
    %v7441 = vpop.permute.xlu0 %7440
    %7442 = vrot.lane.b32.xlu0 %v7254, 4
    %v7443 = vpop.permute.xlu0 %7442
    %7444 = vrot.lane.b32.xlu0 %v7255, 4
    %v7445 = vpop.permute.xlu0 %7444
    %7446 = vrot.lane.b32.xlu0 %v7256, 4
    %v7447 = vpop.permute.xlu0 %7446
    %7448 = vrot.lane.b32.xlu0 %v7257, 4
    %v7449 = vpop.permute.xlu0 %7448
    %vm7514 = vcmask 60448
    %7515 = vst.msk [vmem:[#allocation5] sm:$0xf] %vm7514, %v7323
    %7516 = vst.msk [vmem:[#allocation5 + $0x4] sm:$0xf] %vm7514, %v7325
    %7517 = vst.msk [vmem:[#allocation5 + $0x8] sm:$0xf] %vm7514, %v7327
    %7518 = vst.msk [vmem:[#allocation5 + $0xc] sm:$0xf] %vm7514, %v7329
    %7519 = vst.msk [vmem:[#allocation5 + $0x10] sm:$0xf] %vm7514, %v7331
    %7520 = vst.msk [vmem:[#allocation5 + $0x14] sm:$0xf] %vm7514, %v7333
    %7521 = vst.msk [vmem:[#allocation5 + $0x18] sm:$0xf] %vm7514, %v7335
    %7522 = vst.msk [vmem:[#allocation5 + $0x1c] sm:$0xf] %vm7514, %v7337
    %7523 = vst.msk [vmem:[#allocation5 + $0x20] sm:$0xf] %vm7514, %v7339
    %7524 = vst.msk [vmem:[#allocation5 + $0x24] sm:$0xf] %vm7514, %v7341
    %7525 = vst.msk [vmem:[#allocation5 + $0x28] sm:$0xf] %vm7514, %v7343
    %7526 = vst.msk [vmem:[#allocation5 + $0x2c] sm:$0xf] %vm7514, %v7345
    %7527 = vst.msk [vmem:[#allocation5 + $0x30] sm:$0xf] %vm7514, %v7347
    %7528 = vst.msk [vmem:[#allocation5 + $0x34] sm:$0xf] %vm7514, %v7349
    %7529 = vst.msk [vmem:[#allocation5 + $0x38] sm:$0xf] %vm7514, %v7351
    %7530 = vst.msk [vmem:[#allocation5 + $0x3c] sm:$0xf] %vm7514, %v7353
    %7531 = vst.msk [vmem:[#allocation5 + $0x40] sm:$0xf] %vm7514, %v7355
    %7532 = vst.msk [vmem:[#allocation5 + $0x44] sm:$0xf] %vm7514, %v7357
    %7533 = vst.msk [vmem:[#allocation5 + $0x48] sm:$0xf] %vm7514, %v7359
    %7534 = vst.msk [vmem:[#allocation5 + $0x4c] sm:$0xf] %vm7514, %v7361
    %7535 = vst.msk [vmem:[#allocation5 + $0x50] sm:$0xf] %vm7514, %v7363
    %7536 = vst.msk [vmem:[#allocation5 + $0x54] sm:$0xf] %vm7514, %v7365
    %7537 = vst.msk [vmem:[#allocation5 + $0x58] sm:$0xf] %vm7514, %v7367
    %7538 = vst.msk [vmem:[#allocation5 + $0x5c] sm:$0xf] %vm7514, %v7369
    %7539 = vst.msk [vmem:[#allocation5 + $0x60] sm:$0xf] %vm7514, %v7371
    %7540 = vst.msk [vmem:[#allocation5 + $0x64] sm:$0xf] %vm7514, %v7373
    %7541 = vst.msk [vmem:[#allocation5 + $0x68] sm:$0xf] %vm7514, %v7375
    %7542 = vst.msk [vmem:[#allocation5 + $0x6c] sm:$0xf] %vm7514, %v7377
    %7543 = vst.msk [vmem:[#allocation5 + $0x70] sm:$0xf] %vm7514, %v7379
    %7544 = vst.msk [vmem:[#allocation5 + $0x74] sm:$0xf] %vm7514, %v7381
    %7545 = vst.msk [vmem:[#allocation5 + $0x78] sm:$0xf] %vm7514, %v7383
    %7546 = vst.msk [vmem:[#allocation5 + $0x7c] sm:$0xf] %vm7514, %v7385
    %7547 = vst.msk [vmem:[#allocation5 + $0x80] sm:$0xf] %vm7514, %v7387
    %7548 = vst.msk [vmem:[#allocation5 + $0x84] sm:$0xf] %vm7514, %v7389
    %7549 = vst.msk [vmem:[#allocation5 + $0x88] sm:$0xf] %vm7514, %v7391
    %7550 = vst.msk [vmem:[#allocation5 + $0x8c] sm:$0xf] %vm7514, %v7393
    %7551 = vst.msk [vmem:[#allocation5 + $0x90] sm:$0xf] %vm7514, %v7395
    %7552 = vst.msk [vmem:[#allocation5 + $0x94] sm:$0xf] %vm7514, %v7397
    %7553 = vst.msk [vmem:[#allocation5 + $0x98] sm:$0xf] %vm7514, %v7399
    %7554 = vst.msk [vmem:[#allocation5 + $0x9c] sm:$0xf] %vm7514, %v7401
    %7555 = vst.msk [vmem:[#allocation5 + $0xa0] sm:$0xf] %vm7514, %v7403
    %7556 = vst.msk [vmem:[#allocation5 + $0xa4] sm:$0xf] %vm7514, %v7405
    %7557 = vst.msk [vmem:[#allocation5 + $0xa8] sm:$0xf] %vm7514, %v7407
    %7558 = vst.msk [vmem:[#allocation5 + $0xac] sm:$0xf] %vm7514, %v7409
    %7559 = vst.msk [vmem:[#allocation5 + $0xb0] sm:$0xf] %vm7514, %v7411
    %7560 = vst.msk [vmem:[#allocation5 + $0xb4] sm:$0xf] %vm7514, %v7413
    %7561 = vst.msk [vmem:[#allocation5 + $0xb8] sm:$0xf] %vm7514, %v7415
    %7562 = vst.msk [vmem:[#allocation5 + $0xbc] sm:$0xf] %vm7514, %v7417
    %7563 = vst.msk [vmem:[#allocation5 + $0xc0] sm:$0xf] %vm7514, %v7419
    %7564 = vst.msk [vmem:[#allocation5 + $0xc4] sm:$0xf] %vm7514, %v7421
    %7565 = vst.msk [vmem:[#allocation5 + $0xc8] sm:$0xf] %vm7514, %v7423
    %7566 = vst.msk [vmem:[#allocation5 + $0xcc] sm:$0xf] %vm7514, %v7425
    %7567 = vst.msk [vmem:[#allocation5 + $0xd0] sm:$0xf] %vm7514, %v7427
    %7568 = vst.msk [vmem:[#allocation5 + $0xd4] sm:$0xf] %vm7514, %v7429
    %7569 = vst.msk [vmem:[#allocation5 + $0xd8] sm:$0xf] %vm7514, %v7431
    %7570 = vst.msk [vmem:[#allocation5 + $0xdc] sm:$0xf] %vm7514, %v7433
    %7571 = vst.msk [vmem:[#allocation5 + $0xe0] sm:$0xf] %vm7514, %v7435
    %7572 = vst.msk [vmem:[#allocation5 + $0xe4] sm:$0xf] %vm7514, %v7437
    %7573 = vst.msk [vmem:[#allocation5 + $0xe8] sm:$0xf] %vm7514, %v7439
    %7574 = vst.msk [vmem:[#allocation5 + $0xec] sm:$0xf] %vm7514, %v7441
    %7575 = vst.msk [vmem:[#allocation5 + $0xf0] sm:$0xf] %vm7514, %v7443
    %7576 = vst.msk [vmem:[#allocation5 + $0xf4] sm:$0xf] %vm7514, %v7445
    %7577 = vst.msk [vmem:[#allocation5 + $0xf8] sm:$0xf] %vm7514, %v7447
    %7578 = vst.msk [vmem:[#allocation5 + $0xfc] sm:$0xf] %vm7514, %v7449
    %s7579 = scalar_lea.vmem [#allocation4], 576
    %v7580 = vld [vmem:[%s7579] sm:$0xf]
    %v7581 = vld [vmem:[%s7579 + $0x4] sm:$0xf]
    %v7582 = vld [vmem:[%s7579 + $0x8] sm:$0xf]
    %v7583 = vld [vmem:[%s7579 + $0xc] sm:$0xf]
    %v7584 = vld [vmem:[%s7579 + $0x10] sm:$0xf]
    %v7585 = vld [vmem:[%s7579 + $0x14] sm:$0xf]
    %v7586 = vld [vmem:[%s7579 + $0x18] sm:$0xf]
    %v7587 = vld [vmem:[%s7579 + $0x1c] sm:$0xf]
    %v7588 = vld [vmem:[%s7579 + $0x20] sm:$0xf]
    %v7589 = vld [vmem:[%s7579 + $0x24] sm:$0xf]
    %v7590 = vld [vmem:[%s7579 + $0x28] sm:$0xf]
    %v7591 = vld [vmem:[%s7579 + $0x2c] sm:$0xf]
    %v7592 = vld [vmem:[%s7579 + $0x30] sm:$0xf]
    %v7593 = vld [vmem:[%s7579 + $0x34] sm:$0xf]
    %v7594 = vld [vmem:[%s7579 + $0x38] sm:$0xf]
    %v7595 = vld [vmem:[%s7579 + $0x3c] sm:$0xf]
    %v7596 = vld [vmem:[%s7579 + $0x40] sm:$0xf]
    %v7597 = vld [vmem:[%s7579 + $0x44] sm:$0xf]
    %v7598 = vld [vmem:[%s7579 + $0x48] sm:$0xf]
    %v7599 = vld [vmem:[%s7579 + $0x4c] sm:$0xf]
    %v7600 = vld [vmem:[%s7579 + $0x50] sm:$0xf]
    %v7601 = vld [vmem:[%s7579 + $0x54] sm:$0xf]
    %v7602 = vld [vmem:[%s7579 + $0x58] sm:$0xf]
    %v7603 = vld [vmem:[%s7579 + $0x5c] sm:$0xf]
    %v7604 = vld [vmem:[%s7579 + $0x60] sm:$0xf]
    %v7605 = vld [vmem:[%s7579 + $0x64] sm:$0xf]
    %v7606 = vld [vmem:[%s7579 + $0x68] sm:$0xf]
    %v7607 = vld [vmem:[%s7579 + $0x6c] sm:$0xf]
    %v7608 = vld [vmem:[%s7579 + $0x70] sm:$0xf]
    %v7609 = vld [vmem:[%s7579 + $0x74] sm:$0xf]
    %v7610 = vld [vmem:[%s7579 + $0x78] sm:$0xf]
    %v7611 = vld [vmem:[%s7579 + $0x7c] sm:$0xf]
    %v7612 = vld [vmem:[%s7579 + $0x90] sm:$0xf]
    %v7613 = vld [vmem:[%s7579 + $0x94] sm:$0xf]
    %v7614 = vld [vmem:[%s7579 + $0x98] sm:$0xf]
    %v7615 = vld [vmem:[%s7579 + $0x9c] sm:$0xf]
    %v7616 = vld [vmem:[%s7579 + $0xa0] sm:$0xf]
    %v7617 = vld [vmem:[%s7579 + $0xa4] sm:$0xf]
    %v7618 = vld [vmem:[%s7579 + $0xa8] sm:$0xf]
    %v7619 = vld [vmem:[%s7579 + $0xac] sm:$0xf]
    %v7620 = vld [vmem:[%s7579 + $0xb0] sm:$0xf]
    %v7621 = vld [vmem:[%s7579 + $0xb4] sm:$0xf]
    %v7622 = vld [vmem:[%s7579 + $0xb8] sm:$0xf]
    %v7623 = vld [vmem:[%s7579 + $0xbc] sm:$0xf]
    %v7624 = vld [vmem:[%s7579 + $0xc0] sm:$0xf]
    %v7625 = vld [vmem:[%s7579 + $0xc4] sm:$0xf]
    %v7626 = vld [vmem:[%s7579 + $0xc8] sm:$0xf]
    %v7627 = vld [vmem:[%s7579 + $0xcc] sm:$0xf]
    %v7628 = vld [vmem:[%s7579 + $0xd0] sm:$0xf]
    %v7629 = vld [vmem:[%s7579 + $0xd4] sm:$0xf]
    %v7630 = vld [vmem:[%s7579 + $0xd8] sm:$0xf]
    %v7631 = vld [vmem:[%s7579 + $0xdc] sm:$0xf]
    %v7632 = vld [vmem:[%s7579 + $0xe0] sm:$0xf]
    %v7633 = vld [vmem:[%s7579 + $0xe4] sm:$0xf]
    %v7634 = vld [vmem:[%s7579 + $0xe8] sm:$0xf]
    %v7635 = vld [vmem:[%s7579 + $0xec] sm:$0xf]
    %v7636 = vld [vmem:[%s7579 + $0xf0] sm:$0xf]
    %v7637 = vld [vmem:[%s7579 + $0xf4] sm:$0xf]
    %v7638 = vld [vmem:[%s7579 + $0xf8] sm:$0xf]
    %v7639 = vld [vmem:[%s7579 + $0xfc] sm:$0xf]
    %v7640 = vld [vmem:[%s7579 + $0x100] sm:$0xf]
    %v7641 = vld [vmem:[%s7579 + $0x104] sm:$0xf]
    %v7642 = vld [vmem:[%s7579 + $0x108] sm:$0xf]
    %v7643 = vld [vmem:[%s7579 + $0x10c] sm:$0xf]
    %7708 = vrot.lane.b32.xlu0 %v7580, 8
    %v7709 = vpop.permute.xlu0 %7708
    %7710 = vrot.lane.b32.xlu0 %v7581, 8
    %v7711 = vpop.permute.xlu0 %7710
    %7712 = vrot.lane.b32.xlu0 %v7582, 8
    %v7713 = vpop.permute.xlu0 %7712
    %7714 = vrot.lane.b32.xlu0 %v7583, 8
    %v7715 = vpop.permute.xlu0 %7714
    %7716 = vrot.lane.b32.xlu0 %v7584, 8
    %v7717 = vpop.permute.xlu0 %7716
    %7718 = vrot.lane.b32.xlu0 %v7585, 8
    %v7719 = vpop.permute.xlu0 %7718
    %7720 = vrot.lane.b32.xlu0 %v7586, 8
    %v7721 = vpop.permute.xlu0 %7720
    %7722 = vrot.lane.b32.xlu0 %v7587, 8
    %v7723 = vpop.permute.xlu0 %7722
    %7724 = vrot.lane.b32.xlu0 %v7588, 8
    %v7725 = vpop.permute.xlu0 %7724
    %7726 = vrot.lane.b32.xlu0 %v7589, 8
    %v7727 = vpop.permute.xlu0 %7726
    %7728 = vrot.lane.b32.xlu0 %v7590, 8
    %v7729 = vpop.permute.xlu0 %7728
    %7730 = vrot.lane.b32.xlu0 %v7591, 8
    %v7731 = vpop.permute.xlu0 %7730
    %7732 = vrot.lane.b32.xlu0 %v7592, 8
    %v7733 = vpop.permute.xlu0 %7732
    %7734 = vrot.lane.b32.xlu0 %v7593, 8
    %v7735 = vpop.permute.xlu0 %7734
    %7736 = vrot.lane.b32.xlu0 %v7594, 8
    %v7737 = vpop.permute.xlu0 %7736
    %7738 = vrot.lane.b32.xlu0 %v7595, 8
    %v7739 = vpop.permute.xlu0 %7738
    %7740 = vrot.lane.b32.xlu0 %v7596, 8
    %v7741 = vpop.permute.xlu0 %7740
    %7742 = vrot.lane.b32.xlu0 %v7597, 8
    %v7743 = vpop.permute.xlu0 %7742
    %7744 = vrot.lane.b32.xlu0 %v7598, 8
    %v7745 = vpop.permute.xlu0 %7744
    %7746 = vrot.lane.b32.xlu0 %v7599, 8
    %v7747 = vpop.permute.xlu0 %7746
    %7748 = vrot.lane.b32.xlu0 %v7600, 8
    %v7749 = vpop.permute.xlu0 %7748
    %7750 = vrot.lane.b32.xlu0 %v7601, 8
    %v7751 = vpop.permute.xlu0 %7750
    %7752 = vrot.lane.b32.xlu0 %v7602, 8
    %v7753 = vpop.permute.xlu0 %7752
    %7754 = vrot.lane.b32.xlu0 %v7603, 8
    %v7755 = vpop.permute.xlu0 %7754
    %7756 = vrot.lane.b32.xlu0 %v7604, 8
    %v7757 = vpop.permute.xlu0 %7756
    %7758 = vrot.lane.b32.xlu0 %v7605, 8
    %v7759 = vpop.permute.xlu0 %7758
    %7760 = vrot.lane.b32.xlu0 %v7606, 8
    %v7761 = vpop.permute.xlu0 %7760
    %7762 = vrot.lane.b32.xlu0 %v7607, 8
    %v7763 = vpop.permute.xlu0 %7762
    %7764 = vrot.lane.b32.xlu0 %v7608, 8
    %v7765 = vpop.permute.xlu0 %7764
    %7766 = vrot.lane.b32.xlu0 %v7609, 8
    %v7767 = vpop.permute.xlu0 %7766
    %7768 = vrot.lane.b32.xlu0 %v7610, 8
    %v7769 = vpop.permute.xlu0 %7768
    %7770 = vrot.lane.b32.xlu0 %v7611, 8
    %v7771 = vpop.permute.xlu0 %7770
    %7772 = vrot.lane.b32.xlu0 %v7612, 8
    %v7773 = vpop.permute.xlu0 %7772
    %7774 = vrot.lane.b32.xlu0 %v7613, 8
    %v7775 = vpop.permute.xlu0 %7774
    %7776 = vrot.lane.b32.xlu0 %v7614, 8
    %v7777 = vpop.permute.xlu0 %7776
    %7778 = vrot.lane.b32.xlu0 %v7615, 8
    %v7779 = vpop.permute.xlu0 %7778
    %7780 = vrot.lane.b32.xlu0 %v7616, 8
    %v7781 = vpop.permute.xlu0 %7780
    %7782 = vrot.lane.b32.xlu0 %v7617, 8
    %v7783 = vpop.permute.xlu0 %7782
    %7784 = vrot.lane.b32.xlu0 %v7618, 8
    %v7785 = vpop.permute.xlu0 %7784
    %7786 = vrot.lane.b32.xlu0 %v7619, 8
    %v7787 = vpop.permute.xlu0 %7786
    %7788 = vrot.lane.b32.xlu0 %v7620, 8
    %v7789 = vpop.permute.xlu0 %7788
    %7790 = vrot.lane.b32.xlu0 %v7621, 8
    %v7791 = vpop.permute.xlu0 %7790
    %7792 = vrot.lane.b32.xlu0 %v7622, 8
    %v7793 = vpop.permute.xlu0 %7792
    %7794 = vrot.lane.b32.xlu0 %v7623, 8
    %v7795 = vpop.permute.xlu0 %7794
    %7796 = vrot.lane.b32.xlu0 %v7624, 8
    %v7797 = vpop.permute.xlu0 %7796
    %7798 = vrot.lane.b32.xlu0 %v7625, 8
    %v7799 = vpop.permute.xlu0 %7798
    %7800 = vrot.lane.b32.xlu0 %v7626, 8
    %v7801 = vpop.permute.xlu0 %7800
    %7802 = vrot.lane.b32.xlu0 %v7627, 8
    %v7803 = vpop.permute.xlu0 %7802
    %7804 = vrot.lane.b32.xlu0 %v7628, 8
    %v7805 = vpop.permute.xlu0 %7804
    %7806 = vrot.lane.b32.xlu0 %v7629, 8
    %v7807 = vpop.permute.xlu0 %7806
    %7808 = vrot.lane.b32.xlu0 %v7630, 8
    %v7809 = vpop.permute.xlu0 %7808
    %7810 = vrot.lane.b32.xlu0 %v7631, 8
    %v7811 = vpop.permute.xlu0 %7810
    %7812 = vrot.lane.b32.xlu0 %v7632, 8
    %v7813 = vpop.permute.xlu0 %7812
    %7814 = vrot.lane.b32.xlu0 %v7633, 8
    %v7815 = vpop.permute.xlu0 %7814
    %7816 = vrot.lane.b32.xlu0 %v7634, 8
    %v7817 = vpop.permute.xlu0 %7816
    %7818 = vrot.lane.b32.xlu0 %v7635, 8
    %v7819 = vpop.permute.xlu0 %7818
    %7820 = vrot.lane.b32.xlu0 %v7636, 8
    %v7821 = vpop.permute.xlu0 %7820
    %7822 = vrot.lane.b32.xlu0 %v7637, 8
    %v7823 = vpop.permute.xlu0 %7822
    %7824 = vrot.lane.b32.xlu0 %v7638, 8
    %v7825 = vpop.permute.xlu0 %7824
    %7826 = vrot.lane.b32.xlu0 %v7639, 8
    %v7827 = vpop.permute.xlu0 %7826
    %7828 = vrot.lane.b32.xlu0 %v7640, 8
    %v7829 = vpop.permute.xlu0 %7828
    %7830 = vrot.lane.b32.xlu0 %v7641, 8
    %v7831 = vpop.permute.xlu0 %7830
    %7832 = vrot.lane.b32.xlu0 %v7642, 8
    %v7833 = vpop.permute.xlu0 %7832
    %7834 = vrot.lane.b32.xlu0 %v7643, 8
    %v7835 = vpop.permute.xlu0 %7834
    %vm7900 = vcmask 93248
    %7901 = vst.msk [vmem:[#allocation5] sm:$0xf] %vm7900, %v7709
    %7902 = vst.msk [vmem:[#allocation5 + $0x4] sm:$0xf] %vm7900, %v7711
    %7903 = vst.msk [vmem:[#allocation5 + $0x8] sm:$0xf] %vm7900, %v7713
    %7904 = vst.msk [vmem:[#allocation5 + $0xc] sm:$0xf] %vm7900, %v7715
    %7905 = vst.msk [vmem:[#allocation5 + $0x10] sm:$0xf] %vm7900, %v7717
    %7906 = vst.msk [vmem:[#allocation5 + $0x14] sm:$0xf] %vm7900, %v7719
    %7907 = vst.msk [vmem:[#allocation5 + $0x18] sm:$0xf] %vm7900, %v7721
    %7908 = vst.msk [vmem:[#allocation5 + $0x1c] sm:$0xf] %vm7900, %v7723
    %7909 = vst.msk [vmem:[#allocation5 + $0x20] sm:$0xf] %vm7900, %v7725
    %7910 = vst.msk [vmem:[#allocation5 + $0x24] sm:$0xf] %vm7900, %v7727
    %7911 = vst.msk [vmem:[#allocation5 + $0x28] sm:$0xf] %vm7900, %v7729
    %7912 = vst.msk [vmem:[#allocation5 + $0x2c] sm:$0xf] %vm7900, %v7731
    %7913 = vst.msk [vmem:[#allocation5 + $0x30] sm:$0xf] %vm7900, %v7733
    %7914 = vst.msk [vmem:[#allocation5 + $0x34] sm:$0xf] %vm7900, %v7735
    %7915 = vst.msk [vmem:[#allocation5 + $0x38] sm:$0xf] %vm7900, %v7737
    %7916 = vst.msk [vmem:[#allocation5 + $0x3c] sm:$0xf] %vm7900, %v7739
    %7917 = vst.msk [vmem:[#allocation5 + $0x40] sm:$0xf] %vm7900, %v7741
    %7918 = vst.msk [vmem:[#allocation5 + $0x44] sm:$0xf] %vm7900, %v7743
    %7919 = vst.msk [vmem:[#allocation5 + $0x48] sm:$0xf] %vm7900, %v7745
    %7920 = vst.msk [vmem:[#allocation5 + $0x4c] sm:$0xf] %vm7900, %v7747
    %7921 = vst.msk [vmem:[#allocation5 + $0x50] sm:$0xf] %vm7900, %v7749
    %7922 = vst.msk [vmem:[#allocation5 + $0x54] sm:$0xf] %vm7900, %v7751
    %7923 = vst.msk [vmem:[#allocation5 + $0x58] sm:$0xf] %vm7900, %v7753
    %7924 = vst.msk [vmem:[#allocation5 + $0x5c] sm:$0xf] %vm7900, %v7755
    %7925 = vst.msk [vmem:[#allocation5 + $0x60] sm:$0xf] %vm7900, %v7757
    %7926 = vst.msk [vmem:[#allocation5 + $0x64] sm:$0xf] %vm7900, %v7759
    %7927 = vst.msk [vmem:[#allocation5 + $0x68] sm:$0xf] %vm7900, %v7761
    %7928 = vst.msk [vmem:[#allocation5 + $0x6c] sm:$0xf] %vm7900, %v7763
    %7929 = vst.msk [vmem:[#allocation5 + $0x70] sm:$0xf] %vm7900, %v7765
    %7930 = vst.msk [vmem:[#allocation5 + $0x74] sm:$0xf] %vm7900, %v7767
    %7931 = vst.msk [vmem:[#allocation5 + $0x78] sm:$0xf] %vm7900, %v7769
    %7932 = vst.msk [vmem:[#allocation5 + $0x7c] sm:$0xf] %vm7900, %v7771
    %7933 = vst.msk [vmem:[#allocation5 + $0x80] sm:$0xf] %vm7900, %v7773
    %7934 = vst.msk [vmem:[#allocation5 + $0x84] sm:$0xf] %vm7900, %v7775
    %7935 = vst.msk [vmem:[#allocation5 + $0x88] sm:$0xf] %vm7900, %v7777
    %7936 = vst.msk [vmem:[#allocation5 + $0x8c] sm:$0xf] %vm7900, %v7779
    %7937 = vst.msk [vmem:[#allocation5 + $0x90] sm:$0xf] %vm7900, %v7781
    %7938 = vst.msk [vmem:[#allocation5 + $0x94] sm:$0xf] %vm7900, %v7783
    %7939 = vst.msk [vmem:[#allocation5 + $0x98] sm:$0xf] %vm7900, %v7785
    %7940 = vst.msk [vmem:[#allocation5 + $0x9c] sm:$0xf] %vm7900, %v7787
    %7941 = vst.msk [vmem:[#allocation5 + $0xa0] sm:$0xf] %vm7900, %v7789
    %7942 = vst.msk [vmem:[#allocation5 + $0xa4] sm:$0xf] %vm7900, %v7791
    %7943 = vst.msk [vmem:[#allocation5 + $0xa8] sm:$0xf] %vm7900, %v7793
    %7944 = vst.msk [vmem:[#allocation5 + $0xac] sm:$0xf] %vm7900, %v7795
    %7945 = vst.msk [vmem:[#allocation5 + $0xb0] sm:$0xf] %vm7900, %v7797
    %7946 = vst.msk [vmem:[#allocation5 + $0xb4] sm:$0xf] %vm7900, %v7799
    %7947 = vst.msk [vmem:[#allocation5 + $0xb8] sm:$0xf] %vm7900, %v7801
    %7948 = vst.msk [vmem:[#allocation5 + $0xbc] sm:$0xf] %vm7900, %v7803
    %7949 = vst.msk [vmem:[#allocation5 + $0xc0] sm:$0xf] %vm7900, %v7805
    %7950 = vst.msk [vmem:[#allocation5 + $0xc4] sm:$0xf] %vm7900, %v7807
    %7951 = vst.msk [vmem:[#allocation5 + $0xc8] sm:$0xf] %vm7900, %v7809
    %7952 = vst.msk [vmem:[#allocation5 + $0xcc] sm:$0xf] %vm7900, %v7811
    %7953 = vst.msk [vmem:[#allocation5 + $0xd0] sm:$0xf] %vm7900, %v7813
    %7954 = vst.msk [vmem:[#allocation5 + $0xd4] sm:$0xf] %vm7900, %v7815
    %7955 = vst.msk [vmem:[#allocation5 + $0xd8] sm:$0xf] %vm7900, %v7817
    %7956 = vst.msk [vmem:[#allocation5 + $0xdc] sm:$0xf] %vm7900, %v7819
    %7957 = vst.msk [vmem:[#allocation5 + $0xe0] sm:$0xf] %vm7900, %v7821
    %7958 = vst.msk [vmem:[#allocation5 + $0xe4] sm:$0xf] %vm7900, %v7823
    %7959 = vst.msk [vmem:[#allocation5 + $0xe8] sm:$0xf] %vm7900, %v7825
    %7960 = vst.msk [vmem:[#allocation5 + $0xec] sm:$0xf] %vm7900, %v7827
    %7961 = vst.msk [vmem:[#allocation5 + $0xf0] sm:$0xf] %vm7900, %v7829
    %7962 = vst.msk [vmem:[#allocation5 + $0xf4] sm:$0xf] %vm7900, %v7831
    %7963 = vst.msk [vmem:[#allocation5 + $0xf8] sm:$0xf] %vm7900, %v7833
    %7964 = vst.msk [vmem:[#allocation5 + $0xfc] sm:$0xf] %vm7900, %v7835
    %v7965 = vld [vmem:[%s5615] sm:$0xf]
    %v7966 = vld [vmem:[%s5615 + $0x4] sm:$0xf]
    %v7967 = vld [vmem:[%s5615 + $0x8] sm:$0xf]
    %v7968 = vld [vmem:[%s5615 + $0xc] sm:$0xf]
    %v7969 = vld [vmem:[%s5615 + $0x10] sm:$0xf]
    %v7970 = vld [vmem:[%s5615 + $0x14] sm:$0xf]
    %v7971 = vld [vmem:[%s5615 + $0x18] sm:$0xf]
    %v7972 = vld [vmem:[%s5615 + $0x1c] sm:$0xf]
    %v7973 = vld [vmem:[%s5615 + $0x20] sm:$0xf]
    %v7974 = vld [vmem:[%s5615 + $0x24] sm:$0xf]
    %v7975 = vld [vmem:[%s5615 + $0x28] sm:$0xf]
    %v7976 = vld [vmem:[%s5615 + $0x2c] sm:$0xf]
    %v7977 = vld [vmem:[%s5615 + $0x30] sm:$0xf]
    %v7978 = vld [vmem:[%s5615 + $0x34] sm:$0xf]
    %v7979 = vld [vmem:[%s5615 + $0x38] sm:$0xf]
    %v7980 = vld [vmem:[%s5615 + $0x3c] sm:$0xf]
    %v7981 = vld [vmem:[%s5615 + $0x40] sm:$0xf]
    %v7982 = vld [vmem:[%s5615 + $0x44] sm:$0xf]
    %v7983 = vld [vmem:[%s5615 + $0x48] sm:$0xf]
    %v7984 = vld [vmem:[%s5615 + $0x4c] sm:$0xf]
    %v7985 = vld [vmem:[%s5615 + $0x50] sm:$0xf]
    %v7986 = vld [vmem:[%s5615 + $0x54] sm:$0xf]
    %v7987 = vld [vmem:[%s5615 + $0x58] sm:$0xf]
    %v7988 = vld [vmem:[%s5615 + $0x5c] sm:$0xf]
    %v7989 = vld [vmem:[%s5615 + $0x60] sm:$0xf]
    %v7990 = vld [vmem:[%s5615 + $0x64] sm:$0xf]
    %v7991 = vld [vmem:[%s5615 + $0x68] sm:$0xf]
    %v7992 = vld [vmem:[%s5615 + $0x6c] sm:$0xf]
    %v7993 = vld [vmem:[%s5615 + $0x70] sm:$0xf]
    %v7994 = vld [vmem:[%s5615 + $0x74] sm:$0xf]
    %v7995 = vld [vmem:[%s5615 + $0x78] sm:$0xf]
    %v7996 = vld [vmem:[%s5615 + $0x7c] sm:$0xf]
    %v7997 = vld [vmem:[%s5615 + $0x90] sm:$0xf]
    %v7998 = vld [vmem:[%s5615 + $0x94] sm:$0xf]
    %v7999 = vld [vmem:[%s5615 + $0x98] sm:$0xf]
    %v8000 = vld [vmem:[%s5615 + $0x9c] sm:$0xf]
    %v8001 = vld [vmem:[%s5615 + $0xa0] sm:$0xf]
    %v8002 = vld [vmem:[%s5615 + $0xa4] sm:$0xf]
    %v8003 = vld [vmem:[%s5615 + $0xa8] sm:$0xf]
    %v8004 = vld [vmem:[%s5615 + $0xac] sm:$0xf]
    %v8005 = vld [vmem:[%s5615 + $0xb0] sm:$0xf]
    %v8006 = vld [vmem:[%s5615 + $0xb4] sm:$0xf]
    %v8007 = vld [vmem:[%s5615 + $0xb8] sm:$0xf]
    %v8008 = vld [vmem:[%s5615 + $0xbc] sm:$0xf]
    %v8009 = vld [vmem:[%s5615 + $0xc0] sm:$0xf]
    %v8010 = vld [vmem:[%s5615 + $0xc4] sm:$0xf]
    %v8011 = vld [vmem:[%s5615 + $0xc8] sm:$0xf]
    %v8012 = vld [vmem:[%s5615 + $0xcc] sm:$0xf]
    %v8013 = vld [vmem:[%s5615 + $0xd0] sm:$0xf]
    %v8014 = vld [vmem:[%s5615 + $0xd4] sm:$0xf]
    %v8015 = vld [vmem:[%s5615 + $0xd8] sm:$0xf]
    %v8016 = vld [vmem:[%s5615 + $0xdc] sm:$0xf]
    %v8017 = vld [vmem:[%s5615 + $0xe0] sm:$0xf]
    %v8018 = vld [vmem:[%s5615 + $0xe4] sm:$0xf]
    %v8019 = vld [vmem:[%s5615 + $0xe8] sm:$0xf]
    %v8020 = vld [vmem:[%s5615 + $0xec] sm:$0xf]
    %v8021 = vld [vmem:[%s5615 + $0xf0] sm:$0xf]
    %v8022 = vld [vmem:[%s5615 + $0xf4] sm:$0xf]
    %v8023 = vld [vmem:[%s5615 + $0xf8] sm:$0xf]
    %v8024 = vld [vmem:[%s5615 + $0xfc] sm:$0xf]
    %v8025 = vld [vmem:[%s5615 + $0x100] sm:$0xf]
    %v8026 = vld [vmem:[%s5615 + $0x104] sm:$0xf]
    %v8027 = vld [vmem:[%s5615 + $0x108] sm:$0xf]
    %v8028 = vld [vmem:[%s5615 + $0x10c] sm:$0xf]
    %8093 = vrot.lane.b32.xlu0 %v7965, 12
    %v8094 = vpop.permute.xlu0 %8093
    %8095 = vrot.lane.b32.xlu0 %v7966, 12
    %v8096 = vpop.permute.xlu0 %8095
    %8097 = vrot.lane.b32.xlu0 %v7967, 12
    %v8098 = vpop.permute.xlu0 %8097
    %8099 = vrot.lane.b32.xlu0 %v7968, 12
    %v8100 = vpop.permute.xlu0 %8099
    %8101 = vrot.lane.b32.xlu0 %v7969, 12
    %v8102 = vpop.permute.xlu0 %8101
    %8103 = vrot.lane.b32.xlu0 %v7970, 12
    %v8104 = vpop.permute.xlu0 %8103
    %8105 = vrot.lane.b32.xlu0 %v7971, 12
    %v8106 = vpop.permute.xlu0 %8105
    %8107 = vrot.lane.b32.xlu0 %v7972, 12
    %v8108 = vpop.permute.xlu0 %8107
    %8109 = vrot.lane.b32.xlu0 %v7973, 12
    %v8110 = vpop.permute.xlu0 %8109
    %8111 = vrot.lane.b32.xlu0 %v7974, 12
    %v8112 = vpop.permute.xlu0 %8111
    %8113 = vrot.lane.b32.xlu0 %v7975, 12
    %v8114 = vpop.permute.xlu0 %8113
    %8115 = vrot.lane.b32.xlu0 %v7976, 12
    %v8116 = vpop.permute.xlu0 %8115
    %8117 = vrot.lane.b32.xlu0 %v7977, 12
    %v8118 = vpop.permute.xlu0 %8117
    %8119 = vrot.lane.b32.xlu0 %v7978, 12
    %v8120 = vpop.permute.xlu0 %8119
    %8121 = vrot.lane.b32.xlu0 %v7979, 12
    %v8122 = vpop.permute.xlu0 %8121
    %8123 = vrot.lane.b32.xlu0 %v7980, 12
    %v8124 = vpop.permute.xlu0 %8123
    %8125 = vrot.lane.b32.xlu0 %v7981, 12
    %v8126 = vpop.permute.xlu0 %8125
    %8127 = vrot.lane.b32.xlu0 %v7982, 12
    %v8128 = vpop.permute.xlu0 %8127
    %8129 = vrot.lane.b32.xlu0 %v7983, 12
    %v8130 = vpop.permute.xlu0 %8129
    %8131 = vrot.lane.b32.xlu0 %v7984, 12
    %v8132 = vpop.permute.xlu0 %8131
    %8133 = vrot.lane.b32.xlu0 %v7985, 12
    %v8134 = vpop.permute.xlu0 %8133
    %8135 = vrot.lane.b32.xlu0 %v7986, 12
    %v8136 = vpop.permute.xlu0 %8135
    %8137 = vrot.lane.b32.xlu0 %v7987, 12
    %v8138 = vpop.permute.xlu0 %8137
    %8139 = vrot.lane.b32.xlu0 %v7988, 12
    %v8140 = vpop.permute.xlu0 %8139
    %8141 = vrot.lane.b32.xlu0 %v7989, 12
    %v8142 = vpop.permute.xlu0 %8141
    %8143 = vrot.lane.b32.xlu0 %v7990, 12
    %v8144 = vpop.permute.xlu0 %8143
    %8145 = vrot.lane.b32.xlu0 %v7991, 12
    %v8146 = vpop.permute.xlu0 %8145
    %8147 = vrot.lane.b32.xlu0 %v7992, 12
    %v8148 = vpop.permute.xlu0 %8147
    %8149 = vrot.lane.b32.xlu0 %v7993, 12
    %v8150 = vpop.permute.xlu0 %8149
    %8151 = vrot.lane.b32.xlu0 %v7994, 12
    %v8152 = vpop.permute.xlu0 %8151
    %8153 = vrot.lane.b32.xlu0 %v7995, 12
    %v8154 = vpop.permute.xlu0 %8153
    %8155 = vrot.lane.b32.xlu0 %v7996, 12
    %v8156 = vpop.permute.xlu0 %8155
    %8157 = vrot.lane.b32.xlu0 %v7997, 12
    %v8158 = vpop.permute.xlu0 %8157
    %8159 = vrot.lane.b32.xlu0 %v7998, 12
    %v8160 = vpop.permute.xlu0 %8159
    %8161 = vrot.lane.b32.xlu0 %v7999, 12
    %v8162 = vpop.permute.xlu0 %8161
    %8163 = vrot.lane.b32.xlu0 %v8000, 12
    %v8164 = vpop.permute.xlu0 %8163
    %8165 = vrot.lane.b32.xlu0 %v8001, 12
    %v8166 = vpop.permute.xlu0 %8165
    %8167 = vrot.lane.b32.xlu0 %v8002, 12
    %v8168 = vpop.permute.xlu0 %8167
    %8169 = vrot.lane.b32.xlu0 %v8003, 12
    %v8170 = vpop.permute.xlu0 %8169
    %8171 = vrot.lane.b32.xlu0 %v8004, 12
    %v8172 = vpop.permute.xlu0 %8171
    %8173 = vrot.lane.b32.xlu0 %v8005, 12
    %v8174 = vpop.permute.xlu0 %8173
    %8175 = vrot.lane.b32.xlu0 %v8006, 12
    %v8176 = vpop.permute.xlu0 %8175
    %8177 = vrot.lane.b32.xlu0 %v8007, 12
    %v8178 = vpop.permute.xlu0 %8177
    %8179 = vrot.lane.b32.xlu0 %v8008, 12
    %v8180 = vpop.permute.xlu0 %8179
    %8181 = vrot.lane.b32.xlu0 %v8009, 12
    %v8182 = vpop.permute.xlu0 %8181
    %8183 = vrot.lane.b32.xlu0 %v8010, 12
    %v8184 = vpop.permute.xlu0 %8183
    %8185 = vrot.lane.b32.xlu0 %v8011, 12
    %v8186 = vpop.permute.xlu0 %8185
    %8187 = vrot.lane.b32.xlu0 %v8012, 12
    %v8188 = vpop.permute.xlu0 %8187
    %8189 = vrot.lane.b32.xlu0 %v8013, 12
    %v8190 = vpop.permute.xlu0 %8189
    %8191 = vrot.lane.b32.xlu0 %v8014, 12
    %v8192 = vpop.permute.xlu0 %8191
    %8193 = vrot.lane.b32.xlu0 %v8015, 12
    %v8194 = vpop.permute.xlu0 %8193
    %8195 = vrot.lane.b32.xlu0 %v8016, 12
    %v8196 = vpop.permute.xlu0 %8195
    %8197 = vrot.lane.b32.xlu0 %v8017, 12
    %v8198 = vpop.permute.xlu0 %8197
    %8199 = vrot.lane.b32.xlu0 %v8018, 12
    %v8200 = vpop.permute.xlu0 %8199
    %8201 = vrot.lane.b32.xlu0 %v8019, 12
    %v8202 = vpop.permute.xlu0 %8201
    %8203 = vrot.lane.b32.xlu0 %v8020, 12
    %v8204 = vpop.permute.xlu0 %8203
    %8205 = vrot.lane.b32.xlu0 %v8021, 12
    %v8206 = vpop.permute.xlu0 %8205
    %8207 = vrot.lane.b32.xlu0 %v8022, 12
    %v8208 = vpop.permute.xlu0 %8207
    %8209 = vrot.lane.b32.xlu0 %v8023, 12
    %v8210 = vpop.permute.xlu0 %8209
    %8211 = vrot.lane.b32.xlu0 %v8024, 12
    %v8212 = vpop.permute.xlu0 %8211
    %8213 = vrot.lane.b32.xlu0 %v8025, 12
    %v8214 = vpop.permute.xlu0 %8213
    %8215 = vrot.lane.b32.xlu0 %v8026, 12
    %v8216 = vpop.permute.xlu0 %8215
    %8217 = vrot.lane.b32.xlu0 %v8027, 12
    %v8218 = vpop.permute.xlu0 %8217
    %8219 = vrot.lane.b32.xlu0 %v8028, 12
    %v8220 = vpop.permute.xlu0 %8219
    %vm8285 = vcmask 126048
    %8286 = vst.msk [vmem:[#allocation5] sm:$0xf] %vm8285, %v8094
    %8287 = vst.msk [vmem:[#allocation5 + $0x4] sm:$0xf] %vm8285, %v8096
    %8288 = vst.msk [vmem:[#allocation5 + $0x8] sm:$0xf] %vm8285, %v8098
    %8289 = vst.msk [vmem:[#allocation5 + $0xc] sm:$0xf] %vm8285, %v8100
    %8290 = vst.msk [vmem:[#allocation5 + $0x10] sm:$0xf] %vm8285, %v8102
    %8291 = vst.msk [vmem:[#allocation5 + $0x14] sm:$0xf] %vm8285, %v8104
    %8292 = vst.msk [vmem:[#allocation5 + $0x18] sm:$0xf] %vm8285, %v8106
    %8293 = vst.msk [vmem:[#allocation5 + $0x1c] sm:$0xf] %vm8285, %v8108
    %8294 = vst.msk [vmem:[#allocation5 + $0x20] sm:$0xf] %vm8285, %v8110
    %8295 = vst.msk [vmem:[#allocation5 + $0x24] sm:$0xf] %vm8285, %v8112
    %8296 = vst.msk [vmem:[#allocation5 + $0x28] sm:$0xf] %vm8285, %v8114
    %8297 = vst.msk [vmem:[#allocation5 + $0x2c] sm:$0xf] %vm8285, %v8116
    %8298 = vst.msk [vmem:[#allocation5 + $0x30] sm:$0xf] %vm8285, %v8118
    %8299 = vst.msk [vmem:[#allocation5 + $0x34] sm:$0xf] %vm8285, %v8120
    %8300 = vst.msk [vmem:[#allocation5 + $0x38] sm:$0xf] %vm8285, %v8122
    %8301 = vst.msk [vmem:[#allocation5 + $0x3c] sm:$0xf] %vm8285, %v8124
    %8302 = vst.msk [vmem:[#allocation5 + $0x40] sm:$0xf] %vm8285, %v8126
    %8303 = vst.msk [vmem:[#allocation5 + $0x44] sm:$0xf] %vm8285, %v8128
    %8304 = vst.msk [vmem:[#allocation5 + $0x48] sm:$0xf] %vm8285, %v8130
    %8305 = vst.msk [vmem:[#allocation5 + $0x4c] sm:$0xf] %vm8285, %v8132
    %8306 = vst.msk [vmem:[#allocation5 + $0x50] sm:$0xf] %vm8285, %v8134
    %8307 = vst.msk [vmem:[#allocation5 + $0x54] sm:$0xf] %vm8285, %v8136
    %8308 = vst.msk [vmem:[#allocation5 + $0x58] sm:$0xf] %vm8285, %v8138
    %8309 = vst.msk [vmem:[#allocation5 + $0x5c] sm:$0xf] %vm8285, %v8140
    %8310 = vst.msk [vmem:[#allocation5 + $0x60] sm:$0xf] %vm8285, %v8142
    %8311 = vst.msk [vmem:[#allocation5 + $0x64] sm:$0xf] %vm8285, %v8144
    %8312 = vst.msk [vmem:[#allocation5 + $0x68] sm:$0xf] %vm8285, %v8146
    %8313 = vst.msk [vmem:[#allocation5 + $0x6c] sm:$0xf] %vm8285, %v8148
    %8314 = vst.msk [vmem:[#allocation5 + $0x70] sm:$0xf] %vm8285, %v8150
    %8315 = vst.msk [vmem:[#allocation5 + $0x74] sm:$0xf] %vm8285, %v8152
    %8316 = vst.msk [vmem:[#allocation5 + $0x78] sm:$0xf] %vm8285, %v8154
    %8317 = vst.msk [vmem:[#allocation5 + $0x7c] sm:$0xf] %vm8285, %v8156
    %8318 = vst.msk [vmem:[#allocation5 + $0x80] sm:$0xf] %vm8285, %v8158
    %8319 = vst.msk [vmem:[#allocation5 + $0x84] sm:$0xf] %vm8285, %v8160
    %8320 = vst.msk [vmem:[#allocation5 + $0x88] sm:$0xf] %vm8285, %v8162
    %8321 = vst.msk [vmem:[#allocation5 + $0x8c] sm:$0xf] %vm8285, %v8164
    %8322 = vst.msk [vmem:[#allocation5 + $0x90] sm:$0xf] %vm8285, %v8166
    %8323 = vst.msk [vmem:[#allocation5 + $0x94] sm:$0xf] %vm8285, %v8168
    %8324 = vst.msk [vmem:[#allocation5 + $0x98] sm:$0xf] %vm8285, %v8170
    %8325 = vst.msk [vmem:[#allocation5 + $0x9c] sm:$0xf] %vm8285, %v8172
    %8326 = vst.msk [vmem:[#allocation5 + $0xa0] sm:$0xf] %vm8285, %v8174
    %8327 = vst.msk [vmem:[#allocation5 + $0xa4] sm:$0xf] %vm8285, %v8176
    %8328 = vst.msk [vmem:[#allocation5 + $0xa8] sm:$0xf] %vm8285, %v8178
    %8329 = vst.msk [vmem:[#allocation5 + $0xac] sm:$0xf] %vm8285, %v8180
    %8330 = vst.msk [vmem:[#allocation5 + $0xb0] sm:$0xf] %vm8285, %v8182
    %8331 = vst.msk [vmem:[#allocation5 + $0xb4] sm:$0xf] %vm8285, %v8184
    %8332 = vst.msk [vmem:[#allocation5 + $0xb8] sm:$0xf] %vm8285, %v8186
    %8333 = vst.msk [vmem:[#allocation5 + $0xbc] sm:$0xf] %vm8285, %v8188
    %8334 = vst.msk [vmem:[#allocation5 + $0xc0] sm:$0xf] %vm8285, %v8190
    %8335 = vst.msk [vmem:[#allocation5 + $0xc4] sm:$0xf] %vm8285, %v8192
    %8336 = vst.msk [vmem:[#allocation5 + $0xc8] sm:$0xf] %vm8285, %v8194
    %8337 = vst.msk [vmem:[#allocation5 + $0xcc] sm:$0xf] %vm8285, %v8196
    %8338 = vst.msk [vmem:[#allocation5 + $0xd0] sm:$0xf] %vm8285, %v8198
    %8339 = vst.msk [vmem:[#allocation5 + $0xd4] sm:$0xf] %vm8285, %v8200
    %8340 = vst.msk [vmem:[#allocation5 + $0xd8] sm:$0xf] %vm8285, %v8202
    %8341 = vst.msk [vmem:[#allocation5 + $0xdc] sm:$0xf] %vm8285, %v8204
    %8342 = vst.msk [vmem:[#allocation5 + $0xe0] sm:$0xf] %vm8285, %v8206
    %8343 = vst.msk [vmem:[#allocation5 + $0xe4] sm:$0xf] %vm8285, %v8208
    %8344 = vst.msk [vmem:[#allocation5 + $0xe8] sm:$0xf] %vm8285, %v8210
    %8345 = vst.msk [vmem:[#allocation5 + $0xec] sm:$0xf] %vm8285, %v8212
    %8346 = vst.msk [vmem:[#allocation5 + $0xf0] sm:$0xf] %vm8285, %v8214
    %8347 = vst.msk [vmem:[#allocation5 + $0xf4] sm:$0xf] %vm8285, %v8216
    %8348 = vst.msk [vmem:[#allocation5 + $0xf8] sm:$0xf] %vm8285, %v8218
    %8349 = vst.msk [vmem:[#allocation5 + $0xfc] sm:$0xf] %vm8285, %v8220
    %v8350 = vld [vmem:[%s5813] sm:$0xf]
    %v8351 = vld [vmem:[%s5813 + $0x4] sm:$0xf]
    %v8352 = vld [vmem:[%s5813 + $0x8] sm:$0xf]
    %v8353 = vld [vmem:[%s5813 + $0xc] sm:$0xf]
    %v8354 = vld [vmem:[%s5813 + $0x10] sm:$0xf]
    %v8355 = vld [vmem:[%s5813 + $0x14] sm:$0xf]
    %v8356 = vld [vmem:[%s5813 + $0x18] sm:$0xf]
    %v8357 = vld [vmem:[%s5813 + $0x1c] sm:$0xf]
    %v8358 = vld [vmem:[%s5813 + $0x20] sm:$0xf]
    %v8359 = vld [vmem:[%s5813 + $0x24] sm:$0xf]
    %v8360 = vld [vmem:[%s5813 + $0x28] sm:$0xf]
    %v8361 = vld [vmem:[%s5813 + $0x2c] sm:$0xf]
    %v8362 = vld [vmem:[%s5813 + $0x30] sm:$0xf]
    %v8363 = vld [vmem:[%s5813 + $0x34] sm:$0xf]
    %v8364 = vld [vmem:[%s5813 + $0x38] sm:$0xf]
    %v8365 = vld [vmem:[%s5813 + $0x3c] sm:$0xf]
    %v8366 = vld [vmem:[%s5813 + $0x40] sm:$0xf]
    %v8367 = vld [vmem:[%s5813 + $0x44] sm:$0xf]
    %v8368 = vld [vmem:[%s5813 + $0x48] sm:$0xf]
    %v8369 = vld [vmem:[%s5813 + $0x4c] sm:$0xf]
    %v8370 = vld [vmem:[%s5813 + $0x50] sm:$0xf]
    %v8371 = vld [vmem:[%s5813 + $0x54] sm:$0xf]
    %v8372 = vld [vmem:[%s5813 + $0x58] sm:$0xf]
    %v8373 = vld [vmem:[%s5813 + $0x5c] sm:$0xf]
    %v8374 = vld [vmem:[%s5813 + $0x60] sm:$0xf]
    %v8375 = vld [vmem:[%s5813 + $0x64] sm:$0xf]
    %v8376 = vld [vmem:[%s5813 + $0x68] sm:$0xf]
    %v8377 = vld [vmem:[%s5813 + $0x6c] sm:$0xf]
    %v8378 = vld [vmem:[%s5813 + $0x70] sm:$0xf]
    %v8379 = vld [vmem:[%s5813 + $0x74] sm:$0xf]
    %v8380 = vld [vmem:[%s5813 + $0x78] sm:$0xf]
    %v8381 = vld [vmem:[%s5813 + $0x7c] sm:$0xf]
    %v8382 = vld [vmem:[%s5813 + $0x90] sm:$0xf]
    %v8383 = vld [vmem:[%s5813 + $0x94] sm:$0xf]
    %v8384 = vld [vmem:[%s5813 + $0x98] sm:$0xf]
    %v8385 = vld [vmem:[%s5813 + $0x9c] sm:$0xf]
    %v8386 = vld [vmem:[%s5813 + $0xa0] sm:$0xf]
    %v8387 = vld [vmem:[%s5813 + $0xa4] sm:$0xf]
    %v8388 = vld [vmem:[%s5813 + $0xa8] sm:$0xf]
    %v8389 = vld [vmem:[%s5813 + $0xac] sm:$0xf]
    %v8390 = vld [vmem:[%s5813 + $0xb0] sm:$0xf]
    %v8391 = vld [vmem:[%s5813 + $0xb4] sm:$0xf]
    %v8392 = vld [vmem:[%s5813 + $0xb8] sm:$0xf]
    %v8393 = vld [vmem:[%s5813 + $0xbc] sm:$0xf]
    %v8394 = vld [vmem:[%s5813 + $0xc0] sm:$0xf]
    %v8395 = vld [vmem:[%s5813 + $0xc4] sm:$0xf]
    %v8396 = vld [vmem:[%s5813 + $0xc8] sm:$0xf]
    %v8397 = vld [vmem:[%s5813 + $0xcc] sm:$0xf]
    %v8398 = vld [vmem:[%s5813 + $0xd0] sm:$0xf]
    %v8399 = vld [vmem:[%s5813 + $0xd4] sm:$0xf]
    %v8400 = vld [vmem:[%s5813 + $0xd8] sm:$0xf]
    %v8401 = vld [vmem:[%s5813 + $0xdc] sm:$0xf]
    %v8402 = vld [vmem:[%s5813 + $0xe0] sm:$0xf]
    %v8403 = vld [vmem:[%s5813 + $0xe4] sm:$0xf]
    %v8404 = vld [vmem:[%s5813 + $0xe8] sm:$0xf]
    %v8405 = vld [vmem:[%s5813 + $0xec] sm:$0xf]
    %v8406 = vld [vmem:[%s5813 + $0xf0] sm:$0xf]
    %v8407 = vld [vmem:[%s5813 + $0xf4] sm:$0xf]
    %v8408 = vld [vmem:[%s5813 + $0xf8] sm:$0xf]
    %v8409 = vld [vmem:[%s5813 + $0xfc] sm:$0xf]
    %v8410 = vld [vmem:[%s5813 + $0x100] sm:$0xf]
    %v8411 = vld [vmem:[%s5813 + $0x104] sm:$0xf]
    %v8412 = vld [vmem:[%s5813 + $0x108] sm:$0xf]
    %v8413 = vld [vmem:[%s5813 + $0x10c] sm:$0xf]
    %8478 = vrot.lane.b32.xlu0 %v8350, 16
    %v8479 = vpop.permute.xlu0 %8478
    %8480 = vrot.lane.b32.xlu0 %v8351, 16
    %v8481 = vpop.permute.xlu0 %8480
    %8482 = vrot.lane.b32.xlu0 %v8352, 16
    %v8483 = vpop.permute.xlu0 %8482
    %8484 = vrot.lane.b32.xlu0 %v8353, 16
    %v8485 = vpop.permute.xlu0 %8484
    %8486 = vrot.lane.b32.xlu0 %v8354, 16
    %v8487 = vpop.permute.xlu0 %8486
    %8488 = vrot.lane.b32.xlu0 %v8355, 16
    %v8489 = vpop.permute.xlu0 %8488
    %8490 = vrot.lane.b32.xlu0 %v8356, 16
    %v8491 = vpop.permute.xlu0 %8490
    %8492 = vrot.lane.b32.xlu0 %v8357, 16
    %v8493 = vpop.permute.xlu0 %8492
    %8494 = vrot.lane.b32.xlu0 %v8358, 16
    %v8495 = vpop.permute.xlu0 %8494
    %8496 = vrot.lane.b32.xlu0 %v8359, 16
    %v8497 = vpop.permute.xlu0 %8496
    %8498 = vrot.lane.b32.xlu0 %v8360, 16
    %v8499 = vpop.permute.xlu0 %8498
    %8500 = vrot.lane.b32.xlu0 %v8361, 16
    %v8501 = vpop.permute.xlu0 %8500
    %8502 = vrot.lane.b32.xlu0 %v8362, 16
    %v8503 = vpop.permute.xlu0 %8502
    %8504 = vrot.lane.b32.xlu0 %v8363, 16
    %v8505 = vpop.permute.xlu0 %8504
    %8506 = vrot.lane.b32.xlu0 %v8364, 16
    %v8507 = vpop.permute.xlu0 %8506
    %8508 = vrot.lane.b32.xlu0 %v8365, 16
    %v8509 = vpop.permute.xlu0 %8508
    %8510 = vrot.lane.b32.xlu0 %v8366, 16
    %v8511 = vpop.permute.xlu0 %8510
    %8512 = vrot.lane.b32.xlu0 %v8367, 16
    %v8513 = vpop.permute.xlu0 %8512
    %8514 = vrot.lane.b32.xlu0 %v8368, 16
    %v8515 = vpop.permute.xlu0 %8514
    %8516 = vrot.lane.b32.xlu0 %v8369, 16
    %v8517 = vpop.permute.xlu0 %8516
    %8518 = vrot.lane.b32.xlu0 %v8370, 16
    %v8519 = vpop.permute.xlu0 %8518
    %8520 = vrot.lane.b32.xlu0 %v8371, 16
    %v8521 = vpop.permute.xlu0 %8520
    %8522 = vrot.lane.b32.xlu0 %v8372, 16
    %v8523 = vpop.permute.xlu0 %8522
    %8524 = vrot.lane.b32.xlu0 %v8373, 16
    %v8525 = vpop.permute.xlu0 %8524
    %8526 = vrot.lane.b32.xlu0 %v8374, 16
    %v8527 = vpop.permute.xlu0 %8526
    %8528 = vrot.lane.b32.xlu0 %v8375, 16
    %v8529 = vpop.permute.xlu0 %8528
    %8530 = vrot.lane.b32.xlu0 %v8376, 16
    %v8531 = vpop.permute.xlu0 %8530
    %8532 = vrot.lane.b32.xlu0 %v8377, 16
    %v8533 = vpop.permute.xlu0 %8532
    %8534 = vrot.lane.b32.xlu0 %v8378, 16
    %v8535 = vpop.permute.xlu0 %8534
    %8536 = vrot.lane.b32.xlu0 %v8379, 16
    %v8537 = vpop.permute.xlu0 %8536
    %8538 = vrot.lane.b32.xlu0 %v8380, 16
    %v8539 = vpop.permute.xlu0 %8538
    %8540 = vrot.lane.b32.xlu0 %v8381, 16
    %v8541 = vpop.permute.xlu0 %8540
    %8542 = vrot.lane.b32.xlu0 %v8382, 16
    %v8543 = vpop.permute.xlu0 %8542
    %8544 = vrot.lane.b32.xlu0 %v8383, 16
    %v8545 = vpop.permute.xlu0 %8544
    %8546 = vrot.lane.b32.xlu0 %v8384, 16
    %v8547 = vpop.permute.xlu0 %8546
    %8548 = vrot.lane.b32.xlu0 %v8385, 16
    %v8549 = vpop.permute.xlu0 %8548
    %8550 = vrot.lane.b32.xlu0 %v8386, 16
    %v8551 = vpop.permute.xlu0 %8550
    %8552 = vrot.lane.b32.xlu0 %v8387, 16
    %v8553 = vpop.permute.xlu0 %8552
    %8554 = vrot.lane.b32.xlu0 %v8388, 16
    %v8555 = vpop.permute.xlu0 %8554
    %8556 = vrot.lane.b32.xlu0 %v8389, 16
    %v8557 = vpop.permute.xlu0 %8556
    %8558 = vrot.lane.b32.xlu0 %v8390, 16
    %v8559 = vpop.permute.xlu0 %8558
    %8560 = vrot.lane.b32.xlu0 %v8391, 16
    %v8561 = vpop.permute.xlu0 %8560
    %8562 = vrot.lane.b32.xlu0 %v8392, 16
    %v8563 = vpop.permute.xlu0 %8562
    %8564 = vrot.lane.b32.xlu0 %v8393, 16
    %v8565 = vpop.permute.xlu0 %8564
    %8566 = vrot.lane.b32.xlu0 %v8394, 16
    %v8567 = vpop.permute.xlu0 %8566
    %8568 = vrot.lane.b32.xlu0 %v8395, 16
    %v8569 = vpop.permute.xlu0 %8568
    %8570 = vrot.lane.b32.xlu0 %v8396, 16
    %v8571 = vpop.permute.xlu0 %8570
    %8572 = vrot.lane.b32.xlu0 %v8397, 16
    %v8573 = vpop.permute.xlu0 %8572
    %8574 = vrot.lane.b32.xlu0 %v8398, 16
    %v8575 = vpop.permute.xlu0 %8574
    %8576 = vrot.lane.b32.xlu0 %v8399, 16
    %v8577 = vpop.permute.xlu0 %8576
    %8578 = vrot.lane.b32.xlu0 %v8400, 16
    %v8579 = vpop.permute.xlu0 %8578
    %8580 = vrot.lane.b32.xlu0 %v8401, 16
    %v8581 = vpop.permute.xlu0 %8580
    %8582 = vrot.lane.b32.xlu0 %v8402, 16
    %v8583 = vpop.permute.xlu0 %8582
    %8584 = vrot.lane.b32.xlu0 %v8403, 16
    %v8585 = vpop.permute.xlu0 %8584
    %8586 = vrot.lane.b32.xlu0 %v8404, 16
    %v8587 = vpop.permute.xlu0 %8586
    %8588 = vrot.lane.b32.xlu0 %v8405, 16
    %v8589 = vpop.permute.xlu0 %8588
    %8590 = vrot.lane.b32.xlu0 %v8406, 16
    %v8591 = vpop.permute.xlu0 %8590
    %8592 = vrot.lane.b32.xlu0 %v8407, 16
    %v8593 = vpop.permute.xlu0 %8592
    %8594 = vrot.lane.b32.xlu0 %v8408, 16
    %v8595 = vpop.permute.xlu0 %8594
    %8596 = vrot.lane.b32.xlu0 %v8409, 16
    %v8597 = vpop.permute.xlu0 %8596
    %8598 = vrot.lane.b32.xlu0 %v8410, 16
    %v8599 = vpop.permute.xlu0 %8598
    %8600 = vrot.lane.b32.xlu0 %v8411, 16
    %v8601 = vpop.permute.xlu0 %8600
    %8602 = vrot.lane.b32.xlu0 %v8412, 16
    %v8603 = vpop.permute.xlu0 %8602
    %8604 = vrot.lane.b32.xlu0 %v8413, 16
    %v8605 = vpop.permute.xlu0 %8604
    %vm8670 = vcmask 158848
    %8671 = vst.msk [vmem:[#allocation5] sm:$0xf] %vm8670, %v8479
    %8672 = vst.msk [vmem:[#allocation5 + $0x4] sm:$0xf] %vm8670, %v8481
    %8673 = vst.msk [vmem:[#allocation5 + $0x8] sm:$0xf] %vm8670, %v8483
    %8674 = vst.msk [vmem:[#allocation5 + $0xc] sm:$0xf] %vm8670, %v8485
    %8675 = vst.msk [vmem:[#allocation5 + $0x10] sm:$0xf] %vm8670, %v8487
    %8676 = vst.msk [vmem:[#allocation5 + $0x14] sm:$0xf] %vm8670, %v8489
    %8677 = vst.msk [vmem:[#allocation5 + $0x18] sm:$0xf] %vm8670, %v8491
    %8678 = vst.msk [vmem:[#allocation5 + $0x1c] sm:$0xf] %vm8670, %v8493
    %8679 = vst.msk [vmem:[#allocation5 + $0x20] sm:$0xf] %vm8670, %v8495
    %8680 = vst.msk [vmem:[#allocation5 + $0x24] sm:$0xf] %vm8670, %v8497
    %8681 = vst.msk [vmem:[#allocation5 + $0x28] sm:$0xf] %vm8670, %v8499
    %8682 = vst.msk [vmem:[#allocation5 + $0x2c] sm:$0xf] %vm8670, %v8501
    %8683 = vst.msk [vmem:[#allocation5 + $0x30] sm:$0xf] %vm8670, %v8503
    %8684 = vst.msk [vmem:[#allocation5 + $0x34] sm:$0xf] %vm8670, %v8505
    %8685 = vst.msk [vmem:[#allocation5 + $0x38] sm:$0xf] %vm8670, %v8507
    %8686 = vst.msk [vmem:[#allocation5 + $0x3c] sm:$0xf] %vm8670, %v8509
    %8687 = vst.msk [vmem:[#allocation5 + $0x40] sm:$0xf] %vm8670, %v8511
    %8688 = vst.msk [vmem:[#allocation5 + $0x44] sm:$0xf] %vm8670, %v8513
    %8689 = vst.msk [vmem:[#allocation5 + $0x48] sm:$0xf] %vm8670, %v8515
    %8690 = vst.msk [vmem:[#allocation5 + $0x4c] sm:$0xf] %vm8670, %v8517
    %8691 = vst.msk [vmem:[#allocation5 + $0x50] sm:$0xf] %vm8670, %v8519
    %8692 = vst.msk [vmem:[#allocation5 + $0x54] sm:$0xf] %vm8670, %v8521
    %8693 = vst.msk [vmem:[#allocation5 + $0x58] sm:$0xf] %vm8670, %v8523
    %8694 = vst.msk [vmem:[#allocation5 + $0x5c] sm:$0xf] %vm8670, %v8525
    %8695 = vst.msk [vmem:[#allocation5 + $0x60] sm:$0xf] %vm8670, %v8527
    %8696 = vst.msk [vmem:[#allocation5 + $0x64] sm:$0xf] %vm8670, %v8529
    %8697 = vst.msk [vmem:[#allocation5 + $0x68] sm:$0xf] %vm8670, %v8531
    %8698 = vst.msk [vmem:[#allocation5 + $0x6c] sm:$0xf] %vm8670, %v8533
    %8699 = vst.msk [vmem:[#allocation5 + $0x70] sm:$0xf] %vm8670, %v8535
    %8700 = vst.msk [vmem:[#allocation5 + $0x74] sm:$0xf] %vm8670, %v8537
    %8701 = vst.msk [vmem:[#allocation5 + $0x78] sm:$0xf] %vm8670, %v8539
    %8702 = vst.msk [vmem:[#allocation5 + $0x7c] sm:$0xf] %vm8670, %v8541
    %8703 = vst.msk [vmem:[#allocation5 + $0x80] sm:$0xf] %vm8670, %v8543
    %8704 = vst.msk [vmem:[#allocation5 + $0x84] sm:$0xf] %vm8670, %v8545
    %8705 = vst.msk [vmem:[#allocation5 + $0x88] sm:$0xf] %vm8670, %v8547
    %8706 = vst.msk [vmem:[#allocation5 + $0x8c] sm:$0xf] %vm8670, %v8549
    %8707 = vst.msk [vmem:[#allocation5 + $0x90] sm:$0xf] %vm8670, %v8551
    %8708 = vst.msk [vmem:[#allocation5 + $0x94] sm:$0xf] %vm8670, %v8553
    %8709 = vst.msk [vmem:[#allocation5 + $0x98] sm:$0xf] %vm8670, %v8555
    %8710 = vst.msk [vmem:[#allocation5 + $0x9c] sm:$0xf] %vm8670, %v8557
    %8711 = vst.msk [vmem:[#allocation5 + $0xa0] sm:$0xf] %vm8670, %v8559
    %8712 = vst.msk [vmem:[#allocation5 + $0xa4] sm:$0xf] %vm8670, %v8561
    %8713 = vst.msk [vmem:[#allocation5 + $0xa8] sm:$0xf] %vm8670, %v8563
    %8714 = vst.msk [vmem:[#allocation5 + $0xac] sm:$0xf] %vm8670, %v8565
    %8715 = vst.msk [vmem:[#allocation5 + $0xb0] sm:$0xf] %vm8670, %v8567
    %8716 = vst.msk [vmem:[#allocation5 + $0xb4] sm:$0xf] %vm8670, %v8569
    %8717 = vst.msk [vmem:[#allocation5 + $0xb8] sm:$0xf] %vm8670, %v8571
    %8718 = vst.msk [vmem:[#allocation5 + $0xbc] sm:$0xf] %vm8670, %v8573
    %8719 = vst.msk [vmem:[#allocation5 + $0xc0] sm:$0xf] %vm8670, %v8575
    %8720 = vst.msk [vmem:[#allocation5 + $0xc4] sm:$0xf] %vm8670, %v8577
    %8721 = vst.msk [vmem:[#allocation5 + $0xc8] sm:$0xf] %vm8670, %v8579
    %8722 = vst.msk [vmem:[#allocation5 + $0xcc] sm:$0xf] %vm8670, %v8581
    %8723 = vst.msk [vmem:[#allocation5 + $0xd0] sm:$0xf] %vm8670, %v8583
    %8724 = vst.msk [vmem:[#allocation5 + $0xd4] sm:$0xf] %vm8670, %v8585
    %8725 = vst.msk [vmem:[#allocation5 + $0xd8] sm:$0xf] %vm8670, %v8587
    %8726 = vst.msk [vmem:[#allocation5 + $0xdc] sm:$0xf] %vm8670, %v8589
    %8727 = vst.msk [vmem:[#allocation5 + $0xe0] sm:$0xf] %vm8670, %v8591
    %8728 = vst.msk [vmem:[#allocation5 + $0xe4] sm:$0xf] %vm8670, %v8593
    %8729 = vst.msk [vmem:[#allocation5 + $0xe8] sm:$0xf] %vm8670, %v8595
    %8730 = vst.msk [vmem:[#allocation5 + $0xec] sm:$0xf] %vm8670, %v8597
    %8731 = vst.msk [vmem:[#allocation5 + $0xf0] sm:$0xf] %vm8670, %v8599
    %8732 = vst.msk [vmem:[#allocation5 + $0xf4] sm:$0xf] %vm8670, %v8601
    %8733 = vst.msk [vmem:[#allocation5 + $0xf8] sm:$0xf] %vm8670, %v8603
    %8734 = vst.msk [vmem:[#allocation5 + $0xfc] sm:$0xf] %vm8670, %v8605
    %v8735 = vld [vmem:[%s5714] sm:$0xf]
    %v8736 = vld [vmem:[%s5714 + $0x4] sm:$0xf]
    %v8737 = vld [vmem:[%s5714 + $0x8] sm:$0xf]
    %v8738 = vld [vmem:[%s5714 + $0xc] sm:$0xf]
    %v8739 = vld [vmem:[%s5714 + $0x10] sm:$0xf]
    %v8740 = vld [vmem:[%s5714 + $0x14] sm:$0xf]
    %v8741 = vld [vmem:[%s5714 + $0x18] sm:$0xf]
    %v8742 = vld [vmem:[%s5714 + $0x1c] sm:$0xf]
    %v8743 = vld [vmem:[%s5714 + $0x20] sm:$0xf]
    %v8744 = vld [vmem:[%s5714 + $0x24] sm:$0xf]
    %v8745 = vld [vmem:[%s5714 + $0x28] sm:$0xf]
    %v8746 = vld [vmem:[%s5714 + $0x2c] sm:$0xf]
    %v8747 = vld [vmem:[%s5714 + $0x30] sm:$0xf]
    %v8748 = vld [vmem:[%s5714 + $0x34] sm:$0xf]
    %v8749 = vld [vmem:[%s5714 + $0x38] sm:$0xf]
    %v8750 = vld [vmem:[%s5714 + $0x3c] sm:$0xf]
    %v8751 = vld [vmem:[%s5714 + $0x40] sm:$0xf]
    %v8752 = vld [vmem:[%s5714 + $0x44] sm:$0xf]
    %v8753 = vld [vmem:[%s5714 + $0x48] sm:$0xf]
    %v8754 = vld [vmem:[%s5714 + $0x4c] sm:$0xf]
    %v8755 = vld [vmem:[%s5714 + $0x50] sm:$0xf]
    %v8756 = vld [vmem:[%s5714 + $0x54] sm:$0xf]
    %v8757 = vld [vmem:[%s5714 + $0x58] sm:$0xf]
    %v8758 = vld [vmem:[%s5714 + $0x5c] sm:$0xf]
    %v8759 = vld [vmem:[%s5714 + $0x60] sm:$0xf]
    %v8760 = vld [vmem:[%s5714 + $0x64] sm:$0xf]
    %v8761 = vld [vmem:[%s5714 + $0x68] sm:$0xf]
    %v8762 = vld [vmem:[%s5714 + $0x6c] sm:$0xf]
    %v8763 = vld [vmem:[%s5714 + $0x70] sm:$0xf]
    %v8764 = vld [vmem:[%s5714 + $0x74] sm:$0xf]
    %v8765 = vld [vmem:[%s5714 + $0x78] sm:$0xf]
    %v8766 = vld [vmem:[%s5714 + $0x7c] sm:$0xf]
    %v8767 = vld [vmem:[%s5714 + $0x90] sm:$0xf]
    %v8768 = vld [vmem:[%s5714 + $0x94] sm:$0xf]
    %v8769 = vld [vmem:[%s5714 + $0x98] sm:$0xf]
    %v8770 = vld [vmem:[%s5714 + $0x9c] sm:$0xf]
    %v8771 = vld [vmem:[%s5714 + $0xa0] sm:$0xf]
    %v8772 = vld [vmem:[%s5714 + $0xa4] sm:$0xf]
    %v8773 = vld [vmem:[%s5714 + $0xa8] sm:$0xf]
    %v8774 = vld [vmem:[%s5714 + $0xac] sm:$0xf]
    %v8775 = vld [vmem:[%s5714 + $0xb0] sm:$0xf]
    %v8776 = vld [vmem:[%s5714 + $0xb4] sm:$0xf]
    %v8777 = vld [vmem:[%s5714 + $0xb8] sm:$0xf]
    %v8778 = vld [vmem:[%s5714 + $0xbc] sm:$0xf]
    %v8779 = vld [vmem:[%s5714 + $0xc0] sm:$0xf]
    %v8780 = vld [vmem:[%s5714 + $0xc4] sm:$0xf]
    %v8781 = vld [vmem:[%s5714 + $0xc8] sm:$0xf]
    %v8782 = vld [vmem:[%s5714 + $0xcc] sm:$0xf]
    %v8783 = vld [vmem:[%s5714 + $0xd0] sm:$0xf]
    %v8784 = vld [vmem:[%s5714 + $0xd4] sm:$0xf]
    %v8785 = vld [vmem:[%s5714 + $0xd8] sm:$0xf]
    %v8786 = vld [vmem:[%s5714 + $0xdc] sm:$0xf]
    %v8787 = vld [vmem:[%s5714 + $0xe0] sm:$0xf]
    %v8788 = vld [vmem:[%s5714 + $0xe4] sm:$0xf]
    %v8789 = vld [vmem:[%s5714 + $0xe8] sm:$0xf]
    %v8790 = vld [vmem:[%s5714 + $0xec] sm:$0xf]
    %v8791 = vld [vmem:[%s5714 + $0xf0] sm:$0xf]
    %v8792 = vld [vmem:[%s5714 + $0xf4] sm:$0xf]
    %v8793 = vld [vmem:[%s5714 + $0xf8] sm:$0xf]
    %v8794 = vld [vmem:[%s5714 + $0xfc] sm:$0xf]
    %v8795 = vld [vmem:[%s5714 + $0x100] sm:$0xf]
    %v8796 = vld [vmem:[%s5714 + $0x104] sm:$0xf]
    %v8797 = vld [vmem:[%s5714 + $0x108] sm:$0xf]
    %v8798 = vld [vmem:[%s5714 + $0x10c] sm:$0xf]
    %8863 = vrot.lane.b32.xlu0 %v8735, 20
    %v8864 = vpop.permute.xlu0 %8863
    %8865 = vrot.lane.b32.xlu0 %v8736, 20
    %v8866 = vpop.permute.xlu0 %8865
    %8867 = vrot.lane.b32.xlu0 %v8737, 20
    %v8868 = vpop.permute.xlu0 %8867
    %8869 = vrot.lane.b32.xlu0 %v8738, 20
    %v8870 = vpop.permute.xlu0 %8869
    %8871 = vrot.lane.b32.xlu0 %v8739, 20
    %v8872 = vpop.permute.xlu0 %8871
    %8873 = vrot.lane.b32.xlu0 %v8740, 20
    %v8874 = vpop.permute.xlu0 %8873
    %8875 = vrot.lane.b32.xlu0 %v8741, 20
    %v8876 = vpop.permute.xlu0 %8875
    %8877 = vrot.lane.b32.xlu0 %v8742, 20
    %v8878 = vpop.permute.xlu0 %8877
    %8879 = vrot.lane.b32.xlu0 %v8743, 20
    %v8880 = vpop.permute.xlu0 %8879
    %8881 = vrot.lane.b32.xlu0 %v8744, 20
    %v8882 = vpop.permute.xlu0 %8881
    %8883 = vrot.lane.b32.xlu0 %v8745, 20
    %v8884 = vpop.permute.xlu0 %8883
    %8885 = vrot.lane.b32.xlu0 %v8746, 20
    %v8886 = vpop.permute.xlu0 %8885
    %8887 = vrot.lane.b32.xlu0 %v8747, 20
    %v8888 = vpop.permute.xlu0 %8887
    %8889 = vrot.lane.b32.xlu0 %v8748, 20
    %v8890 = vpop.permute.xlu0 %8889
    %8891 = vrot.lane.b32.xlu0 %v8749, 20
    %v8892 = vpop.permute.xlu0 %8891
    %8893 = vrot.lane.b32.xlu0 %v8750, 20
    %v8894 = vpop.permute.xlu0 %8893
    %8895 = vrot.lane.b32.xlu0 %v8751, 20
    %v8896 = vpop.permute.xlu0 %8895
    %8897 = vrot.lane.b32.xlu0 %v8752, 20
    %v8898 = vpop.permute.xlu0 %8897
    %8899 = vrot.lane.b32.xlu0 %v8753, 20
    %v8900 = vpop.permute.xlu0 %8899
    %8901 = vrot.lane.b32.xlu0 %v8754, 20
    %v8902 = vpop.permute.xlu0 %8901
    %8903 = vrot.lane.b32.xlu0 %v8755, 20
    %v8904 = vpop.permute.xlu0 %8903
    %8905 = vrot.lane.b32.xlu0 %v8756, 20
    %v8906 = vpop.permute.xlu0 %8905
    %8907 = vrot.lane.b32.xlu0 %v8757, 20
    %v8908 = vpop.permute.xlu0 %8907
    %8909 = vrot.lane.b32.xlu0 %v8758, 20
    %v8910 = vpop.permute.xlu0 %8909
    %8911 = vrot.lane.b32.xlu0 %v8759, 20
    %v8912 = vpop.permute.xlu0 %8911
    %8913 = vrot.lane.b32.xlu0 %v8760, 20
    %v8914 = vpop.permute.xlu0 %8913
    %8915 = vrot.lane.b32.xlu0 %v8761, 20
    %v8916 = vpop.permute.xlu0 %8915
    %8917 = vrot.lane.b32.xlu0 %v8762, 20
    %v8918 = vpop.permute.xlu0 %8917
    %8919 = vrot.lane.b32.xlu0 %v8763, 20
    %v8920 = vpop.permute.xlu0 %8919
    %8921 = vrot.lane.b32.xlu0 %v8764, 20
    %v8922 = vpop.permute.xlu0 %8921
    %8923 = vrot.lane.b32.xlu0 %v8765, 20
    %v8924 = vpop.permute.xlu0 %8923
    %8925 = vrot.lane.b32.xlu0 %v8766, 20
    %v8926 = vpop.permute.xlu0 %8925
    %8927 = vrot.lane.b32.xlu0 %v8767, 20
    %v8928 = vpop.permute.xlu0 %8927
    %8929 = vrot.lane.b32.xlu0 %v8768, 20
    %v8930 = vpop.permute.xlu0 %8929
    %8931 = vrot.lane.b32.xlu0 %v8769, 20
    %v8932 = vpop.permute.xlu0 %8931
    %8933 = vrot.lane.b32.xlu0 %v8770, 20
    %v8934 = vpop.permute.xlu0 %8933
    %8935 = vrot.lane.b32.xlu0 %v8771, 20
    %v8936 = vpop.permute.xlu0 %8935
    %8937 = vrot.lane.b32.xlu0 %v8772, 20
    %v8938 = vpop.permute.xlu0 %8937
    %8939 = vrot.lane.b32.xlu0 %v8773, 20
    %v8940 = vpop.permute.xlu0 %8939
    %8941 = vrot.lane.b32.xlu0 %v8774, 20
    %v8942 = vpop.permute.xlu0 %8941
    %8943 = vrot.lane.b32.xlu0 %v8775, 20
    %v8944 = vpop.permute.xlu0 %8943
    %8945 = vrot.lane.b32.xlu0 %v8776, 20
    %v8946 = vpop.permute.xlu0 %8945
    %8947 = vrot.lane.b32.xlu0 %v8777, 20
    %v8948 = vpop.permute.xlu0 %8947
    %8949 = vrot.lane.b32.xlu0 %v8778, 20
    %v8950 = vpop.permute.xlu0 %8949
    %8951 = vrot.lane.b32.xlu0 %v8779, 20
    %v8952 = vpop.permute.xlu0 %8951
    %8953 = vrot.lane.b32.xlu0 %v8780, 20
    %v8954 = vpop.permute.xlu0 %8953
    %8955 = vrot.lane.b32.xlu0 %v8781, 20
    %v8956 = vpop.permute.xlu0 %8955
    %8957 = vrot.lane.b32.xlu0 %v8782, 20
    %v8958 = vpop.permute.xlu0 %8957
    %8959 = vrot.lane.b32.xlu0 %v8783, 20
    %v8960 = vpop.permute.xlu0 %8959
    %8961 = vrot.lane.b32.xlu0 %v8784, 20
    %v8962 = vpop.permute.xlu0 %8961
    %8963 = vrot.lane.b32.xlu0 %v8785, 20
    %v8964 = vpop.permute.xlu0 %8963
    %8965 = vrot.lane.b32.xlu0 %v8786, 20
    %v8966 = vpop.permute.xlu0 %8965
    %8967 = vrot.lane.b32.xlu0 %v8787, 20
    %v8968 = vpop.permute.xlu0 %8967
    %8969 = vrot.lane.b32.xlu0 %v8788, 20
    %v8970 = vpop.permute.xlu0 %8969
    %8971 = vrot.lane.b32.xlu0 %v8789, 20
    %v8972 = vpop.permute.xlu0 %8971
    %8973 = vrot.lane.b32.xlu0 %v8790, 20
    %v8974 = vpop.permute.xlu0 %8973
    %8975 = vrot.lane.b32.xlu0 %v8791, 20
    %v8976 = vpop.permute.xlu0 %8975
    %8977 = vrot.lane.b32.xlu0 %v8792, 20
    %v8978 = vpop.permute.xlu0 %8977
    %8979 = vrot.lane.b32.xlu0 %v8793, 20
    %v8980 = vpop.permute.xlu0 %8979
    %8981 = vrot.lane.b32.xlu0 %v8794, 20
    %v8982 = vpop.permute.xlu0 %8981
    %8983 = vrot.lane.b32.xlu0 %v8795, 20
    %v8984 = vpop.permute.xlu0 %8983
    %8985 = vrot.lane.b32.xlu0 %v8796, 20
    %v8986 = vpop.permute.xlu0 %8985
    %8987 = vrot.lane.b32.xlu0 %v8797, 20
    %v8988 = vpop.permute.xlu0 %8987
    %8989 = vrot.lane.b32.xlu0 %v8798, 20
    %v8990 = vpop.permute.xlu0 %8989
    %vm9055 = vcmask 191648
    %9056 = vst.msk [vmem:[#allocation5] sm:$0xf] %vm9055, %v8864
    %9057 = vst.msk [vmem:[#allocation5 + $0x4] sm:$0xf] %vm9055, %v8866
    %9058 = vst.msk [vmem:[#allocation5 + $0x8] sm:$0xf] %vm9055, %v8868
    %9059 = vst.msk [vmem:[#allocation5 + $0xc] sm:$0xf] %vm9055, %v8870
    %9060 = vst.msk [vmem:[#allocation5 + $0x10] sm:$0xf] %vm9055, %v8872
    %9061 = vst.msk [vmem:[#allocation5 + $0x14] sm:$0xf] %vm9055, %v8874
    %9062 = vst.msk [vmem:[#allocation5 + $0x18] sm:$0xf] %vm9055, %v8876
    %9063 = vst.msk [vmem:[#allocation5 + $0x1c] sm:$0xf] %vm9055, %v8878
    %9064 = vst.msk [vmem:[#allocation5 + $0x20] sm:$0xf] %vm9055, %v8880
    %9065 = vst.msk [vmem:[#allocation5 + $0x24] sm:$0xf] %vm9055, %v8882
    %9066 = vst.msk [vmem:[#allocation5 + $0x28] sm:$0xf] %vm9055, %v8884
    %9067 = vst.msk [vmem:[#allocation5 + $0x2c] sm:$0xf] %vm9055, %v8886
    %9068 = vst.msk [vmem:[#allocation5 + $0x30] sm:$0xf] %vm9055, %v8888
    %9069 = vst.msk [vmem:[#allocation5 + $0x34] sm:$0xf] %vm9055, %v8890
    %9070 = vst.msk [vmem:[#allocation5 + $0x38] sm:$0xf] %vm9055, %v8892
    %9071 = vst.msk [vmem:[#allocation5 + $0x3c] sm:$0xf] %vm9055, %v8894
    %9072 = vst.msk [vmem:[#allocation5 + $0x40] sm:$0xf] %vm9055, %v8896
    %9073 = vst.msk [vmem:[#allocation5 + $0x44] sm:$0xf] %vm9055, %v8898
    %9074 = vst.msk [vmem:[#allocation5 + $0x48] sm:$0xf] %vm9055, %v8900
    %9075 = vst.msk [vmem:[#allocation5 + $0x4c] sm:$0xf] %vm9055, %v8902
    %9076 = vst.msk [vmem:[#allocation5 + $0x50] sm:$0xf] %vm9055, %v8904
    %9077 = vst.msk [vmem:[#allocation5 + $0x54] sm:$0xf] %vm9055, %v8906
    %9078 = vst.msk [vmem:[#allocation5 + $0x58] sm:$0xf] %vm9055, %v8908
    %9079 = vst.msk [vmem:[#allocation5 + $0x5c] sm:$0xf] %vm9055, %v8910
    %9080 = vst.msk [vmem:[#allocation5 + $0x60] sm:$0xf] %vm9055, %v8912
    %9081 = vst.msk [vmem:[#allocation5 + $0x64] sm:$0xf] %vm9055, %v8914
    %9082 = vst.msk [vmem:[#allocation5 + $0x68] sm:$0xf] %vm9055, %v8916
    %9083 = vst.msk [vmem:[#allocation5 + $0x6c] sm:$0xf] %vm9055, %v8918
    %9084 = vst.msk [vmem:[#allocation5 + $0x70] sm:$0xf] %vm9055, %v8920
    %9085 = vst.msk [vmem:[#allocation5 + $0x74] sm:$0xf] %vm9055, %v8922
    %9086 = vst.msk [vmem:[#allocation5 + $0x78] sm:$0xf] %vm9055, %v8924
    %9087 = vst.msk [vmem:[#allocation5 + $0x7c] sm:$0xf] %vm9055, %v8926
    %9088 = vst.msk [vmem:[#allocation5 + $0x80] sm:$0xf] %vm9055, %v8928
    %9089 = vst.msk [vmem:[#allocation5 + $0x84] sm:$0xf] %vm9055, %v8930
    %9090 = vst.msk [vmem:[#allocation5 + $0x88] sm:$0xf] %vm9055, %v8932
    %9091 = vst.msk [vmem:[#allocation5 + $0x8c] sm:$0xf] %vm9055, %v8934
    %9092 = vst.msk [vmem:[#allocation5 + $0x90] sm:$0xf] %vm9055, %v8936
    %9093 = vst.msk [vmem:[#allocation5 + $0x94] sm:$0xf] %vm9055, %v8938
    %9094 = vst.msk [vmem:[#allocation5 + $0x98] sm:$0xf] %vm9055, %v8940
    %9095 = vst.msk [vmem:[#allocation5 + $0x9c] sm:$0xf] %vm9055, %v8942
    %9096 = vst.msk [vmem:[#allocation5 + $0xa0] sm:$0xf] %vm9055, %v8944
    %9097 = vst.msk [vmem:[#allocation5 + $0xa4] sm:$0xf] %vm9055, %v8946
    %9098 = vst.msk [vmem:[#allocation5 + $0xa8] sm:$0xf] %vm9055, %v8948
    %9099 = vst.msk [vmem:[#allocation5 + $0xac] sm:$0xf] %vm9055, %v8950
    %9100 = vst.msk [vmem:[#allocation5 + $0xb0] sm:$0xf] %vm9055, %v8952
    %9101 = vst.msk [vmem:[#allocation5 + $0xb4] sm:$0xf] %vm9055, %v8954
    %9102 = vst.msk [vmem:[#allocation5 + $0xb8] sm:$0xf] %vm9055, %v8956
    %9103 = vst.msk [vmem:[#allocation5 + $0xbc] sm:$0xf] %vm9055, %v8958
    %9104 = vst.msk [vmem:[#allocation5 + $0xc0] sm:$0xf] %vm9055, %v8960
    %9105 = vst.msk [vmem:[#allocation5 + $0xc4] sm:$0xf] %vm9055, %v8962
    %9106 = vst.msk [vmem:[#allocation5 + $0xc8] sm:$0xf] %vm9055, %v8964
    %9107 = vst.msk [vmem:[#allocation5 + $0xcc] sm:$0xf] %vm9055, %v8966
    %9108 = vst.msk [vmem:[#allocation5 + $0xd0] sm:$0xf] %vm9055, %v8968
    %9109 = vst.msk [vmem:[#allocation5 + $0xd4] sm:$0xf] %vm9055, %v8970
    %9110 = vst.msk [vmem:[#allocation5 + $0xd8] sm:$0xf] %vm9055, %v8972
    %9111 = vst.msk [vmem:[#allocation5 + $0xdc] sm:$0xf] %vm9055, %v8974
    %9112 = vst.msk [vmem:[#allocation5 + $0xe0] sm:$0xf] %vm9055, %v8976
    %9113 = vst.msk [vmem:[#allocation5 + $0xe4] sm:$0xf] %vm9055, %v8978
    %9114 = vst.msk [vmem:[#allocation5 + $0xe8] sm:$0xf] %vm9055, %v8980
    %9115 = vst.msk [vmem:[#allocation5 + $0xec] sm:$0xf] %vm9055, %v8982
    %9116 = vst.msk [vmem:[#allocation5 + $0xf0] sm:$0xf] %vm9055, %v8984
    %9117 = vst.msk [vmem:[#allocation5 + $0xf4] sm:$0xf] %vm9055, %v8986
    %9118 = vst.msk [vmem:[#allocation5 + $0xf8] sm:$0xf] %vm9055, %v8988
    %9119 = vst.msk [vmem:[#allocation5 + $0xfc] sm:$0xf] %vm9055, %v8990
    %s9120 = scalar_lea.vmem [#allocation4], 16
    %v9121 = vld [vmem:[%s9120] sm:$0xf]
    %v9122 = vld [vmem:[%s9120 + $0x4] sm:$0xf]
    %v9123 = vld [vmem:[%s9120 + $0x8] sm:$0xf]
    %v9124 = vld [vmem:[%s9120 + $0xc] sm:$0xf]
    %v9125 = vld [vmem:[%s9120 + $0x10] sm:$0xf]
    %v9126 = vld [vmem:[%s9120 + $0x14] sm:$0xf]
    %v9127 = vld [vmem:[%s9120 + $0x18] sm:$0xf]
    %v9128 = vld [vmem:[%s9120 + $0x1c] sm:$0xf]
    %v9129 = vld [vmem:[%s9120 + $0x20] sm:$0xf]
    %v9130 = vld [vmem:[%s9120 + $0x24] sm:$0xf]
    %v9131 = vld [vmem:[%s9120 + $0x28] sm:$0xf]
    %v9132 = vld [vmem:[%s9120 + $0x2c] sm:$0xf]
    %v9133 = vld [vmem:[%s9120 + $0x30] sm:$0xf]
    %v9134 = vld [vmem:[%s9120 + $0x34] sm:$0xf]
    %v9135 = vld [vmem:[%s9120 + $0x38] sm:$0xf]
    %v9136 = vld [vmem:[%s9120 + $0x3c] sm:$0xf]
    %v9137 = vld [vmem:[%s9120 + $0x40] sm:$0xf]
    %v9138 = vld [vmem:[%s9120 + $0x44] sm:$0xf]
    %v9139 = vld [vmem:[%s9120 + $0x48] sm:$0xf]
    %v9140 = vld [vmem:[%s9120 + $0x4c] sm:$0xf]
    %v9141 = vld [vmem:[%s9120 + $0x50] sm:$0xf]
    %v9142 = vld [vmem:[%s9120 + $0x54] sm:$0xf]
    %v9143 = vld [vmem:[%s9120 + $0x58] sm:$0xf]
    %v9144 = vld [vmem:[%s9120 + $0x5c] sm:$0xf]
    %v9145 = vld [vmem:[%s9120 + $0x60] sm:$0xf]
    %v9146 = vld [vmem:[%s9120 + $0x64] sm:$0xf]
    %v9147 = vld [vmem:[%s9120 + $0x68] sm:$0xf]
    %v9148 = vld [vmem:[%s9120 + $0x6c] sm:$0xf]
    %v9149 = vld [vmem:[%s9120 + $0x70] sm:$0xf]
    %v9150 = vld [vmem:[%s9120 + $0x74] sm:$0xf]
    %v9151 = vld [vmem:[%s9120 + $0x78] sm:$0xf]
    %v9152 = vld [vmem:[%s9120 + $0x7c] sm:$0xf]
    %v9153 = vld [vmem:[%s9120 + $0x90] sm:$0xf]
    %v9154 = vld [vmem:[%s9120 + $0x94] sm:$0xf]
    %v9155 = vld [vmem:[%s9120 + $0x98] sm:$0xf]
    %v9156 = vld [vmem:[%s9120 + $0x9c] sm:$0xf]
    %v9157 = vld [vmem:[%s9120 + $0xa0] sm:$0xf]
    %v9158 = vld [vmem:[%s9120 + $0xa4] sm:$0xf]
    %v9159 = vld [vmem:[%s9120 + $0xa8] sm:$0xf]
    %v9160 = vld [vmem:[%s9120 + $0xac] sm:$0xf]
    %v9161 = vld [vmem:[%s9120 + $0xb0] sm:$0xf]
    %v9162 = vld [vmem:[%s9120 + $0xb4] sm:$0xf]
    %v9163 = vld [vmem:[%s9120 + $0xb8] sm:$0xf]
    %v9164 = vld [vmem:[%s9120 + $0xbc] sm:$0xf]
    %v9165 = vld [vmem:[%s9120 + $0xc0] sm:$0xf]
    %v9166 = vld [vmem:[%s9120 + $0xc4] sm:$0xf]
    %v9167 = vld [vmem:[%s9120 + $0xc8] sm:$0xf]
    %v9168 = vld [vmem:[%s9120 + $0xcc] sm:$0xf]
    %v9169 = vld [vmem:[%s9120 + $0xd0] sm:$0xf]
    %v9170 = vld [vmem:[%s9120 + $0xd4] sm:$0xf]
    %v9171 = vld [vmem:[%s9120 + $0xd8] sm:$0xf]
    %v9172 = vld [vmem:[%s9120 + $0xdc] sm:$0xf]
    %v9173 = vld [vmem:[%s9120 + $0xe0] sm:$0xf]
    %v9174 = vld [vmem:[%s9120 + $0xe4] sm:$0xf]
    %v9175 = vld [vmem:[%s9120 + $0xe8] sm:$0xf]
    %v9176 = vld [vmem:[%s9120 + $0xec] sm:$0xf]
    %v9177 = vld [vmem:[%s9120 + $0xf0] sm:$0xf]
    %v9178 = vld [vmem:[%s9120 + $0xf4] sm:$0xf]
    %v9179 = vld [vmem:[%s9120 + $0xf8] sm:$0xf]
    %v9180 = vld [vmem:[%s9120 + $0xfc] sm:$0xf]
    %v9181 = vld [vmem:[%s9120 + $0x100] sm:$0xf]
    %v9182 = vld [vmem:[%s9120 + $0x104] sm:$0xf]
    %v9183 = vld [vmem:[%s9120 + $0x108] sm:$0xf]
    %v9184 = vld [vmem:[%s9120 + $0x10c] sm:$0xf]
    %9249 = vrot.lane.b32.xlu0 %v9121, 24
    %v9250 = vpop.permute.xlu0 %9249
    %9251 = vrot.lane.b32.xlu0 %v9122, 24
    %v9252 = vpop.permute.xlu0 %9251
    %9253 = vrot.lane.b32.xlu0 %v9123, 24
    %v9254 = vpop.permute.xlu0 %9253
    %9255 = vrot.lane.b32.xlu0 %v9124, 24
    %v9256 = vpop.permute.xlu0 %9255
    %9257 = vrot.lane.b32.xlu0 %v9125, 24
    %v9258 = vpop.permute.xlu0 %9257
    %9259 = vrot.lane.b32.xlu0 %v9126, 24
    %v9260 = vpop.permute.xlu0 %9259
    %9261 = vrot.lane.b32.xlu0 %v9127, 24
    %v9262 = vpop.permute.xlu0 %9261
    %9263 = vrot.lane.b32.xlu0 %v9128, 24
    %v9264 = vpop.permute.xlu0 %9263
    %9265 = vrot.lane.b32.xlu0 %v9129, 24
    %v9266 = vpop.permute.xlu0 %9265
    %9267 = vrot.lane.b32.xlu0 %v9130, 24
    %v9268 = vpop.permute.xlu0 %9267
    %9269 = vrot.lane.b32.xlu0 %v9131, 24
    %v9270 = vpop.permute.xlu0 %9269
    %9271 = vrot.lane.b32.xlu0 %v9132, 24
    %v9272 = vpop.permute.xlu0 %9271
    %9273 = vrot.lane.b32.xlu0 %v9133, 24
    %v9274 = vpop.permute.xlu0 %9273
    %9275 = vrot.lane.b32.xlu0 %v9134, 24
    %v9276 = vpop.permute.xlu0 %9275
    %9277 = vrot.lane.b32.xlu0 %v9135, 24
    %v9278 = vpop.permute.xlu0 %9277
    %9279 = vrot.lane.b32.xlu0 %v9136, 24
    %v9280 = vpop.permute.xlu0 %9279
    %9281 = vrot.lane.b32.xlu0 %v9137, 24
    %v9282 = vpop.permute.xlu0 %9281
    %9283 = vrot.lane.b32.xlu0 %v9138, 24
    %v9284 = vpop.permute.xlu0 %9283
    %9285 = vrot.lane.b32.xlu0 %v9139, 24
    %v9286 = vpop.permute.xlu0 %9285
    %9287 = vrot.lane.b32.xlu0 %v9140, 24
    %v9288 = vpop.permute.xlu0 %9287
    %9289 = vrot.lane.b32.xlu0 %v9141, 24
    %v9290 = vpop.permute.xlu0 %9289
    %9291 = vrot.lane.b32.xlu0 %v9142, 24
    %v9292 = vpop.permute.xlu0 %9291
    %9293 = vrot.lane.b32.xlu0 %v9143, 24
    %v9294 = vpop.permute.xlu0 %9293
    %9295 = vrot.lane.b32.xlu0 %v9144, 24
    %v9296 = vpop.permute.xlu0 %9295
    %9297 = vrot.lane.b32.xlu0 %v9145, 24
    %v9298 = vpop.permute.xlu0 %9297
    %9299 = vrot.lane.b32.xlu0 %v9146, 24
    %v9300 = vpop.permute.xlu0 %9299
    %9301 = vrot.lane.b32.xlu0 %v9147, 24
    %v9302 = vpop.permute.xlu0 %9301
    %9303 = vrot.lane.b32.xlu0 %v9148, 24
    %v9304 = vpop.permute.xlu0 %9303
    %9305 = vrot.lane.b32.xlu0 %v9149, 24
    %v9306 = vpop.permute.xlu0 %9305
    %9307 = vrot.lane.b32.xlu0 %v9150, 24
    %v9308 = vpop.permute.xlu0 %9307
    %9309 = vrot.lane.b32.xlu0 %v9151, 24
    %v9310 = vpop.permute.xlu0 %9309
    %9311 = vrot.lane.b32.xlu0 %v9152, 24
    %v9312 = vpop.permute.xlu0 %9311
    %9313 = vrot.lane.b32.xlu0 %v9153, 24
    %v9314 = vpop.permute.xlu0 %9313
    %9315 = vrot.lane.b32.xlu0 %v9154, 24
    %v9316 = vpop.permute.xlu0 %9315
    %9317 = vrot.lane.b32.xlu0 %v9155, 24
    %v9318 = vpop.permute.xlu0 %9317
    %9319 = vrot.lane.b32.xlu0 %v9156, 24
    %v9320 = vpop.permute.xlu0 %9319
    %9321 = vrot.lane.b32.xlu0 %v9157, 24
    %v9322 = vpop.permute.xlu0 %9321
    %9323 = vrot.lane.b32.xlu0 %v9158, 24
    %v9324 = vpop.permute.xlu0 %9323
    %9325 = vrot.lane.b32.xlu0 %v9159, 24
    %v9326 = vpop.permute.xlu0 %9325
    %9327 = vrot.lane.b32.xlu0 %v9160, 24
    %v9328 = vpop.permute.xlu0 %9327
    %9329 = vrot.lane.b32.xlu0 %v9161, 24
    %v9330 = vpop.permute.xlu0 %9329
    %9331 = vrot.lane.b32.xlu0 %v9162, 24
    %v9332 = vpop.permute.xlu0 %9331
    %9333 = vrot.lane.b32.xlu0 %v9163, 24
    %v9334 = vpop.permute.xlu0 %9333
    %9335 = vrot.lane.b32.xlu0 %v9164, 24
    %v9336 = vpop.permute.xlu0 %9335
    %9337 = vrot.lane.b32.xlu0 %v9165, 24
    %v9338 = vpop.permute.xlu0 %9337
    %9339 = vrot.lane.b32.xlu0 %v9166, 24
    %v9340 = vpop.permute.xlu0 %9339
    %9341 = vrot.lane.b32.xlu0 %v9167, 24
    %v9342 = vpop.permute.xlu0 %9341
    %9343 = vrot.lane.b32.xlu0 %v9168, 24
    %v9344 = vpop.permute.xlu0 %9343
    %9345 = vrot.lane.b32.xlu0 %v9169, 24
    %v9346 = vpop.permute.xlu0 %9345
    %9347 = vrot.lane.b32.xlu0 %v9170, 24
    %v9348 = vpop.permute.xlu0 %9347
    %9349 = vrot.lane.b32.xlu0 %v9171, 24
    %v9350 = vpop.permute.xlu0 %9349
    %9351 = vrot.lane.b32.xlu0 %v9172, 24
    %v9352 = vpop.permute.xlu0 %9351
    %9353 = vrot.lane.b32.xlu0 %v9173, 24
    %v9354 = vpop.permute.xlu0 %9353
    %9355 = vrot.lane.b32.xlu0 %v9174, 24
    %v9356 = vpop.permute.xlu0 %9355
    %9357 = vrot.lane.b32.xlu0 %v9175, 24
    %v9358 = vpop.permute.xlu0 %9357
    %9359 = vrot.lane.b32.xlu0 %v9176, 24
    %v9360 = vpop.permute.xlu0 %9359
    %9361 = vrot.lane.b32.xlu0 %v9177, 24
    %v9362 = vpop.permute.xlu0 %9361
    %9363 = vrot.lane.b32.xlu0 %v9178, 24
    %v9364 = vpop.permute.xlu0 %9363
    %9365 = vrot.lane.b32.xlu0 %v9179, 24
    %v9366 = vpop.permute.xlu0 %9365
    %9367 = vrot.lane.b32.xlu0 %v9180, 24
    %v9368 = vpop.permute.xlu0 %9367
    %9369 = vrot.lane.b32.xlu0 %v9181, 24
    %v9370 = vpop.permute.xlu0 %9369
    %9371 = vrot.lane.b32.xlu0 %v9182, 24
    %v9372 = vpop.permute.xlu0 %9371
    %9373 = vrot.lane.b32.xlu0 %v9183, 24
    %v9374 = vpop.permute.xlu0 %9373
    %9375 = vrot.lane.b32.xlu0 %v9184, 24
    %v9376 = vpop.permute.xlu0 %9375
    %vm9441 = vcmask 224448
    %9442 = vst.msk [vmem:[#allocation5] sm:$0xf] %vm9441, %v9250
    %9443 = vst.msk [vmem:[#allocation5 + $0x4] sm:$0xf] %vm9441, %v9252
    %9444 = vst.msk [vmem:[#allocation5 + $0x8] sm:$0xf] %vm9441, %v9254
    %9445 = vst.msk [vmem:[#allocation5 + $0xc] sm:$0xf] %vm9441, %v9256
    %9446 = vst.msk [vmem:[#allocation5 + $0x10] sm:$0xf] %vm9441, %v9258
    %9447 = vst.msk [vmem:[#allocation5 + $0x14] sm:$0xf] %vm9441, %v9260
    %9448 = vst.msk [vmem:[#allocation5 + $0x18] sm:$0xf] %vm9441, %v9262
    %9449 = vst.msk [vmem:[#allocation5 + $0x1c] sm:$0xf] %vm9441, %v9264
    %9450 = vst.msk [vmem:[#allocation5 + $0x20] sm:$0xf] %vm9441, %v9266
    %9451 = vst.msk [vmem:[#allocation5 + $0x24] sm:$0xf] %vm9441, %v9268
    %9452 = vst.msk [vmem:[#allocation5 + $0x28] sm:$0xf] %vm9441, %v9270
    %9453 = vst.msk [vmem:[#allocation5 + $0x2c] sm:$0xf] %vm9441, %v9272
    %9454 = vst.msk [vmem:[#allocation5 + $0x30] sm:$0xf] %vm9441, %v9274
    %9455 = vst.msk [vmem:[#allocation5 + $0x34] sm:$0xf] %vm9441, %v9276
    %9456 = vst.msk [vmem:[#allocation5 + $0x38] sm:$0xf] %vm9441, %v9278
    %9457 = vst.msk [vmem:[#allocation5 + $0x3c] sm:$0xf] %vm9441, %v9280
    %9458 = vst.msk [vmem:[#allocation5 + $0x40] sm:$0xf] %vm9441, %v9282
    %9459 = vst.msk [vmem:[#allocation5 + $0x44] sm:$0xf] %vm9441, %v9284
    %9460 = vst.msk [vmem:[#allocation5 + $0x48] sm:$0xf] %vm9441, %v9286
    %9461 = vst.msk [vmem:[#allocation5 + $0x4c] sm:$0xf] %vm9441, %v9288
    %9462 = vst.msk [vmem:[#allocation5 + $0x50] sm:$0xf] %vm9441, %v9290
    %9463 = vst.msk [vmem:[#allocation5 + $0x54] sm:$0xf] %vm9441, %v9292
    %9464 = vst.msk [vmem:[#allocation5 + $0x58] sm:$0xf] %vm9441, %v9294
    %9465 = vst.msk [vmem:[#allocation5 + $0x5c] sm:$0xf] %vm9441, %v9296
    %9466 = vst.msk [vmem:[#allocation5 + $0x60] sm:$0xf] %vm9441, %v9298
    %9467 = vst.msk [vmem:[#allocation5 + $0x64] sm:$0xf] %vm9441, %v9300
    %9468 = vst.msk [vmem:[#allocation5 + $0x68] sm:$0xf] %vm9441, %v9302
    %9469 = vst.msk [vmem:[#allocation5 + $0x6c] sm:$0xf] %vm9441, %v9304
    %9470 = vst.msk [vmem:[#allocation5 + $0x70] sm:$0xf] %vm9441, %v9306
    %9471 = vst.msk [vmem:[#allocation5 + $0x74] sm:$0xf] %vm9441, %v9308
    %9472 = vst.msk [vmem:[#allocation5 + $0x78] sm:$0xf] %vm9441, %v9310
    %9473 = vst.msk [vmem:[#allocation5 + $0x7c] sm:$0xf] %vm9441, %v9312
    %9474 = vst.msk [vmem:[#allocation5 + $0x80] sm:$0xf] %vm9441, %v9314
    %9475 = vst.msk [vmem:[#allocation5 + $0x84] sm:$0xf] %vm9441, %v9316
    %9476 = vst.msk [vmem:[#allocation5 + $0x88] sm:$0xf] %vm9441, %v9318
    %9477 = vst.msk [vmem:[#allocation5 + $0x8c] sm:$0xf] %vm9441, %v9320
    %9478 = vst.msk [vmem:[#allocation5 + $0x90] sm:$0xf] %vm9441, %v9322
    %9479 = vst.msk [vmem:[#allocation5 + $0x94] sm:$0xf] %vm9441, %v9324
    %9480 = vst.msk [vmem:[#allocation5 + $0x98] sm:$0xf] %vm9441, %v9326
    %9481 = vst.msk [vmem:[#allocation5 + $0x9c] sm:$0xf] %vm9441, %v9328
    %9482 = vst.msk [vmem:[#allocation5 + $0xa0] sm:$0xf] %vm9441, %v9330
    %9483 = vst.msk [vmem:[#allocation5 + $0xa4] sm:$0xf] %vm9441, %v9332
    %9484 = vst.msk [vmem:[#allocation5 + $0xa8] sm:$0xf] %vm9441, %v9334
    %9485 = vst.msk [vmem:[#allocation5 + $0xac] sm:$0xf] %vm9441, %v9336
    %9486 = vst.msk [vmem:[#allocation5 + $0xb0] sm:$0xf] %vm9441, %v9338
    %9487 = vst.msk [vmem:[#allocation5 + $0xb4] sm:$0xf] %vm9441, %v9340
    %9488 = vst.msk [vmem:[#allocation5 + $0xb8] sm:$0xf] %vm9441, %v9342
    %9489 = vst.msk [vmem:[#allocation5 + $0xbc] sm:$0xf] %vm9441, %v9344
    %9490 = vst.msk [vmem:[#allocation5 + $0xc0] sm:$0xf] %vm9441, %v9346
    %9491 = vst.msk [vmem:[#allocation5 + $0xc4] sm:$0xf] %vm9441, %v9348
    %9492 = vst.msk [vmem:[#allocation5 + $0xc8] sm:$0xf] %vm9441, %v9350
    %9493 = vst.msk [vmem:[#allocation5 + $0xcc] sm:$0xf] %vm9441, %v9352
    %9494 = vst.msk [vmem:[#allocation5 + $0xd0] sm:$0xf] %vm9441, %v9354
    %9495 = vst.msk [vmem:[#allocation5 + $0xd4] sm:$0xf] %vm9441, %v9356
    %9496 = vst.msk [vmem:[#allocation5 + $0xd8] sm:$0xf] %vm9441, %v9358
    %9497 = vst.msk [vmem:[#allocation5 + $0xdc] sm:$0xf] %vm9441, %v9360
    %9498 = vst.msk [vmem:[#allocation5 + $0xe0] sm:$0xf] %vm9441, %v9362
    %9499 = vst.msk [vmem:[#allocation5 + $0xe4] sm:$0xf] %vm9441, %v9364
    %9500 = vst.msk [vmem:[#allocation5 + $0xe8] sm:$0xf] %vm9441, %v9366
    %9501 = vst.msk [vmem:[#allocation5 + $0xec] sm:$0xf] %vm9441, %v9368
    %9502 = vst.msk [vmem:[#allocation5 + $0xf0] sm:$0xf] %vm9441, %v9370
    %9503 = vst.msk [vmem:[#allocation5 + $0xf4] sm:$0xf] %vm9441, %v9372
    %9504 = vst.msk [vmem:[#allocation5 + $0xf8] sm:$0xf] %vm9441, %v9374
    %9505 = vst.msk [vmem:[#allocation5 + $0xfc] sm:$0xf] %vm9441, %v9376
    %s9506 = scalar_lea.vmem [#allocation4], 304
    %v9507 = vld [vmem:[%s9506] sm:$0xf]
    %v9508 = vld [vmem:[%s9506 + $0x4] sm:$0xf]
    %v9509 = vld [vmem:[%s9506 + $0x8] sm:$0xf]
    %v9510 = vld [vmem:[%s9506 + $0xc] sm:$0xf]
    %v9511 = vld [vmem:[%s9506 + $0x10] sm:$0xf]
    %v9512 = vld [vmem:[%s9506 + $0x14] sm:$0xf]
    %v9513 = vld [vmem:[%s9506 + $0x18] sm:$0xf]
    %v9514 = vld [vmem:[%s9506 + $0x1c] sm:$0xf]
    %v9515 = vld [vmem:[%s9506 + $0x20] sm:$0xf]
    %v9516 = vld [vmem:[%s9506 + $0x24] sm:$0xf]
    %v9517 = vld [vmem:[%s9506 + $0x28] sm:$0xf]
    %v9518 = vld [vmem:[%s9506 + $0x2c] sm:$0xf]
    %v9519 = vld [vmem:[%s9506 + $0x30] sm:$0xf]
    %v9520 = vld [vmem:[%s9506 + $0x34] sm:$0xf]
    %v9521 = vld [vmem:[%s9506 + $0x38] sm:$0xf]
    %v9522 = vld [vmem:[%s9506 + $0x3c] sm:$0xf]
    %v9523 = vld [vmem:[%s9506 + $0x40] sm:$0xf]
    %v9524 = vld [vmem:[%s9506 + $0x44] sm:$0xf]
    %v9525 = vld [vmem:[%s9506 + $0x48] sm:$0xf]
    %v9526 = vld [vmem:[%s9506 + $0x4c] sm:$0xf]
    %v9527 = vld [vmem:[%s9506 + $0x50] sm:$0xf]
    %v9528 = vld [vmem:[%s9506 + $0x54] sm:$0xf]
    %v9529 = vld [vmem:[%s9506 + $0x58] sm:$0xf]
    %v9530 = vld [vmem:[%s9506 + $0x5c] sm:$0xf]
    %v9531 = vld [vmem:[%s9506 + $0x60] sm:$0xf]
    %v9532 = vld [vmem:[%s9506 + $0x64] sm:$0xf]
    %v9533 = vld [vmem:[%s9506 + $0x68] sm:$0xf]
    %v9534 = vld [vmem:[%s9506 + $0x6c] sm:$0xf]
    %v9535 = vld [vmem:[%s9506 + $0x70] sm:$0xf]
    %v9536 = vld [vmem:[%s9506 + $0x74] sm:$0xf]
    %v9537 = vld [vmem:[%s9506 + $0x78] sm:$0xf]
    %v9538 = vld [vmem:[%s9506 + $0x7c] sm:$0xf]
    %v9539 = vld [vmem:[%s9506 + $0x90] sm:$0xf]
    %v9540 = vld [vmem:[%s9506 + $0x94] sm:$0xf]
    %v9541 = vld [vmem:[%s9506 + $0x98] sm:$0xf]
    %v9542 = vld [vmem:[%s9506 + $0x9c] sm:$0xf]
    %v9543 = vld [vmem:[%s9506 + $0xa0] sm:$0xf]
    %v9544 = vld [vmem:[%s9506 + $0xa4] sm:$0xf]
    %v9545 = vld [vmem:[%s9506 + $0xa8] sm:$0xf]
    %v9546 = vld [vmem:[%s9506 + $0xac] sm:$0xf]
    %v9547 = vld [vmem:[%s9506 + $0xb0] sm:$0xf]
    %v9548 = vld [vmem:[%s9506 + $0xb4] sm:$0xf]
    %v9549 = vld [vmem:[%s9506 + $0xb8] sm:$0xf]
    %v9550 = vld [vmem:[%s9506 + $0xbc] sm:$0xf]
    %v9551 = vld [vmem:[%s9506 + $0xc0] sm:$0xf]
    %v9552 = vld [vmem:[%s9506 + $0xc4] sm:$0xf]
    %v9553 = vld [vmem:[%s9506 + $0xc8] sm:$0xf]
    %v9554 = vld [vmem:[%s9506 + $0xcc] sm:$0xf]
    %v9555 = vld [vmem:[%s9506 + $0xd0] sm:$0xf]
    %v9556 = vld [vmem:[%s9506 + $0xd4] sm:$0xf]
    %v9557 = vld [vmem:[%s9506 + $0xd8] sm:$0xf]
    %v9558 = vld [vmem:[%s9506 + $0xdc] sm:$0xf]
    %v9559 = vld [vmem:[%s9506 + $0xe0] sm:$0xf]
    %v9560 = vld [vmem:[%s9506 + $0xe4] sm:$0xf]
    %v9561 = vld [vmem:[%s9506 + $0xe8] sm:$0xf]
    %v9562 = vld [vmem:[%s9506 + $0xec] sm:$0xf]
    %v9563 = vld [vmem:[%s9506 + $0xf0] sm:$0xf]
    %v9564 = vld [vmem:[%s9506 + $0xf4] sm:$0xf]
    %v9565 = vld [vmem:[%s9506 + $0xf8] sm:$0xf]
    %v9566 = vld [vmem:[%s9506 + $0xfc] sm:$0xf]
    %v9567 = vld [vmem:[%s9506 + $0x100] sm:$0xf]
    %v9568 = vld [vmem:[%s9506 + $0x104] sm:$0xf]
    %v9569 = vld [vmem:[%s9506 + $0x108] sm:$0xf]
    %v9570 = vld [vmem:[%s9506 + $0x10c] sm:$0xf]
    %9635 = vrot.lane.b32.xlu0 %v9507, 28
    %v9636 = vpop.permute.xlu0 %9635
    %9637 = vrot.lane.b32.xlu0 %v9508, 28
    %v9638 = vpop.permute.xlu0 %9637
    %9639 = vrot.lane.b32.xlu0 %v9509, 28
    %v9640 = vpop.permute.xlu0 %9639
    %9641 = vrot.lane.b32.xlu0 %v9510, 28
    %v9642 = vpop.permute.xlu0 %9641
    %9643 = vrot.lane.b32.xlu0 %v9511, 28
    %v9644 = vpop.permute.xlu0 %9643
    %9645 = vrot.lane.b32.xlu0 %v9512, 28
    %v9646 = vpop.permute.xlu0 %9645
    %9647 = vrot.lane.b32.xlu0 %v9513, 28
    %v9648 = vpop.permute.xlu0 %9647
    %9649 = vrot.lane.b32.xlu0 %v9514, 28
    %v9650 = vpop.permute.xlu0 %9649
    %9651 = vrot.lane.b32.xlu0 %v9515, 28
    %v9652 = vpop.permute.xlu0 %9651
    %9653 = vrot.lane.b32.xlu0 %v9516, 28
    %v9654 = vpop.permute.xlu0 %9653
    %9655 = vrot.lane.b32.xlu0 %v9517, 28
    %v9656 = vpop.permute.xlu0 %9655
    %9657 = vrot.lane.b32.xlu0 %v9518, 28
    %v9658 = vpop.permute.xlu0 %9657
    %9659 = vrot.lane.b32.xlu0 %v9519, 28
    %v9660 = vpop.permute.xlu0 %9659
    %9661 = vrot.lane.b32.xlu0 %v9520, 28
    %v9662 = vpop.permute.xlu0 %9661
    %9663 = vrot.lane.b32.xlu0 %v9521, 28
    %v9664 = vpop.permute.xlu0 %9663
    %9665 = vrot.lane.b32.xlu0 %v9522, 28
    %v9666 = vpop.permute.xlu0 %9665
    %9667 = vrot.lane.b32.xlu0 %v9523, 28
    %v9668 = vpop.permute.xlu0 %9667
    %9669 = vrot.lane.b32.xlu0 %v9524, 28
    %v9670 = vpop.permute.xlu0 %9669
    %9671 = vrot.lane.b32.xlu0 %v9525, 28
    %v9672 = vpop.permute.xlu0 %9671
    %9673 = vrot.lane.b32.xlu0 %v9526, 28
    %v9674 = vpop.permute.xlu0 %9673
    %9675 = vrot.lane.b32.xlu0 %v9527, 28
    %v9676 = vpop.permute.xlu0 %9675
    %9677 = vrot.lane.b32.xlu0 %v9528, 28
    %v9678 = vpop.permute.xlu0 %9677
    %9679 = vrot.lane.b32.xlu0 %v9529, 28
    %v9680 = vpop.permute.xlu0 %9679
    %9681 = vrot.lane.b32.xlu0 %v9530, 28
    %v9682 = vpop.permute.xlu0 %9681
    %9683 = vrot.lane.b32.xlu0 %v9531, 28
    %v9684 = vpop.permute.xlu0 %9683
    %9685 = vrot.lane.b32.xlu0 %v9532, 28
    %v9686 = vpop.permute.xlu0 %9685
    %9687 = vrot.lane.b32.xlu0 %v9533, 28
    %v9688 = vpop.permute.xlu0 %9687
    %9689 = vrot.lane.b32.xlu0 %v9534, 28
    %v9690 = vpop.permute.xlu0 %9689
    %9691 = vrot.lane.b32.xlu0 %v9535, 28
    %v9692 = vpop.permute.xlu0 %9691
    %9693 = vrot.lane.b32.xlu0 %v9536, 28
    %v9694 = vpop.permute.xlu0 %9693
    %9695 = vrot.lane.b32.xlu0 %v9537, 28
    %v9696 = vpop.permute.xlu0 %9695
    %9697 = vrot.lane.b32.xlu0 %v9538, 28
    %v9698 = vpop.permute.xlu0 %9697
    %9699 = vrot.lane.b32.xlu0 %v9539, 28
    %v9700 = vpop.permute.xlu0 %9699
    %9701 = vrot.lane.b32.xlu0 %v9540, 28
    %v9702 = vpop.permute.xlu0 %9701
    %9703 = vrot.lane.b32.xlu0 %v9541, 28
    %v9704 = vpop.permute.xlu0 %9703
    %9705 = vrot.lane.b32.xlu0 %v9542, 28
    %v9706 = vpop.permute.xlu0 %9705
    %9707 = vrot.lane.b32.xlu0 %v9543, 28
    %v9708 = vpop.permute.xlu0 %9707
    %9709 = vrot.lane.b32.xlu0 %v9544, 28
    %v9710 = vpop.permute.xlu0 %9709
    %9711 = vrot.lane.b32.xlu0 %v9545, 28
    %v9712 = vpop.permute.xlu0 %9711
    %9713 = vrot.lane.b32.xlu0 %v9546, 28
    %v9714 = vpop.permute.xlu0 %9713
    %9715 = vrot.lane.b32.xlu0 %v9547, 28
    %v9716 = vpop.permute.xlu0 %9715
    %9717 = vrot.lane.b32.xlu0 %v9548, 28
    %v9718 = vpop.permute.xlu0 %9717
    %9719 = vrot.lane.b32.xlu0 %v9549, 28
    %v9720 = vpop.permute.xlu0 %9719
    %9721 = vrot.lane.b32.xlu0 %v9550, 28
    %v9722 = vpop.permute.xlu0 %9721
    %9723 = vrot.lane.b32.xlu0 %v9551, 28
    %v9724 = vpop.permute.xlu0 %9723
    %9725 = vrot.lane.b32.xlu0 %v9552, 28
    %v9726 = vpop.permute.xlu0 %9725
    %9727 = vrot.lane.b32.xlu0 %v9553, 28
    %v9728 = vpop.permute.xlu0 %9727
    %9729 = vrot.lane.b32.xlu0 %v9554, 28
    %v9730 = vpop.permute.xlu0 %9729
    %9731 = vrot.lane.b32.xlu0 %v9555, 28
    %v9732 = vpop.permute.xlu0 %9731
    %9733 = vrot.lane.b32.xlu0 %v9556, 28
    %v9734 = vpop.permute.xlu0 %9733
    %9735 = vrot.lane.b32.xlu0 %v9557, 28
    %v9736 = vpop.permute.xlu0 %9735
    %9737 = vrot.lane.b32.xlu0 %v9558, 28
    %v9738 = vpop.permute.xlu0 %9737
    %9739 = vrot.lane.b32.xlu0 %v9559, 28
    %v9740 = vpop.permute.xlu0 %9739
    %9741 = vrot.lane.b32.xlu0 %v9560, 28
    %v9742 = vpop.permute.xlu0 %9741
    %9743 = vrot.lane.b32.xlu0 %v9561, 28
    %v9744 = vpop.permute.xlu0 %9743
    %9745 = vrot.lane.b32.xlu0 %v9562, 28
    %v9746 = vpop.permute.xlu0 %9745
    %9747 = vrot.lane.b32.xlu0 %v9563, 28
    %v9748 = vpop.permute.xlu0 %9747
    %9749 = vrot.lane.b32.xlu0 %v9564, 28
    %v9750 = vpop.permute.xlu0 %9749
    %9751 = vrot.lane.b32.xlu0 %v9565, 28
    %v9752 = vpop.permute.xlu0 %9751
    %9753 = vrot.lane.b32.xlu0 %v9566, 28
    %v9754 = vpop.permute.xlu0 %9753
    %9755 = vrot.lane.b32.xlu0 %v9567, 28
    %v9756 = vpop.permute.xlu0 %9755
    %9757 = vrot.lane.b32.xlu0 %v9568, 28
    %v9758 = vpop.permute.xlu0 %9757
    %9759 = vrot.lane.b32.xlu0 %v9569, 28
    %v9760 = vpop.permute.xlu0 %9759
    %9761 = vrot.lane.b32.xlu0 %v9570, 28
    %v9762 = vpop.permute.xlu0 %9761
    %vm9827 = vcmask 257248
    %9828 = vst.msk [vmem:[#allocation5] sm:$0xf] %vm9827, %v9636
    %9829 = vst.msk [vmem:[#allocation5 + $0x4] sm:$0xf] %vm9827, %v9638
    %9830 = vst.msk [vmem:[#allocation5 + $0x8] sm:$0xf] %vm9827, %v9640
    %9831 = vst.msk [vmem:[#allocation5 + $0xc] sm:$0xf] %vm9827, %v9642
    %9832 = vst.msk [vmem:[#allocation5 + $0x10] sm:$0xf] %vm9827, %v9644
    %9833 = vst.msk [vmem:[#allocation5 + $0x14] sm:$0xf] %vm9827, %v9646
    %9834 = vst.msk [vmem:[#allocation5 + $0x18] sm:$0xf] %vm9827, %v9648
    %9835 = vst.msk [vmem:[#allocation5 + $0x1c] sm:$0xf] %vm9827, %v9650
    %9836 = vst.msk [vmem:[#allocation5 + $0x20] sm:$0xf] %vm9827, %v9652
    %9837 = vst.msk [vmem:[#allocation5 + $0x24] sm:$0xf] %vm9827, %v9654
    %9838 = vst.msk [vmem:[#allocation5 + $0x28] sm:$0xf] %vm9827, %v9656
    %9839 = vst.msk [vmem:[#allocation5 + $0x2c] sm:$0xf] %vm9827, %v9658
    %9840 = vst.msk [vmem:[#allocation5 + $0x30] sm:$0xf] %vm9827, %v9660
    %9841 = vst.msk [vmem:[#allocation5 + $0x34] sm:$0xf] %vm9827, %v9662
    %9842 = vst.msk [vmem:[#allocation5 + $0x38] sm:$0xf] %vm9827, %v9664
    %9843 = vst.msk [vmem:[#allocation5 + $0x3c] sm:$0xf] %vm9827, %v9666
    %9844 = vst.msk [vmem:[#allocation5 + $0x40] sm:$0xf] %vm9827, %v9668
    %9845 = vst.msk [vmem:[#allocation5 + $0x44] sm:$0xf] %vm9827, %v9670
    %9846 = vst.msk [vmem:[#allocation5 + $0x48] sm:$0xf] %vm9827, %v9672
    %9847 = vst.msk [vmem:[#allocation5 + $0x4c] sm:$0xf] %vm9827, %v9674
    %9848 = vst.msk [vmem:[#allocation5 + $0x50] sm:$0xf] %vm9827, %v9676
    %9849 = vst.msk [vmem:[#allocation5 + $0x54] sm:$0xf] %vm9827, %v9678
    %9850 = vst.msk [vmem:[#allocation5 + $0x58] sm:$0xf] %vm9827, %v9680
    %9851 = vst.msk [vmem:[#allocation5 + $0x5c] sm:$0xf] %vm9827, %v9682
    %9852 = vst.msk [vmem:[#allocation5 + $0x60] sm:$0xf] %vm9827, %v9684
    %9853 = vst.msk [vmem:[#allocation5 + $0x64] sm:$0xf] %vm9827, %v9686
    %9854 = vst.msk [vmem:[#allocation5 + $0x68] sm:$0xf] %vm9827, %v9688
    %9855 = vst.msk [vmem:[#allocation5 + $0x6c] sm:$0xf] %vm9827, %v9690
    %9856 = vst.msk [vmem:[#allocation5 + $0x70] sm:$0xf] %vm9827, %v9692
    %9857 = vst.msk [vmem:[#allocation5 + $0x74] sm:$0xf] %vm9827, %v9694
    %9858 = vst.msk [vmem:[#allocation5 + $0x78] sm:$0xf] %vm9827, %v9696
    %9859 = vst.msk [vmem:[#allocation5 + $0x7c] sm:$0xf] %vm9827, %v9698
    %9860 = vst.msk [vmem:[#allocation5 + $0x80] sm:$0xf] %vm9827, %v9700
    %9861 = vst.msk [vmem:[#allocation5 + $0x84] sm:$0xf] %vm9827, %v9702
    %9862 = vst.msk [vmem:[#allocation5 + $0x88] sm:$0xf] %vm9827, %v9704
    %9863 = vst.msk [vmem:[#allocation5 + $0x8c] sm:$0xf] %vm9827, %v9706
    %9864 = vst.msk [vmem:[#allocation5 + $0x90] sm:$0xf] %vm9827, %v9708
    %9865 = vst.msk [vmem:[#allocation5 + $0x94] sm:$0xf] %vm9827, %v9710
    %9866 = vst.msk [vmem:[#allocation5 + $0x98] sm:$0xf] %vm9827, %v9712
    %9867 = vst.msk [vmem:[#allocation5 + $0x9c] sm:$0xf] %vm9827, %v9714
    %9868 = vst.msk [vmem:[#allocation5 + $0xa0] sm:$0xf] %vm9827, %v9716
    %9869 = vst.msk [vmem:[#allocation5 + $0xa4] sm:$0xf] %vm9827, %v9718
    %9870 = vst.msk [vmem:[#allocation5 + $0xa8] sm:$0xf] %vm9827, %v9720
    %9871 = vst.msk [vmem:[#allocation5 + $0xac] sm:$0xf] %vm9827, %v9722
    %9872 = vst.msk [vmem:[#allocation5 + $0xb0] sm:$0xf] %vm9827, %v9724
    %9873 = vst.msk [vmem:[#allocation5 + $0xb4] sm:$0xf] %vm9827, %v9726
    %9874 = vst.msk [vmem:[#allocation5 + $0xb8] sm:$0xf] %vm9827, %v9728
    %9875 = vst.msk [vmem:[#allocation5 + $0xbc] sm:$0xf] %vm9827, %v9730
    %9876 = vst.msk [vmem:[#allocation5 + $0xc0] sm:$0xf] %vm9827, %v9732
    %9877 = vst.msk [vmem:[#allocation5 + $0xc4] sm:$0xf] %vm9827, %v9734
    %9878 = vst.msk [vmem:[#allocation5 + $0xc8] sm:$0xf] %vm9827, %v9736
    %9879 = vst.msk [vmem:[#allocation5 + $0xcc] sm:$0xf] %vm9827, %v9738
    %9880 = vst.msk [vmem:[#allocation5 + $0xd0] sm:$0xf] %vm9827, %v9740
    %9881 = vst.msk [vmem:[#allocation5 + $0xd4] sm:$0xf] %vm9827, %v9742
    %9882 = vst.msk [vmem:[#allocation5 + $0xd8] sm:$0xf] %vm9827, %v9744
    %9883 = vst.msk [vmem:[#allocation5 + $0xdc] sm:$0xf] %vm9827, %v9746
    %9884 = vst.msk [vmem:[#allocation5 + $0xe0] sm:$0xf] %vm9827, %v9748
    %9885 = vst.msk [vmem:[#allocation5 + $0xe4] sm:$0xf] %vm9827, %v9750
    %9886 = vst.msk [vmem:[#allocation5 + $0xe8] sm:$0xf] %vm9827, %v9752
    %9887 = vst.msk [vmem:[#allocation5 + $0xec] sm:$0xf] %vm9827, %v9754
    %9888 = vst.msk [vmem:[#allocation5 + $0xf0] sm:$0xf] %vm9827, %v9756
    %9889 = vst.msk [vmem:[#allocation5 + $0xf4] sm:$0xf] %vm9827, %v9758
    %9890 = vst.msk [vmem:[#allocation5 + $0xf8] sm:$0xf] %vm9827, %v9760
    %9891 = vst.msk [vmem:[#allocation5 + $0xfc] sm:$0xf] %vm9827, %v9762
    %s9892 = scalar_lea.vmem [#allocation4], 592
    %v9893 = vld [vmem:[%s9892] sm:$0xf]
    %v9894 = vld [vmem:[%s9892 + $0x4] sm:$0xf]
    %v9895 = vld [vmem:[%s9892 + $0x8] sm:$0xf]
    %v9896 = vld [vmem:[%s9892 + $0xc] sm:$0xf]
    %v9897 = vld [vmem:[%s9892 + $0x10] sm:$0xf]
    %v9898 = vld [vmem:[%s9892 + $0x14] sm:$0xf]
    %v9899 = vld [vmem:[%s9892 + $0x18] sm:$0xf]
    %v9900 = vld [vmem:[%s9892 + $0x1c] sm:$0xf]
    %v9901 = vld [vmem:[%s9892 + $0x20] sm:$0xf]
    %v9902 = vld [vmem:[%s9892 + $0x24] sm:$0xf]
    %v9903 = vld [vmem:[%s9892 + $0x28] sm:$0xf]
    %v9904 = vld [vmem:[%s9892 + $0x2c] sm:$0xf]
    %v9905 = vld [vmem:[%s9892 + $0x30] sm:$0xf]
    %v9906 = vld [vmem:[%s9892 + $0x34] sm:$0xf]
    %v9907 = vld [vmem:[%s9892 + $0x38] sm:$0xf]
    %v9908 = vld [vmem:[%s9892 + $0x3c] sm:$0xf]
    %v9909 = vld [vmem:[%s9892 + $0x40] sm:$0xf]
    %v9910 = vld [vmem:[%s9892 + $0x44] sm:$0xf]
    %v9911 = vld [vmem:[%s9892 + $0x48] sm:$0xf]
    %v9912 = vld [vmem:[%s9892 + $0x4c] sm:$0xf]
    %v9913 = vld [vmem:[%s9892 + $0x50] sm:$0xf]
    %v9914 = vld [vmem:[%s9892 + $0x54] sm:$0xf]
    %v9915 = vld [vmem:[%s9892 + $0x58] sm:$0xf]
    %v9916 = vld [vmem:[%s9892 + $0x5c] sm:$0xf]
    %v9917 = vld [vmem:[%s9892 + $0x60] sm:$0xf]
    %v9918 = vld [vmem:[%s9892 + $0x64] sm:$0xf]
    %v9919 = vld [vmem:[%s9892 + $0x68] sm:$0xf]
    %v9920 = vld [vmem:[%s9892 + $0x6c] sm:$0xf]
    %v9921 = vld [vmem:[%s9892 + $0x70] sm:$0xf]
    %v9922 = vld [vmem:[%s9892 + $0x74] sm:$0xf]
    %v9923 = vld [vmem:[%s9892 + $0x78] sm:$0xf]
    %v9924 = vld [vmem:[%s9892 + $0x7c] sm:$0xf]
    %v9925 = vld [vmem:[%s9892 + $0x90] sm:$0xf]
    %v9926 = vld [vmem:[%s9892 + $0x94] sm:$0xf]
    %v9927 = vld [vmem:[%s9892 + $0x98] sm:$0xf]
    %v9928 = vld [vmem:[%s9892 + $0x9c] sm:$0xf]
    %v9929 = vld [vmem:[%s9892 + $0xa0] sm:$0xf]
    %v9930 = vld [vmem:[%s9892 + $0xa4] sm:$0xf]
    %v9931 = vld [vmem:[%s9892 + $0xa8] sm:$0xf]
    %v9932 = vld [vmem:[%s9892 + $0xac] sm:$0xf]
    %v9933 = vld [vmem:[%s9892 + $0xb0] sm:$0xf]
    %v9934 = vld [vmem:[%s9892 + $0xb4] sm:$0xf]
    %v9935 = vld [vmem:[%s9892 + $0xb8] sm:$0xf]
    %v9936 = vld [vmem:[%s9892 + $0xbc] sm:$0xf]
    %v9937 = vld [vmem:[%s9892 + $0xc0] sm:$0xf]
    %v9938 = vld [vmem:[%s9892 + $0xc4] sm:$0xf]
    %v9939 = vld [vmem:[%s9892 + $0xc8] sm:$0xf]
    %v9940 = vld [vmem:[%s9892 + $0xcc] sm:$0xf]
    %v9941 = vld [vmem:[%s9892 + $0xd0] sm:$0xf]
    %v9942 = vld [vmem:[%s9892 + $0xd4] sm:$0xf]
    %v9943 = vld [vmem:[%s9892 + $0xd8] sm:$0xf]
    %v9944 = vld [vmem:[%s9892 + $0xdc] sm:$0xf]
    %v9945 = vld [vmem:[%s9892 + $0xe0] sm:$0xf]
    %v9946 = vld [vmem:[%s9892 + $0xe4] sm:$0xf]
    %v9947 = vld [vmem:[%s9892 + $0xe8] sm:$0xf]
    %v9948 = vld [vmem:[%s9892 + $0xec] sm:$0xf]
    %v9949 = vld [vmem:[%s9892 + $0xf0] sm:$0xf]
    %v9950 = vld [vmem:[%s9892 + $0xf4] sm:$0xf]
    %v9951 = vld [vmem:[%s9892 + $0xf8] sm:$0xf]
    %v9952 = vld [vmem:[%s9892 + $0xfc] sm:$0xf]
    %v9953 = vld [vmem:[%s9892 + $0x100] sm:$0xf]
    %v9954 = vld [vmem:[%s9892 + $0x104] sm:$0xf]
    %v9955 = vld [vmem:[%s9892 + $0x108] sm:$0xf]
    %v9956 = vld [vmem:[%s9892 + $0x10c] sm:$0xf]
    %10021 = vrot.lane.b32.xlu0 %v9893, 32
    %v10022 = vpop.permute.xlu0 %10021
    %10023 = vrot.lane.b32.xlu0 %v9894, 32
    %v10024 = vpop.permute.xlu0 %10023
    %10025 = vrot.lane.b32.xlu0 %v9895, 32
    %v10026 = vpop.permute.xlu0 %10025
    %10027 = vrot.lane.b32.xlu0 %v9896, 32
    %v10028 = vpop.permute.xlu0 %10027
    %10029 = vrot.lane.b32.xlu0 %v9897, 32
    %v10030 = vpop.permute.xlu0 %10029
    %10031 = vrot.lane.b32.xlu0 %v9898, 32
    %v10032 = vpop.permute.xlu0 %10031
    %10033 = vrot.lane.b32.xlu0 %v9899, 32
    %v10034 = vpop.permute.xlu0 %10033
    %10035 = vrot.lane.b32.xlu0 %v9900, 32
    %v10036 = vpop.permute.xlu0 %10035
    %10037 = vrot.lane.b32.xlu0 %v9901, 32
    %v10038 = vpop.permute.xlu0 %10037
    %10039 = vrot.lane.b32.xlu0 %v9902, 32
    %v10040 = vpop.permute.xlu0 %10039
    %10041 = vrot.lane.b32.xlu0 %v9903, 32
    %v10042 = vpop.permute.xlu0 %10041
    %10043 = vrot.lane.b32.xlu0 %v9904, 32
    %v10044 = vpop.permute.xlu0 %10043
    %10045 = vrot.lane.b32.xlu0 %v9905, 32
    %v10046 = vpop.permute.xlu0 %10045
    %10047 = vrot.lane.b32.xlu0 %v9906, 32
    %v10048 = vpop.permute.xlu0 %10047
    %10049 = vrot.lane.b32.xlu0 %v9907, 32
    %v10050 = vpop.permute.xlu0 %10049
    %10051 = vrot.lane.b32.xlu0 %v9908, 32
    %v10052 = vpop.permute.xlu0 %10051
    %10053 = vrot.lane.b32.xlu0 %v9909, 32
    %v10054 = vpop.permute.xlu0 %10053
    %10055 = vrot.lane.b32.xlu0 %v9910, 32
    %v10056 = vpop.permute.xlu0 %10055
    %10057 = vrot.lane.b32.xlu0 %v9911, 32
    %v10058 = vpop.permute.xlu0 %10057
    %10059 = vrot.lane.b32.xlu0 %v9912, 32
    %v10060 = vpop.permute.xlu0 %10059
    %10061 = vrot.lane.b32.xlu0 %v9913, 32
    %v10062 = vpop.permute.xlu0 %10061
    %10063 = vrot.lane.b32.xlu0 %v9914, 32
    %v10064 = vpop.permute.xlu0 %10063
    %10065 = vrot.lane.b32.xlu0 %v9915, 32
    %v10066 = vpop.permute.xlu0 %10065
    %10067 = vrot.lane.b32.xlu0 %v9916, 32
    %v10068 = vpop.permute.xlu0 %10067
    %10069 = vrot.lane.b32.xlu0 %v9917, 32
    %v10070 = vpop.permute.xlu0 %10069
    %10071 = vrot.lane.b32.xlu0 %v9918, 32
    %v10072 = vpop.permute.xlu0 %10071
    %10073 = vrot.lane.b32.xlu0 %v9919, 32
    %v10074 = vpop.permute.xlu0 %10073
    %10075 = vrot.lane.b32.xlu0 %v9920, 32
    %v10076 = vpop.permute.xlu0 %10075
    %10077 = vrot.lane.b32.xlu0 %v9921, 32
    %v10078 = vpop.permute.xlu0 %10077
    %10079 = vrot.lane.b32.xlu0 %v9922, 32
    %v10080 = vpop.permute.xlu0 %10079
    %10081 = vrot.lane.b32.xlu0 %v9923, 32
    %v10082 = vpop.permute.xlu0 %10081
    %10083 = vrot.lane.b32.xlu0 %v9924, 32
    %v10084 = vpop.permute.xlu0 %10083
    %10085 = vrot.lane.b32.xlu0 %v9925, 32
    %v10086 = vpop.permute.xlu0 %10085
    %10087 = vrot.lane.b32.xlu0 %v9926, 32
    %v10088 = vpop.permute.xlu0 %10087
    %10089 = vrot.lane.b32.xlu0 %v9927, 32
    %v10090 = vpop.permute.xlu0 %10089
    %10091 = vrot.lane.b32.xlu0 %v9928, 32
    %v10092 = vpop.permute.xlu0 %10091
    %10093 = vrot.lane.b32.xlu0 %v9929, 32
    %v10094 = vpop.permute.xlu0 %10093
    %10095 = vrot.lane.b32.xlu0 %v9930, 32
    %v10096 = vpop.permute.xlu0 %10095
    %10097 = vrot.lane.b32.xlu0 %v9931, 32
    %v10098 = vpop.permute.xlu0 %10097
    %10099 = vrot.lane.b32.xlu0 %v9932, 32
    %v10100 = vpop.permute.xlu0 %10099
    %10101 = vrot.lane.b32.xlu0 %v9933, 32
    %v10102 = vpop.permute.xlu0 %10101
    %10103 = vrot.lane.b32.xlu0 %v9934, 32
    %v10104 = vpop.permute.xlu0 %10103
    %10105 = vrot.lane.b32.xlu0 %v9935, 32
    %v10106 = vpop.permute.xlu0 %10105
    %10107 = vrot.lane.b32.xlu0 %v9936, 32
    %v10108 = vpop.permute.xlu0 %10107
    %10109 = vrot.lane.b32.xlu0 %v9937, 32
    %v10110 = vpop.permute.xlu0 %10109
    %10111 = vrot.lane.b32.xlu0 %v9938, 32
    %v10112 = vpop.permute.xlu0 %10111
    %10113 = vrot.lane.b32.xlu0 %v9939, 32
    %v10114 = vpop.permute.xlu0 %10113
    %10115 = vrot.lane.b32.xlu0 %v9940, 32
    %v10116 = vpop.permute.xlu0 %10115
    %10117 = vrot.lane.b32.xlu0 %v9941, 32
    %v10118 = vpop.permute.xlu0 %10117
    %10119 = vrot.lane.b32.xlu0 %v9942, 32
    %v10120 = vpop.permute.xlu0 %10119
    %10121 = vrot.lane.b32.xlu0 %v9943, 32
    %v10122 = vpop.permute.xlu0 %10121
    %10123 = vrot.lane.b32.xlu0 %v9944, 32
    %v10124 = vpop.permute.xlu0 %10123
    %10125 = vrot.lane.b32.xlu0 %v9945, 32
    %v10126 = vpop.permute.xlu0 %10125
    %10127 = vrot.lane.b32.xlu0 %v9946, 32
    %v10128 = vpop.permute.xlu0 %10127
    %10129 = vrot.lane.b32.xlu0 %v9947, 32
    %v10130 = vpop.permute.xlu0 %10129
    %10131 = vrot.lane.b32.xlu0 %v9948, 32
    %v10132 = vpop.permute.xlu0 %10131
    %10133 = vrot.lane.b32.xlu0 %v9949, 32
    %v10134 = vpop.permute.xlu0 %10133
    %10135 = vrot.lane.b32.xlu0 %v9950, 32
    %v10136 = vpop.permute.xlu0 %10135
    %10137 = vrot.lane.b32.xlu0 %v9951, 32
    %v10138 = vpop.permute.xlu0 %10137
    %10139 = vrot.lane.b32.xlu0 %v9952, 32
    %v10140 = vpop.permute.xlu0 %10139
    %10141 = vrot.lane.b32.xlu0 %v9953, 32
    %v10142 = vpop.permute.xlu0 %10141
    %10143 = vrot.lane.b32.xlu0 %v9954, 32
    %v10144 = vpop.permute.xlu0 %10143
    %10145 = vrot.lane.b32.xlu0 %v9955, 32
    %v10146 = vpop.permute.xlu0 %10145
    %10147 = vrot.lane.b32.xlu0 %v9956, 32
    %v10148 = vpop.permute.xlu0 %10147
    %vm10213 = vcmask 290048
    %10214 = vst.msk [vmem:[#allocation5] sm:$0xf] %vm10213, %v10022
    %10215 = vst.msk [vmem:[#allocation5 + $0x4] sm:$0xf] %vm10213, %v10024
    %10216 = vst.msk [vmem:[#allocation5 + $0x8] sm:$0xf] %vm10213, %v10026
    %10217 = vst.msk [vmem:[#allocation5 + $0xc] sm:$0xf] %vm10213, %v10028
    %10218 = vst.msk [vmem:[#allocation5 + $0x10] sm:$0xf] %vm10213, %v10030
    %10219 = vst.msk [vmem:[#allocation5 + $0x14] sm:$0xf] %vm10213, %v10032
    %10220 = vst.msk [vmem:[#allocation5 + $0x18] sm:$0xf] %vm10213, %v10034
    %10221 = vst.msk [vmem:[#allocation5 + $0x1c] sm:$0xf] %vm10213, %v10036
    %10222 = vst.msk [vmem:[#allocation5 + $0x20] sm:$0xf] %vm10213, %v10038
    %10223 = vst.msk [vmem:[#allocation5 + $0x24] sm:$0xf] %vm10213, %v10040
    %10224 = vst.msk [vmem:[#allocation5 + $0x28] sm:$0xf] %vm10213, %v10042
    %10225 = vst.msk [vmem:[#allocation5 + $0x2c] sm:$0xf] %vm10213, %v10044
    %10226 = vst.msk [vmem:[#allocation5 + $0x30] sm:$0xf] %vm10213, %v10046
    %10227 = vst.msk [vmem:[#allocation5 + $0x34] sm:$0xf] %vm10213, %v10048
    %10228 = vst.msk [vmem:[#allocation5 + $0x38] sm:$0xf] %vm10213, %v10050
    %10229 = vst.msk [vmem:[#allocation5 + $0x3c] sm:$0xf] %vm10213, %v10052
    %10230 = vst.msk [vmem:[#allocation5 + $0x40] sm:$0xf] %vm10213, %v10054
    %10231 = vst.msk [vmem:[#allocation5 + $0x44] sm:$0xf] %vm10213, %v10056
    %10232 = vst.msk [vmem:[#allocation5 + $0x48] sm:$0xf] %vm10213, %v10058
    %10233 = vst.msk [vmem:[#allocation5 + $0x4c] sm:$0xf] %vm10213, %v10060
    %10234 = vst.msk [vmem:[#allocation5 + $0x50] sm:$0xf] %vm10213, %v10062
    %10235 = vst.msk [vmem:[#allocation5 + $0x54] sm:$0xf] %vm10213, %v10064
    %10236 = vst.msk [vmem:[#allocation5 + $0x58] sm:$0xf] %vm10213, %v10066
    %10237 = vst.msk [vmem:[#allocation5 + $0x5c] sm:$0xf] %vm10213, %v10068
    %10238 = vst.msk [vmem:[#allocation5 + $0x60] sm:$0xf] %vm10213, %v10070
    %10239 = vst.msk [vmem:[#allocation5 + $0x64] sm:$0xf] %vm10213, %v10072
    %10240 = vst.msk [vmem:[#allocation5 + $0x68] sm:$0xf] %vm10213, %v10074
    %10241 = vst.msk [vmem:[#allocation5 + $0x6c] sm:$0xf] %vm10213, %v10076
    %10242 = vst.msk [vmem:[#allocation5 + $0x70] sm:$0xf] %vm10213, %v10078
    %10243 = vst.msk [vmem:[#allocation5 + $0x74] sm:$0xf] %vm10213, %v10080
    %10244 = vst.msk [vmem:[#allocation5 + $0x78] sm:$0xf] %vm10213, %v10082
    %10245 = vst.msk [vmem:[#allocation5 + $0x7c] sm:$0xf] %vm10213, %v10084
    %10246 = vst.msk [vmem:[#allocation5 + $0x80] sm:$0xf] %vm10213, %v10086
    %10247 = vst.msk [vmem:[#allocation5 + $0x84] sm:$0xf] %vm10213, %v10088
    %10248 = vst.msk [vmem:[#allocation5 + $0x88] sm:$0xf] %vm10213, %v10090
    %10249 = vst.msk [vmem:[#allocation5 + $0x8c] sm:$0xf] %vm10213, %v10092
    %10250 = vst.msk [vmem:[#allocation5 + $0x90] sm:$0xf] %vm10213, %v10094
    %10251 = vst.msk [vmem:[#allocation5 + $0x94] sm:$0xf] %vm10213, %v10096
    %10252 = vst.msk [vmem:[#allocation5 + $0x98] sm:$0xf] %vm10213, %v10098
    %10253 = vst.msk [vmem:[#allocation5 + $0x9c] sm:$0xf] %vm10213, %v10100
    %10254 = vst.msk [vmem:[#allocation5 + $0xa0] sm:$0xf] %vm10213, %v10102
    %10255 = vst.msk [vmem:[#allocation5 + $0xa4] sm:$0xf] %vm10213, %v10104
    %10256 = vst.msk [vmem:[#allocation5 + $0xa8] sm:$0xf] %vm10213, %v10106
    %10257 = vst.msk [vmem:[#allocation5 + $0xac] sm:$0xf] %vm10213, %v10108
    %10258 = vst.msk [vmem:[#allocation5 + $0xb0] sm:$0xf] %vm10213, %v10110
    %10259 = vst.msk [vmem:[#allocation5 + $0xb4] sm:$0xf] %vm10213, %v10112
    %10260 = vst.msk [vmem:[#allocation5 + $0xb8] sm:$0xf] %vm10213, %v10114
    %10261 = vst.msk [vmem:[#allocation5 + $0xbc] sm:$0xf] %vm10213, %v10116
    %10262 = vst.msk [vmem:[#allocation5 + $0xc0] sm:$0xf] %vm10213, %v10118
    %10263 = vst.msk [vmem:[#allocation5 + $0xc4] sm:$0xf] %vm10213, %v10120
    %10264 = vst.msk [vmem:[#allocation5 + $0xc8] sm:$0xf] %vm10213, %v10122
    %10265 = vst.msk [vmem:[#allocation5 + $0xcc] sm:$0xf] %vm10213, %v10124
    %10266 = vst.msk [vmem:[#allocation5 + $0xd0] sm:$0xf] %vm10213, %v10126
    %10267 = vst.msk [vmem:[#allocation5 + $0xd4] sm:$0xf] %vm10213, %v10128
    %10268 = vst.msk [vmem:[#allocation5 + $0xd8] sm:$0xf] %vm10213, %v10130
    %10269 = vst.msk [vmem:[#allocation5 + $0xdc] sm:$0xf] %vm10213, %v10132
    %10270 = vst.msk [vmem:[#allocation5 + $0xe0] sm:$0xf] %vm10213, %v10134
    %10271 = vst.msk [vmem:[#allocation5 + $0xe4] sm:$0xf] %vm10213, %v10136
    %10272 = vst.msk [vmem:[#allocation5 + $0xe8] sm:$0xf] %vm10213, %v10138
    %10273 = vst.msk [vmem:[#allocation5 + $0xec] sm:$0xf] %vm10213, %v10140
    %10274 = vst.msk [vmem:[#allocation5 + $0xf0] sm:$0xf] %vm10213, %v10142
    %10275 = vst.msk [vmem:[#allocation5 + $0xf4] sm:$0xf] %vm10213, %v10144
    %10276 = vst.msk [vmem:[#allocation5 + $0xf8] sm:$0xf] %vm10213, %v10146
    %10277 = vst.msk [vmem:[#allocation5 + $0xfc] sm:$0xf] %vm10213, %v10148
    %v10278 = vld [vmem:[#allocation5] sm:$0xf]
    %v10279 = vld [vmem:[#allocation5 + $0x4] sm:$0xf]
    %v10280 = vld [vmem:[#allocation5 + $0x8] sm:$0xf]
    %v10281 = vld [vmem:[#allocation5 + $0xc] sm:$0xf]
    %v10282 = vld [vmem:[#allocation5 + $0x10] sm:$0xf]
    %v10283 = vld [vmem:[#allocation5 + $0x14] sm:$0xf]
    %v10284 = vld [vmem:[#allocation5 + $0x18] sm:$0xf]
    %v10285 = vld [vmem:[#allocation5 + $0x1c] sm:$0xf]
    %v10286 = vld [vmem:[#allocation5 + $0x20] sm:$0xf]
    %v10287 = vld [vmem:[#allocation5 + $0x24] sm:$0xf]
    %v10288 = vld [vmem:[#allocation5 + $0x28] sm:$0xf]
    %v10289 = vld [vmem:[#allocation5 + $0x2c] sm:$0xf]
    %v10290 = vld [vmem:[#allocation5 + $0x30] sm:$0xf]
    %v10291 = vld [vmem:[#allocation5 + $0x34] sm:$0xf]
    %v10292 = vld [vmem:[#allocation5 + $0x38] sm:$0xf]
    %v10293 = vld [vmem:[#allocation5 + $0x3c] sm:$0xf]
    %v10294 = vld [vmem:[#allocation5 + $0x40] sm:$0xf]
    %v10295 = vld [vmem:[#allocation5 + $0x44] sm:$0xf]
    %v10296 = vld [vmem:[#allocation5 + $0x48] sm:$0xf]
    %v10297 = vld [vmem:[#allocation5 + $0x4c] sm:$0xf]
    %v10298 = vld [vmem:[#allocation5 + $0x50] sm:$0xf]
    %v10299 = vld [vmem:[#allocation5 + $0x54] sm:$0xf]
    %v10300 = vld [vmem:[#allocation5 + $0x58] sm:$0xf]
    %v10301 = vld [vmem:[#allocation5 + $0x5c] sm:$0xf]
    %v10302 = vld [vmem:[#allocation5 + $0x60] sm:$0xf]
    %v10303 = vld [vmem:[#allocation5 + $0x64] sm:$0xf]
    %v10304 = vld [vmem:[#allocation5 + $0x68] sm:$0xf]
    %v10305 = vld [vmem:[#allocation5 + $0x6c] sm:$0xf]
    %v10306 = vld [vmem:[#allocation5 + $0x70] sm:$0xf]
    %v10307 = vld [vmem:[#allocation5 + $0x74] sm:$0xf]
    %v10308 = vld [vmem:[#allocation5 + $0x78] sm:$0xf]
    %v10309 = vld [vmem:[#allocation5 + $0x7c] sm:$0xf]
    %v10310 = vld [vmem:[#allocation5 + $0x80] sm:$0xf]
    %v10311 = vld [vmem:[#allocation5 + $0x84] sm:$0xf]
    %v10312 = vld [vmem:[#allocation5 + $0x88] sm:$0xf]
    %v10313 = vld [vmem:[#allocation5 + $0x8c] sm:$0xf]
    %v10314 = vld [vmem:[#allocation5 + $0x90] sm:$0xf]
    %v10315 = vld [vmem:[#allocation5 + $0x94] sm:$0xf]
    %v10316 = vld [vmem:[#allocation5 + $0x98] sm:$0xf]
    %v10317 = vld [vmem:[#allocation5 + $0x9c] sm:$0xf]
    %v10318 = vld [vmem:[#allocation5 + $0xa0] sm:$0xf]
    %v10319 = vld [vmem:[#allocation5 + $0xa4] sm:$0xf]
    %v10320 = vld [vmem:[#allocation5 + $0xa8] sm:$0xf]
    %v10321 = vld [vmem:[#allocation5 + $0xac] sm:$0xf]
    %v10322 = vld [vmem:[#allocation5 + $0xb0] sm:$0xf]
    %v10323 = vld [vmem:[#allocation5 + $0xb4] sm:$0xf]
    %v10324 = vld [vmem:[#allocation5 + $0xb8] sm:$0xf]
    %v10325 = vld [vmem:[#allocation5 + $0xbc] sm:$0xf]
    %v10326 = vld [vmem:[#allocation5 + $0xc0] sm:$0xf]
    %v10327 = vld [vmem:[#allocation5 + $0xc4] sm:$0xf]
    %v10328 = vld [vmem:[#allocation5 + $0xc8] sm:$0xf]
    %v10329 = vld [vmem:[#allocation5 + $0xcc] sm:$0xf]
    %v10330 = vld [vmem:[#allocation5 + $0xd0] sm:$0xf]
    %v10331 = vld [vmem:[#allocation5 + $0xd4] sm:$0xf]
    %v10332 = vld [vmem:[#allocation5 + $0xd8] sm:$0xf]
    %v10333 = vld [vmem:[#allocation5 + $0xdc] sm:$0xf]
    %v10334 = vld [vmem:[#allocation5 + $0xe0] sm:$0xf]
    %v10335 = vld [vmem:[#allocation5 + $0xe4] sm:$0xf]
    %v10336 = vld [vmem:[#allocation5 + $0xe8] sm:$0xf]
    %v10337 = vld [vmem:[#allocation5 + $0xec] sm:$0xf]
    %v10338 = vld [vmem:[#allocation5 + $0xf0] sm:$0xf]
    %v10339 = vld [vmem:[#allocation5 + $0xf4] sm:$0xf]
    %v10340 = vld [vmem:[#allocation5 + $0xf8] sm:$0xf]
    %v10341 = vld [vmem:[#allocation5 + $0xfc] sm:$0xf]
    %v10342 = vld [vmem:[%s4] sm:$0xf]
    %v10343 = vld [vmem:[%s4 + $0x4] sm:$0xf]
    %v10344 = vld [vmem:[%s4 + $0x8] sm:$0xf]
    %v10345 = vld [vmem:[%s4 + $0xc] sm:$0xf]
    %v10346 = vld [vmem:[%s4 + $0x10] sm:$0x3]
    %v10411 = vunpack.c.l.b16 %v10278
    %v10412 = vunpack.c.l.b16 %v10279
    %v10413 = vunpack.c.l.b16 %v10280
    %v10414 = vunpack.c.l.b16 %v10281
    %v10415 = vunpack.c.l.b16 %v10282
    %v10416 = vunpack.c.l.b16 %v10283
    %v10417 = vunpack.c.l.b16 %v10284
    %v10418 = vunpack.c.l.b16 %v10285
    %v10419 = vunpack.c.l.b16 %v10286
    %v10420 = vunpack.c.l.b16 %v10287
    %v10421 = vunpack.c.l.b16 %v10288
    %v10422 = vunpack.c.l.b16 %v10289
    %v10423 = vunpack.c.l.b16 %v10290
    %v10424 = vunpack.c.l.b16 %v10291
    %v10425 = vunpack.c.l.b16 %v10292
    %v10426 = vunpack.c.l.b16 %v10293
    %v10427 = vunpack.c.l.b16 %v10294
    %v10428 = vunpack.c.l.b16 %v10295
    %v10429 = vunpack.c.l.b16 %v10296
    %v10430 = vunpack.c.l.b16 %v10297
    %v10431 = vunpack.c.l.b16 %v10298
    %v10432 = vunpack.c.l.b16 %v10299
    %v10433 = vunpack.c.l.b16 %v10300
    %v10434 = vunpack.c.l.b16 %v10301
    %v10435 = vunpack.c.l.b16 %v10302
    %v10436 = vunpack.c.l.b16 %v10303
    %v10437 = vunpack.c.l.b16 %v10304
    %v10438 = vunpack.c.l.b16 %v10305
    %v10439 = vunpack.c.l.b16 %v10306
    %v10440 = vunpack.c.l.b16 %v10307
    %v10441 = vunpack.c.l.b16 %v10308
    %v10442 = vunpack.c.l.b16 %v10309
    %v10443 = vunpack.c.l.b16 %v10310
    %v10444 = vunpack.c.l.b16 %v10311
    %v10445 = vunpack.c.l.b16 %v10312
    %v10446 = vunpack.c.l.b16 %v10313
    %v10447 = vunpack.c.l.b16 %v10314
    %v10448 = vunpack.c.l.b16 %v10315
    %v10449 = vunpack.c.l.b16 %v10316
    %v10450 = vunpack.c.l.b16 %v10317
    %v10451 = vunpack.c.l.b16 %v10318
    %v10452 = vunpack.c.l.b16 %v10319
    %v10453 = vunpack.c.l.b16 %v10320
    %v10454 = vunpack.c.l.b16 %v10321
    %v10455 = vunpack.c.l.b16 %v10322
    %v10456 = vunpack.c.l.b16 %v10323
    %v10457 = vunpack.c.l.b16 %v10324
    %v10458 = vunpack.c.l.b16 %v10325
    %v10459 = vunpack.c.l.b16 %v10326
    %v10460 = vunpack.c.l.b16 %v10327
    %v10461 = vunpack.c.l.b16 %v10328
    %v10462 = vunpack.c.l.b16 %v10329
    %v10463 = vunpack.c.l.b16 %v10330
    %v10464 = vunpack.c.l.b16 %v10331
    %v10465 = vunpack.c.l.b16 %v10332
    %v10466 = vunpack.c.l.b16 %v10333
    %v10467 = vunpack.c.l.b16 %v10334
    %v10468 = vunpack.c.l.b16 %v10335
    %v10469 = vunpack.c.l.b16 %v10336
    %v10470 = vunpack.c.l.b16 %v10337
    %v10471 = vunpack.c.l.b16 %v10338
    %v10472 = vunpack.c.l.b16 %v10339
    %v10473 = vunpack.c.l.b16 %v10340
    %v10474 = vunpack.c.l.b16 %v10341
    %v10475 = vpack.c.b16 %v10412, %v10411
    %v10476 = vpack.c.b16 %v10414, %v10413
    %v10477 = vpack.c.b16 %v10416, %v10415
    %v10478 = vpack.c.b16 %v10418, %v10417
    %v10479 = vpack.c.b16 %v10420, %v10419
    %v10480 = vpack.c.b16 %v10422, %v10421
    %v10481 = vpack.c.b16 %v10424, %v10423
    %v10482 = vpack.c.b16 %v10426, %v10425
    %v10483 = vpack.c.b16 %v10428, %v10427
    %v10484 = vpack.c.b16 %v10430, %v10429
    %v10485 = vpack.c.b16 %v10432, %v10431
    %v10486 = vpack.c.b16 %v10434, %v10433
    %v10487 = vpack.c.b16 %v10436, %v10435
    %v10488 = vpack.c.b16 %v10438, %v10437
    %v10489 = vpack.c.b16 %v10440, %v10439
    %v10490 = vpack.c.b16 %v10442, %v10441
    %v10491 = vpack.c.b16 %v10444, %v10443
    %v10492 = vpack.c.b16 %v10446, %v10445
    %v10493 = vpack.c.b16 %v10448, %v10447
    %v10494 = vpack.c.b16 %v10450, %v10449
    %v10495 = vpack.c.b16 %v10452, %v10451
    %v10496 = vpack.c.b16 %v10454, %v10453
    %v10497 = vpack.c.b16 %v10456, %v10455
    %v10498 = vpack.c.b16 %v10458, %v10457
    %v10499 = vpack.c.b16 %v10460, %v10459
    %v10500 = vpack.c.b16 %v10462, %v10461
    %v10501 = vpack.c.b16 %v10464, %v10463
    %v10502 = vpack.c.b16 %v10466, %v10465
    %v10503 = vpack.c.b16 %v10468, %v10467
    %v10504 = vpack.c.b16 %v10470, %v10469
    %v10505 = vpack.c.b16 %v10472, %v10471
    %v10506 = vpack.c.b16 %v10474, %v10473
    %v10512 = vunpack.c.l.b16 %v10342
    %v10513 = vunpack.c.l.b16 %v10343
    %v10514 = vunpack.c.l.b16 %v10344
    %v10515 = vunpack.c.l.b16 %v10345
    %v10516 = vunpack.c.l.b16 %v10346
    %v10517 = vpack.c.b16 %v10513, %v10512
    %v10518 = vpack.c.b16 %v10515, %v10514
    %v10519 = vpack.c.b16 %v10516, %v10516
    %vm10522 = vcmask 293888
    %v10524 = vsel %vm10522, %v10475, 0
    %v10527 = vsel %vm10522, %v10476, 0
    %v10530 = vsel %vm10522, %v10477, 0
    %v10533 = vsel %vm10522, %v10478, 0
    %v10536 = vsel %vm10522, %v10479, 0
    %v10539 = vsel %vm10522, %v10480, 0
    %v10542 = vsel %vm10522, %v10481, 0
    %v10545 = vsel %vm10522, %v10482, 0
    %v10548 = vsel %vm10522, %v10483, 0
    %v10551 = vsel %vm10522, %v10484, 0
    %v10554 = vsel %vm10522, %v10485, 0
    %v10557 = vsel %vm10522, %v10486, 0
    %v10560 = vsel %vm10522, %v10487, 0
    %v10563 = vsel %vm10522, %v10488, 0
    %v10566 = vsel %vm10522, %v10489, 0
    %v10569 = vsel %vm10522, %v10490, 0
    %v10572 = vsel %vm10522, %v10491, 0
    %v10575 = vsel %vm10522, %v10492, 0
    %v10578 = vsel %vm10522, %v10493, 0
    %v10581 = vsel %vm10522, %v10494, 0
    %v10584 = vsel %vm10522, %v10495, 0
    %v10587 = vsel %vm10522, %v10496, 0
    %v10590 = vsel %vm10522, %v10497, 0
    %v10593 = vsel %vm10522, %v10498, 0
    %v10596 = vsel %vm10522, %v10499, 0
    %v10599 = vsel %vm10522, %v10500, 0
    %v10602 = vsel %vm10522, %v10501, 0
    %v10605 = vsel %vm10522, %v10502, 0
    %v10608 = vsel %vm10522, %v10503, 0
    %v10611 = vsel %vm10522, %v10504, 0
    %v10614 = vsel %vm10522, %v10505, 0
    %v10617 = vsel %vm10522, %v10506, 0
    %vm10619 = vcmask 1041408
    %v10621 = vsel %vm10619, %v10519, 0
    %10623 = vmatpush.bf16.msra.mxu0 0
    %10624 = vmatpush.bf16.msra.mxu0 0
    %10625 = vmatpush.bf16.msra.mxu0 0
    %10626 = vmatpush.bf16.msra.mxu0 0
    %10627 = vmatpush.bf16.msra.mxu0 0
    %10628 = vmatpush.bf16.msra.mxu0 %v10621
    %10629 = vmatpush.bf16.msra.mxu0 %v10518
    %10630 = vmatpush.bf16.msra.mxu0 %v10517
    %10631 = vmatmul.bf16.gmra.mxu0 %v10524
    %v10632 = vpop.f32.mrf.mxu0
    %v10633 = vadd.f32 0.0, %v10632
    %v10634 = vpop.f32.mrf.mxu0
    %v10635 = vadd.f32 0.0, %v10634
    %10636 = vmatmul.bf16.gmra.mxu0 %v10527
    %v10637 = vpop.f32.mrf.mxu0
    %v10638 = vadd.f32 0.0, %v10637
    %v10639 = vpop.f32.mrf.mxu0
    %v10640 = vadd.f32 0.0, %v10639
    %10641 = vmatmul.bf16.gmra.mxu0 %v10530
    %v10642 = vpop.f32.mrf.mxu0
    %v10643 = vadd.f32 0.0, %v10642
    %v10644 = vpop.f32.mrf.mxu0
    %v10645 = vadd.f32 0.0, %v10644
    %10646 = vmatmul.bf16.gmra.mxu0 %v10533
    %v10647 = vpop.f32.mrf.mxu0
    %v10648 = vadd.f32 0.0, %v10647
    %v10649 = vpop.f32.mrf.mxu0
    %v10650 = vadd.f32 0.0, %v10649
    %10651 = vmatmul.bf16.gmra.mxu0 %v10536
    %v10652 = vpop.f32.mrf.mxu0
    %v10653 = vadd.f32 0.0, %v10652
    %v10654 = vpop.f32.mrf.mxu0
    %v10655 = vadd.f32 0.0, %v10654
    %10656 = vmatmul.bf16.gmra.mxu0 %v10539
    %v10657 = vpop.f32.mrf.mxu0
    %v10658 = vadd.f32 0.0, %v10657
    %v10659 = vpop.f32.mrf.mxu0
    %v10660 = vadd.f32 0.0, %v10659
    %10661 = vmatmul.bf16.gmra.mxu0 %v10542
    %v10662 = vpop.f32.mrf.mxu0
    %v10663 = vadd.f32 0.0, %v10662
    %v10664 = vpop.f32.mrf.mxu0
    %v10665 = vadd.f32 0.0, %v10664
    %10666 = vmatmul.bf16.gmra.mxu0 %v10545
    %v10667 = vpop.f32.mrf.mxu0
    %v10668 = vadd.f32 0.0, %v10667
    %v10669 = vpop.f32.mrf.mxu0
    %v10670 = vadd.f32 0.0, %v10669
    %10671 = vmatmul.bf16.gmra.mxu0 %v10548
    %v10672 = vpop.f32.mrf.mxu0
    %v10673 = vadd.f32 0.0, %v10672
    %v10674 = vpop.f32.mrf.mxu0
    %v10675 = vadd.f32 0.0, %v10674
    %10676 = vmatmul.bf16.gmra.mxu0 %v10551
    %v10677 = vpop.f32.mrf.mxu0
    %v10678 = vadd.f32 0.0, %v10677
    %v10679 = vpop.f32.mrf.mxu0
    %v10680 = vadd.f32 0.0, %v10679
    %10681 = vmatmul.bf16.gmra.mxu0 %v10554
    %v10682 = vpop.f32.mrf.mxu0
    %v10683 = vadd.f32 0.0, %v10682
    %v10684 = vpop.f32.mrf.mxu0
    %v10685 = vadd.f32 0.0, %v10684
    %10686 = vmatmul.bf16.gmra.mxu0 %v10557
    %v10687 = vpop.f32.mrf.mxu0
    %v10688 = vadd.f32 0.0, %v10687
    %v10689 = vpop.f32.mrf.mxu0
    %v10690 = vadd.f32 0.0, %v10689
    %10691 = vmatmul.bf16.gmra.mxu0 %v10560
    %v10692 = vpop.f32.mrf.mxu0
    %v10693 = vadd.f32 0.0, %v10692
    %v10694 = vpop.f32.mrf.mxu0
    %v10695 = vadd.f32 0.0, %v10694
    %10696 = vmatmul.bf16.gmra.mxu0 %v10563
    %v10697 = vpop.f32.mrf.mxu0
    %v10698 = vadd.f32 0.0, %v10697
    %v10699 = vpop.f32.mrf.mxu0
    %v10700 = vadd.f32 0.0, %v10699
    %10701 = vmatmul.bf16.gmra.mxu0 %v10566
    %v10702 = vpop.f32.mrf.mxu0
    %v10703 = vadd.f32 0.0, %v10702
    %v10704 = vpop.f32.mrf.mxu0
    %v10705 = vadd.f32 0.0, %v10704
    %10706 = vmatmul.bf16.gmra.mxu0 %v10569
    %v10707 = vpop.f32.mrf.mxu0
    %v10708 = vadd.f32 0.0, %v10707
    %v10709 = vpop.f32.mrf.mxu0
    %v10710 = vadd.f32 0.0, %v10709
    %10711 = vmatmul.bf16.gmra.mxu0 %v10572
    %v10712 = vpop.f32.mrf.mxu0
    %v10713 = vadd.f32 0.0, %v10712
    %v10714 = vpop.f32.mrf.mxu0
    %v10715 = vadd.f32 0.0, %v10714
    %10716 = vmatmul.bf16.gmra.mxu0 %v10575
    %v10717 = vpop.f32.mrf.mxu0
    %v10718 = vadd.f32 0.0, %v10717
    %v10719 = vpop.f32.mrf.mxu0
    %v10720 = vadd.f32 0.0, %v10719
    %10721 = vmatmul.bf16.gmra.mxu0 %v10578
    %v10722 = vpop.f32.mrf.mxu0
    %v10723 = vadd.f32 0.0, %v10722
    %v10724 = vpop.f32.mrf.mxu0
    %v10725 = vadd.f32 0.0, %v10724
    %10726 = vmatmul.bf16.gmra.mxu0 %v10581
    %v10727 = vpop.f32.mrf.mxu0
    %v10728 = vadd.f32 0.0, %v10727
    %v10729 = vpop.f32.mrf.mxu0
    %v10730 = vadd.f32 0.0, %v10729
    %10731 = vmatmul.bf16.gmra.mxu0 %v10584
    %v10732 = vpop.f32.mrf.mxu0
    %v10733 = vadd.f32 0.0, %v10732
    %v10734 = vpop.f32.mrf.mxu0
    %v10735 = vadd.f32 0.0, %v10734
    %10736 = vmatmul.bf16.gmra.mxu0 %v10587
    %v10737 = vpop.f32.mrf.mxu0
    %v10738 = vadd.f32 0.0, %v10737
    %v10739 = vpop.f32.mrf.mxu0
    %v10740 = vadd.f32 0.0, %v10739
    %10741 = vmatmul.bf16.gmra.mxu0 %v10590
    %v10742 = vpop.f32.mrf.mxu0
    %v10743 = vadd.f32 0.0, %v10742
    %v10744 = vpop.f32.mrf.mxu0
    %v10745 = vadd.f32 0.0, %v10744
    %10746 = vmatmul.bf16.gmra.mxu0 %v10593
    %v10747 = vpop.f32.mrf.mxu0
    %v10748 = vadd.f32 0.0, %v10747
    %v10749 = vpop.f32.mrf.mxu0
    %v10750 = vadd.f32 0.0, %v10749
    %10751 = vmatmul.bf16.gmra.mxu0 %v10596
    %v10752 = vpop.f32.mrf.mxu0
    %v10753 = vadd.f32 0.0, %v10752
    %v10754 = vpop.f32.mrf.mxu0
    %v10755 = vadd.f32 0.0, %v10754
    %10756 = vmatmul.bf16.gmra.mxu0 %v10599
    %v10757 = vpop.f32.mrf.mxu0
    %v10758 = vadd.f32 0.0, %v10757
    %v10759 = vpop.f32.mrf.mxu0
    %v10760 = vadd.f32 0.0, %v10759
    %10761 = vmatmul.bf16.gmra.mxu0 %v10602
    %v10762 = vpop.f32.mrf.mxu0
    %v10763 = vadd.f32 0.0, %v10762
    %v10764 = vpop.f32.mrf.mxu0
    %v10765 = vadd.f32 0.0, %v10764
    %10766 = vmatmul.bf16.gmra.mxu0 %v10605
    %v10767 = vpop.f32.mrf.mxu0
    %v10768 = vadd.f32 0.0, %v10767
    %v10769 = vpop.f32.mrf.mxu0
    %v10770 = vadd.f32 0.0, %v10769
    %10771 = vmatmul.bf16.gmra.mxu0 %v10608
    %v10772 = vpop.f32.mrf.mxu0
    %v10773 = vadd.f32 0.0, %v10772
    %v10774 = vpop.f32.mrf.mxu0
    %v10775 = vadd.f32 0.0, %v10774
    %10776 = vmatmul.bf16.gmra.mxu0 %v10611
    %v10777 = vpop.f32.mrf.mxu0
    %v10778 = vadd.f32 0.0, %v10777
    %v10779 = vpop.f32.mrf.mxu0
    %v10780 = vadd.f32 0.0, %v10779
    %10781 = vmatmul.bf16.gmra.mxu0 %v10614
    %v10782 = vpop.f32.mrf.mxu0
    %v10783 = vadd.f32 0.0, %v10782
    %v10784 = vpop.f32.mrf.mxu0
    %v10785 = vadd.f32 0.0, %v10784
    %10786 = vmatmul.bf16.gmra.mxu0 %v10617
    %v10787 = vpop.f32.mrf.mxu0
    %v10788 = vadd.f32 0.0, %v10787
    %v10789 = vpop.f32.mrf.mxu0
    %v10790 = vadd.f32 0.0, %v10789
    %10791 = vdwg.mxu0
    %v10792 = vld [vmem:[%s5] sm:$0x1]
    %v10794 = vperm.slane %v10792, 0
    %v10796 = vmul.f32 %v10633, %v10794
    %v10797 = vmul.f32 %v10635, %v10794
    %v10798 = vmul.f32 %v10638, %v10794
    %v10799 = vmul.f32 %v10640, %v10794
    %v10800 = vmul.f32 %v10643, %v10794
    %v10801 = vmul.f32 %v10645, %v10794
    %v10802 = vmul.f32 %v10648, %v10794
    %v10803 = vmul.f32 %v10650, %v10794
    %v10804 = vmul.f32 %v10653, %v10794
    %v10805 = vmul.f32 %v10655, %v10794
    %v10806 = vmul.f32 %v10658, %v10794
    %v10807 = vmul.f32 %v10660, %v10794
    %v10808 = vmul.f32 %v10663, %v10794
    %v10809 = vmul.f32 %v10665, %v10794
    %v10810 = vmul.f32 %v10668, %v10794
    %v10811 = vmul.f32 %v10670, %v10794
    %v10812 = vmul.f32 %v10673, %v10794
    %v10813 = vmul.f32 %v10675, %v10794
    %v10814 = vmul.f32 %v10678, %v10794
    %v10815 = vmul.f32 %v10680, %v10794
    %v10816 = vmul.f32 %v10683, %v10794
    %v10817 = vmul.f32 %v10685, %v10794
    %v10818 = vmul.f32 %v10688, %v10794
    %v10819 = vmul.f32 %v10690, %v10794
    %v10820 = vmul.f32 %v10693, %v10794
    %v10821 = vmul.f32 %v10695, %v10794
    %v10822 = vmul.f32 %v10698, %v10794
    %v10823 = vmul.f32 %v10700, %v10794
    %v10824 = vmul.f32 %v10703, %v10794
    %v10825 = vmul.f32 %v10705, %v10794
    %v10826 = vmul.f32 %v10708, %v10794
    %v10827 = vmul.f32 %v10710, %v10794
    %v10828 = vmul.f32 %v10713, %v10794
    %v10829 = vmul.f32 %v10715, %v10794
    %v10830 = vmul.f32 %v10718, %v10794
    %v10831 = vmul.f32 %v10720, %v10794
    %v10832 = vmul.f32 %v10723, %v10794
    %v10833 = vmul.f32 %v10725, %v10794
    %v10834 = vmul.f32 %v10728, %v10794
    %v10835 = vmul.f32 %v10730, %v10794
    %v10836 = vmul.f32 %v10733, %v10794
    %v10837 = vmul.f32 %v10735, %v10794
    %v10838 = vmul.f32 %v10738, %v10794
    %v10839 = vmul.f32 %v10740, %v10794
    %v10840 = vmul.f32 %v10743, %v10794
    %v10841 = vmul.f32 %v10745, %v10794
    %v10842 = vmul.f32 %v10748, %v10794
    %v10843 = vmul.f32 %v10750, %v10794
    %v10844 = vmul.f32 %v10753, %v10794
    %v10845 = vmul.f32 %v10755, %v10794
    %v10846 = vmul.f32 %v10758, %v10794
    %v10847 = vmul.f32 %v10760, %v10794
    %v10848 = vmul.f32 %v10763, %v10794
    %v10849 = vmul.f32 %v10765, %v10794
    %v10850 = vmul.f32 %v10768, %v10794
    %v10851 = vmul.f32 %v10770, %v10794
    %v10852 = vmul.f32 %v10773, %v10794
    %v10853 = vmul.f32 %v10775, %v10794
    %v10854 = vmul.f32 %v10778, %v10794
    %v10855 = vmul.f32 %v10780, %v10794
    %v10856 = vmul.f32 %v10783, %v10794
    %v10857 = vmul.f32 %v10785, %v10794
    %v10858 = vmul.f32 %v10788, %v10794
    %v10859 = vmul.f32 %v10790, %v10794
    %v10860 = vld [vmem:[%s6] sm:$0x1]
    %v10862 = vperm.slane %v10860, 0
    %v10864 = vadd.f32 %v10796, %v10862
    %v10865 = vadd.f32 %v10797, %v10862
    %v10866 = vadd.f32 %v10798, %v10862
    %v10867 = vadd.f32 %v10799, %v10862
    %v10868 = vadd.f32 %v10800, %v10862
    %v10869 = vadd.f32 %v10801, %v10862
    %v10870 = vadd.f32 %v10802, %v10862
    %v10871 = vadd.f32 %v10803, %v10862
    %v10872 = vadd.f32 %v10804, %v10862
    %v10873 = vadd.f32 %v10805, %v10862
    %v10874 = vadd.f32 %v10806, %v10862
    %v10875 = vadd.f32 %v10807, %v10862
    %v10876 = vadd.f32 %v10808, %v10862
    %v10877 = vadd.f32 %v10809, %v10862
    %v10878 = vadd.f32 %v10810, %v10862
    %v10879 = vadd.f32 %v10811, %v10862
    %v10880 = vadd.f32 %v10812, %v10862
    %v10881 = vadd.f32 %v10813, %v10862
    %v10882 = vadd.f32 %v10814, %v10862
    %v10883 = vadd.f32 %v10815, %v10862
    %v10884 = vadd.f32 %v10816, %v10862
    %v10885 = vadd.f32 %v10817, %v10862
    %v10886 = vadd.f32 %v10818, %v10862
    %v10887 = vadd.f32 %v10819, %v10862
    %v10888 = vadd.f32 %v10820, %v10862
    %v10889 = vadd.f32 %v10821, %v10862
    %v10890 = vadd.f32 %v10822, %v10862
    %v10891 = vadd.f32 %v10823, %v10862
    %v10892 = vadd.f32 %v10824, %v10862
    %v10893 = vadd.f32 %v10825, %v10862
    %v10894 = vadd.f32 %v10826, %v10862
    %v10895 = vadd.f32 %v10827, %v10862
    %v10896 = vadd.f32 %v10828, %v10862
    %v10897 = vadd.f32 %v10829, %v10862
    %v10898 = vadd.f32 %v10830, %v10862
    %v10899 = vadd.f32 %v10831, %v10862
    %v10900 = vadd.f32 %v10832, %v10862
    %v10901 = vadd.f32 %v10833, %v10862
    %v10902 = vadd.f32 %v10834, %v10862
    %v10903 = vadd.f32 %v10835, %v10862
    %v10904 = vadd.f32 %v10836, %v10862
    %v10905 = vadd.f32 %v10837, %v10862
    %v10906 = vadd.f32 %v10838, %v10862
    %v10907 = vadd.f32 %v10839, %v10862
    %v10908 = vadd.f32 %v10840, %v10862
    %v10909 = vadd.f32 %v10841, %v10862
    %v10910 = vadd.f32 %v10842, %v10862
    %v10911 = vadd.f32 %v10843, %v10862
    %v10912 = vadd.f32 %v10844, %v10862
    %v10913 = vadd.f32 %v10845, %v10862
    %v10914 = vadd.f32 %v10846, %v10862
    %v10915 = vadd.f32 %v10847, %v10862
    %v10916 = vadd.f32 %v10848, %v10862
    %v10917 = vadd.f32 %v10849, %v10862
    %v10918 = vadd.f32 %v10850, %v10862
    %v10919 = vadd.f32 %v10851, %v10862
    %v10920 = vadd.f32 %v10852, %v10862
    %v10921 = vadd.f32 %v10853, %v10862
    %v10922 = vadd.f32 %v10854, %v10862
    %v10923 = vadd.f32 %v10855, %v10862
    %v10924 = vadd.f32 %v10856, %v10862
    %v10925 = vadd.f32 %v10857, %v10862
    %v10926 = vadd.f32 %v10858, %v10862
    %v10927 = vadd.f32 %v10859, %v10862
    %v10928 = vmax.f32 %v10864, 0.0
    %v10929 = vmax.f32 %v10865, 0.0
    %v10930 = vmax.f32 %v10866, 0.0
    %v10931 = vmax.f32 %v10867, 0.0
    %v10932 = vmax.f32 %v10868, 0.0
    %v10933 = vmax.f32 %v10869, 0.0
    %v10934 = vmax.f32 %v10870, 0.0
    %v10935 = vmax.f32 %v10871, 0.0
    %v10936 = vmax.f32 %v10872, 0.0
    %v10937 = vmax.f32 %v10873, 0.0
    %v10938 = vmax.f32 %v10874, 0.0
    %v10939 = vmax.f32 %v10875, 0.0
    %v10940 = vmax.f32 %v10876, 0.0
    %v10941 = vmax.f32 %v10877, 0.0
    %v10942 = vmax.f32 %v10878, 0.0
    %v10943 = vmax.f32 %v10879, 0.0
    %v10944 = vmax.f32 %v10880, 0.0
    %v10945 = vmax.f32 %v10881, 0.0
    %v10946 = vmax.f32 %v10882, 0.0
    %v10947 = vmax.f32 %v10883, 0.0
    %v10948 = vmax.f32 %v10884, 0.0
    %v10949 = vmax.f32 %v10885, 0.0
    %v10950 = vmax.f32 %v10886, 0.0
    %v10951 = vmax.f32 %v10887, 0.0
    %v10952 = vmax.f32 %v10888, 0.0
    %v10953 = vmax.f32 %v10889, 0.0
    %v10954 = vmax.f32 %v10890, 0.0
    %v10955 = vmax.f32 %v10891, 0.0
    %v10956 = vmax.f32 %v10892, 0.0
    %v10957 = vmax.f32 %v10893, 0.0
    %v10958 = vmax.f32 %v10894, 0.0
    %v10959 = vmax.f32 %v10895, 0.0
    %v10960 = vmax.f32 %v10896, 0.0
    %v10961 = vmax.f32 %v10897, 0.0
    %v10962 = vmax.f32 %v10898, 0.0
    %v10963 = vmax.f32 %v10899, 0.0
    %v10964 = vmax.f32 %v10900, 0.0
    %v10965 = vmax.f32 %v10901, 0.0
    %v10966 = vmax.f32 %v10902, 0.0
    %v10967 = vmax.f32 %v10903, 0.0
    %v10968 = vmax.f32 %v10904, 0.0
    %v10969 = vmax.f32 %v10905, 0.0
    %v10970 = vmax.f32 %v10906, 0.0
    %v10971 = vmax.f32 %v10907, 0.0
    %v10972 = vmax.f32 %v10908, 0.0
    %v10973 = vmax.f32 %v10909, 0.0
    %v10974 = vmax.f32 %v10910, 0.0
    %v10975 = vmax.f32 %v10911, 0.0
    %v10976 = vmax.f32 %v10912, 0.0
    %v10977 = vmax.f32 %v10913, 0.0
    %v10978 = vmax.f32 %v10914, 0.0
    %v10979 = vmax.f32 %v10915, 0.0
    %v10980 = vmax.f32 %v10916, 0.0
    %v10981 = vmax.f32 %v10917, 0.0
    %v10982 = vmax.f32 %v10918, 0.0
    %v10983 = vmax.f32 %v10919, 0.0
    %v10984 = vmax.f32 %v10920, 0.0
    %v10985 = vmax.f32 %v10921, 0.0
    %v10986 = vmax.f32 %v10922, 0.0
    %v10987 = vmax.f32 %v10923, 0.0
    %v10988 = vmax.f32 %v10924, 0.0
    %v10989 = vmax.f32 %v10925, 0.0
    %v10990 = vmax.f32 %v10926, 0.0
    %v10991 = vmax.f32 %v10927, 0.0
    %v10992 = vpack.c.bf16 %v10929, %v10928
    %v10993 = vpack.c.bf16 %v10931, %v10930
    %v10994 = vpack.c.bf16 %v10933, %v10932
    %v10995 = vpack.c.bf16 %v10935, %v10934
    %v10996 = vpack.c.bf16 %v10937, %v10936
    %v10997 = vpack.c.bf16 %v10939, %v10938
    %v10998 = vpack.c.bf16 %v10941, %v10940
    %v10999 = vpack.c.bf16 %v10943, %v10942
    %v11000 = vpack.c.bf16 %v10945, %v10944
    %v11001 = vpack.c.bf16 %v10947, %v10946
    %v11002 = vpack.c.bf16 %v10949, %v10948
    %v11003 = vpack.c.bf16 %v10951, %v10950
    %v11004 = vpack.c.bf16 %v10953, %v10952
    %v11005 = vpack.c.bf16 %v10955, %v10954
    %v11006 = vpack.c.bf16 %v10957, %v10956
    %v11007 = vpack.c.bf16 %v10959, %v10958
    %v11008 = vpack.c.bf16 %v10961, %v10960
    %v11009 = vpack.c.bf16 %v10963, %v10962
    %v11010 = vpack.c.bf16 %v10965, %v10964
    %v11011 = vpack.c.bf16 %v10967, %v10966
    %v11012 = vpack.c.bf16 %v10969, %v10968
    %v11013 = vpack.c.bf16 %v10971, %v10970
    %v11014 = vpack.c.bf16 %v10973, %v10972
    %v11015 = vpack.c.bf16 %v10975, %v10974
    %v11016 = vpack.c.bf16 %v10977, %v10976
    %v11017 = vpack.c.bf16 %v10979, %v10978
    %v11018 = vpack.c.bf16 %v10981, %v10980
    %v11019 = vpack.c.bf16 %v10983, %v10982
    %v11020 = vpack.c.bf16 %v10985, %v10984
    %v11021 = vpack.c.bf16 %v10987, %v10986
    %v11022 = vpack.c.bf16 %v10989, %v10988
    %v11023 = vpack.c.bf16 %v10991, %v10990
    %v11024 = vld [vmem:[%s7] sm:$0x3]
    %v11025 = vld [vmem:[%s8] sm:$0x1]
    %v11027 = vperm.slane %v11025, 0
    %vm11029 = vcmask 31744
    %v11031 = vsel %vm11029, %v10992, 0
    %v11034 = vsel %vm11029, %v10993, 0
    %v11037 = vsel %vm11029, %v10994, 0
    %v11040 = vsel %vm11029, %v10995, 0
    %v11043 = vsel %vm11029, %v10996, 0
    %v11046 = vsel %vm11029, %v10997, 0
    %v11049 = vsel %vm11029, %v10998, 0
    %v11052 = vsel %vm11029, %v10999, 0
    %v11055 = vsel %vm11029, %v11000, 0
    %v11058 = vsel %vm11029, %v11001, 0
    %v11061 = vsel %vm11029, %v11002, 0
    %v11064 = vsel %vm11029, %v11003, 0
    %v11067 = vsel %vm11029, %v11004, 0
    %v11070 = vsel %vm11029, %v11005, 0
    %v11073 = vsel %vm11029, %v11006, 0
    %v11076 = vsel %vm11029, %v11007, 0
    %v11079 = vsel %vm11029, %v11008, 0
    %v11082 = vsel %vm11029, %v11009, 0
    %v11085 = vsel %vm11029, %v11010, 0
    %v11088 = vsel %vm11029, %v11011, 0
    %v11091 = vsel %vm11029, %v11012, 0
    %v11094 = vsel %vm11029, %v11013, 0
    %v11097 = vsel %vm11029, %v11014, 0
    %v11100 = vsel %vm11029, %v11015, 0
    %v11103 = vsel %vm11029, %v11016, 0
    %v11106 = vsel %vm11029, %v11017, 0
    %v11109 = vsel %vm11029, %v11018, 0
    %v11112 = vsel %vm11029, %v11019, 0
    %v11115 = vsel %vm11029, %v11020, 0
    %v11118 = vsel %vm11029, %v11021, 0
    %v11121 = vsel %vm11029, %v11022, 0
    %v11124 = vsel %vm11029, %v11023, 0
    %v11127 = vsel %vm10619, %v11024, 0
    %11129 = vmatpush.bf16.msra.mxu0 0
    %11130 = vmatpush.bf16.msra.mxu0 0
    %11131 = vmatpush.bf16.msra.mxu0 0
    %11132 = vmatpush.bf16.msra.mxu0 0
    %11133 = vmatpush.bf16.msra.mxu0 0
    %11134 = vmatpush.bf16.msra.mxu0 0
    %11135 = vmatpush.bf16.msra.mxu0 0
    %11136 = vmatpush.bf16.msra.mxu0 %v11127
    %11137 = vmatmul.bf16.gmra.mxu0 %v11031
    %v11138 = vpop.f32.mrf.mxu0
    %v11139 = vadd.f32 %v11027, %v11138
    %v11140 = vpop.f32.mrf.mxu0
    %v11141 = vadd.f32 %v11027, %v11140
    %11142 = vmatmul.bf16.gmra.mxu0 %v11034
    %v11143 = vpop.f32.mrf.mxu0
    %v11144 = vadd.f32 %v11027, %v11143
    %v11145 = vpop.f32.mrf.mxu0
    %v11146 = vadd.f32 %v11027, %v11145
    %11147 = vmatmul.bf16.gmra.mxu0 %v11037
    %v11148 = vpop.f32.mrf.mxu0
    %v11149 = vadd.f32 %v11027, %v11148
    %v11150 = vpop.f32.mrf.mxu0
    %v11151 = vadd.f32 %v11027, %v11150
    %11152 = vmatmul.bf16.gmra.mxu0 %v11040
    %v11153 = vpop.f32.mrf.mxu0
    %v11154 = vadd.f32 %v11027, %v11153
    %v11155 = vpop.f32.mrf.mxu0
    %v11156 = vadd.f32 %v11027, %v11155
    %11157 = vmatmul.bf16.gmra.mxu0 %v11043
    %v11158 = vpop.f32.mrf.mxu0
    %v11159 = vadd.f32 %v11027, %v11158
    %v11160 = vpop.f32.mrf.mxu0
    %v11161 = vadd.f32 %v11027, %v11160
    %11162 = vmatmul.bf16.gmra.mxu0 %v11046
    %v11163 = vpop.f32.mrf.mxu0
    %v11164 = vadd.f32 %v11027, %v11163
    %v11165 = vpop.f32.mrf.mxu0
    %v11166 = vadd.f32 %v11027, %v11165
    %11167 = vmatmul.bf16.gmra.mxu0 %v11049
    %v11168 = vpop.f32.mrf.mxu0
    %v11169 = vadd.f32 %v11027, %v11168
    %v11170 = vpop.f32.mrf.mxu0
    %v11171 = vadd.f32 %v11027, %v11170
    %11172 = vmatmul.bf16.gmra.mxu0 %v11052
    %v11173 = vpop.f32.mrf.mxu0
    %v11174 = vadd.f32 %v11027, %v11173
    %v11175 = vpop.f32.mrf.mxu0
    %v11176 = vadd.f32 %v11027, %v11175
    %11177 = vmatmul.bf16.gmra.mxu0 %v11055
    %v11178 = vpop.f32.mrf.mxu0
    %v11179 = vadd.f32 %v11027, %v11178
    %v11180 = vpop.f32.mrf.mxu0
    %v11181 = vadd.f32 %v11027, %v11180
    %11182 = vmatmul.bf16.gmra.mxu0 %v11058
    %v11183 = vpop.f32.mrf.mxu0
    %v11184 = vadd.f32 %v11027, %v11183
    %v11185 = vpop.f32.mrf.mxu0
    %v11186 = vadd.f32 %v11027, %v11185
    %11187 = vmatmul.bf16.gmra.mxu0 %v11061
    %v11188 = vpop.f32.mrf.mxu0
    %v11189 = vadd.f32 %v11027, %v11188
    %v11190 = vpop.f32.mrf.mxu0
    %v11191 = vadd.f32 %v11027, %v11190
    %11192 = vmatmul.bf16.gmra.mxu0 %v11064
    %v11193 = vpop.f32.mrf.mxu0
    %v11194 = vadd.f32 %v11027, %v11193
    %v11195 = vpop.f32.mrf.mxu0
    %v11196 = vadd.f32 %v11027, %v11195
    %11197 = vmatmul.bf16.gmra.mxu0 %v11067
    %v11198 = vpop.f32.mrf.mxu0
    %v11199 = vadd.f32 %v11027, %v11198
    %v11200 = vpop.f32.mrf.mxu0
    %v11201 = vadd.f32 %v11027, %v11200
    %11202 = vmatmul.bf16.gmra.mxu0 %v11070
    %v11203 = vpop.f32.mrf.mxu0
    %v11204 = vadd.f32 %v11027, %v11203
    %v11205 = vpop.f32.mrf.mxu0
    %v11206 = vadd.f32 %v11027, %v11205
    %11207 = vmatmul.bf16.gmra.mxu0 %v11073
    %v11208 = vpop.f32.mrf.mxu0
    %v11209 = vadd.f32 %v11027, %v11208
    %v11210 = vpop.f32.mrf.mxu0
    %v11211 = vadd.f32 %v11027, %v11210
    %11212 = vmatmul.bf16.gmra.mxu0 %v11076
    %v11213 = vpop.f32.mrf.mxu0
    %v11214 = vadd.f32 %v11027, %v11213
    %v11215 = vpop.f32.mrf.mxu0
    %v11216 = vadd.f32 %v11027, %v11215
    %11217 = vmatmul.bf16.gmra.mxu0 %v11079
    %v11218 = vpop.f32.mrf.mxu0
    %v11219 = vadd.f32 %v11027, %v11218
    %v11220 = vpop.f32.mrf.mxu0
    %v11221 = vadd.f32 %v11027, %v11220
    %11222 = vmatmul.bf16.gmra.mxu0 %v11082
    %v11223 = vpop.f32.mrf.mxu0
    %v11224 = vadd.f32 %v11027, %v11223
    %v11225 = vpop.f32.mrf.mxu0
    %v11226 = vadd.f32 %v11027, %v11225
    %11227 = vmatmul.bf16.gmra.mxu0 %v11085
    %v11228 = vpop.f32.mrf.mxu0
    %v11229 = vadd.f32 %v11027, %v11228
    %v11230 = vpop.f32.mrf.mxu0
    %v11231 = vadd.f32 %v11027, %v11230
    %11232 = vmatmul.bf16.gmra.mxu0 %v11088
    %v11233 = vpop.f32.mrf.mxu0
    %v11234 = vadd.f32 %v11027, %v11233
    %v11235 = vpop.f32.mrf.mxu0
    %v11236 = vadd.f32 %v11027, %v11235
    %11237 = vmatmul.bf16.gmra.mxu0 %v11091
    %v11238 = vpop.f32.mrf.mxu0
    %v11239 = vadd.f32 %v11027, %v11238
    %v11240 = vpop.f32.mrf.mxu0
    %v11241 = vadd.f32 %v11027, %v11240
    %11242 = vmatmul.bf16.gmra.mxu0 %v11094
    %v11243 = vpop.f32.mrf.mxu0
    %v11244 = vadd.f32 %v11027, %v11243
    %v11245 = vpop.f32.mrf.mxu0
    %v11246 = vadd.f32 %v11027, %v11245
    %11247 = vmatmul.bf16.gmra.mxu0 %v11097
    %v11248 = vpop.f32.mrf.mxu0
    %v11249 = vadd.f32 %v11027, %v11248
    %v11250 = vpop.f32.mrf.mxu0
    %v11251 = vadd.f32 %v11027, %v11250
    %11252 = vmatmul.bf16.gmra.mxu0 %v11100
    %v11253 = vpop.f32.mrf.mxu0
    %v11254 = vadd.f32 %v11027, %v11253
    %v11255 = vpop.f32.mrf.mxu0
    %v11256 = vadd.f32 %v11027, %v11255
    %11257 = vmatmul.bf16.gmra.mxu0 %v11103
    %v11258 = vpop.f32.mrf.mxu0
    %v11259 = vadd.f32 %v11027, %v11258
    %v11260 = vpop.f32.mrf.mxu0
    %v11261 = vadd.f32 %v11027, %v11260
    %11262 = vmatmul.bf16.gmra.mxu0 %v11106
    %v11263 = vpop.f32.mrf.mxu0
    %v11264 = vadd.f32 %v11027, %v11263
    %v11265 = vpop.f32.mrf.mxu0
    %v11266 = vadd.f32 %v11027, %v11265
    %11267 = vmatmul.bf16.gmra.mxu0 %v11109
    %v11268 = vpop.f32.mrf.mxu0
    %v11269 = vadd.f32 %v11027, %v11268
    %v11270 = vpop.f32.mrf.mxu0
    %v11271 = vadd.f32 %v11027, %v11270
    %11272 = vmatmul.bf16.gmra.mxu0 %v11112
    %v11273 = vpop.f32.mrf.mxu0
    %v11274 = vadd.f32 %v11027, %v11273
    %v11275 = vpop.f32.mrf.mxu0
    %v11276 = vadd.f32 %v11027, %v11275
    %11277 = vmatmul.bf16.gmra.mxu0 %v11115
    %v11278 = vpop.f32.mrf.mxu0
    %v11279 = vadd.f32 %v11027, %v11278
    %v11280 = vpop.f32.mrf.mxu0
    %v11281 = vadd.f32 %v11027, %v11280
    %11282 = vmatmul.bf16.gmra.mxu0 %v11118
    %v11283 = vpop.f32.mrf.mxu0
    %v11284 = vadd.f32 %v11027, %v11283
    %v11285 = vpop.f32.mrf.mxu0
    %v11286 = vadd.f32 %v11027, %v11285
    %11287 = vmatmul.bf16.gmra.mxu0 %v11121
    %v11288 = vpop.f32.mrf.mxu0
    %v11289 = vadd.f32 %v11027, %v11288
    %v11290 = vpop.f32.mrf.mxu0
    %v11291 = vadd.f32 %v11027, %v11290
    %11292 = vmatmul.bf16.gmra.mxu0 %v11124
    %v11293 = vpop.f32.mrf.mxu0
    %v11294 = vadd.f32 %v11027, %v11293
    %v11295 = vpop.f32.mrf.mxu0
    %v11296 = vadd.f32 %v11027, %v11295
    %11297 = vdwg.mxu0
    %11298 = vst [vmem:[#allocation6] sm:$0xff] %v11139
    %11299 = vst [vmem:[#allocation6 + $0x8] sm:$0xff] %v11141
    %11300 = vst [vmem:[#allocation6 + $0x10] sm:$0xff] %v11144
    %11301 = vst [vmem:[#allocation6 + $0x18] sm:$0xff] %v11146
    %11302 = vst [vmem:[#allocation6 + $0x20] sm:$0xff] %v11149
    %11303 = vst [vmem:[#allocation6 + $0x28] sm:$0xff] %v11151
    %11304 = vst [vmem:[#allocation6 + $0x30] sm:$0xff] %v11154
    %11305 = vst [vmem:[#allocation6 + $0x38] sm:$0xff] %v11156
    %11306 = vst [vmem:[#allocation6 + $0x40] sm:$0xff] %v11159
    %11307 = vst [vmem:[#allocation6 + $0x48] sm:$0xff] %v11161
    %11308 = vst [vmem:[#allocation6 + $0x50] sm:$0xff] %v11164
    %11309 = vst [vmem:[#allocation6 + $0x58] sm:$0xff] %v11166
    %11310 = vst [vmem:[#allocation6 + $0x60] sm:$0xff] %v11169
    %11311 = vst [vmem:[#allocation6 + $0x68] sm:$0xff] %v11171
    %11312 = vst [vmem:[#allocation6 + $0x70] sm:$0xff] %v11174
    %11313 = vst [vmem:[#allocation6 + $0x78] sm:$0xff] %v11176
    %11314 = vst [vmem:[#allocation6 + $0x80] sm:$0xff] %v11179
    %11315 = vst [vmem:[#allocation6 + $0x88] sm:$0xff] %v11181
    %11316 = vst [vmem:[#allocation6 + $0x90] sm:$0xff] %v11184
    %11317 = vst [vmem:[#allocation6 + $0x98] sm:$0xff] %v11186
    %11318 = vst [vmem:[#allocation6 + $0xa0] sm:$0xff] %v11189
    %11319 = vst [vmem:[#allocation6 + $0xa8] sm:$0xff] %v11191
    %11320 = vst [vmem:[#allocation6 + $0xb0] sm:$0xff] %v11194
    %11321 = vst [vmem:[#allocation6 + $0xb8] sm:$0xff] %v11196
    %11322 = vst [vmem:[#allocation6 + $0xc0] sm:$0xff] %v11199
    %11323 = vst [vmem:[#allocation6 + $0xc8] sm:$0xff] %v11201
    %11324 = vst [vmem:[#allocation6 + $0xd0] sm:$0xff] %v11204
    %11325 = vst [vmem:[#allocation6 + $0xd8] sm:$0xff] %v11206
    %11326 = vst [vmem:[#allocation6 + $0xe0] sm:$0xff] %v11209
    %11327 = vst [vmem:[#allocation6 + $0xe8] sm:$0xff] %v11211
    %11328 = vst [vmem:[#allocation6 + $0xf0] sm:$0xff] %v11214
    %11329 = vst [vmem:[#allocation6 + $0xf8] sm:$0xff] %v11216
    %11330 = vst [vmem:[#allocation6 + $0x100] sm:$0xff] %v11219
    %11331 = vst [vmem:[#allocation6 + $0x108] sm:$0xff] %v11221
    %11332 = vst [vmem:[#allocation6 + $0x110] sm:$0xff] %v11224
    %11333 = vst [vmem:[#allocation6 + $0x118] sm:$0xff] %v11226
    %11334 = vst [vmem:[#allocation6 + $0x120] sm:$0xff] %v11229
    %11335 = vst [vmem:[#allocation6 + $0x128] sm:$0xff] %v11231
    %11336 = vst [vmem:[#allocation6 + $0x130] sm:$0xff] %v11234
    %11337 = vst [vmem:[#allocation6 + $0x138] sm:$0xff] %v11236
    %11338 = vst [vmem:[#allocation6 + $0x140] sm:$0xff] %v11239
    %11339 = vst [vmem:[#allocation6 + $0x148] sm:$0xff] %v11241
    %11340 = vst [vmem:[#allocation6 + $0x150] sm:$0xff] %v11244
    %11341 = vst [vmem:[#allocation6 + $0x158] sm:$0xff] %v11246
    %11342 = vst [vmem:[#allocation6 + $0x160] sm:$0xff] %v11249
    %11343 = vst [vmem:[#allocation6 + $0x168] sm:$0xff] %v11251
    %11344 = vst [vmem:[#allocation6 + $0x170] sm:$0xff] %v11254
    %11345 = vst [vmem:[#allocation6 + $0x178] sm:$0xff] %v11256
    %11346 = vst [vmem:[#allocation6 + $0x180] sm:$0xff] %v11259
    %11347 = vst [vmem:[#allocation6 + $0x188] sm:$0xff] %v11261
    %11348 = vst [vmem:[#allocation6 + $0x190] sm:$0xff] %v11264
    %11349 = vst [vmem:[#allocation6 + $0x198] sm:$0xff] %v11266
    %11350 = vst [vmem:[#allocation6 + $0x1a0] sm:$0xff] %v11269
    %11351 = vst [vmem:[#allocation6 + $0x1a8] sm:$0xff] %v11271
    %11352 = vst [vmem:[#allocation6 + $0x1b0] sm:$0xff] %v11274
    %11353 = vst [vmem:[#allocation6 + $0x1b8] sm:$0xff] %v11276
    %11354 = vst [vmem:[#allocation6 + $0x1c0] sm:$0xff] %v11279
    %11355 = vst [vmem:[#allocation6 + $0x1c8] sm:$0xff] %v11281
    %11356 = vst [vmem:[#allocation6 + $0x1d0] sm:$0xff] %v11284
    %11357 = vst [vmem:[#allocation6 + $0x1d8] sm:$0xff] %v11286
    %11358 = vst [vmem:[#allocation6 + $0x1e0] sm:$0xff] %v11289
    %11359 = vst [vmem:[#allocation6 + $0x1e8] sm:$0xff] %v11291
    %11360 = vst [vmem:[#allocation6 + $0x1f0] sm:$0xff] %v11294
    %11361 = vst [vmem:[#allocation6 + $0x1f8] sm:$0xff] %v11296
    // Predicated region
    $region38: #{tpu_custom_call.1} parent=1 // pred_check
      _
    $region39: #{tpu_custom_call.1} parent=1 // pred_check_branch
      %11363 = sbr.rel (0) target = $region41
    $region40: #{tpu_custom_call.1} parent=1 // pred_region
      %11365 = vsyncadd [#allocation7], 0
      %s11366 = sshll.u32 [#allocation6], 4
      %s11367 = int_to_ptr.vmem [resolvable:$true] %s11366
      %s11368 = sshll.u32 %s9, 4
      %s11369 = int_to_ptr.hbm [resolvable:$true] %s11368
      %11374 = dma.vmem_to_hbm [thread:$0]  %s11367, 8192, %s11369, [#allocation7], 128, 128, 8
    $region41: #{tpu_custom_call.1} parent=1 // pred_fallthru
      _
    // Predicated region
    $region42: #{tpu_custom_call.1} parent=1 // pred_check
      _
    $region43: #{tpu_custom_call.1} parent=1 // pred_check_branch
      %11376 = sbr.rel (0) target = $region45
    $region44: #{tpu_custom_call.1} parent=1 // pred_region
      %11378 = dma.done [#allocation7], 8192
    $region45: #{tpu_custom_call.1} parent=1 // pred_fallthru
      _
    %11379 = vsyncpa [#allocation7], 1

</llo_original>
